<compile_context>
chip_gen: v6e
topology: v6e:2x2x1
jax: 0.10.0
libtpu: 0.0.40
codegen_flags: <defaults>
</compile_context>

<pallas_src>
import functools

import jax
import jax.numpy as jnp
import numpy as np
from jax import lax
from jax.experimental import pallas as pl
from jax.experimental.pallas import tpu as pltpu

A_TYPE = "relu"   # one of the module's supported activations
BT_MAX = 128      # max images per grid step (~11 MiB VMEM at 128; fits v5e's
                  # 16 MiB scoped default, and we raise the limit anyway)

# Activations that are monotone non-decreasing, so act(max(a,b)) == max(act(a),
# act(b)) and we may 2x2-max-pool BEFORE activating (saves 4x activation work).
_MONOTONE_ACTIVATIONS = ("relu", "tanh", "gelu", "sigmoid", "lrelu", "elu",
                         "selu", "celu", "softplus")


def _activation(x, a_type):
    if a_type == "relu":
        return jnp.maximum(x, 0.0)
    elif a_type in ("tanh", "gelu"):          # module maps 'gelu' to nn.Tanh()
        return jnp.tanh(x)
    elif a_type == "sigmoid":
        return 1.0 / (1.0 + jnp.exp(-x))
    elif a_type == "lrelu":
        return jnp.where(x >= 0, x, 0.01 * x)
    elif a_type == "elu":
        # stable: never evaluate exp on large positives
        return jnp.where(x >= 0, x, jnp.expm1(jnp.minimum(x, 0.0)))
    elif a_type == "selu":
        scale, alpha = 1.0507009873554805, 1.6732632423543772
        return scale * jnp.where(x >= 0, x,
                                 alpha * jnp.expm1(jnp.minimum(x, 0.0)))
    elif a_type == "celu":                    # default alpha=1 -> same as elu
        return jnp.where(x >= 0, x, jnp.expm1(jnp.minimum(x, 0.0)))
    elif a_type == "softplus":
        # stable: softplus(x) = max(x, 0) + log1p(exp(-|x|))
        return jnp.maximum(x, 0.0) + jnp.log1p(jnp.exp(-jnp.abs(x)))
    else:
        raise NotImplementedError(a_type)


# ---------------- fused Pallas kernel ----------------

def lenet_fused_kernel(x_ref, wc_ref, cb_ref, wfc_ref, fb_ref, o_ref, *,
                       a_type, bt):
    # x_ref  : (28, bt, 28)    bf16 image tile, h-major (lanes = input width)
    # wc_ref : (140, 512)      bf16 banded conv weights; row = ki*28 + w_in,
    #                               col = parity*256 + w2*20 + c (lane-padded)
    # cb_ref : (1, 256)        f32  conv bias tiled over (w2, c) lanes (padded)
    # wfc_ref: (12, 256, 128)  bf16 fc weights, one slab per pooled row h2
    # fb_ref : (1, 128)        f32  fc bias (lane-padded; lanes 10..127 zero)
    # o_ref  : (bt, 128)       f32  logits (lanes 0..9 valid)
    rows = 24 * bt

    # im2col over kernel-height only: lane-concat the 5 height-shifted slices
    # (bt % 16 == 0 keeps the bf16 reshape a pure view).  One matmul then does
    # the whole 5x5 conv for both width parities; all accumulation stays in
    # the MXU (no VMEM accumulator read-modify-write).
    lhs = jnp.concatenate(
        [x_ref[pl.ds(ki, 24), :, :].reshape(rows, 28) for ki in range(5)],
        axis=-1)                                            # (24*bt, 140) bf16
    z = jnp.dot(lhs, wc_ref[...],
                preferred_element_type=jnp.float32)         # (24*bt, 512) f32

    # Width-pool (max over the two parities) + bias + activation.  All
    # supported activations are monotone, so act(max(.)) == max(act(.)).
    act = _activation(jnp.maximum(z[:, :256], z[:, 256:]) + cb_ref[...], a_type)

    # Height-pool: rows are h-major, so the (h2, q) pairs are adjacent major
    # slabs — no cross-lane data movement.
    z4 = act.reshape(12, 2, bt, 256)
    hp = jnp.maximum(z4[:, 0], z4[:, 1]).astype(jnp.bfloat16)   # (12, bt, 256)

    # fc: 12 (bt,256)@(256,128) matmuls accumulated into one small f32 value
    # (consecutive matmuls into a single accumulator; init from first dot).
    out = jnp.dot(hp[0], wfc_ref[0], preferred_element_type=jnp.float32)
    for h2 in range(1, 12):
        out = out + jnp.dot(hp[h2], wfc_ref[h2],
                            preferred_element_type=jnp.float32)
    o_ref[...] = out + fb_ref[...]


# ---------------- one-time (init) weight preparation ----------------

def prepare_params(conv_w, conv_b, fc_w, fc_b):
    """Hoisted out of the forward path: build the banded conv matrix (ki and
    width-parity folded into one contraction / one output-lane axis) and the
    flatten-order-matched fc weight once, in bf16 for the MXU."""
    cw = np.asarray(conv_w, np.float32).reshape(20, 5, 5)        # (c, ki, kj)

    # wc[ki*28 + w_in, p*256 + w2*20 + c] = cw[c, ki, w_in - (2*w2 + p)]
    wc = np.zeros((140, 512), np.float32)
    for ki in range(5):
        for p in range(2):
            for w2 in range(12):
                for kj in range(5):
                    w_in = 2 * w2 + p + kj
                    wc[ki * 28 + w_in,
                       p * 256 + w2 * 20:p * 256 + (w2 + 1) * 20] = cw[:, ki, kj]

    cb = np.zeros((1, 256), np.float32)
    cb[0, :240] = np.tile(np.asarray(conv_b, np.float32), 12)

    # PyTorch flattens (B, 20, 12, 12) as c*144 + h2*12 + w2; our lanes are
    # w2*20 + c per pooled row h2 -> permute once so semantics match exactly.
    fw = np.asarray(fc_w, np.float32).reshape(10, 20, 12, 12)    # (o,c,h2,w2)
    wfc = np.zeros((12, 256, 128), np.float32)
    wfc[:, :240, :10] = np.transpose(fw, (2, 3, 1, 0)).reshape(12, 240, 10)

    fb = np.zeros((1, 128), np.float32)
    fb[0, :10] = np.asarray(fc_b, np.float32)

    return (jnp.asarray(wc, jnp.bfloat16), jnp.asarray(cb),
            jnp.asarray(wfc, jnp.bfloat16), jnp.asarray(fb))


# ---------------- forward wrapper ----------------

def _pick_bt(batch, bt_max=BT_MAX):
    # bt must be a multiple of 16 (clean bf16 sublane tiling); keep >=2 grid
    # steps when the batch allows so both v7x TensorCores get work.
    half = -(-batch // 2)
    bt = -(-half // 16) * 16
    return int(max(16, min(bt_max, bt)))


def lenet_forward(x, params, a_type=A_TYPE, bt=None):
    assert a_type in _MONOTONE_ACTIVATIONS, (
        "pool-before-activation requires a monotone activation: %s" % a_type)
    wc, cb, wfc, fb = params
    B = x.shape[0]
    assert x.shape[1:] == (1, 28, 28)
    if bt is None:
        bt = _pick_bt(B)
    assert bt % 16 == 0
    bp = -(-B // bt) * bt

    # Tiny layout glue on the raw images only: squeeze the channel, cast to
    # bf16 once (halves per-step input DMA), pad the batch to a tile multiple,
    # go h-major for the kernel.
    xs = x.reshape(B, 28, 28).astype(jnp.bfloat16)
    if bp != B:
        xs = jnp.pad(xs, ((0, bp - B), (0, 0), (0, 0)))
    xt = jnp.transpose(xs, (1, 0, 2))                            # (28, bp, 28)

    flops = 2 * 24 * bp * 140 * 512 + 2 * bp * 12 * 256 * 128
    transcendentals = 0 if a_type in ("relu", "lrelu") else 24 * bp * 256
    bytes_accessed = (xt.size * 2 + (140 * 512 + 12 * 256 * 128) * 2
                      + (256 + 128) * 4 + bp * 128 * 4)

    out = pl.pallas_call(
        functools.partial(lenet_fused_kernel, a_type=a_type, bt=bt),
        out_shape=jax.ShapeDtypeStruct((bp, 128), jnp.float32),
        grid=(bp // bt,),
        in_specs=[
            pl.BlockSpec((28, bt, 28), lambda i: (0, i, 0)),     # image tile
            pl.BlockSpec((140, 512), lambda i: (0, 0)),          # conv weights
            pl.BlockSpec((1, 256), lambda i: (0, 0)),            # conv bias
            pl.BlockSpec((12, 256, 128), lambda i: (0, 0, 0)),   # fc weights
            pl.BlockSpec((1, 128), lambda i: (0, 0)),            # fc bias
        ],
        out_specs=pl.BlockSpec((bt, 128), lambda i: (i, 0)),
        compiler_params=pltpu.CompilerParams(
            dimension_semantics=("parallel",),
            vmem_limit_bytes=32 * 1024 * 1024),
        cost_estimate=pl.CostEstimate(flops=flops,
                                      transcendentals=transcendentals,
                                      bytes_accessed=bytes_accessed),
    )(xt, wc, cb, wfc, fb)
    return out[:B, :10]


# ---------------- pure-JAX reference (verification only) ----------------

def lenet_reference(x, conv_w, conv_b, fc_w, fc_b, a_type=A_TYPE):
    y = lax.conv_general_dilated(x, conv_w, (1, 1), "VALID",
                                 dimension_numbers=("NCHW", "OIHW", "NCHW"))
    y = y + conv_b[None, :, None, None]
    y = _activation(y, a_type)
    B = x.shape[0]
    y = y.reshape(B, 20, 12, 2, 12, 2).max(axis=(3, 5))          # max_pool 2x2
    return y.reshape(B, 2880) @ fc_w.T + fc_b[None, :]


if __name__ == "__main__":
    key = jax.random.PRNGKey(0)
    k_x, k_x2, k_cw, k_cb, k_fw, k_fb = jax.random.split(key, 6)

    # Synthetic parameters (shapes from the module's __init__).
    conv_w = jax.random.normal(k_cw, (20, 1, 5, 5), dtype=jnp.float32) * 0.1
    conv_b = jax.random.normal(k_cb, (20,), dtype=jnp.float32) * 0.1
    fc_w = jax.random.normal(k_fw, (10, 20 * 12 * 12), dtype=jnp.float32) * 0.02
    fc_b = jax.random.normal(k_fb, (10,), dtype=jnp.float32) * 0.1

    params = prepare_params(conv_w, conv_b, fc_w, fc_b)   # once, at model init
    fwd = jax.jit(lenet_forward)

    # Batch of 48 -> bt=32, grid of 2 batch tiles (both v7x TensorCores busy,
    # also exercises the pad-to-tile path: 48 -> 64).
    x = jax.random.normal(k_x, (48, 1, 28, 28), dtype=jnp.float32)
    out = jax.block_until_ready(fwd(x, params))
    ref = lenet_reference(x, conv_w, conv_b, fc_w, fc_b)
    np.testing.assert_allclose(np.asarray(out), np.asarray(ref),
                               rtol=5e-2, atol=5e-2)       # bf16-matmul tolerance

    # Tiny ragged batch exercises bt=16 / grid=1.
    x2 = jax.random.normal(k_x2, (5, 1, 28, 28), dtype=jnp.float32)
    out2 = jax.block_until_ready(fwd(x2, params))
    ref2 = lenet_reference(x2, conv_w, conv_b, fc_w, fc_b)
    np.testing.assert_allclose(np.asarray(out2), np.asarray(ref2),
                               rtol=5e-2, atol=5e-2)

    print("KERNEL_OK")
</pallas_src>

<mosaic_0001>
module attributes {stable_mosaic.version = 11 : i64} {
  func.func @lenet_fused_kernel(%arg0: i32, %arg1: memref<28x32x28xbf16, #tpu.memory_space<vmem>>, %arg2: memref<140x512xbf16, #tpu.memory_space<vmem>>, %arg3: memref<1x256xf32, #tpu.memory_space<vmem>>, %arg4: memref<12x256x128xbf16, #tpu.memory_space<vmem>>, %arg5: memref<1x128xf32, #tpu.memory_space<vmem>>, %arg6: memref<32x128xf32, #tpu.memory_space<vmem>>) attributes {dimension_semantics = [#tpu.dimension_semantics<parallel>], iteration_bounds = array<i64: 2>, scalar_prefetch = 0 : i64, scratch_operands = 0 : i64, tpu.core_type = #tpu.core_type<tc>, window_params = [{transform_indices = @transform_0, window_bounds = array<i64: 28, 32, 28>}, {pipeline_mode = #tpu.pipeline_mode<synchronous>, transform_indices = @transform_1, window_bounds = array<i64: 140, 512>}, {pipeline_mode = #tpu.pipeline_mode<synchronous>, transform_indices = @transform_2, window_bounds = array<i64: 1, 256>}, {pipeline_mode = #tpu.pipeline_mode<synchronous>, transform_indices = @transform_3, window_bounds = array<i64: 12, 256, 128>}, {pipeline_mode = #tpu.pipeline_mode<synchronous>, transform_indices = @transform_4, window_bounds = array<i64: 1, 128>}, {transform_indices = @transform_5, window_bounds = array<i64: 32, 128>}]} {
    %c0 = arith.constant 0 : index
    %c0_0 = arith.constant 0 : index
    %c0_1 = arith.constant 0 : index
    %0 = vector.load %arg1[%c0, %c0_0, %c0_1] : memref<28x32x28xbf16, #tpu.memory_space<vmem>>, vector<24x32x28xbf16>
    %1 = vector.shape_cast %0 : vector<24x32x28xbf16> to vector<768x28xbf16>
    %c1 = arith.constant 1 : index
    %c0_2 = arith.constant 0 : index
    %c0_3 = arith.constant 0 : index
    %2 = vector.load %arg1[%c1, %c0_2, %c0_3] : memref<28x32x28xbf16, #tpu.memory_space<vmem>>, vector<24x32x28xbf16>
    %3 = vector.shape_cast %2 : vector<24x32x28xbf16> to vector<768x28xbf16>
    %c2 = arith.constant 2 : index
    %c0_4 = arith.constant 0 : index
    %c0_5 = arith.constant 0 : index
    %4 = vector.load %arg1[%c2, %c0_4, %c0_5] : memref<28x32x28xbf16, #tpu.memory_space<vmem>>, vector<24x32x28xbf16>
    %5 = vector.shape_cast %4 : vector<24x32x28xbf16> to vector<768x28xbf16>
    %c3 = arith.constant 3 : index
    %c0_6 = arith.constant 0 : index
    %c0_7 = arith.constant 0 : index
    %6 = vector.load %arg1[%c3, %c0_6, %c0_7] : memref<28x32x28xbf16, #tpu.memory_space<vmem>>, vector<24x32x28xbf16>
    %7 = vector.shape_cast %6 : vector<24x32x28xbf16> to vector<768x28xbf16>
    %c4 = arith.constant 4 : index
    %c0_8 = arith.constant 0 : index
    %c0_9 = arith.constant 0 : index
    %8 = vector.load %arg1[%c4, %c0_8, %c0_9] : memref<28x32x28xbf16, #tpu.memory_space<vmem>>, vector<24x32x28xbf16>
    %9 = vector.shape_cast %8 : vector<24x32x28xbf16> to vector<768x28xbf16>
    %10 = tpu.concatenate %1, %3, %5, %7, %9 in 1 : vector<768x28xbf16>, vector<768x28xbf16>, vector<768x28xbf16>, vector<768x28xbf16>, vector<768x28xbf16> -> vector<768x140xbf16>
    %c0_10 = arith.constant 0 : index
    %c0_11 = arith.constant 0 : index
    %11 = vector.load %arg2[%c0_10, %c0_11] : memref<140x512xbf16, #tpu.memory_space<vmem>>, vector<140x512xbf16>
    %cst = arith.constant dense<0.000000e+00> : vector<768x512xf32>
    %12 = tpu.matmul %10, %11, %cst {dimension_numbers = #tpu.dot_dimension_numbers<[1], [0], [0], [1], [0, 0, 1, 1], [], []>} : vector<768x140xbf16>, vector<140x512xbf16>, vector<768x512xf32> -> vector<768x512xf32>
    %13 = vector.extract_strided_slice %12 {offsets = [0, 0], sizes = [768, 256], strides = [1, 1]} : vector<768x512xf32> to vector<768x256xf32>
    %14 = vector.extract_strided_slice %12 {offsets = [0, 256], sizes = [768, 256], strides = [1, 1]} : vector<768x512xf32> to vector<768x256xf32>
    %15 = arith.maximumf %13, %14 : vector<768x256xf32>
    %c0_12 = arith.constant 0 : index
    %c0_13 = arith.constant 0 : index
    %16 = vector.load %arg3[%c0_12, %c0_13] : memref<1x256xf32, #tpu.memory_space<vmem>>, vector<1x256xf32>
    %17 = vector.broadcast %16 : vector<1x256xf32> to vector<768x256xf32>
    %18 = arith.addf %15, %17 : vector<768x256xf32>
    %cst_14 = arith.constant 0.000000e+00 : f32
    %19 = vector.broadcast %cst_14 : f32 to vector<768x256xf32>
    %20 = arith.maximumf %18, %19 : vector<768x256xf32>
    %21 = vector.shape_cast %20 : vector<768x256xf32> to vector<12x2x32x256xf32>
    %22 = vector.extract_strided_slice %21 {offsets = [0, 0, 0, 0], sizes = [12, 1, 32, 256], strides = [1, 1, 1, 1]} : vector<12x2x32x256xf32> to vector<12x1x32x256xf32>
    %23 = vector.shape_cast %22 : vector<12x1x32x256xf32> to vector<12x32x256xf32>
    %24 = vector.extract_strided_slice %21 {offsets = [0, 1, 0, 0], sizes = [12, 1, 32, 256], strides = [1, 1, 1, 1]} : vector<12x2x32x256xf32> to vector<12x1x32x256xf32>
    %25 = vector.shape_cast %24 : vector<12x1x32x256xf32> to vector<12x32x256xf32>
    %26 = arith.maximumf %23, %25 : vector<12x32x256xf32>
    %27 = arith.truncf %26 : vector<12x32x256xf32> to vector<12x32x256xbf16>
    %28 = vector.extract_strided_slice %27 {offsets = [0, 0, 0], sizes = [1, 32, 256], strides = [1, 1, 1]} : vector<12x32x256xbf16> to vector<1x32x256xbf16>
    %29 = vector.shape_cast %28 : vector<1x32x256xbf16> to vector<32x256xbf16>
    %c0_15 = arith.constant 0 : index
    %c0_16 = arith.constant 0 : index
    %c0_17 = arith.constant 0 : index
    %30 = vector.load %arg4[%c0_15, %c0_16, %c0_17] : memref<12x256x128xbf16, #tpu.memory_space<vmem>>, vector<1x256x128xbf16>
    %31 = vector.shape_cast %30 : vector<1x256x128xbf16> to vector<256x128xbf16>
    %cst_18 = arith.constant dense<0.000000e+00> : vector<32x128xf32>
    %32 = tpu.matmul %29, %31, %cst_18 {dimension_numbers = #tpu.dot_dimension_numbers<[1], [0], [0], [1], [0, 0, 1, 1], [], []>} : vector<32x256xbf16>, vector<256x128xbf16>, vector<32x128xf32> -> vector<32x128xf32>
    %33 = vector.extract_strided_slice %27 {offsets = [1, 0, 0], sizes = [1, 32, 256], strides = [1, 1, 1]} : vector<12x32x256xbf16> to vector<1x32x256xbf16>
    %34 = vector.shape_cast %33 : vector<1x32x256xbf16> to vector<32x256xbf16>
    %c1_19 = arith.constant 1 : index
    %c0_20 = arith.constant 0 : index
    %c0_21 = arith.constant 0 : index
    %35 = vector.load %arg4[%c1_19, %c0_20, %c0_21] : memref<12x256x128xbf16, #tpu.memory_space<vmem>>, vector<1x256x128xbf16>
    %36 = vector.shape_cast %35 : vector<1x256x128xbf16> to vector<256x128xbf16>
    %cst_22 = arith.constant dense<0.000000e+00> : vector<32x128xf32>
    %37 = tpu.matmul %34, %36, %cst_22 {dimension_numbers = #tpu.dot_dimension_numbers<[1], [0], [0], [1], [0, 0, 1, 1], [], []>} : vector<32x256xbf16>, vector<256x128xbf16>, vector<32x128xf32> -> vector<32x128xf32>
    %38 = arith.addf %32, %37 : vector<32x128xf32>
    %39 = vector.extract_strided_slice %27 {offsets = [2, 0, 0], sizes = [1, 32, 256], strides = [1, 1, 1]} : vector<12x32x256xbf16> to vector<1x32x256xbf16>
    %40 = vector.shape_cast %39 : vector<1x32x256xbf16> to vector<32x256xbf16>
    %c2_23 = arith.constant 2 : index
    %c0_24 = arith.constant 0 : index
    %c0_25 = arith.constant 0 : index
    %41 = vector.load %arg4[%c2_23, %c0_24, %c0_25] : memref<12x256x128xbf16, #tpu.memory_space<vmem>>, vector<1x256x128xbf16>
    %42 = vector.shape_cast %41 : vector<1x256x128xbf16> to vector<256x128xbf16>
    %cst_26 = arith.constant dense<0.000000e+00> : vector<32x128xf32>
    %43 = tpu.matmul %40, %42, %cst_26 {dimension_numbers = #tpu.dot_dimension_numbers<[1], [0], [0], [1], [0, 0, 1, 1], [], []>} : vector<32x256xbf16>, vector<256x128xbf16>, vector<32x128xf32> -> vector<32x128xf32>
    %44 = arith.addf %38, %43 : vector<32x128xf32>
    %45 = vector.extract_strided_slice %27 {offsets = [3, 0, 0], sizes = [1, 32, 256], strides = [1, 1, 1]} : vector<12x32x256xbf16> to vector<1x32x256xbf16>
    %46 = vector.shape_cast %45 : vector<1x32x256xbf16> to vector<32x256xbf16>
    %c3_27 = arith.constant 3 : index
    %c0_28 = arith.constant 0 : index
    %c0_29 = arith.constant 0 : index
    %47 = vector.load %arg4[%c3_27, %c0_28, %c0_29] : memref<12x256x128xbf16, #tpu.memory_space<vmem>>, vector<1x256x128xbf16>
    %48 = vector.shape_cast %47 : vector<1x256x128xbf16> to vector<256x128xbf16>
    %cst_30 = arith.constant dense<0.000000e+00> : vector<32x128xf32>
    %49 = tpu.matmul %46, %48, %cst_30 {dimension_numbers = #tpu.dot_dimension_numbers<[1], [0], [0], [1], [0, 0, 1, 1], [], []>} : vector<32x256xbf16>, vector<256x128xbf16>, vector<32x128xf32> -> vector<32x128xf32>
    %50 = arith.addf %44, %49 : vector<32x128xf32>
    %51 = vector.extract_strided_slice %27 {offsets = [4, 0, 0], sizes = [1, 32, 256], strides = [1, 1, 1]} : vector<12x32x256xbf16> to vector<1x32x256xbf16>
    %52 = vector.shape_cast %51 : vector<1x32x256xbf16> to vector<32x256xbf16>
    %c4_31 = arith.constant 4 : index
    %c0_32 = arith.constant 0 : index
    %c0_33 = arith.constant 0 : index
    %53 = vector.load %arg4[%c4_31, %c0_32, %c0_33] : memref<12x256x128xbf16, #tpu.memory_space<vmem>>, vector<1x256x128xbf16>
    %54 = vector.shape_cast %53 : vector<1x256x128xbf16> to vector<256x128xbf16>
    %cst_34 = arith.constant dense<0.000000e+00> : vector<32x128xf32>
    %55 = tpu.matmul %52, %54, %cst_34 {dimension_numbers = #tpu.dot_dimension_numbers<[1], [0], [0], [1], [0, 0, 1, 1], [], []>} : vector<32x256xbf16>, vector<256x128xbf16>, vector<32x128xf32> -> vector<32x128xf32>
    %56 = arith.addf %50, %55 : vector<32x128xf32>
    %57 = vector.extract_strided_slice %27 {offsets = [5, 0, 0], sizes = [1, 32, 256], strides = [1, 1, 1]} : vector<12x32x256xbf16> to vector<1x32x256xbf16>
    %58 = vector.shape_cast %57 : vector<1x32x256xbf16> to vector<32x256xbf16>
    %c5 = arith.constant 5 : index
    %c0_35 = arith.constant 0 : index
    %c0_36 = arith.constant 0 : index
    %59 = vector.load %arg4[%c5, %c0_35, %c0_36] : memref<12x256x128xbf16, #tpu.memory_space<vmem>>, vector<1x256x128xbf16>
    %60 = vector.shape_cast %59 : vector<1x256x128xbf16> to vector<256x128xbf16>
    %cst_37 = arith.constant dense<0.000000e+00> : vector<32x128xf32>
    %61 = tpu.matmul %58, %60, %cst_37 {dimension_numbers = #tpu.dot_dimension_numbers<[1], [0], [0], [1], [0, 0, 1, 1], [], []>} : vector<32x256xbf16>, vector<256x128xbf16>, vector<32x128xf32> -> vector<32x128xf32>
    %62 = arith.addf %56, %61 : vector<32x128xf32>
    %63 = vector.extract_strided_slice %27 {offsets = [6, 0, 0], sizes = [1, 32, 256], strides = [1, 1, 1]} : vector<12x32x256xbf16> to vector<1x32x256xbf16>
    %64 = vector.shape_cast %63 : vector<1x32x256xbf16> to vector<32x256xbf16>
    %c6 = arith.constant 6 : index
    %c0_38 = arith.constant 0 : index
    %c0_39 = arith.constant 0 : index
    %65 = vector.load %arg4[%c6, %c0_38, %c0_39] : memref<12x256x128xbf16, #tpu.memory_space<vmem>>, vector<1x256x128xbf16>
    %66 = vector.shape_cast %65 : vector<1x256x128xbf16> to vector<256x128xbf16>
    %cst_40 = arith.constant dense<0.000000e+00> : vector<32x128xf32>
    %67 = tpu.matmul %64, %66, %cst_40 {dimension_numbers = #tpu.dot_dimension_numbers<[1], [0], [0], [1], [0, 0, 1, 1], [], []>} : vector<32x256xbf16>, vector<256x128xbf16>, vector<32x128xf32> -> vector<32x128xf32>
    %68 = arith.addf %62, %67 : vector<32x128xf32>
    %69 = vector.extract_strided_slice %27 {offsets = [7, 0, 0], sizes = [1, 32, 256], strides = [1, 1, 1]} : vector<12x32x256xbf16> to vector<1x32x256xbf16>
    %70 = vector.shape_cast %69 : vector<1x32x256xbf16> to vector<32x256xbf16>
    %c7 = arith.constant 7 : index
    %c0_41 = arith.constant 0 : index
    %c0_42 = arith.constant 0 : index
    %71 = vector.load %arg4[%c7, %c0_41, %c0_42] : memref<12x256x128xbf16, #tpu.memory_space<vmem>>, vector<1x256x128xbf16>
    %72 = vector.shape_cast %71 : vector<1x256x128xbf16> to vector<256x128xbf16>
    %cst_43 = arith.constant dense<0.000000e+00> : vector<32x128xf32>
    %73 = tpu.matmul %70, %72, %cst_43 {dimension_numbers = #tpu.dot_dimension_numbers<[1], [0], [0], [1], [0, 0, 1, 1], [], []>} : vector<32x256xbf16>, vector<256x128xbf16>, vector<32x128xf32> -> vector<32x128xf32>
    %74 = arith.addf %68, %73 : vector<32x128xf32>
    %75 = vector.extract_strided_slice %27 {offsets = [8, 0, 0], sizes = [1, 32, 256], strides = [1, 1, 1]} : vector<12x32x256xbf16> to vector<1x32x256xbf16>
    %76 = vector.shape_cast %75 : vector<1x32x256xbf16> to vector<32x256xbf16>
    %c8 = arith.constant 8 : index
    %c0_44 = arith.constant 0 : index
    %c0_45 = arith.constant 0 : index
    %77 = vector.load %arg4[%c8, %c0_44, %c0_45] : memref<12x256x128xbf16, #tpu.memory_space<vmem>>, vector<1x256x128xbf16>
    %78 = vector.shape_cast %77 : vector<1x256x128xbf16> to vector<256x128xbf16>
    %cst_46 = arith.constant dense<0.000000e+00> : vector<32x128xf32>
    %79 = tpu.matmul %76, %78, %cst_46 {dimension_numbers = #tpu.dot_dimension_numbers<[1], [0], [0], [1], [0, 0, 1, 1], [], []>} : vector<32x256xbf16>, vector<256x128xbf16>, vector<32x128xf32> -> vector<32x128xf32>
    %80 = arith.addf %74, %79 : vector<32x128xf32>
    %81 = vector.extract_strided_slice %27 {offsets = [9, 0, 0], sizes = [1, 32, 256], strides = [1, 1, 1]} : vector<12x32x256xbf16> to vector<1x32x256xbf16>
    %82 = vector.shape_cast %81 : vector<1x32x256xbf16> to vector<32x256xbf16>
    %c9 = arith.constant 9 : index
    %c0_47 = arith.constant 0 : index
    %c0_48 = arith.constant 0 : index
    %83 = vector.load %arg4[%c9, %c0_47, %c0_48] : memref<12x256x128xbf16, #tpu.memory_space<vmem>>, vector<1x256x128xbf16>
    %84 = vector.shape_cast %83 : vector<1x256x128xbf16> to vector<256x128xbf16>
    %cst_49 = arith.constant dense<0.000000e+00> : vector<32x128xf32>
    %85 = tpu.matmul %82, %84, %cst_49 {dimension_numbers = #tpu.dot_dimension_numbers<[1], [0], [0], [1], [0, 0, 1, 1], [], []>} : vector<32x256xbf16>, vector<256x128xbf16>, vector<32x128xf32> -> vector<32x128xf32>
    %86 = arith.addf %80, %85 : vector<32x128xf32>
    %87 = vector.extract_strided_slice %27 {offsets = [10, 0, 0], sizes = [1, 32, 256], strides = [1, 1, 1]} : vector<12x32x256xbf16> to vector<1x32x256xbf16>
    %88 = vector.shape_cast %87 : vector<1x32x256xbf16> to vector<32x256xbf16>
    %c10 = arith.constant 10 : index
    %c0_50 = arith.constant 0 : index
    %c0_51 = arith.constant 0 : index
    %89 = vector.load %arg4[%c10, %c0_50, %c0_51] : memref<12x256x128xbf16, #tpu.memory_space<vmem>>, vector<1x256x128xbf16>
    %90 = vector.shape_cast %89 : vector<1x256x128xbf16> to vector<256x128xbf16>
    %cst_52 = arith.constant dense<0.000000e+00> : vector<32x128xf32>
    %91 = tpu.matmul %88, %90, %cst_52 {dimension_numbers = #tpu.dot_dimension_numbers<[1], [0], [0], [1], [0, 0, 1, 1], [], []>} : vector<32x256xbf16>, vector<256x128xbf16>, vector<32x128xf32> -> vector<32x128xf32>
    %92 = arith.addf %86, %91 : vector<32x128xf32>
    %93 = vector.extract_strided_slice %27 {offsets = [11, 0, 0], sizes = [1, 32, 256], strides = [1, 1, 1]} : vector<12x32x256xbf16> to vector<1x32x256xbf16>
    %94 = vector.shape_cast %93 : vector<1x32x256xbf16> to vector<32x256xbf16>
    %c11 = arith.constant 11 : index
    %c0_53 = arith.constant 0 : index
    %c0_54 = arith.constant 0 : index
    %95 = vector.load %arg4[%c11, %c0_53, %c0_54] : memref<12x256x128xbf16, #tpu.memory_space<vmem>>, vector<1x256x128xbf16>
    %96 = vector.shape_cast %95 : vector<1x256x128xbf16> to vector<256x128xbf16>
    %cst_55 = arith.constant dense<0.000000e+00> : vector<32x128xf32>
    %97 = tpu.matmul %94, %96, %cst_55 {dimension_numbers = #tpu.dot_dimension_numbers<[1], [0], [0], [1], [0, 0, 1, 1], [], []>} : vector<32x256xbf16>, vector<256x128xbf16>, vector<32x128xf32> -> vector<32x128xf32>
    %98 = arith.addf %92, %97 : vector<32x128xf32>
    %c0_56 = arith.constant 0 : index
    %c0_57 = arith.constant 0 : index
    %99 = vector.load %arg5[%c0_56, %c0_57] : memref<1x128xf32, #tpu.memory_space<vmem>>, vector<1x128xf32>
    %100 = vector.broadcast %99 : vector<1x128xf32> to vector<32x128xf32>
    %101 = arith.addf %98, %100 : vector<32x128xf32>
    %c0_58 = arith.constant 0 : index
    %c0_59 = arith.constant 0 : index
    %102 = vector.load %arg6[%c0_58, %c0_59] : memref<32x128xf32, #tpu.memory_space<vmem>>, vector<32x128xf32>
    tpu.vector_store %arg6[%c0_58, %c0_59], %101 {strides = array<i32>} : memref<32x128xf32, #tpu.memory_space<vmem>>, vector<32x128xf32>,
    return
  }
  func.func @transform_0(%arg0: i32) -> (i32, i32, i32) {
    %c0_i32 = arith.constant 0 : i32
    %c0_i32_0 = arith.constant 0 : i32
    %c0_i32_1 = arith.constant 0 : i32
    return %c0_i32, %arg0, %c0_i32_0 : i32, i32, i32
  }
  func.func @transform_1(%arg0: i32) -> (i32, i32) {
    %c0_i32 = arith.constant 0 : i32
    %c0_i32_0 = arith.constant 0 : i32
    %c0_i32_1 = arith.constant 0 : i32
    return %c0_i32, %c0_i32_0 : i32, i32
  }
  func.func @transform_2(%arg0: i32) -> (i32, i32) {
    %c0_i32 = arith.constant 0 : i32
    %c0_i32_0 = arith.constant 0 : i32
    %c0_i32_1 = arith.constant 0 : i32
    return %c0_i32, %c0_i32_0 : i32, i32
  }
  func.func @transform_3(%arg0: i32) -> (i32, i32, i32) {
    %c0_i32 = arith.constant 0 : i32
    %c0_i32_0 = arith.constant 0 : i32
    %c0_i32_1 = arith.constant 0 : i32
    %c0_i32_2 = arith.constant 0 : i32
    return %c0_i32, %c0_i32_0, %c0_i32_1 : i32, i32, i32
  }
  func.func @transform_4(%arg0: i32) -> (i32, i32) {
    %c0_i32 = arith.constant 0 : i32
    %c0_i32_0 = arith.constant 0 : i32
    %c0_i32_1 = arith.constant 0 : i32
    return %c0_i32, %c0_i32_0 : i32, i32
  }
  func.func @transform_5(%arg0: i32) -> (i32, i32) {
    %c0_i32 = arith.constant 0 : i32
    %c0_i32_0 = arith.constant 0 : i32
    return %arg0, %c0_i32 : i32, i32
  }
}

</mosaic_0001>

<llo_original>
// kernel: lenet_forward.1
$region0: #{lenet_forward.1}
  #allocation0 [shape = 'u32[]', space=smem, size = 0x4, offset = 0x4, fixed_abs, tag = 'smem constant byte address 0x4 - core index']
  #allocation1 [shape = 'u32[144,128]{1,0:T(1,128)}', space=vmem, size = 0x12000, scoped, tag = 'internal scratch']
  %s0 = inlined_call_operand.vmem [shape: bf16[28,64,28], index: 0, kind: input, shape index: {}]
  %s1 = inlined_call_operand.vmem [shape: bf16[140,512], index: 1, kind: input, shape index: {}]
  %s2 = inlined_call_operand.vmem [shape: f32[1,256], index: 2, kind: input, shape index: {}]
  %s3 = inlined_call_operand.vmem [shape: bf16[12,256,128], index: 3, kind: input, shape index: {}]
  %s4 = inlined_call_operand.vmem [shape: f32[1,128], index: 4, kind: input, shape index: {}]
  %s5 = inlined_call_operand.vmem [shape: f32[64,128], index: 5, kind: output, shape index: {}]
  %s6 = sld [smem:[#allocation0]]
  $region94: #{lenet_forward.1} parent=0
    _
  %s8 = ssub.s32 1, %s6
  %s9 = scalar_select 0, %s8, %s6
  $region1: #{lenet_forward.1} parent=0
    #allocation2 [shape = 'u8[458752]{0}', space=vmem, size = 0x70000, scoped, tag = 'input window, operand 0']
    loop: start=0, step=1, limit=4
    $region2: #{lenet_forward.1} parent=1 // loop_pre_header
      _
    $region3: #{lenet_forward.1} parent=1 // loop_header
      %s11 = sphi 0, %s15
      %p12 = scmp.ge.s32.totalorder %s11, 4
      %s21 = sphi 0, %s23
      %s24 = sphi 0, %s21
      %s25 = sphi 0, %s24
      %s41 = sphi 0, %s25
      %s45 = sphi 0, %s45
      %s47 = sphi 0, %s45
      %s48 = sphi 0, %s47
      %s62 = sphi 0, %s48
      %s66 = sphi 0, %s66
      %s68 = sphi 0, %s66
      %s69 = sphi 0, %s68
      %s83 = sphi 0, %s69
      %s87 = sphi 0, %s87
      %s89 = sphi 0, %s87
      %s90 = sphi 0, %s89
      %s104 = sphi 0, %s90
      %s108 = sphi 0, %s108
      %s110 = sphi 0, %s108
      %s111 = sphi 0, %s110
      %s125 = sphi 0, %s111
      %s131 = sphi 0, %s133
      %s134 = sphi 0, %s131
      %s135 = sphi 0, %s134
      %s151 = sphi 0, %s135
    $region4: #{lenet_forward.1} parent=1 // loop_header_branch
      %14 = sbr.rel (%p12) target = $region8
    $region5: #{lenet_forward.1} parent=1 // loop_body
      %s16 = ssub.s32 %s11, 1
      %s17 = ssub.s32 %s11, 2
      %s18 = sadd.s32 %s11, 1
      %s19 = ssub.s32 %s11, %s18
      %p20 = scmp.eq.s32.totalorder %s19, 0
      %s22 = sadd.s32 %s21, 1
      %s23 = scalar_select %p20, %s21, %s22
      %p26 = pneg %p20
      %p27 = scmp.eq.s32.totalorder %s11, 1
      %p28 = por %p26, %p27
      %p29 = scmp.ne.s32.totalorder %s21, %s24
      %p30 = scmp.eq.s32.totalorder %s11, 0
      %p31 = por %p29, %p30
      %p32 = scmp.ne.s32.totalorder %s21, %s24
      %p33 = scmp.eq.s32.totalorder %s16, 1
      %p34 = por %p32, %p33
      %p35 = scmp.ne.s32.totalorder %s24, %s25
      %p36 = scmp.eq.s32.totalorder %s16, 0
      %p37 = por %p35, %p36
      %p38 = scmp.ne.s32.totalorder %s24, %s25
      %p39 = scmp.eq.s32.totalorder %s17, 1
      %p40 = por %p38, %p39
      %p42 = scmp.ne.s32.totalorder %s25, %s41
      %p43 = scmp.eq.s32.totalorder %s17, 0
      %p44 = por %p42, %p43
      %s46 = sadd.s32 %s45, 1
      %p49 = scmp.eq.s32.totalorder %s11, 1
      %p50 = scmp.ne.s32.totalorder %s45, %s47
      %p51 = scmp.eq.s32.totalorder %s11, 0
      %p52 = por %p50, %p51
      %p53 = scmp.ne.s32.totalorder %s45, %s47
      %p54 = scmp.eq.s32.totalorder %s16, 1
      %p55 = por %p53, %p54
      %p56 = scmp.ne.s32.totalorder %s47, %s48
      %p57 = scmp.eq.s32.totalorder %s16, 0
      %p58 = por %p56, %p57
      %p59 = scmp.ne.s32.totalorder %s47, %s48
      %p60 = scmp.eq.s32.totalorder %s17, 1
      %p61 = por %p59, %p60
      %p63 = scmp.ne.s32.totalorder %s48, %s62
      %p64 = scmp.eq.s32.totalorder %s17, 0
      %p65 = por %p63, %p64
      %s67 = sadd.s32 %s66, 1
      %p70 = scmp.eq.s32.totalorder %s11, 1
      %p71 = scmp.ne.s32.totalorder %s66, %s68
      %p72 = scmp.eq.s32.totalorder %s11, 0
      %p73 = por %p71, %p72
      %p74 = scmp.ne.s32.totalorder %s66, %s68
      %p75 = scmp.eq.s32.totalorder %s16, 1
      %p76 = por %p74, %p75
      %p77 = scmp.ne.s32.totalorder %s68, %s69
      %p78 = scmp.eq.s32.totalorder %s16, 0
      %p79 = por %p77, %p78
      %p80 = scmp.ne.s32.totalorder %s68, %s69
      %p81 = scmp.eq.s32.totalorder %s17, 1
      %p82 = por %p80, %p81
      %p84 = scmp.ne.s32.totalorder %s69, %s83
      %p85 = scmp.eq.s32.totalorder %s17, 0
      %p86 = por %p84, %p85
      %s88 = sadd.s32 %s87, 1
      %p91 = scmp.eq.s32.totalorder %s11, 1
      %p92 = scmp.ne.s32.totalorder %s87, %s89
      %p93 = scmp.eq.s32.totalorder %s11, 0
      %p94 = por %p92, %p93
      %p95 = scmp.ne.s32.totalorder %s87, %s89
      %p96 = scmp.eq.s32.totalorder %s16, 1
      %p97 = por %p95, %p96
      %p98 = scmp.ne.s32.totalorder %s89, %s90
      %p99 = scmp.eq.s32.totalorder %s16, 0
      %p100 = por %p98, %p99
      %p101 = scmp.ne.s32.totalorder %s89, %s90
      %p102 = scmp.eq.s32.totalorder %s17, 1
      %p103 = por %p101, %p102
      %p105 = scmp.ne.s32.totalorder %s90, %s104
      %p106 = scmp.eq.s32.totalorder %s17, 0
      %p107 = por %p105, %p106
      %s109 = sadd.s32 %s108, 1
      %p112 = scmp.eq.s32.totalorder %s11, 1
      %p113 = scmp.ne.s32.totalorder %s108, %s110
      %p114 = scmp.eq.s32.totalorder %s11, 0
      %p115 = por %p113, %p114
      %p116 = scmp.ne.s32.totalorder %s108, %s110
      %p117 = scmp.eq.s32.totalorder %s16, 1
      %p118 = por %p116, %p117
      %p119 = scmp.ne.s32.totalorder %s110, %s111
      %p120 = scmp.eq.s32.totalorder %s16, 0
      %p121 = por %p119, %p120
      %p122 = scmp.ne.s32.totalorder %s110, %s111
      %p123 = scmp.eq.s32.totalorder %s17, 1
      %p124 = por %p122, %p123
      %p126 = scmp.ne.s32.totalorder %s111, %s125
      %p127 = scmp.eq.s32.totalorder %s17, 0
      %p128 = por %p126, %p127
      %s129 = ssub.s32 %s11, %s18
      %p130 = scmp.eq.s32.totalorder %s129, 0
      %s132 = sadd.s32 %s131, 1
      %s133 = scalar_select %p130, %s131, %s132
      %p136 = pneg %p130
      %p137 = scmp.eq.s32.totalorder %s11, 1
      %p138 = por %p136, %p137
      %p139 = scmp.ne.s32.totalorder %s131, %s134
      %p140 = scmp.eq.s32.totalorder %s11, 0
      %p141 = por %p139, %p140
      %p142 = scmp.ne.s32.totalorder %s131, %s134
      %p143 = scmp.eq.s32.totalorder %s16, 1
      %p144 = por %p142, %p143
      %p145 = scmp.ne.s32.totalorder %s134, %s135
      %p146 = scmp.eq.s32.totalorder %s16, 0
      %p147 = por %p145, %p146
      %p148 = scmp.ne.s32.totalorder %s134, %s135
      %p149 = scmp.eq.s32.totalorder %s17, 1
      %p150 = por %p148, %p149
      %p152 = scmp.ne.s32.totalorder %s135, %s151
      %p153 = scmp.eq.s32.totalorder %s17, 0
      %p154 = por %p152, %p153
      %p155 = scmp.le.s32.totalorder 1, %s11
      %p156 = scmp.lt.s32.totalorder %s11, 3
      %p157 = pnand %p155, %p156
      %p158 = pneg %p157
      // Predicated region
      $region9: #{lenet_forward.1} parent=5 // pred_check
        _
      $region10: #{lenet_forward.1} parent=5 // pred_check_branch
        %160 = sbr.rel (%p157) target = $region12
      $region11: #{lenet_forward.1} parent=5 // pred_region
        %s161 = ssub.s32 %s11, 1
        // Predicated region
        $region13: #{lenet_forward.1} parent=11 // pred_check
          %p162 = pneg %p58
        $region14: #{lenet_forward.1} parent=11 // pred_check_branch
          %164 = sbr.rel (%p162) target = $region16
        $region15: #{lenet_forward.1} parent=11 // pred_region
          _
        $region16: #{lenet_forward.1} parent=11 // pred_fallthru
          _
        // Predicated region
        $region17: #{lenet_forward.1} parent=11 // pred_check
          %p165 = pneg %p79
        $region18: #{lenet_forward.1} parent=11 // pred_check_branch
          %167 = sbr.rel (%p165) target = $region20
        $region19: #{lenet_forward.1} parent=11 // pred_region
          _
        $region20: #{lenet_forward.1} parent=11 // pred_fallthru
          _
        // Predicated region
        $region21: #{lenet_forward.1} parent=11 // pred_check
          %p168 = pneg %p100
        $region22: #{lenet_forward.1} parent=11 // pred_check_branch
          %170 = sbr.rel (%p168) target = $region24
        $region23: #{lenet_forward.1} parent=11 // pred_region
          _
        $region24: #{lenet_forward.1} parent=11 // pred_fallthru
          _
        // Predicated region
        $region25: #{lenet_forward.1} parent=11 // pred_check
          %p171 = pneg %p121
        $region26: #{lenet_forward.1} parent=11 // pred_check_branch
          %173 = sbr.rel (%p171) target = $region28
        $region27: #{lenet_forward.1} parent=11 // pred_region
          _
        $region28: #{lenet_forward.1} parent=11 // pred_fallthru
          _
      $region12: #{lenet_forward.1} parent=5 // pred_fallthru
        _
      %p174 = scmp.lt.s32.totalorder %s11, 2
      // Predicated region
      $region29: #{lenet_forward.1} parent=5 // pred_check
        %p175 = pneg %p174
      $region30: #{lenet_forward.1} parent=5 // pred_check_branch
        %177 = sbr.rel (%p175) target = $region32
      $region31: #{lenet_forward.1} parent=5 // pred_region
        // Predicated region
        $region33: #{lenet_forward.1} parent=31 // pred_check
          %p178 = pneg %p31
        $region34: #{lenet_forward.1} parent=31 // pred_check_branch
          %180 = sbr.rel (%p178) target = $region36
        $region35: #{lenet_forward.1} parent=31 // pred_region
          %s181 = sand.u32 %s21, 1
          %s182 = sand.u32 %s21, 1
          %s183 = smul.addr %s182, 448
          %s184 = scalar_lea.vmem [#allocation2], %s183
          %s185 = smul.u32 4, %s11
          %s186 = smul.addr %s185, 4
          %s187 = scalar_lea.vmem %s0, %s186
          // Predicated region
          $region37: #{lenet_forward.1} parent=35 // pred_check
            _
          $region38: #{lenet_forward.1} parent=35 // pred_check_branch
            %189 = sbr.rel (0) target = $region40
          $region39: #{lenet_forward.1} parent=35 // pred_region
            // Predicated region
            $region41: #{lenet_forward.1} parent=39 // pred_check
              _
            $region42: #{lenet_forward.1} parent=39 // pred_check_branch
              %191 = sbr.rel target = $region44
            $region43: #{lenet_forward.1} parent=39 // pred_region
              // Predicated region
              $region56: #{lenet_forward.1} parent=43 // pred_check
                _
              $region57: #{lenet_forward.1} parent=43 // pred_check_branch
                %429 = sbr.rel (0) target = $region59
              $region58: #{lenet_forward.1} parent=43 // pred_region
                loop: start=0, step=1, limit=1
                $region60: #{lenet_forward.1} parent=58 // loop_pre_header
                  _
                $region61: #{lenet_forward.1} parent=58 // loop_header
                  %s431 = sphi 0, %s435
                  %p432 = scmp.ge.s32.totalorder %s431, 1
                  %s436 = sphi %s187, %s187
                  %s437 = sphi %s184, %s184
                $region62: #{lenet_forward.1} parent=58 // loop_header_branch
                  %434 = sbr.rel (%p432) target = $region66
                $region63: #{lenet_forward.1} parent=58 // loop_body
                  _
                $region64: #{lenet_forward.1} parent=58 // loop_footer
                  %s435 = sadd.s32 1, %s431
                $region65: #{lenet_forward.1} parent=58 // loop_footer_branch
                  %430 = sbr.rel target = $region61
                $region66: #{lenet_forward.1} parent=58 // loop_exit
                  _
                %s439 = ssub.s32 16, 1
                loop: start=0, step=1, limit=1
                $region67: #{lenet_forward.1} parent=58 // loop_pre_header
                  _
                $region68: #{lenet_forward.1} parent=58 // loop_header
                  %s441 = sphi 0, %s445
                  %p442 = scmp.ge.s32.totalorder %s441, 1
                  %s446 = sphi %s187, %s187
                  %s447 = sphi %s184, %s184
                $region69: #{lenet_forward.1} parent=58 // loop_header_branch
                  %444 = sbr.rel (%p442) target = $region73
                $region70: #{lenet_forward.1} parent=58 // loop_body
                  %v448 = vld [vmem:[%s446] sm:%s439]
                  %449 = vst [vmem:[%s447] sm:%s439] %v448
                  %v450 = vld [vmem:[%s446 + $0x4] sm:%s439]
                  %451 = vst [vmem:[%s447 + $0x4] sm:%s439] %v450
                  %v452 = vld [vmem:[%s446 + $0x8] sm:%s439]
                  %453 = vst [vmem:[%s447 + $0x8] sm:%s439] %v452
                  %v454 = vld [vmem:[%s446 + $0xc] sm:%s439]
                  %455 = vst [vmem:[%s447 + $0xc] sm:%s439] %v454
                  %v456 = vld [vmem:[%s446 + $0x20] sm:%s439]
                  %457 = vst [vmem:[%s447 + $0x10] sm:%s439] %v456
                  %v458 = vld [vmem:[%s446 + $0x24] sm:%s439]
                  %459 = vst [vmem:[%s447 + $0x14] sm:%s439] %v458
                  %v460 = vld [vmem:[%s446 + $0x28] sm:%s439]
                  %461 = vst [vmem:[%s447 + $0x18] sm:%s439] %v460
                  %v462 = vld [vmem:[%s446 + $0x2c] sm:%s439]
                  %463 = vst [vmem:[%s447 + $0x1c] sm:%s439] %v462
                  %v464 = vld [vmem:[%s446 + $0x40] sm:%s439]
                  %465 = vst [vmem:[%s447 + $0x20] sm:%s439] %v464
                  %v466 = vld [vmem:[%s446 + $0x44] sm:%s439]
                  %467 = vst [vmem:[%s447 + $0x24] sm:%s439] %v466
                  %v468 = vld [vmem:[%s446 + $0x48] sm:%s439]
                  %469 = vst [vmem:[%s447 + $0x28] sm:%s439] %v468
                  %v470 = vld [vmem:[%s446 + $0x4c] sm:%s439]
                  %471 = vst [vmem:[%s447 + $0x2c] sm:%s439] %v470
                  %v472 = vld [vmem:[%s446 + $0x60] sm:%s439]
                  %473 = vst [vmem:[%s447 + $0x30] sm:%s439] %v472
                  %v474 = vld [vmem:[%s446 + $0x64] sm:%s439]
                  %475 = vst [vmem:[%s447 + $0x34] sm:%s439] %v474
                  %v476 = vld [vmem:[%s446 + $0x68] sm:%s439]
                  %477 = vst [vmem:[%s447 + $0x38] sm:%s439] %v476
                  %v478 = vld [vmem:[%s446 + $0x6c] sm:%s439]
                  %479 = vst [vmem:[%s447 + $0x3c] sm:%s439] %v478
                  %v480 = vld [vmem:[%s446 + $0x80] sm:%s439]
                  %481 = vst [vmem:[%s447 + $0x40] sm:%s439] %v480
                  %v482 = vld [vmem:[%s446 + $0x84] sm:%s439]
                  %483 = vst [vmem:[%s447 + $0x44] sm:%s439] %v482
                  %v484 = vld [vmem:[%s446 + $0x88] sm:%s439]
                  %485 = vst [vmem:[%s447 + $0x48] sm:%s439] %v484
                  %v486 = vld [vmem:[%s446 + $0x8c] sm:%s439]
                  %487 = vst [vmem:[%s447 + $0x4c] sm:%s439] %v486
                  %v488 = vld [vmem:[%s446 + $0xa0] sm:%s439]
                  %489 = vst [vmem:[%s447 + $0x50] sm:%s439] %v488
                  %v490 = vld [vmem:[%s446 + $0xa4] sm:%s439]
                  %491 = vst [vmem:[%s447 + $0x54] sm:%s439] %v490
                  %v492 = vld [vmem:[%s446 + $0xa8] sm:%s439]
                  %493 = vst [vmem:[%s447 + $0x58] sm:%s439] %v492
                  %v494 = vld [vmem:[%s446 + $0xac] sm:%s439]
                  %495 = vst [vmem:[%s447 + $0x5c] sm:%s439] %v494
                  %v496 = vld [vmem:[%s446 + $0xc0] sm:%s439]
                  %497 = vst [vmem:[%s447 + $0x60] sm:%s439] %v496
                  %v498 = vld [vmem:[%s446 + $0xc4] sm:%s439]
                  %499 = vst [vmem:[%s447 + $0x64] sm:%s439] %v498
                  %v500 = vld [vmem:[%s446 + $0xc8] sm:%s439]
                  %501 = vst [vmem:[%s447 + $0x68] sm:%s439] %v500
                  %v502 = vld [vmem:[%s446 + $0xcc] sm:%s439]
                  %503 = vst [vmem:[%s447 + $0x6c] sm:%s439] %v502
                  %v504 = vld [vmem:[%s446 + $0xe0] sm:%s439]
                  %505 = vst [vmem:[%s447 + $0x70] sm:%s439] %v504
                  %v506 = vld [vmem:[%s446 + $0xe4] sm:%s439]
                  %507 = vst [vmem:[%s447 + $0x74] sm:%s439] %v506
                  %v508 = vld [vmem:[%s446 + $0xe8] sm:%s439]
                  %509 = vst [vmem:[%s447 + $0x78] sm:%s439] %v508
                  %v510 = vld [vmem:[%s446 + $0xec] sm:%s439]
                  %511 = vst [vmem:[%s447 + $0x7c] sm:%s439] %v510
                  %v512 = vld [vmem:[%s446 + $0x100] sm:%s439]
                  %513 = vst [vmem:[%s447 + $0x80] sm:%s439] %v512
                  %v514 = vld [vmem:[%s446 + $0x104] sm:%s439]
                  %515 = vst [vmem:[%s447 + $0x84] sm:%s439] %v514
                  %v516 = vld [vmem:[%s446 + $0x108] sm:%s439]
                  %517 = vst [vmem:[%s447 + $0x88] sm:%s439] %v516
                  %v518 = vld [vmem:[%s446 + $0x10c] sm:%s439]
                  %519 = vst [vmem:[%s447 + $0x8c] sm:%s439] %v518
                  %v520 = vld [vmem:[%s446 + $0x120] sm:%s439]
                  %521 = vst [vmem:[%s447 + $0x90] sm:%s439] %v520
                  %v522 = vld [vmem:[%s446 + $0x124] sm:%s439]
                  %523 = vst [vmem:[%s447 + $0x94] sm:%s439] %v522
                  %v524 = vld [vmem:[%s446 + $0x128] sm:%s439]
                  %525 = vst [vmem:[%s447 + $0x98] sm:%s439] %v524
                  %v526 = vld [vmem:[%s446 + $0x12c] sm:%s439]
                  %527 = vst [vmem:[%s447 + $0x9c] sm:%s439] %v526
                  %v528 = vld [vmem:[%s446 + $0x140] sm:%s439]
                  %529 = vst [vmem:[%s447 + $0xa0] sm:%s439] %v528
                  %v530 = vld [vmem:[%s446 + $0x144] sm:%s439]
                  %531 = vst [vmem:[%s447 + $0xa4] sm:%s439] %v530
                  %v532 = vld [vmem:[%s446 + $0x148] sm:%s439]
                  %533 = vst [vmem:[%s447 + $0xa8] sm:%s439] %v532
                  %v534 = vld [vmem:[%s446 + $0x14c] sm:%s439]
                  %535 = vst [vmem:[%s447 + $0xac] sm:%s439] %v534
                  %v536 = vld [vmem:[%s446 + $0x160] sm:%s439]
                  %537 = vst [vmem:[%s447 + $0xb0] sm:%s439] %v536
                  %v538 = vld [vmem:[%s446 + $0x164] sm:%s439]
                  %539 = vst [vmem:[%s447 + $0xb4] sm:%s439] %v538
                  %v540 = vld [vmem:[%s446 + $0x168] sm:%s439]
                  %541 = vst [vmem:[%s447 + $0xb8] sm:%s439] %v540
                  %v542 = vld [vmem:[%s446 + $0x16c] sm:%s439]
                  %543 = vst [vmem:[%s447 + $0xbc] sm:%s439] %v542
                  %v544 = vld [vmem:[%s446 + $0x180] sm:%s439]
                  %545 = vst [vmem:[%s447 + $0xc0] sm:%s439] %v544
                  %v546 = vld [vmem:[%s446 + $0x184] sm:%s439]
                  %547 = vst [vmem:[%s447 + $0xc4] sm:%s439] %v546
                  %v548 = vld [vmem:[%s446 + $0x188] sm:%s439]
                  %549 = vst [vmem:[%s447 + $0xc8] sm:%s439] %v548
                  %v550 = vld [vmem:[%s446 + $0x18c] sm:%s439]
                  %551 = vst [vmem:[%s447 + $0xcc] sm:%s439] %v550
                  %v552 = vld [vmem:[%s446 + $0x1a0] sm:%s439]
                  %553 = vst [vmem:[%s447 + $0xd0] sm:%s439] %v552
                  %v554 = vld [vmem:[%s446 + $0x1a4] sm:%s439]
                  %555 = vst [vmem:[%s447 + $0xd4] sm:%s439] %v554
                  %v556 = vld [vmem:[%s446 + $0x1a8] sm:%s439]
                  %557 = vst [vmem:[%s447 + $0xd8] sm:%s439] %v556
                  %v558 = vld [vmem:[%s446 + $0x1ac] sm:%s439]
                  %559 = vst [vmem:[%s447 + $0xdc] sm:%s439] %v558
                  %v560 = vld [vmem:[%s446 + $0x1c0] sm:%s439]
                  %561 = vst [vmem:[%s447 + $0xe0] sm:%s439] %v560
                  %v562 = vld [vmem:[%s446 + $0x1c4] sm:%s439]
                  %563 = vst [vmem:[%s447 + $0xe4] sm:%s439] %v562
                  %v564 = vld [vmem:[%s446 + $0x1c8] sm:%s439]
                  %565 = vst [vmem:[%s447 + $0xe8] sm:%s439] %v564
                  %v566 = vld [vmem:[%s446 + $0x1cc] sm:%s439]
                  %567 = vst [vmem:[%s447 + $0xec] sm:%s439] %v566
                  %v568 = vld [vmem:[%s446 + $0x1e0] sm:%s439]
                  %569 = vst [vmem:[%s447 + $0xf0] sm:%s439] %v568
                  %v570 = vld [vmem:[%s446 + $0x1e4] sm:%s439]
                  %571 = vst [vmem:[%s447 + $0xf4] sm:%s439] %v570
                  %v572 = vld [vmem:[%s446 + $0x1e8] sm:%s439]
                  %573 = vst [vmem:[%s447 + $0xf8] sm:%s439] %v572
                  %v574 = vld [vmem:[%s446 + $0x1ec] sm:%s439]
                  %575 = vst [vmem:[%s447 + $0xfc] sm:%s439] %v574
                  %v576 = vld [vmem:[%s446 + $0x200] sm:%s439]
                  %577 = vst [vmem:[%s447 + $0x100] sm:%s439] %v576
                  %v578 = vld [vmem:[%s446 + $0x204] sm:%s439]
                  %579 = vst [vmem:[%s447 + $0x104] sm:%s439] %v578
                  %v580 = vld [vmem:[%s446 + $0x208] sm:%s439]
                  %581 = vst [vmem:[%s447 + $0x108] sm:%s439] %v580
                  %v582 = vld [vmem:[%s446 + $0x20c] sm:%s439]
                  %583 = vst [vmem:[%s447 + $0x10c] sm:%s439] %v582
                  %v584 = vld [vmem:[%s446 + $0x220] sm:%s439]
                  %585 = vst [vmem:[%s447 + $0x110] sm:%s439] %v584
                  %v586 = vld [vmem:[%s446 + $0x224] sm:%s439]
                  %587 = vst [vmem:[%s447 + $0x114] sm:%s439] %v586
                  %v588 = vld [vmem:[%s446 + $0x228] sm:%s439]
                  %589 = vst [vmem:[%s447 + $0x118] sm:%s439] %v588
                  %v590 = vld [vmem:[%s446 + $0x22c] sm:%s439]
                  %591 = vst [vmem:[%s447 + $0x11c] sm:%s439] %v590
                  %v592 = vld [vmem:[%s446 + $0x240] sm:%s439]
                  %593 = vst [vmem:[%s447 + $0x120] sm:%s439] %v592
                  %v594 = vld [vmem:[%s446 + $0x244] sm:%s439]
                  %595 = vst [vmem:[%s447 + $0x124] sm:%s439] %v594
                  %v596 = vld [vmem:[%s446 + $0x248] sm:%s439]
                  %597 = vst [vmem:[%s447 + $0x128] sm:%s439] %v596
                  %v598 = vld [vmem:[%s446 + $0x24c] sm:%s439]
                  %599 = vst [vmem:[%s447 + $0x12c] sm:%s439] %v598
                  %v600 = vld [vmem:[%s446 + $0x260] sm:%s439]
                  %601 = vst [vmem:[%s447 + $0x130] sm:%s439] %v600
                  %v602 = vld [vmem:[%s446 + $0x264] sm:%s439]
                  %603 = vst [vmem:[%s447 + $0x134] sm:%s439] %v602
                  %v604 = vld [vmem:[%s446 + $0x268] sm:%s439]
                  %605 = vst [vmem:[%s447 + $0x138] sm:%s439] %v604
                  %v606 = vld [vmem:[%s446 + $0x26c] sm:%s439]
                  %607 = vst [vmem:[%s447 + $0x13c] sm:%s439] %v606
                  %v608 = vld [vmem:[%s446 + $0x280] sm:%s439]
                  %609 = vst [vmem:[%s447 + $0x140] sm:%s439] %v608
                  %v610 = vld [vmem:[%s446 + $0x284] sm:%s439]
                  %611 = vst [vmem:[%s447 + $0x144] sm:%s439] %v610
                  %v612 = vld [vmem:[%s446 + $0x288] sm:%s439]
                  %613 = vst [vmem:[%s447 + $0x148] sm:%s439] %v612
                  %v614 = vld [vmem:[%s446 + $0x28c] sm:%s439]
                  %615 = vst [vmem:[%s447 + $0x14c] sm:%s439] %v614
                  %v616 = vld [vmem:[%s446 + $0x2a0] sm:%s439]
                  %617 = vst [vmem:[%s447 + $0x150] sm:%s439] %v616
                  %v618 = vld [vmem:[%s446 + $0x2a4] sm:%s439]
                  %619 = vst [vmem:[%s447 + $0x154] sm:%s439] %v618
                  %v620 = vld [vmem:[%s446 + $0x2a8] sm:%s439]
                  %621 = vst [vmem:[%s447 + $0x158] sm:%s439] %v620
                  %v622 = vld [vmem:[%s446 + $0x2ac] sm:%s439]
                  %623 = vst [vmem:[%s447 + $0x15c] sm:%s439] %v622
                  %v624 = vld [vmem:[%s446 + $0x2c0] sm:%s439]
                  %625 = vst [vmem:[%s447 + $0x160] sm:%s439] %v624
                  %v626 = vld [vmem:[%s446 + $0x2c4] sm:%s439]
                  %627 = vst [vmem:[%s447 + $0x164] sm:%s439] %v626
                  %v628 = vld [vmem:[%s446 + $0x2c8] sm:%s439]
                  %629 = vst [vmem:[%s447 + $0x168] sm:%s439] %v628
                  %v630 = vld [vmem:[%s446 + $0x2cc] sm:%s439]
                  %631 = vst [vmem:[%s447 + $0x16c] sm:%s439] %v630
                  %v632 = vld [vmem:[%s446 + $0x2e0] sm:%s439]
                  %633 = vst [vmem:[%s447 + $0x170] sm:%s439] %v632
                  %v634 = vld [vmem:[%s446 + $0x2e4] sm:%s439]
                  %635 = vst [vmem:[%s447 + $0x174] sm:%s439] %v634
                  %v636 = vld [vmem:[%s446 + $0x2e8] sm:%s439]
                  %637 = vst [vmem:[%s447 + $0x178] sm:%s439] %v636
                  %v638 = vld [vmem:[%s446 + $0x2ec] sm:%s439]
                  %639 = vst [vmem:[%s447 + $0x17c] sm:%s439] %v638
                  %v640 = vld [vmem:[%s446 + $0x300] sm:%s439]
                  %641 = vst [vmem:[%s447 + $0x180] sm:%s439] %v640
                  %v642 = vld [vmem:[%s446 + $0x304] sm:%s439]
                  %643 = vst [vmem:[%s447 + $0x184] sm:%s439] %v642
                  %v644 = vld [vmem:[%s446 + $0x308] sm:%s439]
                  %645 = vst [vmem:[%s447 + $0x188] sm:%s439] %v644
                  %v646 = vld [vmem:[%s446 + $0x30c] sm:%s439]
                  %647 = vst [vmem:[%s447 + $0x18c] sm:%s439] %v646
                  %v648 = vld [vmem:[%s446 + $0x320] sm:%s439]
                  %649 = vst [vmem:[%s447 + $0x190] sm:%s439] %v648
                  %v650 = vld [vmem:[%s446 + $0x324] sm:%s439]
                  %651 = vst [vmem:[%s447 + $0x194] sm:%s439] %v650
                  %v652 = vld [vmem:[%s446 + $0x328] sm:%s439]
                  %653 = vst [vmem:[%s447 + $0x198] sm:%s439] %v652
                  %v654 = vld [vmem:[%s446 + $0x32c] sm:%s439]
                  %655 = vst [vmem:[%s447 + $0x19c] sm:%s439] %v654
                  %v656 = vld [vmem:[%s446 + $0x340] sm:%s439]
                  %657 = vst [vmem:[%s447 + $0x1a0] sm:%s439] %v656
                  %v658 = vld [vmem:[%s446 + $0x344] sm:%s439]
                  %659 = vst [vmem:[%s447 + $0x1a4] sm:%s439] %v658
                  %v660 = vld [vmem:[%s446 + $0x348] sm:%s439]
                  %661 = vst [vmem:[%s447 + $0x1a8] sm:%s439] %v660
                  %v662 = vld [vmem:[%s446 + $0x34c] sm:%s439]
                  %663 = vst [vmem:[%s447 + $0x1ac] sm:%s439] %v662
                  %v664 = vld [vmem:[%s446 + $0x360] sm:%s439]
                  %665 = vst [vmem:[%s447 + $0x1b0] sm:%s439] %v664
                  %v666 = vld [vmem:[%s446 + $0x364] sm:%s439]
                  %667 = vst [vmem:[%s447 + $0x1b4] sm:%s439] %v666
                  %v668 = vld [vmem:[%s446 + $0x368] sm:%s439]
                  %669 = vst [vmem:[%s447 + $0x1b8] sm:%s439] %v668
                  %v670 = vld [vmem:[%s446 + $0x36c] sm:%s439]
                  %671 = vst [vmem:[%s447 + $0x1bc] sm:%s439] %v670
                $region71: #{lenet_forward.1} parent=58 // loop_footer
                  %s445 = sadd.s32 1, %s441
                $region72: #{lenet_forward.1} parent=58 // loop_footer_branch
                  %440 = sbr.rel target = $region68
                $region73: #{lenet_forward.1} parent=58 // loop_exit
                  _
              $region59: #{lenet_forward.1} parent=43 // pred_fallthru
                _
            $region44: #{lenet_forward.1} parent=39 // pred_fallthru
              _
            // Predicated region
            $region45: #{lenet_forward.1} parent=39 // pred_check
              _
            $region46: #{lenet_forward.1} parent=39 // pred_check_branch
              %193 = sbr.rel (0) target = $region48
            $region47: #{lenet_forward.1} parent=39 // pred_region
              %s195 = ssub.s32 16, 1
              loop: start=0, step=1, limit=1
              $region49: #{lenet_forward.1} parent=47 // loop_pre_header
                _
              $region50: #{lenet_forward.1} parent=47 // loop_header
                %s197 = sphi 0, %s201
                %p198 = scmp.ge.s32.totalorder %s197, 1
                %s202 = sphi %s187, %s187
                %s203 = sphi %s184, %s184
              $region51: #{lenet_forward.1} parent=47 // loop_header_branch
                %200 = sbr.rel (%p198) target = $region55
              $region52: #{lenet_forward.1} parent=47 // loop_body
                %v204 = vld [vmem:[%s202] sm:%s195]
                %205 = vst [vmem:[%s203] sm:%s195] %v204
                %v206 = vld [vmem:[%s202 + $0x4] sm:%s195]
                %207 = vst [vmem:[%s203 + $0x4] sm:%s195] %v206
                %v208 = vld [vmem:[%s202 + $0x8] sm:%s195]
                %209 = vst [vmem:[%s203 + $0x8] sm:%s195] %v208
                %v210 = vld [vmem:[%s202 + $0xc] sm:%s195]
                %211 = vst [vmem:[%s203 + $0xc] sm:%s195] %v210
                %v212 = vld [vmem:[%s202 + $0x20] sm:%s195]
                %213 = vst [vmem:[%s203 + $0x10] sm:%s195] %v212
                %v214 = vld [vmem:[%s202 + $0x24] sm:%s195]
                %215 = vst [vmem:[%s203 + $0x14] sm:%s195] %v214
                %v216 = vld [vmem:[%s202 + $0x28] sm:%s195]
                %217 = vst [vmem:[%s203 + $0x18] sm:%s195] %v216
                %v218 = vld [vmem:[%s202 + $0x2c] sm:%s195]
                %219 = vst [vmem:[%s203 + $0x1c] sm:%s195] %v218
                %v220 = vld [vmem:[%s202 + $0x40] sm:%s195]
                %221 = vst [vmem:[%s203 + $0x20] sm:%s195] %v220
                %v222 = vld [vmem:[%s202 + $0x44] sm:%s195]
                %223 = vst [vmem:[%s203 + $0x24] sm:%s195] %v222
                %v224 = vld [vmem:[%s202 + $0x48] sm:%s195]
                %225 = vst [vmem:[%s203 + $0x28] sm:%s195] %v224
                %v226 = vld [vmem:[%s202 + $0x4c] sm:%s195]
                %227 = vst [vmem:[%s203 + $0x2c] sm:%s195] %v226
                %v228 = vld [vmem:[%s202 + $0x60] sm:%s195]
                %229 = vst [vmem:[%s203 + $0x30] sm:%s195] %v228
                %v230 = vld [vmem:[%s202 + $0x64] sm:%s195]
                %231 = vst [vmem:[%s203 + $0x34] sm:%s195] %v230
                %v232 = vld [vmem:[%s202 + $0x68] sm:%s195]
                %233 = vst [vmem:[%s203 + $0x38] sm:%s195] %v232
                %v234 = vld [vmem:[%s202 + $0x6c] sm:%s195]
                %235 = vst [vmem:[%s203 + $0x3c] sm:%s195] %v234
                %v236 = vld [vmem:[%s202 + $0x80] sm:%s195]
                %237 = vst [vmem:[%s203 + $0x40] sm:%s195] %v236
                %v238 = vld [vmem:[%s202 + $0x84] sm:%s195]
                %239 = vst [vmem:[%s203 + $0x44] sm:%s195] %v238
                %v240 = vld [vmem:[%s202 + $0x88] sm:%s195]
                %241 = vst [vmem:[%s203 + $0x48] sm:%s195] %v240
                %v242 = vld [vmem:[%s202 + $0x8c] sm:%s195]
                %243 = vst [vmem:[%s203 + $0x4c] sm:%s195] %v242
                %v244 = vld [vmem:[%s202 + $0xa0] sm:%s195]
                %245 = vst [vmem:[%s203 + $0x50] sm:%s195] %v244
                %v246 = vld [vmem:[%s202 + $0xa4] sm:%s195]
                %247 = vst [vmem:[%s203 + $0x54] sm:%s195] %v246
                %v248 = vld [vmem:[%s202 + $0xa8] sm:%s195]
                %249 = vst [vmem:[%s203 + $0x58] sm:%s195] %v248
                %v250 = vld [vmem:[%s202 + $0xac] sm:%s195]
                %251 = vst [vmem:[%s203 + $0x5c] sm:%s195] %v250
                %v252 = vld [vmem:[%s202 + $0xc0] sm:%s195]
                %253 = vst [vmem:[%s203 + $0x60] sm:%s195] %v252
                %v254 = vld [vmem:[%s202 + $0xc4] sm:%s195]
                %255 = vst [vmem:[%s203 + $0x64] sm:%s195] %v254
                %v256 = vld [vmem:[%s202 + $0xc8] sm:%s195]
                %257 = vst [vmem:[%s203 + $0x68] sm:%s195] %v256
                %v258 = vld [vmem:[%s202 + $0xcc] sm:%s195]
                %259 = vst [vmem:[%s203 + $0x6c] sm:%s195] %v258
                %v260 = vld [vmem:[%s202 + $0xe0] sm:%s195]
                %261 = vst [vmem:[%s203 + $0x70] sm:%s195] %v260
                %v262 = vld [vmem:[%s202 + $0xe4] sm:%s195]
                %263 = vst [vmem:[%s203 + $0x74] sm:%s195] %v262
                %v264 = vld [vmem:[%s202 + $0xe8] sm:%s195]
                %265 = vst [vmem:[%s203 + $0x78] sm:%s195] %v264
                %v266 = vld [vmem:[%s202 + $0xec] sm:%s195]
                %267 = vst [vmem:[%s203 + $0x7c] sm:%s195] %v266
                %v268 = vld [vmem:[%s202 + $0x100] sm:%s195]
                %269 = vst [vmem:[%s203 + $0x80] sm:%s195] %v268
                %v270 = vld [vmem:[%s202 + $0x104] sm:%s195]
                %271 = vst [vmem:[%s203 + $0x84] sm:%s195] %v270
                %v272 = vld [vmem:[%s202 + $0x108] sm:%s195]
                %273 = vst [vmem:[%s203 + $0x88] sm:%s195] %v272
                %v274 = vld [vmem:[%s202 + $0x10c] sm:%s195]
                %275 = vst [vmem:[%s203 + $0x8c] sm:%s195] %v274
                %v276 = vld [vmem:[%s202 + $0x120] sm:%s195]
                %277 = vst [vmem:[%s203 + $0x90] sm:%s195] %v276
                %v278 = vld [vmem:[%s202 + $0x124] sm:%s195]
                %279 = vst [vmem:[%s203 + $0x94] sm:%s195] %v278
                %v280 = vld [vmem:[%s202 + $0x128] sm:%s195]
                %281 = vst [vmem:[%s203 + $0x98] sm:%s195] %v280
                %v282 = vld [vmem:[%s202 + $0x12c] sm:%s195]
                %283 = vst [vmem:[%s203 + $0x9c] sm:%s195] %v282
                %v284 = vld [vmem:[%s202 + $0x140] sm:%s195]
                %285 = vst [vmem:[%s203 + $0xa0] sm:%s195] %v284
                %v286 = vld [vmem:[%s202 + $0x144] sm:%s195]
                %287 = vst [vmem:[%s203 + $0xa4] sm:%s195] %v286
                %v288 = vld [vmem:[%s202 + $0x148] sm:%s195]
                %289 = vst [vmem:[%s203 + $0xa8] sm:%s195] %v288
                %v290 = vld [vmem:[%s202 + $0x14c] sm:%s195]
                %291 = vst [vmem:[%s203 + $0xac] sm:%s195] %v290
                %v292 = vld [vmem:[%s202 + $0x160] sm:%s195]
                %293 = vst [vmem:[%s203 + $0xb0] sm:%s195] %v292
                %v294 = vld [vmem:[%s202 + $0x164] sm:%s195]
                %295 = vst [vmem:[%s203 + $0xb4] sm:%s195] %v294
                %v296 = vld [vmem:[%s202 + $0x168] sm:%s195]
                %297 = vst [vmem:[%s203 + $0xb8] sm:%s195] %v296
                %v298 = vld [vmem:[%s202 + $0x16c] sm:%s195]
                %299 = vst [vmem:[%s203 + $0xbc] sm:%s195] %v298
                %v300 = vld [vmem:[%s202 + $0x180] sm:%s195]
                %301 = vst [vmem:[%s203 + $0xc0] sm:%s195] %v300
                %v302 = vld [vmem:[%s202 + $0x184] sm:%s195]
                %303 = vst [vmem:[%s203 + $0xc4] sm:%s195] %v302
                %v304 = vld [vmem:[%s202 + $0x188] sm:%s195]
                %305 = vst [vmem:[%s203 + $0xc8] sm:%s195] %v304
                %v306 = vld [vmem:[%s202 + $0x18c] sm:%s195]
                %307 = vst [vmem:[%s203 + $0xcc] sm:%s195] %v306
                %v308 = vld [vmem:[%s202 + $0x1a0] sm:%s195]
                %309 = vst [vmem:[%s203 + $0xd0] sm:%s195] %v308
                %v310 = vld [vmem:[%s202 + $0x1a4] sm:%s195]
                %311 = vst [vmem:[%s203 + $0xd4] sm:%s195] %v310
                %v312 = vld [vmem:[%s202 + $0x1a8] sm:%s195]
                %313 = vst [vmem:[%s203 + $0xd8] sm:%s195] %v312
                %v314 = vld [vmem:[%s202 + $0x1ac] sm:%s195]
                %315 = vst [vmem:[%s203 + $0xdc] sm:%s195] %v314
                %v316 = vld [vmem:[%s202 + $0x1c0] sm:%s195]
                %317 = vst [vmem:[%s203 + $0xe0] sm:%s195] %v316
                %v318 = vld [vmem:[%s202 + $0x1c4] sm:%s195]
                %319 = vst [vmem:[%s203 + $0xe4] sm:%s195] %v318
                %v320 = vld [vmem:[%s202 + $0x1c8] sm:%s195]
                %321 = vst [vmem:[%s203 + $0xe8] sm:%s195] %v320
                %v322 = vld [vmem:[%s202 + $0x1cc] sm:%s195]
                %323 = vst [vmem:[%s203 + $0xec] sm:%s195] %v322
                %v324 = vld [vmem:[%s202 + $0x1e0] sm:%s195]
                %325 = vst [vmem:[%s203 + $0xf0] sm:%s195] %v324
                %v326 = vld [vmem:[%s202 + $0x1e4] sm:%s195]
                %327 = vst [vmem:[%s203 + $0xf4] sm:%s195] %v326
                %v328 = vld [vmem:[%s202 + $0x1e8] sm:%s195]
                %329 = vst [vmem:[%s203 + $0xf8] sm:%s195] %v328
                %v330 = vld [vmem:[%s202 + $0x1ec] sm:%s195]
                %331 = vst [vmem:[%s203 + $0xfc] sm:%s195] %v330
                %v332 = vld [vmem:[%s202 + $0x200] sm:%s195]
                %333 = vst [vmem:[%s203 + $0x100] sm:%s195] %v332
                %v334 = vld [vmem:[%s202 + $0x204] sm:%s195]
                %335 = vst [vmem:[%s203 + $0x104] sm:%s195] %v334
                %v336 = vld [vmem:[%s202 + $0x208] sm:%s195]
                %337 = vst [vmem:[%s203 + $0x108] sm:%s195] %v336
                %v338 = vld [vmem:[%s202 + $0x20c] sm:%s195]
                %339 = vst [vmem:[%s203 + $0x10c] sm:%s195] %v338
                %v340 = vld [vmem:[%s202 + $0x220] sm:%s195]
                %341 = vst [vmem:[%s203 + $0x110] sm:%s195] %v340
                %v342 = vld [vmem:[%s202 + $0x224] sm:%s195]
                %343 = vst [vmem:[%s203 + $0x114] sm:%s195] %v342
                %v344 = vld [vmem:[%s202 + $0x228] sm:%s195]
                %345 = vst [vmem:[%s203 + $0x118] sm:%s195] %v344
                %v346 = vld [vmem:[%s202 + $0x22c] sm:%s195]
                %347 = vst [vmem:[%s203 + $0x11c] sm:%s195] %v346
                %v348 = vld [vmem:[%s202 + $0x240] sm:%s195]
                %349 = vst [vmem:[%s203 + $0x120] sm:%s195] %v348
                %v350 = vld [vmem:[%s202 + $0x244] sm:%s195]
                %351 = vst [vmem:[%s203 + $0x124] sm:%s195] %v350
                %v352 = vld [vmem:[%s202 + $0x248] sm:%s195]
                %353 = vst [vmem:[%s203 + $0x128] sm:%s195] %v352
                %v354 = vld [vmem:[%s202 + $0x24c] sm:%s195]
                %355 = vst [vmem:[%s203 + $0x12c] sm:%s195] %v354
                %v356 = vld [vmem:[%s202 + $0x260] sm:%s195]
                %357 = vst [vmem:[%s203 + $0x130] sm:%s195] %v356
                %v358 = vld [vmem:[%s202 + $0x264] sm:%s195]
                %359 = vst [vmem:[%s203 + $0x134] sm:%s195] %v358
                %v360 = vld [vmem:[%s202 + $0x268] sm:%s195]
                %361 = vst [vmem:[%s203 + $0x138] sm:%s195] %v360
                %v362 = vld [vmem:[%s202 + $0x26c] sm:%s195]
                %363 = vst [vmem:[%s203 + $0x13c] sm:%s195] %v362
                %v364 = vld [vmem:[%s202 + $0x280] sm:%s195]
                %365 = vst [vmem:[%s203 + $0x140] sm:%s195] %v364
                %v366 = vld [vmem:[%s202 + $0x284] sm:%s195]
                %367 = vst [vmem:[%s203 + $0x144] sm:%s195] %v366
                %v368 = vld [vmem:[%s202 + $0x288] sm:%s195]
                %369 = vst [vmem:[%s203 + $0x148] sm:%s195] %v368
                %v370 = vld [vmem:[%s202 + $0x28c] sm:%s195]
                %371 = vst [vmem:[%s203 + $0x14c] sm:%s195] %v370
                %v372 = vld [vmem:[%s202 + $0x2a0] sm:%s195]
                %373 = vst [vmem:[%s203 + $0x150] sm:%s195] %v372
                %v374 = vld [vmem:[%s202 + $0x2a4] sm:%s195]
                %375 = vst [vmem:[%s203 + $0x154] sm:%s195] %v374
                %v376 = vld [vmem:[%s202 + $0x2a8] sm:%s195]
                %377 = vst [vmem:[%s203 + $0x158] sm:%s195] %v376
                %v378 = vld [vmem:[%s202 + $0x2ac] sm:%s195]
                %379 = vst [vmem:[%s203 + $0x15c] sm:%s195] %v378
                %v380 = vld [vmem:[%s202 + $0x2c0] sm:%s195]
                %381 = vst [vmem:[%s203 + $0x160] sm:%s195] %v380
                %v382 = vld [vmem:[%s202 + $0x2c4] sm:%s195]
                %383 = vst [vmem:[%s203 + $0x164] sm:%s195] %v382
                %v384 = vld [vmem:[%s202 + $0x2c8] sm:%s195]
                %385 = vst [vmem:[%s203 + $0x168] sm:%s195] %v384
                %v386 = vld [vmem:[%s202 + $0x2cc] sm:%s195]
                %387 = vst [vmem:[%s203 + $0x16c] sm:%s195] %v386
                %v388 = vld [vmem:[%s202 + $0x2e0] sm:%s195]
                %389 = vst [vmem:[%s203 + $0x170] sm:%s195] %v388
                %v390 = vld [vmem:[%s202 + $0x2e4] sm:%s195]
                %391 = vst [vmem:[%s203 + $0x174] sm:%s195] %v390
                %v392 = vld [vmem:[%s202 + $0x2e8] sm:%s195]
                %393 = vst [vmem:[%s203 + $0x178] sm:%s195] %v392
                %v394 = vld [vmem:[%s202 + $0x2ec] sm:%s195]
                %395 = vst [vmem:[%s203 + $0x17c] sm:%s195] %v394
                %v396 = vld [vmem:[%s202 + $0x300] sm:%s195]
                %397 = vst [vmem:[%s203 + $0x180] sm:%s195] %v396
                %v398 = vld [vmem:[%s202 + $0x304] sm:%s195]
                %399 = vst [vmem:[%s203 + $0x184] sm:%s195] %v398
                %v400 = vld [vmem:[%s202 + $0x308] sm:%s195]
                %401 = vst [vmem:[%s203 + $0x188] sm:%s195] %v400
                %v402 = vld [vmem:[%s202 + $0x30c] sm:%s195]
                %403 = vst [vmem:[%s203 + $0x18c] sm:%s195] %v402
                %v404 = vld [vmem:[%s202 + $0x320] sm:%s195]
                %405 = vst [vmem:[%s203 + $0x190] sm:%s195] %v404
                %v406 = vld [vmem:[%s202 + $0x324] sm:%s195]
                %407 = vst [vmem:[%s203 + $0x194] sm:%s195] %v406
                %v408 = vld [vmem:[%s202 + $0x328] sm:%s195]
                %409 = vst [vmem:[%s203 + $0x198] sm:%s195] %v408
                %v410 = vld [vmem:[%s202 + $0x32c] sm:%s195]
                %411 = vst [vmem:[%s203 + $0x19c] sm:%s195] %v410
                %v412 = vld [vmem:[%s202 + $0x340] sm:%s195]
                %413 = vst [vmem:[%s203 + $0x1a0] sm:%s195] %v412
                %v414 = vld [vmem:[%s202 + $0x344] sm:%s195]
                %415 = vst [vmem:[%s203 + $0x1a4] sm:%s195] %v414
                %v416 = vld [vmem:[%s202 + $0x348] sm:%s195]
                %417 = vst [vmem:[%s203 + $0x1a8] sm:%s195] %v416
                %v418 = vld [vmem:[%s202 + $0x34c] sm:%s195]
                %419 = vst [vmem:[%s203 + $0x1ac] sm:%s195] %v418
                %v420 = vld [vmem:[%s202 + $0x360] sm:%s195]
                %421 = vst [vmem:[%s203 + $0x1b0] sm:%s195] %v420
                %v422 = vld [vmem:[%s202 + $0x364] sm:%s195]
                %423 = vst [vmem:[%s203 + $0x1b4] sm:%s195] %v422
                %v424 = vld [vmem:[%s202 + $0x368] sm:%s195]
                %425 = vst [vmem:[%s203 + $0x1b8] sm:%s195] %v424
                %v426 = vld [vmem:[%s202 + $0x36c] sm:%s195]
                %427 = vst [vmem:[%s203 + $0x1bc] sm:%s195] %v426
              $region53: #{lenet_forward.1} parent=47 // loop_footer
                %s201 = sadd.s32 1, %s197
              $region54: #{lenet_forward.1} parent=47 // loop_footer_branch
                %196 = sbr.rel target = $region50
              $region55: #{lenet_forward.1} parent=47 // loop_exit
                _
            $region48: #{lenet_forward.1} parent=39 // pred_fallthru
              _
          $region40: #{lenet_forward.1} parent=35 // pred_fallthru
            _
          %672 = vnop
        $region36: #{lenet_forward.1} parent=31 // pred_fallthru
          _
      $region32: #{lenet_forward.1} parent=5 // pred_fallthru
        _
      %p673 = scmp.le.s32.totalorder 1, %s11
      %p674 = scmp.lt.s32.totalorder %s11, 3
      %p675 = pnand %p673, %p674
      %p676 = pneg %p675
      // Predicated region
      $region74: #{lenet_forward.1} parent=5 // pred_check
        _
      $region75: #{lenet_forward.1} parent=5 // pred_check_branch
        %678 = sbr.rel (%p675) target = $region77
      $region76: #{lenet_forward.1} parent=5 // pred_region
        %s679 = ssub.s32 %s11, 1
        %s680 = sand.u32 %s24, 1
        %s681 = sand.u32 %s24, 1
        %s682 = smul.addr %s681, 448
        %s683 = scalar_lea.vmem [#allocation2], %s682
        // Predicated region
        $region78: #{lenet_forward.1} parent=76 // pred_check
          %p684 = pneg %p37
        $region79: #{lenet_forward.1} parent=76 // pred_check_branch
          %686 = sbr.rel (%p684) target = $region81
        $region80: #{lenet_forward.1} parent=76 // pred_region
          _
        $region81: #{lenet_forward.1} parent=76 // pred_fallthru
          _
        %s687 = sand.u32 %s24, 1
        %s688 = sand.u32 %s24, 1
        %s689 = smul.addr %s688, 448
        %s690 = scalar_lea.vmem [#allocation2], %s689
        %p691 = pneg %p37
        %p692 = pneg %p34
        %p693 = pneg %p58
        %p694 = pneg %p55
        %p695 = pneg %p79
        %p696 = pneg %p76
        %p697 = pneg %p100
        %p698 = pneg %p97
        %p699 = pneg %p121
        %p700 = pneg %p118
        %p701 = pneg %p147
        %p702 = pneg %p144
        %s703 = smul.u32 4, %s16
        %p704 = scmp.lt.s32.totalorder %s703, 7
        %s705 = scalar_select %p704, %s703, 7
        %s706 = smul.addr %s705, 8
        %s707 = scalar_lea.vmem %s5, %s706
        %s708 = smul.u32 4, %s16
        %s709 = smul.u32 4, %s16
        %p710 = scmp.lt.s32.totalorder %s709, 7
        %s711 = scalar_select %p710, %s709, 7
        %s712 = smul.addr %s711, 8
        %s713 = scalar_lea.vmem %s5, %s712
        %s714 = smul.u32 4, %s16
        %v716 = vld [vmem:[%s683] sm:$0xf]
        %v717 = vld [vmem:[%s683 + $0x4] sm:$0xf]
        %v718 = vld [vmem:[%s683 + $0x8] sm:$0xf]
        %v719 = vld [vmem:[%s683 + $0xc] sm:$0xf]
        %v720 = vld [vmem:[%s683 + $0x10] sm:$0xf]
        %v721 = vld [vmem:[%s683 + $0x14] sm:$0xf]
        %v722 = vld [vmem:[%s683 + $0x18] sm:$0xf]
        %v723 = vld [vmem:[%s683 + $0x1c] sm:$0xf]
        %v724 = vld [vmem:[%s683 + $0x20] sm:$0xf]
        %v725 = vld [vmem:[%s683 + $0x24] sm:$0xf]
        %v726 = vld [vmem:[%s683 + $0x28] sm:$0xf]
        %v727 = vld [vmem:[%s683 + $0x2c] sm:$0xf]
        %v728 = vld [vmem:[%s683 + $0x30] sm:$0xf]
        %v729 = vld [vmem:[%s683 + $0x34] sm:$0xf]
        %v730 = vld [vmem:[%s683 + $0x38] sm:$0xf]
        %v731 = vld [vmem:[%s683 + $0x3c] sm:$0xf]
        %v732 = vld [vmem:[%s683 + $0x40] sm:$0xf]
        %v733 = vld [vmem:[%s683 + $0x44] sm:$0xf]
        %v734 = vld [vmem:[%s683 + $0x48] sm:$0xf]
        %v735 = vld [vmem:[%s683 + $0x4c] sm:$0xf]
        %v736 = vld [vmem:[%s683 + $0x50] sm:$0xf]
        %v737 = vld [vmem:[%s683 + $0x54] sm:$0xf]
        %v738 = vld [vmem:[%s683 + $0x58] sm:$0xf]
        %v739 = vld [vmem:[%s683 + $0x5c] sm:$0xf]
        %v740 = vld [vmem:[%s683 + $0x60] sm:$0xf]
        %v741 = vld [vmem:[%s683 + $0x64] sm:$0xf]
        %v742 = vld [vmem:[%s683 + $0x68] sm:$0xf]
        %v743 = vld [vmem:[%s683 + $0x6c] sm:$0xf]
        %v744 = vld [vmem:[%s683 + $0x70] sm:$0xf]
        %v745 = vld [vmem:[%s683 + $0x74] sm:$0xf]
        %v746 = vld [vmem:[%s683 + $0x78] sm:$0xf]
        %v747 = vld [vmem:[%s683 + $0x7c] sm:$0xf]
        %v748 = vld [vmem:[%s683 + $0x80] sm:$0xf]
        %v749 = vld [vmem:[%s683 + $0x84] sm:$0xf]
        %v750 = vld [vmem:[%s683 + $0x88] sm:$0xf]
        %v751 = vld [vmem:[%s683 + $0x8c] sm:$0xf]
        %v752 = vld [vmem:[%s683 + $0x90] sm:$0xf]
        %v753 = vld [vmem:[%s683 + $0x94] sm:$0xf]
        %v754 = vld [vmem:[%s683 + $0x98] sm:$0xf]
        %v755 = vld [vmem:[%s683 + $0x9c] sm:$0xf]
        %v756 = vld [vmem:[%s683 + $0xa0] sm:$0xf]
        %v757 = vld [vmem:[%s683 + $0xa4] sm:$0xf]
        %v758 = vld [vmem:[%s683 + $0xa8] sm:$0xf]
        %v759 = vld [vmem:[%s683 + $0xac] sm:$0xf]
        %v760 = vld [vmem:[%s683 + $0xb0] sm:$0xf]
        %v761 = vld [vmem:[%s683 + $0xb4] sm:$0xf]
        %v762 = vld [vmem:[%s683 + $0xb8] sm:$0xf]
        %v763 = vld [vmem:[%s683 + $0xbc] sm:$0xf]
        %v764 = vld [vmem:[%s683 + $0xc0] sm:$0xf]
        %v765 = vld [vmem:[%s683 + $0xc4] sm:$0xf]
        %v766 = vld [vmem:[%s683 + $0xc8] sm:$0xf]
        %v767 = vld [vmem:[%s683 + $0xcc] sm:$0xf]
        %v768 = vld [vmem:[%s683 + $0xd0] sm:$0xf]
        %v769 = vld [vmem:[%s683 + $0xd4] sm:$0xf]
        %v770 = vld [vmem:[%s683 + $0xd8] sm:$0xf]
        %v771 = vld [vmem:[%s683 + $0xdc] sm:$0xf]
        %v772 = vld [vmem:[%s683 + $0xe0] sm:$0xf]
        %v773 = vld [vmem:[%s683 + $0xe4] sm:$0xf]
        %v774 = vld [vmem:[%s683 + $0xe8] sm:$0xf]
        %v775 = vld [vmem:[%s683 + $0xec] sm:$0xf]
        %v776 = vld [vmem:[%s683 + $0xf0] sm:$0xf]
        %v777 = vld [vmem:[%s683 + $0xf4] sm:$0xf]
        %v778 = vld [vmem:[%s683 + $0xf8] sm:$0xf]
        %v779 = vld [vmem:[%s683 + $0xfc] sm:$0xf]
        %v780 = vld [vmem:[%s683 + $0x100] sm:$0xf]
        %v781 = vld [vmem:[%s683 + $0x104] sm:$0xf]
        %v782 = vld [vmem:[%s683 + $0x108] sm:$0xf]
        %v783 = vld [vmem:[%s683 + $0x10c] sm:$0xf]
        %v784 = vld [vmem:[%s683 + $0x110] sm:$0xf]
        %v785 = vld [vmem:[%s683 + $0x114] sm:$0xf]
        %v786 = vld [vmem:[%s683 + $0x118] sm:$0xf]
        %v787 = vld [vmem:[%s683 + $0x11c] sm:$0xf]
        %v788 = vld [vmem:[%s683 + $0x120] sm:$0xf]
        %v789 = vld [vmem:[%s683 + $0x124] sm:$0xf]
        %v790 = vld [vmem:[%s683 + $0x128] sm:$0xf]
        %v791 = vld [vmem:[%s683 + $0x12c] sm:$0xf]
        %v792 = vld [vmem:[%s683 + $0x130] sm:$0xf]
        %v793 = vld [vmem:[%s683 + $0x134] sm:$0xf]
        %v794 = vld [vmem:[%s683 + $0x138] sm:$0xf]
        %v795 = vld [vmem:[%s683 + $0x13c] sm:$0xf]
        %v796 = vld [vmem:[%s683 + $0x140] sm:$0xf]
        %v797 = vld [vmem:[%s683 + $0x144] sm:$0xf]
        %v798 = vld [vmem:[%s683 + $0x148] sm:$0xf]
        %v799 = vld [vmem:[%s683 + $0x14c] sm:$0xf]
        %v800 = vld [vmem:[%s683 + $0x150] sm:$0xf]
        %v801 = vld [vmem:[%s683 + $0x154] sm:$0xf]
        %v802 = vld [vmem:[%s683 + $0x158] sm:$0xf]
        %v803 = vld [vmem:[%s683 + $0x15c] sm:$0xf]
        %v804 = vld [vmem:[%s683 + $0x160] sm:$0xf]
        %v805 = vld [vmem:[%s683 + $0x164] sm:$0xf]
        %v806 = vld [vmem:[%s683 + $0x168] sm:$0xf]
        %v807 = vld [vmem:[%s683 + $0x16c] sm:$0xf]
        %v808 = vld [vmem:[%s683 + $0x170] sm:$0xf]
        %v809 = vld [vmem:[%s683 + $0x174] sm:$0xf]
        %v810 = vld [vmem:[%s683 + $0x178] sm:$0xf]
        %v811 = vld [vmem:[%s683 + $0x17c] sm:$0xf]
        %s812 = scalar_lea.vmem %s683, 16 [#allocation2]
        %v813 = vld [vmem:[%s812] sm:$0xf]
        %v814 = vld [vmem:[%s812 + $0x4] sm:$0xf]
        %v815 = vld [vmem:[%s812 + $0x8] sm:$0xf]
        %v816 = vld [vmem:[%s812 + $0xc] sm:$0xf]
        %v817 = vld [vmem:[%s812 + $0x10] sm:$0xf]
        %v818 = vld [vmem:[%s812 + $0x14] sm:$0xf]
        %v819 = vld [vmem:[%s812 + $0x18] sm:$0xf]
        %v820 = vld [vmem:[%s812 + $0x1c] sm:$0xf]
        %v821 = vld [vmem:[%s812 + $0x20] sm:$0xf]
        %v822 = vld [vmem:[%s812 + $0x24] sm:$0xf]
        %v823 = vld [vmem:[%s812 + $0x28] sm:$0xf]
        %v824 = vld [vmem:[%s812 + $0x2c] sm:$0xf]
        %v825 = vld [vmem:[%s812 + $0x30] sm:$0xf]
        %v826 = vld [vmem:[%s812 + $0x34] sm:$0xf]
        %v827 = vld [vmem:[%s812 + $0x38] sm:$0xf]
        %v828 = vld [vmem:[%s812 + $0x3c] sm:$0xf]
        %v829 = vld [vmem:[%s812 + $0x40] sm:$0xf]
        %v830 = vld [vmem:[%s812 + $0x44] sm:$0xf]
        %v831 = vld [vmem:[%s812 + $0x48] sm:$0xf]
        %v832 = vld [vmem:[%s812 + $0x4c] sm:$0xf]
        %v833 = vld [vmem:[%s812 + $0x50] sm:$0xf]
        %v834 = vld [vmem:[%s812 + $0x54] sm:$0xf]
        %v835 = vld [vmem:[%s812 + $0x58] sm:$0xf]
        %v836 = vld [vmem:[%s812 + $0x5c] sm:$0xf]
        %v837 = vld [vmem:[%s812 + $0x60] sm:$0xf]
        %v838 = vld [vmem:[%s812 + $0x64] sm:$0xf]
        %v839 = vld [vmem:[%s812 + $0x68] sm:$0xf]
        %v840 = vld [vmem:[%s812 + $0x6c] sm:$0xf]
        %v841 = vld [vmem:[%s812 + $0x70] sm:$0xf]
        %v842 = vld [vmem:[%s812 + $0x74] sm:$0xf]
        %v843 = vld [vmem:[%s812 + $0x78] sm:$0xf]
        %v844 = vld [vmem:[%s812 + $0x7c] sm:$0xf]
        %v845 = vld [vmem:[%s812 + $0x80] sm:$0xf]
        %v846 = vld [vmem:[%s812 + $0x84] sm:$0xf]
        %v847 = vld [vmem:[%s812 + $0x88] sm:$0xf]
        %v848 = vld [vmem:[%s812 + $0x8c] sm:$0xf]
        %v849 = vld [vmem:[%s812 + $0x90] sm:$0xf]
        %v850 = vld [vmem:[%s812 + $0x94] sm:$0xf]
        %v851 = vld [vmem:[%s812 + $0x98] sm:$0xf]
        %v852 = vld [vmem:[%s812 + $0x9c] sm:$0xf]
        %v853 = vld [vmem:[%s812 + $0xa0] sm:$0xf]
        %v854 = vld [vmem:[%s812 + $0xa4] sm:$0xf]
        %v855 = vld [vmem:[%s812 + $0xa8] sm:$0xf]
        %v856 = vld [vmem:[%s812 + $0xac] sm:$0xf]
        %v857 = vld [vmem:[%s812 + $0xb0] sm:$0xf]
        %v858 = vld [vmem:[%s812 + $0xb4] sm:$0xf]
        %v859 = vld [vmem:[%s812 + $0xb8] sm:$0xf]
        %v860 = vld [vmem:[%s812 + $0xbc] sm:$0xf]
        %v861 = vld [vmem:[%s812 + $0xc0] sm:$0xf]
        %v862 = vld [vmem:[%s812 + $0xc4] sm:$0xf]
        %v863 = vld [vmem:[%s812 + $0xc8] sm:$0xf]
        %v864 = vld [vmem:[%s812 + $0xcc] sm:$0xf]
        %v865 = vld [vmem:[%s812 + $0xd0] sm:$0xf]
        %v866 = vld [vmem:[%s812 + $0xd4] sm:$0xf]
        %v867 = vld [vmem:[%s812 + $0xd8] sm:$0xf]
        %v868 = vld [vmem:[%s812 + $0xdc] sm:$0xf]
        %v869 = vld [vmem:[%s812 + $0xe0] sm:$0xf]
        %v870 = vld [vmem:[%s812 + $0xe4] sm:$0xf]
        %v871 = vld [vmem:[%s812 + $0xe8] sm:$0xf]
        %v872 = vld [vmem:[%s812 + $0xec] sm:$0xf]
        %v873 = vld [vmem:[%s812 + $0xf0] sm:$0xf]
        %v874 = vld [vmem:[%s812 + $0xf4] sm:$0xf]
        %v875 = vld [vmem:[%s812 + $0xf8] sm:$0xf]
        %v876 = vld [vmem:[%s812 + $0xfc] sm:$0xf]
        %v877 = vld [vmem:[%s812 + $0x100] sm:$0xf]
        %v878 = vld [vmem:[%s812 + $0x104] sm:$0xf]
        %v879 = vld [vmem:[%s812 + $0x108] sm:$0xf]
        %v880 = vld [vmem:[%s812 + $0x10c] sm:$0xf]
        %v881 = vld [vmem:[%s812 + $0x110] sm:$0xf]
        %v882 = vld [vmem:[%s812 + $0x114] sm:$0xf]
        %v883 = vld [vmem:[%s812 + $0x118] sm:$0xf]
        %v884 = vld [vmem:[%s812 + $0x11c] sm:$0xf]
        %v885 = vld [vmem:[%s812 + $0x120] sm:$0xf]
        %v886 = vld [vmem:[%s812 + $0x124] sm:$0xf]
        %v887 = vld [vmem:[%s812 + $0x128] sm:$0xf]
        %v888 = vld [vmem:[%s812 + $0x12c] sm:$0xf]
        %v889 = vld [vmem:[%s812 + $0x130] sm:$0xf]
        %v890 = vld [vmem:[%s812 + $0x134] sm:$0xf]
        %v891 = vld [vmem:[%s812 + $0x138] sm:$0xf]
        %v892 = vld [vmem:[%s812 + $0x13c] sm:$0xf]
        %v893 = vld [vmem:[%s812 + $0x140] sm:$0xf]
        %v894 = vld [vmem:[%s812 + $0x144] sm:$0xf]
        %v895 = vld [vmem:[%s812 + $0x148] sm:$0xf]
        %v896 = vld [vmem:[%s812 + $0x14c] sm:$0xf]
        %v897 = vld [vmem:[%s812 + $0x150] sm:$0xf]
        %v898 = vld [vmem:[%s812 + $0x154] sm:$0xf]
        %v899 = vld [vmem:[%s812 + $0x158] sm:$0xf]
        %v900 = vld [vmem:[%s812 + $0x15c] sm:$0xf]
        %v901 = vld [vmem:[%s812 + $0x160] sm:$0xf]
        %v902 = vld [vmem:[%s812 + $0x164] sm:$0xf]
        %v903 = vld [vmem:[%s812 + $0x168] sm:$0xf]
        %v904 = vld [vmem:[%s812 + $0x16c] sm:$0xf]
        %v905 = vld [vmem:[%s812 + $0x170] sm:$0xf]
        %v906 = vld [vmem:[%s812 + $0x174] sm:$0xf]
        %v907 = vld [vmem:[%s812 + $0x178] sm:$0xf]
        %v908 = vld [vmem:[%s812 + $0x17c] sm:$0xf]
        %s909 = scalar_lea.vmem %s683, 32 [#allocation2]
        %v910 = vld [vmem:[%s909] sm:$0xf]
        %v911 = vld [vmem:[%s909 + $0x4] sm:$0xf]
        %v912 = vld [vmem:[%s909 + $0x8] sm:$0xf]
        %v913 = vld [vmem:[%s909 + $0xc] sm:$0xf]
        %v914 = vld [vmem:[%s909 + $0x10] sm:$0xf]
        %v915 = vld [vmem:[%s909 + $0x14] sm:$0xf]
        %v916 = vld [vmem:[%s909 + $0x18] sm:$0xf]
        %v917 = vld [vmem:[%s909 + $0x1c] sm:$0xf]
        %v918 = vld [vmem:[%s909 + $0x20] sm:$0xf]
        %v919 = vld [vmem:[%s909 + $0x24] sm:$0xf]
        %v920 = vld [vmem:[%s909 + $0x28] sm:$0xf]
        %v921 = vld [vmem:[%s909 + $0x2c] sm:$0xf]
        %v922 = vld [vmem:[%s909 + $0x30] sm:$0xf]
        %v923 = vld [vmem:[%s909 + $0x34] sm:$0xf]
        %v924 = vld [vmem:[%s909 + $0x38] sm:$0xf]
        %v925 = vld [vmem:[%s909 + $0x3c] sm:$0xf]
        %v926 = vld [vmem:[%s909 + $0x40] sm:$0xf]
        %v927 = vld [vmem:[%s909 + $0x44] sm:$0xf]
        %v928 = vld [vmem:[%s909 + $0x48] sm:$0xf]
        %v929 = vld [vmem:[%s909 + $0x4c] sm:$0xf]
        %v930 = vld [vmem:[%s909 + $0x50] sm:$0xf]
        %v931 = vld [vmem:[%s909 + $0x54] sm:$0xf]
        %v932 = vld [vmem:[%s909 + $0x58] sm:$0xf]
        %v933 = vld [vmem:[%s909 + $0x5c] sm:$0xf]
        %v934 = vld [vmem:[%s909 + $0x60] sm:$0xf]
        %v935 = vld [vmem:[%s909 + $0x64] sm:$0xf]
        %v936 = vld [vmem:[%s909 + $0x68] sm:$0xf]
        %v937 = vld [vmem:[%s909 + $0x6c] sm:$0xf]
        %v938 = vld [vmem:[%s909 + $0x70] sm:$0xf]
        %v939 = vld [vmem:[%s909 + $0x74] sm:$0xf]
        %v940 = vld [vmem:[%s909 + $0x78] sm:$0xf]
        %v941 = vld [vmem:[%s909 + $0x7c] sm:$0xf]
        %v942 = vld [vmem:[%s909 + $0x80] sm:$0xf]
        %v943 = vld [vmem:[%s909 + $0x84] sm:$0xf]
        %v944 = vld [vmem:[%s909 + $0x88] sm:$0xf]
        %v945 = vld [vmem:[%s909 + $0x8c] sm:$0xf]
        %v946 = vld [vmem:[%s909 + $0x90] sm:$0xf]
        %v947 = vld [vmem:[%s909 + $0x94] sm:$0xf]
        %v948 = vld [vmem:[%s909 + $0x98] sm:$0xf]
        %v949 = vld [vmem:[%s909 + $0x9c] sm:$0xf]
        %v950 = vld [vmem:[%s909 + $0xa0] sm:$0xf]
        %v951 = vld [vmem:[%s909 + $0xa4] sm:$0xf]
        %v952 = vld [vmem:[%s909 + $0xa8] sm:$0xf]
        %v953 = vld [vmem:[%s909 + $0xac] sm:$0xf]
        %v954 = vld [vmem:[%s909 + $0xb0] sm:$0xf]
        %v955 = vld [vmem:[%s909 + $0xb4] sm:$0xf]
        %v956 = vld [vmem:[%s909 + $0xb8] sm:$0xf]
        %v957 = vld [vmem:[%s909 + $0xbc] sm:$0xf]
        %v958 = vld [vmem:[%s909 + $0xc0] sm:$0xf]
        %v959 = vld [vmem:[%s909 + $0xc4] sm:$0xf]
        %v960 = vld [vmem:[%s909 + $0xc8] sm:$0xf]
        %v961 = vld [vmem:[%s909 + $0xcc] sm:$0xf]
        %v962 = vld [vmem:[%s909 + $0xd0] sm:$0xf]
        %v963 = vld [vmem:[%s909 + $0xd4] sm:$0xf]
        %v964 = vld [vmem:[%s909 + $0xd8] sm:$0xf]
        %v965 = vld [vmem:[%s909 + $0xdc] sm:$0xf]
        %v966 = vld [vmem:[%s909 + $0xe0] sm:$0xf]
        %v967 = vld [vmem:[%s909 + $0xe4] sm:$0xf]
        %v968 = vld [vmem:[%s909 + $0xe8] sm:$0xf]
        %v969 = vld [vmem:[%s909 + $0xec] sm:$0xf]
        %v970 = vld [vmem:[%s909 + $0xf0] sm:$0xf]
        %v971 = vld [vmem:[%s909 + $0xf4] sm:$0xf]
        %v972 = vld [vmem:[%s909 + $0xf8] sm:$0xf]
        %v973 = vld [vmem:[%s909 + $0xfc] sm:$0xf]
        %v974 = vld [vmem:[%s909 + $0x100] sm:$0xf]
        %v975 = vld [vmem:[%s909 + $0x104] sm:$0xf]
        %v976 = vld [vmem:[%s909 + $0x108] sm:$0xf]
        %v977 = vld [vmem:[%s909 + $0x10c] sm:$0xf]
        %v978 = vld [vmem:[%s909 + $0x110] sm:$0xf]
        %v979 = vld [vmem:[%s909 + $0x114] sm:$0xf]
        %v980 = vld [vmem:[%s909 + $0x118] sm:$0xf]
        %v981 = vld [vmem:[%s909 + $0x11c] sm:$0xf]
        %v982 = vld [vmem:[%s909 + $0x120] sm:$0xf]
        %v983 = vld [vmem:[%s909 + $0x124] sm:$0xf]
        %v984 = vld [vmem:[%s909 + $0x128] sm:$0xf]
        %v985 = vld [vmem:[%s909 + $0x12c] sm:$0xf]
        %v986 = vld [vmem:[%s909 + $0x130] sm:$0xf]
        %v987 = vld [vmem:[%s909 + $0x134] sm:$0xf]
        %v988 = vld [vmem:[%s909 + $0x138] sm:$0xf]
        %v989 = vld [vmem:[%s909 + $0x13c] sm:$0xf]
        %v990 = vld [vmem:[%s909 + $0x140] sm:$0xf]
        %v991 = vld [vmem:[%s909 + $0x144] sm:$0xf]
        %v992 = vld [vmem:[%s909 + $0x148] sm:$0xf]
        %v993 = vld [vmem:[%s909 + $0x14c] sm:$0xf]
        %v994 = vld [vmem:[%s909 + $0x150] sm:$0xf]
        %v995 = vld [vmem:[%s909 + $0x154] sm:$0xf]
        %v996 = vld [vmem:[%s909 + $0x158] sm:$0xf]
        %v997 = vld [vmem:[%s909 + $0x15c] sm:$0xf]
        %v998 = vld [vmem:[%s909 + $0x160] sm:$0xf]
        %v999 = vld [vmem:[%s909 + $0x164] sm:$0xf]
        %v1000 = vld [vmem:[%s909 + $0x168] sm:$0xf]
        %v1001 = vld [vmem:[%s909 + $0x16c] sm:$0xf]
        %v1002 = vld [vmem:[%s909 + $0x170] sm:$0xf]
        %v1003 = vld [vmem:[%s909 + $0x174] sm:$0xf]
        %v1004 = vld [vmem:[%s909 + $0x178] sm:$0xf]
        %v1005 = vld [vmem:[%s909 + $0x17c] sm:$0xf]
        %s1006 = scalar_lea.vmem %s683, 48 [#allocation2]
        %v1007 = vld [vmem:[%s1006] sm:$0xf]
        %v1008 = vld [vmem:[%s1006 + $0x4] sm:$0xf]
        %v1009 = vld [vmem:[%s1006 + $0x8] sm:$0xf]
        %v1010 = vld [vmem:[%s1006 + $0xc] sm:$0xf]
        %v1011 = vld [vmem:[%s1006 + $0x10] sm:$0xf]
        %v1012 = vld [vmem:[%s1006 + $0x14] sm:$0xf]
        %v1013 = vld [vmem:[%s1006 + $0x18] sm:$0xf]
        %v1014 = vld [vmem:[%s1006 + $0x1c] sm:$0xf]
        %v1015 = vld [vmem:[%s1006 + $0x20] sm:$0xf]
        %v1016 = vld [vmem:[%s1006 + $0x24] sm:$0xf]
        %v1017 = vld [vmem:[%s1006 + $0x28] sm:$0xf]
        %v1018 = vld [vmem:[%s1006 + $0x2c] sm:$0xf]
        %v1019 = vld [vmem:[%s1006 + $0x30] sm:$0xf]
        %v1020 = vld [vmem:[%s1006 + $0x34] sm:$0xf]
        %v1021 = vld [vmem:[%s1006 + $0x38] sm:$0xf]
        %v1022 = vld [vmem:[%s1006 + $0x3c] sm:$0xf]
        %v1023 = vld [vmem:[%s1006 + $0x40] sm:$0xf]
        %v1024 = vld [vmem:[%s1006 + $0x44] sm:$0xf]
        %v1025 = vld [vmem:[%s1006 + $0x48] sm:$0xf]
        %v1026 = vld [vmem:[%s1006 + $0x4c] sm:$0xf]
        %v1027 = vld [vmem:[%s1006 + $0x50] sm:$0xf]
        %v1028 = vld [vmem:[%s1006 + $0x54] sm:$0xf]
        %v1029 = vld [vmem:[%s1006 + $0x58] sm:$0xf]
        %v1030 = vld [vmem:[%s1006 + $0x5c] sm:$0xf]
        %v1031 = vld [vmem:[%s1006 + $0x60] sm:$0xf]
        %v1032 = vld [vmem:[%s1006 + $0x64] sm:$0xf]
        %v1033 = vld [vmem:[%s1006 + $0x68] sm:$0xf]
        %v1034 = vld [vmem:[%s1006 + $0x6c] sm:$0xf]
        %v1035 = vld [vmem:[%s1006 + $0x70] sm:$0xf]
        %v1036 = vld [vmem:[%s1006 + $0x74] sm:$0xf]
        %v1037 = vld [vmem:[%s1006 + $0x78] sm:$0xf]
        %v1038 = vld [vmem:[%s1006 + $0x7c] sm:$0xf]
        %v1039 = vld [vmem:[%s1006 + $0x80] sm:$0xf]
        %v1040 = vld [vmem:[%s1006 + $0x84] sm:$0xf]
        %v1041 = vld [vmem:[%s1006 + $0x88] sm:$0xf]
        %v1042 = vld [vmem:[%s1006 + $0x8c] sm:$0xf]
        %v1043 = vld [vmem:[%s1006 + $0x90] sm:$0xf]
        %v1044 = vld [vmem:[%s1006 + $0x94] sm:$0xf]
        %v1045 = vld [vmem:[%s1006 + $0x98] sm:$0xf]
        %v1046 = vld [vmem:[%s1006 + $0x9c] sm:$0xf]
        %v1047 = vld [vmem:[%s1006 + $0xa0] sm:$0xf]
        %v1048 = vld [vmem:[%s1006 + $0xa4] sm:$0xf]
        %v1049 = vld [vmem:[%s1006 + $0xa8] sm:$0xf]
        %v1050 = vld [vmem:[%s1006 + $0xac] sm:$0xf]
        %v1051 = vld [vmem:[%s1006 + $0xb0] sm:$0xf]
        %v1052 = vld [vmem:[%s1006 + $0xb4] sm:$0xf]
        %v1053 = vld [vmem:[%s1006 + $0xb8] sm:$0xf]
        %v1054 = vld [vmem:[%s1006 + $0xbc] sm:$0xf]
        %v1055 = vld [vmem:[%s1006 + $0xc0] sm:$0xf]
        %v1056 = vld [vmem:[%s1006 + $0xc4] sm:$0xf]
        %v1057 = vld [vmem:[%s1006 + $0xc8] sm:$0xf]
        %v1058 = vld [vmem:[%s1006 + $0xcc] sm:$0xf]
        %v1059 = vld [vmem:[%s1006 + $0xd0] sm:$0xf]
        %v1060 = vld [vmem:[%s1006 + $0xd4] sm:$0xf]
        %v1061 = vld [vmem:[%s1006 + $0xd8] sm:$0xf]
        %v1062 = vld [vmem:[%s1006 + $0xdc] sm:$0xf]
        %v1063 = vld [vmem:[%s1006 + $0xe0] sm:$0xf]
        %v1064 = vld [vmem:[%s1006 + $0xe4] sm:$0xf]
        %v1065 = vld [vmem:[%s1006 + $0xe8] sm:$0xf]
        %v1066 = vld [vmem:[%s1006 + $0xec] sm:$0xf]
        %v1067 = vld [vmem:[%s1006 + $0xf0] sm:$0xf]
        %v1068 = vld [vmem:[%s1006 + $0xf4] sm:$0xf]
        %v1069 = vld [vmem:[%s1006 + $0xf8] sm:$0xf]
        %v1070 = vld [vmem:[%s1006 + $0xfc] sm:$0xf]
        %v1071 = vld [vmem:[%s1006 + $0x100] sm:$0xf]
        %v1072 = vld [vmem:[%s1006 + $0x104] sm:$0xf]
        %v1073 = vld [vmem:[%s1006 + $0x108] sm:$0xf]
        %v1074 = vld [vmem:[%s1006 + $0x10c] sm:$0xf]
        %v1075 = vld [vmem:[%s1006 + $0x110] sm:$0xf]
        %v1076 = vld [vmem:[%s1006 + $0x114] sm:$0xf]
        %v1077 = vld [vmem:[%s1006 + $0x118] sm:$0xf]
        %v1078 = vld [vmem:[%s1006 + $0x11c] sm:$0xf]
        %v1079 = vld [vmem:[%s1006 + $0x120] sm:$0xf]
        %v1080 = vld [vmem:[%s1006 + $0x124] sm:$0xf]
        %v1081 = vld [vmem:[%s1006 + $0x128] sm:$0xf]
        %v1082 = vld [vmem:[%s1006 + $0x12c] sm:$0xf]
        %v1083 = vld [vmem:[%s1006 + $0x130] sm:$0xf]
        %v1084 = vld [vmem:[%s1006 + $0x134] sm:$0xf]
        %v1085 = vld [vmem:[%s1006 + $0x138] sm:$0xf]
        %v1086 = vld [vmem:[%s1006 + $0x13c] sm:$0xf]
        %v1087 = vld [vmem:[%s1006 + $0x140] sm:$0xf]
        %v1088 = vld [vmem:[%s1006 + $0x144] sm:$0xf]
        %v1089 = vld [vmem:[%s1006 + $0x148] sm:$0xf]
        %v1090 = vld [vmem:[%s1006 + $0x14c] sm:$0xf]
        %v1091 = vld [vmem:[%s1006 + $0x150] sm:$0xf]
        %v1092 = vld [vmem:[%s1006 + $0x154] sm:$0xf]
        %v1093 = vld [vmem:[%s1006 + $0x158] sm:$0xf]
        %v1094 = vld [vmem:[%s1006 + $0x15c] sm:$0xf]
        %v1095 = vld [vmem:[%s1006 + $0x160] sm:$0xf]
        %v1096 = vld [vmem:[%s1006 + $0x164] sm:$0xf]
        %v1097 = vld [vmem:[%s1006 + $0x168] sm:$0xf]
        %v1098 = vld [vmem:[%s1006 + $0x16c] sm:$0xf]
        %v1099 = vld [vmem:[%s1006 + $0x170] sm:$0xf]
        %v1100 = vld [vmem:[%s1006 + $0x174] sm:$0xf]
        %v1101 = vld [vmem:[%s1006 + $0x178] sm:$0xf]
        %v1102 = vld [vmem:[%s1006 + $0x17c] sm:$0xf]
        %s1103 = scalar_lea.vmem %s683, 64 [#allocation2]
        %v1104 = vld [vmem:[%s1103] sm:$0xf]
        %v1105 = vld [vmem:[%s1103 + $0x4] sm:$0xf]
        %v1106 = vld [vmem:[%s1103 + $0x8] sm:$0xf]
        %v1107 = vld [vmem:[%s1103 + $0xc] sm:$0xf]
        %v1108 = vld [vmem:[%s1103 + $0x10] sm:$0xf]
        %v1109 = vld [vmem:[%s1103 + $0x14] sm:$0xf]
        %v1110 = vld [vmem:[%s1103 + $0x18] sm:$0xf]
        %v1111 = vld [vmem:[%s1103 + $0x1c] sm:$0xf]
        %v1112 = vld [vmem:[%s1103 + $0x20] sm:$0xf]
        %v1113 = vld [vmem:[%s1103 + $0x24] sm:$0xf]
        %v1114 = vld [vmem:[%s1103 + $0x28] sm:$0xf]
        %v1115 = vld [vmem:[%s1103 + $0x2c] sm:$0xf]
        %v1116 = vld [vmem:[%s1103 + $0x30] sm:$0xf]
        %v1117 = vld [vmem:[%s1103 + $0x34] sm:$0xf]
        %v1118 = vld [vmem:[%s1103 + $0x38] sm:$0xf]
        %v1119 = vld [vmem:[%s1103 + $0x3c] sm:$0xf]
        %v1120 = vld [vmem:[%s1103 + $0x40] sm:$0xf]
        %v1121 = vld [vmem:[%s1103 + $0x44] sm:$0xf]
        %v1122 = vld [vmem:[%s1103 + $0x48] sm:$0xf]
        %v1123 = vld [vmem:[%s1103 + $0x4c] sm:$0xf]
        %v1124 = vld [vmem:[%s1103 + $0x50] sm:$0xf]
        %v1125 = vld [vmem:[%s1103 + $0x54] sm:$0xf]
        %v1126 = vld [vmem:[%s1103 + $0x58] sm:$0xf]
        %v1127 = vld [vmem:[%s1103 + $0x5c] sm:$0xf]
        %v1128 = vld [vmem:[%s1103 + $0x60] sm:$0xf]
        %v1129 = vld [vmem:[%s1103 + $0x64] sm:$0xf]
        %v1130 = vld [vmem:[%s1103 + $0x68] sm:$0xf]
        %v1131 = vld [vmem:[%s1103 + $0x6c] sm:$0xf]
        %v1132 = vld [vmem:[%s1103 + $0x70] sm:$0xf]
        %v1133 = vld [vmem:[%s1103 + $0x74] sm:$0xf]
        %v1134 = vld [vmem:[%s1103 + $0x78] sm:$0xf]
        %v1135 = vld [vmem:[%s1103 + $0x7c] sm:$0xf]
        %v1136 = vld [vmem:[%s1103 + $0x80] sm:$0xf]
        %v1137 = vld [vmem:[%s1103 + $0x84] sm:$0xf]
        %v1138 = vld [vmem:[%s1103 + $0x88] sm:$0xf]
        %v1139 = vld [vmem:[%s1103 + $0x8c] sm:$0xf]
        %v1140 = vld [vmem:[%s1103 + $0x90] sm:$0xf]
        %v1141 = vld [vmem:[%s1103 + $0x94] sm:$0xf]
        %v1142 = vld [vmem:[%s1103 + $0x98] sm:$0xf]
        %v1143 = vld [vmem:[%s1103 + $0x9c] sm:$0xf]
        %v1144 = vld [vmem:[%s1103 + $0xa0] sm:$0xf]
        %v1145 = vld [vmem:[%s1103 + $0xa4] sm:$0xf]
        %v1146 = vld [vmem:[%s1103 + $0xa8] sm:$0xf]
        %v1147 = vld [vmem:[%s1103 + $0xac] sm:$0xf]
        %v1148 = vld [vmem:[%s1103 + $0xb0] sm:$0xf]
        %v1149 = vld [vmem:[%s1103 + $0xb4] sm:$0xf]
        %v1150 = vld [vmem:[%s1103 + $0xb8] sm:$0xf]
        %v1151 = vld [vmem:[%s1103 + $0xbc] sm:$0xf]
        %v1152 = vld [vmem:[%s1103 + $0xc0] sm:$0xf]
        %v1153 = vld [vmem:[%s1103 + $0xc4] sm:$0xf]
        %v1154 = vld [vmem:[%s1103 + $0xc8] sm:$0xf]
        %v1155 = vld [vmem:[%s1103 + $0xcc] sm:$0xf]
        %v1156 = vld [vmem:[%s1103 + $0xd0] sm:$0xf]
        %v1157 = vld [vmem:[%s1103 + $0xd4] sm:$0xf]
        %v1158 = vld [vmem:[%s1103 + $0xd8] sm:$0xf]
        %v1159 = vld [vmem:[%s1103 + $0xdc] sm:$0xf]
        %v1160 = vld [vmem:[%s1103 + $0xe0] sm:$0xf]
        %v1161 = vld [vmem:[%s1103 + $0xe4] sm:$0xf]
        %v1162 = vld [vmem:[%s1103 + $0xe8] sm:$0xf]
        %v1163 = vld [vmem:[%s1103 + $0xec] sm:$0xf]
        %v1164 = vld [vmem:[%s1103 + $0xf0] sm:$0xf]
        %v1165 = vld [vmem:[%s1103 + $0xf4] sm:$0xf]
        %v1166 = vld [vmem:[%s1103 + $0xf8] sm:$0xf]
        %v1167 = vld [vmem:[%s1103 + $0xfc] sm:$0xf]
        %v1168 = vld [vmem:[%s1103 + $0x100] sm:$0xf]
        %v1169 = vld [vmem:[%s1103 + $0x104] sm:$0xf]
        %v1170 = vld [vmem:[%s1103 + $0x108] sm:$0xf]
        %v1171 = vld [vmem:[%s1103 + $0x10c] sm:$0xf]
        %v1172 = vld [vmem:[%s1103 + $0x110] sm:$0xf]
        %v1173 = vld [vmem:[%s1103 + $0x114] sm:$0xf]
        %v1174 = vld [vmem:[%s1103 + $0x118] sm:$0xf]
        %v1175 = vld [vmem:[%s1103 + $0x11c] sm:$0xf]
        %v1176 = vld [vmem:[%s1103 + $0x120] sm:$0xf]
        %v1177 = vld [vmem:[%s1103 + $0x124] sm:$0xf]
        %v1178 = vld [vmem:[%s1103 + $0x128] sm:$0xf]
        %v1179 = vld [vmem:[%s1103 + $0x12c] sm:$0xf]
        %v1180 = vld [vmem:[%s1103 + $0x130] sm:$0xf]
        %v1181 = vld [vmem:[%s1103 + $0x134] sm:$0xf]
        %v1182 = vld [vmem:[%s1103 + $0x138] sm:$0xf]
        %v1183 = vld [vmem:[%s1103 + $0x13c] sm:$0xf]
        %v1184 = vld [vmem:[%s1103 + $0x140] sm:$0xf]
        %v1185 = vld [vmem:[%s1103 + $0x144] sm:$0xf]
        %v1186 = vld [vmem:[%s1103 + $0x148] sm:$0xf]
        %v1187 = vld [vmem:[%s1103 + $0x14c] sm:$0xf]
        %v1188 = vld [vmem:[%s1103 + $0x150] sm:$0xf]
        %v1189 = vld [vmem:[%s1103 + $0x154] sm:$0xf]
        %v1190 = vld [vmem:[%s1103 + $0x158] sm:$0xf]
        %v1191 = vld [vmem:[%s1103 + $0x15c] sm:$0xf]
        %v1192 = vld [vmem:[%s1103 + $0x160] sm:$0xf]
        %v1193 = vld [vmem:[%s1103 + $0x164] sm:$0xf]
        %v1194 = vld [vmem:[%s1103 + $0x168] sm:$0xf]
        %v1195 = vld [vmem:[%s1103 + $0x16c] sm:$0xf]
        %v1196 = vld [vmem:[%s1103 + $0x170] sm:$0xf]
        %v1197 = vld [vmem:[%s1103 + $0x174] sm:$0xf]
        %v1198 = vld [vmem:[%s1103 + $0x178] sm:$0xf]
        %v1199 = vld [vmem:[%s1103 + $0x17c] sm:$0xf]
        %v1296 = vunpack.c.l.b16 %v716
        %v1297 = vunpack.c.l.b16 %v717
        %v1298 = vunpack.c.l.b16 %v718
        %v1299 = vunpack.c.l.b16 %v719
        %v1300 = vunpack.c.l.b16 %v720
        %v1301 = vunpack.c.l.b16 %v721
        %v1302 = vunpack.c.l.b16 %v722
        %v1303 = vunpack.c.l.b16 %v723
        %v1304 = vunpack.c.l.b16 %v724
        %v1305 = vunpack.c.l.b16 %v725
        %v1306 = vunpack.c.l.b16 %v726
        %v1307 = vunpack.c.l.b16 %v727
        %v1308 = vunpack.c.l.b16 %v728
        %v1309 = vunpack.c.l.b16 %v729
        %v1310 = vunpack.c.l.b16 %v730
        %v1311 = vunpack.c.l.b16 %v731
        %v1312 = vunpack.c.l.b16 %v732
        %v1313 = vunpack.c.l.b16 %v733
        %v1314 = vunpack.c.l.b16 %v734
        %v1315 = vunpack.c.l.b16 %v735
        %v1316 = vunpack.c.l.b16 %v736
        %v1317 = vunpack.c.l.b16 %v737
        %v1318 = vunpack.c.l.b16 %v738
        %v1319 = vunpack.c.l.b16 %v739
        %v1320 = vunpack.c.l.b16 %v740
        %v1321 = vunpack.c.l.b16 %v741
        %v1322 = vunpack.c.l.b16 %v742
        %v1323 = vunpack.c.l.b16 %v743
        %v1324 = vunpack.c.l.b16 %v744
        %v1325 = vunpack.c.l.b16 %v745
        %v1326 = vunpack.c.l.b16 %v746
        %v1327 = vunpack.c.l.b16 %v747
        %v1328 = vunpack.c.l.b16 %v748
        %v1329 = vunpack.c.l.b16 %v749
        %v1330 = vunpack.c.l.b16 %v750
        %v1331 = vunpack.c.l.b16 %v751
        %v1332 = vunpack.c.l.b16 %v752
        %v1333 = vunpack.c.l.b16 %v753
        %v1334 = vunpack.c.l.b16 %v754
        %v1335 = vunpack.c.l.b16 %v755
        %v1336 = vunpack.c.l.b16 %v756
        %v1337 = vunpack.c.l.b16 %v757
        %v1338 = vunpack.c.l.b16 %v758
        %v1339 = vunpack.c.l.b16 %v759
        %v1340 = vunpack.c.l.b16 %v760
        %v1341 = vunpack.c.l.b16 %v761
        %v1342 = vunpack.c.l.b16 %v762
        %v1343 = vunpack.c.l.b16 %v763
        %v1344 = vunpack.c.l.b16 %v764
        %v1345 = vunpack.c.l.b16 %v765
        %v1346 = vunpack.c.l.b16 %v766
        %v1347 = vunpack.c.l.b16 %v767
        %v1348 = vunpack.c.l.b16 %v768
        %v1349 = vunpack.c.l.b16 %v769
        %v1350 = vunpack.c.l.b16 %v770
        %v1351 = vunpack.c.l.b16 %v771
        %v1352 = vunpack.c.l.b16 %v772
        %v1353 = vunpack.c.l.b16 %v773
        %v1354 = vunpack.c.l.b16 %v774
        %v1355 = vunpack.c.l.b16 %v775
        %v1356 = vunpack.c.l.b16 %v776
        %v1357 = vunpack.c.l.b16 %v777
        %v1358 = vunpack.c.l.b16 %v778
        %v1359 = vunpack.c.l.b16 %v779
        %v1360 = vunpack.c.l.b16 %v780
        %v1361 = vunpack.c.l.b16 %v781
        %v1362 = vunpack.c.l.b16 %v782
        %v1363 = vunpack.c.l.b16 %v783
        %v1364 = vunpack.c.l.b16 %v784
        %v1365 = vunpack.c.l.b16 %v785
        %v1366 = vunpack.c.l.b16 %v786
        %v1367 = vunpack.c.l.b16 %v787
        %v1368 = vunpack.c.l.b16 %v788
        %v1369 = vunpack.c.l.b16 %v789
        %v1370 = vunpack.c.l.b16 %v790
        %v1371 = vunpack.c.l.b16 %v791
        %v1372 = vunpack.c.l.b16 %v792
        %v1373 = vunpack.c.l.b16 %v793
        %v1374 = vunpack.c.l.b16 %v794
        %v1375 = vunpack.c.l.b16 %v795
        %v1376 = vunpack.c.l.b16 %v796
        %v1377 = vunpack.c.l.b16 %v797
        %v1378 = vunpack.c.l.b16 %v798
        %v1379 = vunpack.c.l.b16 %v799
        %v1380 = vunpack.c.l.b16 %v800
        %v1381 = vunpack.c.l.b16 %v801
        %v1382 = vunpack.c.l.b16 %v802
        %v1383 = vunpack.c.l.b16 %v803
        %v1384 = vunpack.c.l.b16 %v804
        %v1385 = vunpack.c.l.b16 %v805
        %v1386 = vunpack.c.l.b16 %v806
        %v1387 = vunpack.c.l.b16 %v807
        %v1388 = vunpack.c.l.b16 %v808
        %v1389 = vunpack.c.l.b16 %v809
        %v1390 = vunpack.c.l.b16 %v810
        %v1391 = vunpack.c.l.b16 %v811
        %v1392 = vpack.c.b16 %v1297, %v1296
        %v1393 = vpack.c.b16 %v1299, %v1298
        %v1394 = vpack.c.b16 %v1301, %v1300
        %v1395 = vpack.c.b16 %v1303, %v1302
        %v1396 = vpack.c.b16 %v1305, %v1304
        %v1397 = vpack.c.b16 %v1307, %v1306
        %v1398 = vpack.c.b16 %v1309, %v1308
        %v1399 = vpack.c.b16 %v1311, %v1310
        %v1400 = vpack.c.b16 %v1313, %v1312
        %v1401 = vpack.c.b16 %v1315, %v1314
        %v1402 = vpack.c.b16 %v1317, %v1316
        %v1403 = vpack.c.b16 %v1319, %v1318
        %v1404 = vpack.c.b16 %v1321, %v1320
        %v1405 = vpack.c.b16 %v1323, %v1322
        %v1406 = vpack.c.b16 %v1325, %v1324
        %v1407 = vpack.c.b16 %v1327, %v1326
        %v1408 = vpack.c.b16 %v1329, %v1328
        %v1409 = vpack.c.b16 %v1331, %v1330
        %v1410 = vpack.c.b16 %v1333, %v1332
        %v1411 = vpack.c.b16 %v1335, %v1334
        %v1412 = vpack.c.b16 %v1337, %v1336
        %v1413 = vpack.c.b16 %v1339, %v1338
        %v1414 = vpack.c.b16 %v1341, %v1340
        %v1415 = vpack.c.b16 %v1343, %v1342
        %v1416 = vpack.c.b16 %v1345, %v1344
        %v1417 = vpack.c.b16 %v1347, %v1346
        %v1418 = vpack.c.b16 %v1349, %v1348
        %v1419 = vpack.c.b16 %v1351, %v1350
        %v1420 = vpack.c.b16 %v1353, %v1352
        %v1421 = vpack.c.b16 %v1355, %v1354
        %v1422 = vpack.c.b16 %v1357, %v1356
        %v1423 = vpack.c.b16 %v1359, %v1358
        %v1424 = vpack.c.b16 %v1361, %v1360
        %v1425 = vpack.c.b16 %v1363, %v1362
        %v1426 = vpack.c.b16 %v1365, %v1364
        %v1427 = vpack.c.b16 %v1367, %v1366
        %v1428 = vpack.c.b16 %v1369, %v1368
        %v1429 = vpack.c.b16 %v1371, %v1370
        %v1430 = vpack.c.b16 %v1373, %v1372
        %v1431 = vpack.c.b16 %v1375, %v1374
        %v1432 = vpack.c.b16 %v1377, %v1376
        %v1433 = vpack.c.b16 %v1379, %v1378
        %v1434 = vpack.c.b16 %v1381, %v1380
        %v1435 = vpack.c.b16 %v1383, %v1382
        %v1436 = vpack.c.b16 %v1385, %v1384
        %v1437 = vpack.c.b16 %v1387, %v1386
        %v1438 = vpack.c.b16 %v1389, %v1388
        %v1439 = vpack.c.b16 %v1391, %v1390
        %v1536 = vunpack.c.l.b16 %v813
        %v1537 = vunpack.c.l.b16 %v814
        %v1538 = vunpack.c.l.b16 %v815
        %v1539 = vunpack.c.l.b16 %v816
        %v1540 = vunpack.c.l.b16 %v817
        %v1541 = vunpack.c.l.b16 %v818
        %v1542 = vunpack.c.l.b16 %v819
        %v1543 = vunpack.c.l.b16 %v820
        %v1544 = vunpack.c.l.b16 %v821
        %v1545 = vunpack.c.l.b16 %v822
        %v1546 = vunpack.c.l.b16 %v823
        %v1547 = vunpack.c.l.b16 %v824
        %v1548 = vunpack.c.l.b16 %v825
        %v1549 = vunpack.c.l.b16 %v826
        %v1550 = vunpack.c.l.b16 %v827
        %v1551 = vunpack.c.l.b16 %v828
        %v1552 = vunpack.c.l.b16 %v829
        %v1553 = vunpack.c.l.b16 %v830
        %v1554 = vunpack.c.l.b16 %v831
        %v1555 = vunpack.c.l.b16 %v832
        %v1556 = vunpack.c.l.b16 %v833
        %v1557 = vunpack.c.l.b16 %v834
        %v1558 = vunpack.c.l.b16 %v835
        %v1559 = vunpack.c.l.b16 %v836
        %v1560 = vunpack.c.l.b16 %v837
        %v1561 = vunpack.c.l.b16 %v838
        %v1562 = vunpack.c.l.b16 %v839
        %v1563 = vunpack.c.l.b16 %v840
        %v1564 = vunpack.c.l.b16 %v841
        %v1565 = vunpack.c.l.b16 %v842
        %v1566 = vunpack.c.l.b16 %v843
        %v1567 = vunpack.c.l.b16 %v844
        %v1568 = vunpack.c.l.b16 %v845
        %v1569 = vunpack.c.l.b16 %v846
        %v1570 = vunpack.c.l.b16 %v847
        %v1571 = vunpack.c.l.b16 %v848
        %v1572 = vunpack.c.l.b16 %v849
        %v1573 = vunpack.c.l.b16 %v850
        %v1574 = vunpack.c.l.b16 %v851
        %v1575 = vunpack.c.l.b16 %v852
        %v1576 = vunpack.c.l.b16 %v853
        %v1577 = vunpack.c.l.b16 %v854
        %v1578 = vunpack.c.l.b16 %v855
        %v1579 = vunpack.c.l.b16 %v856
        %v1580 = vunpack.c.l.b16 %v857
        %v1581 = vunpack.c.l.b16 %v858
        %v1582 = vunpack.c.l.b16 %v859
        %v1583 = vunpack.c.l.b16 %v860
        %v1584 = vunpack.c.l.b16 %v861
        %v1585 = vunpack.c.l.b16 %v862
        %v1586 = vunpack.c.l.b16 %v863
        %v1587 = vunpack.c.l.b16 %v864
        %v1588 = vunpack.c.l.b16 %v865
        %v1589 = vunpack.c.l.b16 %v866
        %v1590 = vunpack.c.l.b16 %v867
        %v1591 = vunpack.c.l.b16 %v868
        %v1592 = vunpack.c.l.b16 %v869
        %v1593 = vunpack.c.l.b16 %v870
        %v1594 = vunpack.c.l.b16 %v871
        %v1595 = vunpack.c.l.b16 %v872
        %v1596 = vunpack.c.l.b16 %v873
        %v1597 = vunpack.c.l.b16 %v874
        %v1598 = vunpack.c.l.b16 %v875
        %v1599 = vunpack.c.l.b16 %v876
        %v1600 = vunpack.c.l.b16 %v877
        %v1601 = vunpack.c.l.b16 %v878
        %v1602 = vunpack.c.l.b16 %v879
        %v1603 = vunpack.c.l.b16 %v880
        %v1604 = vunpack.c.l.b16 %v881
        %v1605 = vunpack.c.l.b16 %v882
        %v1606 = vunpack.c.l.b16 %v883
        %v1607 = vunpack.c.l.b16 %v884
        %v1608 = vunpack.c.l.b16 %v885
        %v1609 = vunpack.c.l.b16 %v886
        %v1610 = vunpack.c.l.b16 %v887
        %v1611 = vunpack.c.l.b16 %v888
        %v1612 = vunpack.c.l.b16 %v889
        %v1613 = vunpack.c.l.b16 %v890
        %v1614 = vunpack.c.l.b16 %v891
        %v1615 = vunpack.c.l.b16 %v892
        %v1616 = vunpack.c.l.b16 %v893
        %v1617 = vunpack.c.l.b16 %v894
        %v1618 = vunpack.c.l.b16 %v895
        %v1619 = vunpack.c.l.b16 %v896
        %v1620 = vunpack.c.l.b16 %v897
        %v1621 = vunpack.c.l.b16 %v898
        %v1622 = vunpack.c.l.b16 %v899
        %v1623 = vunpack.c.l.b16 %v900
        %v1624 = vunpack.c.l.b16 %v901
        %v1625 = vunpack.c.l.b16 %v902
        %v1626 = vunpack.c.l.b16 %v903
        %v1627 = vunpack.c.l.b16 %v904
        %v1628 = vunpack.c.l.b16 %v905
        %v1629 = vunpack.c.l.b16 %v906
        %v1630 = vunpack.c.l.b16 %v907
        %v1631 = vunpack.c.l.b16 %v908
        %v1632 = vpack.c.b16 %v1537, %v1536
        %v1633 = vpack.c.b16 %v1539, %v1538
        %v1634 = vpack.c.b16 %v1541, %v1540
        %v1635 = vpack.c.b16 %v1543, %v1542
        %v1636 = vpack.c.b16 %v1545, %v1544
        %v1637 = vpack.c.b16 %v1547, %v1546
        %v1638 = vpack.c.b16 %v1549, %v1548
        %v1639 = vpack.c.b16 %v1551, %v1550
        %v1640 = vpack.c.b16 %v1553, %v1552
        %v1641 = vpack.c.b16 %v1555, %v1554
        %v1642 = vpack.c.b16 %v1557, %v1556
        %v1643 = vpack.c.b16 %v1559, %v1558
        %v1644 = vpack.c.b16 %v1561, %v1560
        %v1645 = vpack.c.b16 %v1563, %v1562
        %v1646 = vpack.c.b16 %v1565, %v1564
        %v1647 = vpack.c.b16 %v1567, %v1566
        %v1648 = vpack.c.b16 %v1569, %v1568
        %v1649 = vpack.c.b16 %v1571, %v1570
        %v1650 = vpack.c.b16 %v1573, %v1572
        %v1651 = vpack.c.b16 %v1575, %v1574
        %v1652 = vpack.c.b16 %v1577, %v1576
        %v1653 = vpack.c.b16 %v1579, %v1578
        %v1654 = vpack.c.b16 %v1581, %v1580
        %v1655 = vpack.c.b16 %v1583, %v1582
        %v1656 = vpack.c.b16 %v1585, %v1584
        %v1657 = vpack.c.b16 %v1587, %v1586
        %v1658 = vpack.c.b16 %v1589, %v1588
        %v1659 = vpack.c.b16 %v1591, %v1590
        %v1660 = vpack.c.b16 %v1593, %v1592
        %v1661 = vpack.c.b16 %v1595, %v1594
        %v1662 = vpack.c.b16 %v1597, %v1596
        %v1663 = vpack.c.b16 %v1599, %v1598
        %v1664 = vpack.c.b16 %v1601, %v1600
        %v1665 = vpack.c.b16 %v1603, %v1602
        %v1666 = vpack.c.b16 %v1605, %v1604
        %v1667 = vpack.c.b16 %v1607, %v1606
        %v1668 = vpack.c.b16 %v1609, %v1608
        %v1669 = vpack.c.b16 %v1611, %v1610
        %v1670 = vpack.c.b16 %v1613, %v1612
        %v1671 = vpack.c.b16 %v1615, %v1614
        %v1672 = vpack.c.b16 %v1617, %v1616
        %v1673 = vpack.c.b16 %v1619, %v1618
        %v1674 = vpack.c.b16 %v1621, %v1620
        %v1675 = vpack.c.b16 %v1623, %v1622
        %v1676 = vpack.c.b16 %v1625, %v1624
        %v1677 = vpack.c.b16 %v1627, %v1626
        %v1678 = vpack.c.b16 %v1629, %v1628
        %v1679 = vpack.c.b16 %v1631, %v1630
        %1680 = vrot.lane.b32.xlu0 %v1632, 28
        %v1681 = vpop.permute.xlu0 %1680
        %1682 = vrot.lane.b32.xlu0 %v1633, 28
        %v1683 = vpop.permute.xlu0 %1682
        %1684 = vrot.lane.b32.xlu0 %v1634, 28
        %v1685 = vpop.permute.xlu0 %1684
        %1686 = vrot.lane.b32.xlu0 %v1635, 28
        %v1687 = vpop.permute.xlu0 %1686
        %1688 = vrot.lane.b32.xlu0 %v1636, 28
        %v1689 = vpop.permute.xlu0 %1688
        %1690 = vrot.lane.b32.xlu0 %v1637, 28
        %v1691 = vpop.permute.xlu0 %1690
        %1692 = vrot.lane.b32.xlu0 %v1638, 28
        %v1693 = vpop.permute.xlu0 %1692
        %1694 = vrot.lane.b32.xlu0 %v1639, 28
        %v1695 = vpop.permute.xlu0 %1694
        %1696 = vrot.lane.b32.xlu0 %v1640, 28
        %v1697 = vpop.permute.xlu0 %1696
        %1698 = vrot.lane.b32.xlu0 %v1641, 28
        %v1699 = vpop.permute.xlu0 %1698
        %1700 = vrot.lane.b32.xlu0 %v1642, 28
        %v1701 = vpop.permute.xlu0 %1700
        %1702 = vrot.lane.b32.xlu0 %v1643, 28
        %v1703 = vpop.permute.xlu0 %1702
        %1704 = vrot.lane.b32.xlu0 %v1644, 28
        %v1705 = vpop.permute.xlu0 %1704
        %1706 = vrot.lane.b32.xlu0 %v1645, 28
        %v1707 = vpop.permute.xlu0 %1706
        %1708 = vrot.lane.b32.xlu0 %v1646, 28
        %v1709 = vpop.permute.xlu0 %1708
        %1710 = vrot.lane.b32.xlu0 %v1647, 28
        %v1711 = vpop.permute.xlu0 %1710
        %1712 = vrot.lane.b32.xlu0 %v1648, 28
        %v1713 = vpop.permute.xlu0 %1712
        %1714 = vrot.lane.b32.xlu0 %v1649, 28
        %v1715 = vpop.permute.xlu0 %1714
        %1716 = vrot.lane.b32.xlu0 %v1650, 28
        %v1717 = vpop.permute.xlu0 %1716
        %1718 = vrot.lane.b32.xlu0 %v1651, 28
        %v1719 = vpop.permute.xlu0 %1718
        %1720 = vrot.lane.b32.xlu0 %v1652, 28
        %v1721 = vpop.permute.xlu0 %1720
        %1722 = vrot.lane.b32.xlu0 %v1653, 28
        %v1723 = vpop.permute.xlu0 %1722
        %1724 = vrot.lane.b32.xlu0 %v1654, 28
        %v1725 = vpop.permute.xlu0 %1724
        %1726 = vrot.lane.b32.xlu0 %v1655, 28
        %v1727 = vpop.permute.xlu0 %1726
        %1728 = vrot.lane.b32.xlu0 %v1656, 28
        %v1729 = vpop.permute.xlu0 %1728
        %1730 = vrot.lane.b32.xlu0 %v1657, 28
        %v1731 = vpop.permute.xlu0 %1730
        %1732 = vrot.lane.b32.xlu0 %v1658, 28
        %v1733 = vpop.permute.xlu0 %1732
        %1734 = vrot.lane.b32.xlu0 %v1659, 28
        %v1735 = vpop.permute.xlu0 %1734
        %1736 = vrot.lane.b32.xlu0 %v1660, 28
        %v1737 = vpop.permute.xlu0 %1736
        %1738 = vrot.lane.b32.xlu0 %v1661, 28
        %v1739 = vpop.permute.xlu0 %1738
        %1740 = vrot.lane.b32.xlu0 %v1662, 28
        %v1741 = vpop.permute.xlu0 %1740
        %1742 = vrot.lane.b32.xlu0 %v1663, 28
        %v1743 = vpop.permute.xlu0 %1742
        %1744 = vrot.lane.b32.xlu0 %v1664, 28
        %v1745 = vpop.permute.xlu0 %1744
        %1746 = vrot.lane.b32.xlu0 %v1665, 28
        %v1747 = vpop.permute.xlu0 %1746
        %1748 = vrot.lane.b32.xlu0 %v1666, 28
        %v1749 = vpop.permute.xlu0 %1748
        %1750 = vrot.lane.b32.xlu0 %v1667, 28
        %v1751 = vpop.permute.xlu0 %1750
        %1752 = vrot.lane.b32.xlu0 %v1668, 28
        %v1753 = vpop.permute.xlu0 %1752
        %1754 = vrot.lane.b32.xlu0 %v1669, 28
        %v1755 = vpop.permute.xlu0 %1754
        %1756 = vrot.lane.b32.xlu0 %v1670, 28
        %v1757 = vpop.permute.xlu0 %1756
        %1758 = vrot.lane.b32.xlu0 %v1671, 28
        %v1759 = vpop.permute.xlu0 %1758
        %1760 = vrot.lane.b32.xlu0 %v1672, 28
        %v1761 = vpop.permute.xlu0 %1760
        %1762 = vrot.lane.b32.xlu0 %v1673, 28
        %v1763 = vpop.permute.xlu0 %1762
        %1764 = vrot.lane.b32.xlu0 %v1674, 28
        %v1765 = vpop.permute.xlu0 %1764
        %1766 = vrot.lane.b32.xlu0 %v1675, 28
        %v1767 = vpop.permute.xlu0 %1766
        %1768 = vrot.lane.b32.xlu0 %v1676, 28
        %v1769 = vpop.permute.xlu0 %1768
        %1770 = vrot.lane.b32.xlu0 %v1677, 28
        %v1771 = vpop.permute.xlu0 %1770
        %1772 = vrot.lane.b32.xlu0 %v1678, 28
        %v1773 = vpop.permute.xlu0 %1772
        %1774 = vrot.lane.b32.xlu0 %v1679, 28
        %v1775 = vpop.permute.xlu0 %1774
        %v1872 = vunpack.c.l.b16 %v910
        %v1873 = vunpack.c.l.b16 %v911
        %v1874 = vunpack.c.l.b16 %v912
        %v1875 = vunpack.c.l.b16 %v913
        %v1876 = vunpack.c.l.b16 %v914
        %v1877 = vunpack.c.l.b16 %v915
        %v1878 = vunpack.c.l.b16 %v916
        %v1879 = vunpack.c.l.b16 %v917
        %v1880 = vunpack.c.l.b16 %v918
        %v1881 = vunpack.c.l.b16 %v919
        %v1882 = vunpack.c.l.b16 %v920
        %v1883 = vunpack.c.l.b16 %v921
        %v1884 = vunpack.c.l.b16 %v922
        %v1885 = vunpack.c.l.b16 %v923
        %v1886 = vunpack.c.l.b16 %v924
        %v1887 = vunpack.c.l.b16 %v925
        %v1888 = vunpack.c.l.b16 %v926
        %v1889 = vunpack.c.l.b16 %v927
        %v1890 = vunpack.c.l.b16 %v928
        %v1891 = vunpack.c.l.b16 %v929
        %v1892 = vunpack.c.l.b16 %v930
        %v1893 = vunpack.c.l.b16 %v931
        %v1894 = vunpack.c.l.b16 %v932
        %v1895 = vunpack.c.l.b16 %v933
        %v1896 = vunpack.c.l.b16 %v934
        %v1897 = vunpack.c.l.b16 %v935
        %v1898 = vunpack.c.l.b16 %v936
        %v1899 = vunpack.c.l.b16 %v937
        %v1900 = vunpack.c.l.b16 %v938
        %v1901 = vunpack.c.l.b16 %v939
        %v1902 = vunpack.c.l.b16 %v940
        %v1903 = vunpack.c.l.b16 %v941
        %v1904 = vunpack.c.l.b16 %v942
        %v1905 = vunpack.c.l.b16 %v943
        %v1906 = vunpack.c.l.b16 %v944
        %v1907 = vunpack.c.l.b16 %v945
        %v1908 = vunpack.c.l.b16 %v946
        %v1909 = vunpack.c.l.b16 %v947
        %v1910 = vunpack.c.l.b16 %v948
        %v1911 = vunpack.c.l.b16 %v949
        %v1912 = vunpack.c.l.b16 %v950
        %v1913 = vunpack.c.l.b16 %v951
        %v1914 = vunpack.c.l.b16 %v952
        %v1915 = vunpack.c.l.b16 %v953
        %v1916 = vunpack.c.l.b16 %v954
        %v1917 = vunpack.c.l.b16 %v955
        %v1918 = vunpack.c.l.b16 %v956
        %v1919 = vunpack.c.l.b16 %v957
        %v1920 = vunpack.c.l.b16 %v958
        %v1921 = vunpack.c.l.b16 %v959
        %v1922 = vunpack.c.l.b16 %v960
        %v1923 = vunpack.c.l.b16 %v961
        %v1924 = vunpack.c.l.b16 %v962
        %v1925 = vunpack.c.l.b16 %v963
        %v1926 = vunpack.c.l.b16 %v964
        %v1927 = vunpack.c.l.b16 %v965
        %v1928 = vunpack.c.l.b16 %v966
        %v1929 = vunpack.c.l.b16 %v967
        %v1930 = vunpack.c.l.b16 %v968
        %v1931 = vunpack.c.l.b16 %v969
        %v1932 = vunpack.c.l.b16 %v970
        %v1933 = vunpack.c.l.b16 %v971
        %v1934 = vunpack.c.l.b16 %v972
        %v1935 = vunpack.c.l.b16 %v973
        %v1936 = vunpack.c.l.b16 %v974
        %v1937 = vunpack.c.l.b16 %v975
        %v1938 = vunpack.c.l.b16 %v976
        %v1939 = vunpack.c.l.b16 %v977
        %v1940 = vunpack.c.l.b16 %v978
        %v1941 = vunpack.c.l.b16 %v979
        %v1942 = vunpack.c.l.b16 %v980
        %v1943 = vunpack.c.l.b16 %v981
        %v1944 = vunpack.c.l.b16 %v982
        %v1945 = vunpack.c.l.b16 %v983
        %v1946 = vunpack.c.l.b16 %v984
        %v1947 = vunpack.c.l.b16 %v985
        %v1948 = vunpack.c.l.b16 %v986
        %v1949 = vunpack.c.l.b16 %v987
        %v1950 = vunpack.c.l.b16 %v988
        %v1951 = vunpack.c.l.b16 %v989
        %v1952 = vunpack.c.l.b16 %v990
        %v1953 = vunpack.c.l.b16 %v991
        %v1954 = vunpack.c.l.b16 %v992
        %v1955 = vunpack.c.l.b16 %v993
        %v1956 = vunpack.c.l.b16 %v994
        %v1957 = vunpack.c.l.b16 %v995
        %v1958 = vunpack.c.l.b16 %v996
        %v1959 = vunpack.c.l.b16 %v997
        %v1960 = vunpack.c.l.b16 %v998
        %v1961 = vunpack.c.l.b16 %v999
        %v1962 = vunpack.c.l.b16 %v1000
        %v1963 = vunpack.c.l.b16 %v1001
        %v1964 = vunpack.c.l.b16 %v1002
        %v1965 = vunpack.c.l.b16 %v1003
        %v1966 = vunpack.c.l.b16 %v1004
        %v1967 = vunpack.c.l.b16 %v1005
        %v1968 = vpack.c.b16 %v1873, %v1872
        %v1969 = vpack.c.b16 %v1875, %v1874
        %v1970 = vpack.c.b16 %v1877, %v1876
        %v1971 = vpack.c.b16 %v1879, %v1878
        %v1972 = vpack.c.b16 %v1881, %v1880
        %v1973 = vpack.c.b16 %v1883, %v1882
        %v1974 = vpack.c.b16 %v1885, %v1884
        %v1975 = vpack.c.b16 %v1887, %v1886
        %v1976 = vpack.c.b16 %v1889, %v1888
        %v1977 = vpack.c.b16 %v1891, %v1890
        %v1978 = vpack.c.b16 %v1893, %v1892
        %v1979 = vpack.c.b16 %v1895, %v1894
        %v1980 = vpack.c.b16 %v1897, %v1896
        %v1981 = vpack.c.b16 %v1899, %v1898
        %v1982 = vpack.c.b16 %v1901, %v1900
        %v1983 = vpack.c.b16 %v1903, %v1902
        %v1984 = vpack.c.b16 %v1905, %v1904
        %v1985 = vpack.c.b16 %v1907, %v1906
        %v1986 = vpack.c.b16 %v1909, %v1908
        %v1987 = vpack.c.b16 %v1911, %v1910
        %v1988 = vpack.c.b16 %v1913, %v1912
        %v1989 = vpack.c.b16 %v1915, %v1914
        %v1990 = vpack.c.b16 %v1917, %v1916
        %v1991 = vpack.c.b16 %v1919, %v1918
        %v1992 = vpack.c.b16 %v1921, %v1920
        %v1993 = vpack.c.b16 %v1923, %v1922
        %v1994 = vpack.c.b16 %v1925, %v1924
        %v1995 = vpack.c.b16 %v1927, %v1926
        %v1996 = vpack.c.b16 %v1929, %v1928
        %v1997 = vpack.c.b16 %v1931, %v1930
        %v1998 = vpack.c.b16 %v1933, %v1932
        %v1999 = vpack.c.b16 %v1935, %v1934
        %v2000 = vpack.c.b16 %v1937, %v1936
        %v2001 = vpack.c.b16 %v1939, %v1938
        %v2002 = vpack.c.b16 %v1941, %v1940
        %v2003 = vpack.c.b16 %v1943, %v1942
        %v2004 = vpack.c.b16 %v1945, %v1944
        %v2005 = vpack.c.b16 %v1947, %v1946
        %v2006 = vpack.c.b16 %v1949, %v1948
        %v2007 = vpack.c.b16 %v1951, %v1950
        %v2008 = vpack.c.b16 %v1953, %v1952
        %v2009 = vpack.c.b16 %v1955, %v1954
        %v2010 = vpack.c.b16 %v1957, %v1956
        %v2011 = vpack.c.b16 %v1959, %v1958
        %v2012 = vpack.c.b16 %v1961, %v1960
        %v2013 = vpack.c.b16 %v1963, %v1962
        %v2014 = vpack.c.b16 %v1965, %v1964
        %v2015 = vpack.c.b16 %v1967, %v1966
        %2016 = vrot.lane.b32.xlu0 %v1968, 56
        %v2017 = vpop.permute.xlu0 %2016
        %2018 = vrot.lane.b32.xlu0 %v1969, 56
        %v2019 = vpop.permute.xlu0 %2018
        %2020 = vrot.lane.b32.xlu0 %v1970, 56
        %v2021 = vpop.permute.xlu0 %2020
        %2022 = vrot.lane.b32.xlu0 %v1971, 56
        %v2023 = vpop.permute.xlu0 %2022
        %2024 = vrot.lane.b32.xlu0 %v1972, 56
        %v2025 = vpop.permute.xlu0 %2024
        %2026 = vrot.lane.b32.xlu0 %v1973, 56
        %v2027 = vpop.permute.xlu0 %2026
        %2028 = vrot.lane.b32.xlu0 %v1974, 56
        %v2029 = vpop.permute.xlu0 %2028
        %2030 = vrot.lane.b32.xlu0 %v1975, 56
        %v2031 = vpop.permute.xlu0 %2030
        %2032 = vrot.lane.b32.xlu0 %v1976, 56
        %v2033 = vpop.permute.xlu0 %2032
        %2034 = vrot.lane.b32.xlu0 %v1977, 56
        %v2035 = vpop.permute.xlu0 %2034
        %2036 = vrot.lane.b32.xlu0 %v1978, 56
        %v2037 = vpop.permute.xlu0 %2036
        %2038 = vrot.lane.b32.xlu0 %v1979, 56
        %v2039 = vpop.permute.xlu0 %2038
        %2040 = vrot.lane.b32.xlu0 %v1980, 56
        %v2041 = vpop.permute.xlu0 %2040
        %2042 = vrot.lane.b32.xlu0 %v1981, 56
        %v2043 = vpop.permute.xlu0 %2042
        %2044 = vrot.lane.b32.xlu0 %v1982, 56
        %v2045 = vpop.permute.xlu0 %2044
        %2046 = vrot.lane.b32.xlu0 %v1983, 56
        %v2047 = vpop.permute.xlu0 %2046
        %2048 = vrot.lane.b32.xlu0 %v1984, 56
        %v2049 = vpop.permute.xlu0 %2048
        %2050 = vrot.lane.b32.xlu0 %v1985, 56
        %v2051 = vpop.permute.xlu0 %2050
        %2052 = vrot.lane.b32.xlu0 %v1986, 56
        %v2053 = vpop.permute.xlu0 %2052
        %2054 = vrot.lane.b32.xlu0 %v1987, 56
        %v2055 = vpop.permute.xlu0 %2054
        %2056 = vrot.lane.b32.xlu0 %v1988, 56
        %v2057 = vpop.permute.xlu0 %2056
        %2058 = vrot.lane.b32.xlu0 %v1989, 56
        %v2059 = vpop.permute.xlu0 %2058
        %2060 = vrot.lane.b32.xlu0 %v1990, 56
        %v2061 = vpop.permute.xlu0 %2060
        %2062 = vrot.lane.b32.xlu0 %v1991, 56
        %v2063 = vpop.permute.xlu0 %2062
        %2064 = vrot.lane.b32.xlu0 %v1992, 56
        %v2065 = vpop.permute.xlu0 %2064
        %2066 = vrot.lane.b32.xlu0 %v1993, 56
        %v2067 = vpop.permute.xlu0 %2066
        %2068 = vrot.lane.b32.xlu0 %v1994, 56
        %v2069 = vpop.permute.xlu0 %2068
        %2070 = vrot.lane.b32.xlu0 %v1995, 56
        %v2071 = vpop.permute.xlu0 %2070
        %2072 = vrot.lane.b32.xlu0 %v1996, 56
        %v2073 = vpop.permute.xlu0 %2072
        %2074 = vrot.lane.b32.xlu0 %v1997, 56
        %v2075 = vpop.permute.xlu0 %2074
        %2076 = vrot.lane.b32.xlu0 %v1998, 56
        %v2077 = vpop.permute.xlu0 %2076
        %2078 = vrot.lane.b32.xlu0 %v1999, 56
        %v2079 = vpop.permute.xlu0 %2078
        %2080 = vrot.lane.b32.xlu0 %v2000, 56
        %v2081 = vpop.permute.xlu0 %2080
        %2082 = vrot.lane.b32.xlu0 %v2001, 56
        %v2083 = vpop.permute.xlu0 %2082
        %2084 = vrot.lane.b32.xlu0 %v2002, 56
        %v2085 = vpop.permute.xlu0 %2084
        %2086 = vrot.lane.b32.xlu0 %v2003, 56
        %v2087 = vpop.permute.xlu0 %2086
        %2088 = vrot.lane.b32.xlu0 %v2004, 56
        %v2089 = vpop.permute.xlu0 %2088
        %2090 = vrot.lane.b32.xlu0 %v2005, 56
        %v2091 = vpop.permute.xlu0 %2090
        %2092 = vrot.lane.b32.xlu0 %v2006, 56
        %v2093 = vpop.permute.xlu0 %2092
        %2094 = vrot.lane.b32.xlu0 %v2007, 56
        %v2095 = vpop.permute.xlu0 %2094
        %2096 = vrot.lane.b32.xlu0 %v2008, 56
        %v2097 = vpop.permute.xlu0 %2096
        %2098 = vrot.lane.b32.xlu0 %v2009, 56
        %v2099 = vpop.permute.xlu0 %2098
        %2100 = vrot.lane.b32.xlu0 %v2010, 56
        %v2101 = vpop.permute.xlu0 %2100
        %2102 = vrot.lane.b32.xlu0 %v2011, 56
        %v2103 = vpop.permute.xlu0 %2102
        %2104 = vrot.lane.b32.xlu0 %v2012, 56
        %v2105 = vpop.permute.xlu0 %2104
        %2106 = vrot.lane.b32.xlu0 %v2013, 56
        %v2107 = vpop.permute.xlu0 %2106
        %2108 = vrot.lane.b32.xlu0 %v2014, 56
        %v2109 = vpop.permute.xlu0 %2108
        %2110 = vrot.lane.b32.xlu0 %v2015, 56
        %v2111 = vpop.permute.xlu0 %2110
        %v2208 = vunpack.c.l.b16 %v1007
        %v2209 = vunpack.c.l.b16 %v1008
        %v2210 = vunpack.c.l.b16 %v1009
        %v2211 = vunpack.c.l.b16 %v1010
        %v2212 = vunpack.c.l.b16 %v1011
        %v2213 = vunpack.c.l.b16 %v1012
        %v2214 = vunpack.c.l.b16 %v1013
        %v2215 = vunpack.c.l.b16 %v1014
        %v2216 = vunpack.c.l.b16 %v1015
        %v2217 = vunpack.c.l.b16 %v1016
        %v2218 = vunpack.c.l.b16 %v1017
        %v2219 = vunpack.c.l.b16 %v1018
        %v2220 = vunpack.c.l.b16 %v1019
        %v2221 = vunpack.c.l.b16 %v1020
        %v2222 = vunpack.c.l.b16 %v1021
        %v2223 = vunpack.c.l.b16 %v1022
        %v2224 = vunpack.c.l.b16 %v1023
        %v2225 = vunpack.c.l.b16 %v1024
        %v2226 = vunpack.c.l.b16 %v1025
        %v2227 = vunpack.c.l.b16 %v1026
        %v2228 = vunpack.c.l.b16 %v1027
        %v2229 = vunpack.c.l.b16 %v1028
        %v2230 = vunpack.c.l.b16 %v1029
        %v2231 = vunpack.c.l.b16 %v1030
        %v2232 = vunpack.c.l.b16 %v1031
        %v2233 = vunpack.c.l.b16 %v1032
        %v2234 = vunpack.c.l.b16 %v1033
        %v2235 = vunpack.c.l.b16 %v1034
        %v2236 = vunpack.c.l.b16 %v1035
        %v2237 = vunpack.c.l.b16 %v1036
        %v2238 = vunpack.c.l.b16 %v1037
        %v2239 = vunpack.c.l.b16 %v1038
        %v2240 = vunpack.c.l.b16 %v1039
        %v2241 = vunpack.c.l.b16 %v1040
        %v2242 = vunpack.c.l.b16 %v1041
        %v2243 = vunpack.c.l.b16 %v1042
        %v2244 = vunpack.c.l.b16 %v1043
        %v2245 = vunpack.c.l.b16 %v1044
        %v2246 = vunpack.c.l.b16 %v1045
        %v2247 = vunpack.c.l.b16 %v1046
        %v2248 = vunpack.c.l.b16 %v1047
        %v2249 = vunpack.c.l.b16 %v1048
        %v2250 = vunpack.c.l.b16 %v1049
        %v2251 = vunpack.c.l.b16 %v1050
        %v2252 = vunpack.c.l.b16 %v1051
        %v2253 = vunpack.c.l.b16 %v1052
        %v2254 = vunpack.c.l.b16 %v1053
        %v2255 = vunpack.c.l.b16 %v1054
        %v2256 = vunpack.c.l.b16 %v1055
        %v2257 = vunpack.c.l.b16 %v1056
        %v2258 = vunpack.c.l.b16 %v1057
        %v2259 = vunpack.c.l.b16 %v1058
        %v2260 = vunpack.c.l.b16 %v1059
        %v2261 = vunpack.c.l.b16 %v1060
        %v2262 = vunpack.c.l.b16 %v1061
        %v2263 = vunpack.c.l.b16 %v1062
        %v2264 = vunpack.c.l.b16 %v1063
        %v2265 = vunpack.c.l.b16 %v1064
        %v2266 = vunpack.c.l.b16 %v1065
        %v2267 = vunpack.c.l.b16 %v1066
        %v2268 = vunpack.c.l.b16 %v1067
        %v2269 = vunpack.c.l.b16 %v1068
        %v2270 = vunpack.c.l.b16 %v1069
        %v2271 = vunpack.c.l.b16 %v1070
        %v2272 = vunpack.c.l.b16 %v1071
        %v2273 = vunpack.c.l.b16 %v1072
        %v2274 = vunpack.c.l.b16 %v1073
        %v2275 = vunpack.c.l.b16 %v1074
        %v2276 = vunpack.c.l.b16 %v1075
        %v2277 = vunpack.c.l.b16 %v1076
        %v2278 = vunpack.c.l.b16 %v1077
        %v2279 = vunpack.c.l.b16 %v1078
        %v2280 = vunpack.c.l.b16 %v1079
        %v2281 = vunpack.c.l.b16 %v1080
        %v2282 = vunpack.c.l.b16 %v1081
        %v2283 = vunpack.c.l.b16 %v1082
        %v2284 = vunpack.c.l.b16 %v1083
        %v2285 = vunpack.c.l.b16 %v1084
        %v2286 = vunpack.c.l.b16 %v1085
        %v2287 = vunpack.c.l.b16 %v1086
        %v2288 = vunpack.c.l.b16 %v1087
        %v2289 = vunpack.c.l.b16 %v1088
        %v2290 = vunpack.c.l.b16 %v1089
        %v2291 = vunpack.c.l.b16 %v1090
        %v2292 = vunpack.c.l.b16 %v1091
        %v2293 = vunpack.c.l.b16 %v1092
        %v2294 = vunpack.c.l.b16 %v1093
        %v2295 = vunpack.c.l.b16 %v1094
        %v2296 = vunpack.c.l.b16 %v1095
        %v2297 = vunpack.c.l.b16 %v1096
        %v2298 = vunpack.c.l.b16 %v1097
        %v2299 = vunpack.c.l.b16 %v1098
        %v2300 = vunpack.c.l.b16 %v1099
        %v2301 = vunpack.c.l.b16 %v1100
        %v2302 = vunpack.c.l.b16 %v1101
        %v2303 = vunpack.c.l.b16 %v1102
        %v2304 = vpack.c.b16 %v2209, %v2208
        %v2305 = vpack.c.b16 %v2211, %v2210
        %v2306 = vpack.c.b16 %v2213, %v2212
        %v2307 = vpack.c.b16 %v2215, %v2214
        %v2308 = vpack.c.b16 %v2217, %v2216
        %v2309 = vpack.c.b16 %v2219, %v2218
        %v2310 = vpack.c.b16 %v2221, %v2220
        %v2311 = vpack.c.b16 %v2223, %v2222
        %v2312 = vpack.c.b16 %v2225, %v2224
        %v2313 = vpack.c.b16 %v2227, %v2226
        %v2314 = vpack.c.b16 %v2229, %v2228
        %v2315 = vpack.c.b16 %v2231, %v2230
        %v2316 = vpack.c.b16 %v2233, %v2232
        %v2317 = vpack.c.b16 %v2235, %v2234
        %v2318 = vpack.c.b16 %v2237, %v2236
        %v2319 = vpack.c.b16 %v2239, %v2238
        %v2320 = vpack.c.b16 %v2241, %v2240
        %v2321 = vpack.c.b16 %v2243, %v2242
        %v2322 = vpack.c.b16 %v2245, %v2244
        %v2323 = vpack.c.b16 %v2247, %v2246
        %v2324 = vpack.c.b16 %v2249, %v2248
        %v2325 = vpack.c.b16 %v2251, %v2250
        %v2326 = vpack.c.b16 %v2253, %v2252
        %v2327 = vpack.c.b16 %v2255, %v2254
        %v2328 = vpack.c.b16 %v2257, %v2256
        %v2329 = vpack.c.b16 %v2259, %v2258
        %v2330 = vpack.c.b16 %v2261, %v2260
        %v2331 = vpack.c.b16 %v2263, %v2262
        %v2332 = vpack.c.b16 %v2265, %v2264
        %v2333 = vpack.c.b16 %v2267, %v2266
        %v2334 = vpack.c.b16 %v2269, %v2268
        %v2335 = vpack.c.b16 %v2271, %v2270
        %v2336 = vpack.c.b16 %v2273, %v2272
        %v2337 = vpack.c.b16 %v2275, %v2274
        %v2338 = vpack.c.b16 %v2277, %v2276
        %v2339 = vpack.c.b16 %v2279, %v2278
        %v2340 = vpack.c.b16 %v2281, %v2280
        %v2341 = vpack.c.b16 %v2283, %v2282
        %v2342 = vpack.c.b16 %v2285, %v2284
        %v2343 = vpack.c.b16 %v2287, %v2286
        %v2344 = vpack.c.b16 %v2289, %v2288
        %v2345 = vpack.c.b16 %v2291, %v2290
        %v2346 = vpack.c.b16 %v2293, %v2292
        %v2347 = vpack.c.b16 %v2295, %v2294
        %v2348 = vpack.c.b16 %v2297, %v2296
        %v2349 = vpack.c.b16 %v2299, %v2298
        %v2350 = vpack.c.b16 %v2301, %v2300
        %v2351 = vpack.c.b16 %v2303, %v2302
        %2352 = vrot.lane.b32.xlu0 %v2304, 84
        %v2353 = vpop.permute.xlu0 %2352
        %2354 = vrot.lane.b32.xlu0 %v2305, 84
        %v2355 = vpop.permute.xlu0 %2354
        %2356 = vrot.lane.b32.xlu0 %v2306, 84
        %v2357 = vpop.permute.xlu0 %2356
        %2358 = vrot.lane.b32.xlu0 %v2307, 84
        %v2359 = vpop.permute.xlu0 %2358
        %2360 = vrot.lane.b32.xlu0 %v2308, 84
        %v2361 = vpop.permute.xlu0 %2360
        %2362 = vrot.lane.b32.xlu0 %v2309, 84
        %v2363 = vpop.permute.xlu0 %2362
        %2364 = vrot.lane.b32.xlu0 %v2310, 84
        %v2365 = vpop.permute.xlu0 %2364
        %2366 = vrot.lane.b32.xlu0 %v2311, 84
        %v2367 = vpop.permute.xlu0 %2366
        %2368 = vrot.lane.b32.xlu0 %v2312, 84
        %v2369 = vpop.permute.xlu0 %2368
        %2370 = vrot.lane.b32.xlu0 %v2313, 84
        %v2371 = vpop.permute.xlu0 %2370
        %2372 = vrot.lane.b32.xlu0 %v2314, 84
        %v2373 = vpop.permute.xlu0 %2372
        %2374 = vrot.lane.b32.xlu0 %v2315, 84
        %v2375 = vpop.permute.xlu0 %2374
        %2376 = vrot.lane.b32.xlu0 %v2316, 84
        %v2377 = vpop.permute.xlu0 %2376
        %2378 = vrot.lane.b32.xlu0 %v2317, 84
        %v2379 = vpop.permute.xlu0 %2378
        %2380 = vrot.lane.b32.xlu0 %v2318, 84
        %v2381 = vpop.permute.xlu0 %2380
        %2382 = vrot.lane.b32.xlu0 %v2319, 84
        %v2383 = vpop.permute.xlu0 %2382
        %2384 = vrot.lane.b32.xlu0 %v2320, 84
        %v2385 = vpop.permute.xlu0 %2384
        %2386 = vrot.lane.b32.xlu0 %v2321, 84
        %v2387 = vpop.permute.xlu0 %2386
        %2388 = vrot.lane.b32.xlu0 %v2322, 84
        %v2389 = vpop.permute.xlu0 %2388
        %2390 = vrot.lane.b32.xlu0 %v2323, 84
        %v2391 = vpop.permute.xlu0 %2390
        %2392 = vrot.lane.b32.xlu0 %v2324, 84
        %v2393 = vpop.permute.xlu0 %2392
        %2394 = vrot.lane.b32.xlu0 %v2325, 84
        %v2395 = vpop.permute.xlu0 %2394
        %2396 = vrot.lane.b32.xlu0 %v2326, 84
        %v2397 = vpop.permute.xlu0 %2396
        %2398 = vrot.lane.b32.xlu0 %v2327, 84
        %v2399 = vpop.permute.xlu0 %2398
        %2400 = vrot.lane.b32.xlu0 %v2328, 84
        %v2401 = vpop.permute.xlu0 %2400
        %2402 = vrot.lane.b32.xlu0 %v2329, 84
        %v2403 = vpop.permute.xlu0 %2402
        %2404 = vrot.lane.b32.xlu0 %v2330, 84
        %v2405 = vpop.permute.xlu0 %2404
        %2406 = vrot.lane.b32.xlu0 %v2331, 84
        %v2407 = vpop.permute.xlu0 %2406
        %2408 = vrot.lane.b32.xlu0 %v2332, 84
        %v2409 = vpop.permute.xlu0 %2408
        %2410 = vrot.lane.b32.xlu0 %v2333, 84
        %v2411 = vpop.permute.xlu0 %2410
        %2412 = vrot.lane.b32.xlu0 %v2334, 84
        %v2413 = vpop.permute.xlu0 %2412
        %2414 = vrot.lane.b32.xlu0 %v2335, 84
        %v2415 = vpop.permute.xlu0 %2414
        %2416 = vrot.lane.b32.xlu0 %v2336, 84
        %v2417 = vpop.permute.xlu0 %2416
        %2418 = vrot.lane.b32.xlu0 %v2337, 84
        %v2419 = vpop.permute.xlu0 %2418
        %2420 = vrot.lane.b32.xlu0 %v2338, 84
        %v2421 = vpop.permute.xlu0 %2420
        %2422 = vrot.lane.b32.xlu0 %v2339, 84
        %v2423 = vpop.permute.xlu0 %2422
        %2424 = vrot.lane.b32.xlu0 %v2340, 84
        %v2425 = vpop.permute.xlu0 %2424
        %2426 = vrot.lane.b32.xlu0 %v2341, 84
        %v2427 = vpop.permute.xlu0 %2426
        %2428 = vrot.lane.b32.xlu0 %v2342, 84
        %v2429 = vpop.permute.xlu0 %2428
        %2430 = vrot.lane.b32.xlu0 %v2343, 84
        %v2431 = vpop.permute.xlu0 %2430
        %2432 = vrot.lane.b32.xlu0 %v2344, 84
        %v2433 = vpop.permute.xlu0 %2432
        %2434 = vrot.lane.b32.xlu0 %v2345, 84
        %v2435 = vpop.permute.xlu0 %2434
        %2436 = vrot.lane.b32.xlu0 %v2346, 84
        %v2437 = vpop.permute.xlu0 %2436
        %2438 = vrot.lane.b32.xlu0 %v2347, 84
        %v2439 = vpop.permute.xlu0 %2438
        %2440 = vrot.lane.b32.xlu0 %v2348, 84
        %v2441 = vpop.permute.xlu0 %2440
        %2442 = vrot.lane.b32.xlu0 %v2349, 84
        %v2443 = vpop.permute.xlu0 %2442
        %2444 = vrot.lane.b32.xlu0 %v2350, 84
        %v2445 = vpop.permute.xlu0 %2444
        %2446 = vrot.lane.b32.xlu0 %v2351, 84
        %v2447 = vpop.permute.xlu0 %2446
        %v2544 = vunpack.c.l.b16 %v1104
        %v2545 = vunpack.c.l.b16 %v1105
        %v2546 = vunpack.c.l.b16 %v1106
        %v2547 = vunpack.c.l.b16 %v1107
        %v2548 = vunpack.c.l.b16 %v1108
        %v2549 = vunpack.c.l.b16 %v1109
        %v2550 = vunpack.c.l.b16 %v1110
        %v2551 = vunpack.c.l.b16 %v1111
        %v2552 = vunpack.c.l.b16 %v1112
        %v2553 = vunpack.c.l.b16 %v1113
        %v2554 = vunpack.c.l.b16 %v1114
        %v2555 = vunpack.c.l.b16 %v1115
        %v2556 = vunpack.c.l.b16 %v1116
        %v2557 = vunpack.c.l.b16 %v1117
        %v2558 = vunpack.c.l.b16 %v1118
        %v2559 = vunpack.c.l.b16 %v1119
        %v2560 = vunpack.c.l.b16 %v1120
        %v2561 = vunpack.c.l.b16 %v1121
        %v2562 = vunpack.c.l.b16 %v1122
        %v2563 = vunpack.c.l.b16 %v1123
        %v2564 = vunpack.c.l.b16 %v1124
        %v2565 = vunpack.c.l.b16 %v1125
        %v2566 = vunpack.c.l.b16 %v1126
        %v2567 = vunpack.c.l.b16 %v1127
        %v2568 = vunpack.c.l.b16 %v1128
        %v2569 = vunpack.c.l.b16 %v1129
        %v2570 = vunpack.c.l.b16 %v1130
        %v2571 = vunpack.c.l.b16 %v1131
        %v2572 = vunpack.c.l.b16 %v1132
        %v2573 = vunpack.c.l.b16 %v1133
        %v2574 = vunpack.c.l.b16 %v1134
        %v2575 = vunpack.c.l.b16 %v1135
        %v2576 = vunpack.c.l.b16 %v1136
        %v2577 = vunpack.c.l.b16 %v1137
        %v2578 = vunpack.c.l.b16 %v1138
        %v2579 = vunpack.c.l.b16 %v1139
        %v2580 = vunpack.c.l.b16 %v1140
        %v2581 = vunpack.c.l.b16 %v1141
        %v2582 = vunpack.c.l.b16 %v1142
        %v2583 = vunpack.c.l.b16 %v1143
        %v2584 = vunpack.c.l.b16 %v1144
        %v2585 = vunpack.c.l.b16 %v1145
        %v2586 = vunpack.c.l.b16 %v1146
        %v2587 = vunpack.c.l.b16 %v1147
        %v2588 = vunpack.c.l.b16 %v1148
        %v2589 = vunpack.c.l.b16 %v1149
        %v2590 = vunpack.c.l.b16 %v1150
        %v2591 = vunpack.c.l.b16 %v1151
        %v2592 = vunpack.c.l.b16 %v1152
        %v2593 = vunpack.c.l.b16 %v1153
        %v2594 = vunpack.c.l.b16 %v1154
        %v2595 = vunpack.c.l.b16 %v1155
        %v2596 = vunpack.c.l.b16 %v1156
        %v2597 = vunpack.c.l.b16 %v1157
        %v2598 = vunpack.c.l.b16 %v1158
        %v2599 = vunpack.c.l.b16 %v1159
        %v2600 = vunpack.c.l.b16 %v1160
        %v2601 = vunpack.c.l.b16 %v1161
        %v2602 = vunpack.c.l.b16 %v1162
        %v2603 = vunpack.c.l.b16 %v1163
        %v2604 = vunpack.c.l.b16 %v1164
        %v2605 = vunpack.c.l.b16 %v1165
        %v2606 = vunpack.c.l.b16 %v1166
        %v2607 = vunpack.c.l.b16 %v1167
        %v2608 = vunpack.c.l.b16 %v1168
        %v2609 = vunpack.c.l.b16 %v1169
        %v2610 = vunpack.c.l.b16 %v1170
        %v2611 = vunpack.c.l.b16 %v1171
        %v2612 = vunpack.c.l.b16 %v1172
        %v2613 = vunpack.c.l.b16 %v1173
        %v2614 = vunpack.c.l.b16 %v1174
        %v2615 = vunpack.c.l.b16 %v1175
        %v2616 = vunpack.c.l.b16 %v1176
        %v2617 = vunpack.c.l.b16 %v1177
        %v2618 = vunpack.c.l.b16 %v1178
        %v2619 = vunpack.c.l.b16 %v1179
        %v2620 = vunpack.c.l.b16 %v1180
        %v2621 = vunpack.c.l.b16 %v1181
        %v2622 = vunpack.c.l.b16 %v1182
        %v2623 = vunpack.c.l.b16 %v1183
        %v2624 = vunpack.c.l.b16 %v1184
        %v2625 = vunpack.c.l.b16 %v1185
        %v2626 = vunpack.c.l.b16 %v1186
        %v2627 = vunpack.c.l.b16 %v1187
        %v2628 = vunpack.c.l.b16 %v1188
        %v2629 = vunpack.c.l.b16 %v1189
        %v2630 = vunpack.c.l.b16 %v1190
        %v2631 = vunpack.c.l.b16 %v1191
        %v2632 = vunpack.c.l.b16 %v1192
        %v2633 = vunpack.c.l.b16 %v1193
        %v2634 = vunpack.c.l.b16 %v1194
        %v2635 = vunpack.c.l.b16 %v1195
        %v2636 = vunpack.c.l.b16 %v1196
        %v2637 = vunpack.c.l.b16 %v1197
        %v2638 = vunpack.c.l.b16 %v1198
        %v2639 = vunpack.c.l.b16 %v1199
        %v2640 = vpack.c.b16 %v2545, %v2544
        %v2641 = vpack.c.b16 %v2547, %v2546
        %v2642 = vpack.c.b16 %v2549, %v2548
        %v2643 = vpack.c.b16 %v2551, %v2550
        %v2644 = vpack.c.b16 %v2553, %v2552
        %v2645 = vpack.c.b16 %v2555, %v2554
        %v2646 = vpack.c.b16 %v2557, %v2556
        %v2647 = vpack.c.b16 %v2559, %v2558
        %v2648 = vpack.c.b16 %v2561, %v2560
        %v2649 = vpack.c.b16 %v2563, %v2562
        %v2650 = vpack.c.b16 %v2565, %v2564
        %v2651 = vpack.c.b16 %v2567, %v2566
        %v2652 = vpack.c.b16 %v2569, %v2568
        %v2653 = vpack.c.b16 %v2571, %v2570
        %v2654 = vpack.c.b16 %v2573, %v2572
        %v2655 = vpack.c.b16 %v2575, %v2574
        %v2656 = vpack.c.b16 %v2577, %v2576
        %v2657 = vpack.c.b16 %v2579, %v2578
        %v2658 = vpack.c.b16 %v2581, %v2580
        %v2659 = vpack.c.b16 %v2583, %v2582
        %v2660 = vpack.c.b16 %v2585, %v2584
        %v2661 = vpack.c.b16 %v2587, %v2586
        %v2662 = vpack.c.b16 %v2589, %v2588
        %v2663 = vpack.c.b16 %v2591, %v2590
        %v2664 = vpack.c.b16 %v2593, %v2592
        %v2665 = vpack.c.b16 %v2595, %v2594
        %v2666 = vpack.c.b16 %v2597, %v2596
        %v2667 = vpack.c.b16 %v2599, %v2598
        %v2668 = vpack.c.b16 %v2601, %v2600
        %v2669 = vpack.c.b16 %v2603, %v2602
        %v2670 = vpack.c.b16 %v2605, %v2604
        %v2671 = vpack.c.b16 %v2607, %v2606
        %v2672 = vpack.c.b16 %v2609, %v2608
        %v2673 = vpack.c.b16 %v2611, %v2610
        %v2674 = vpack.c.b16 %v2613, %v2612
        %v2675 = vpack.c.b16 %v2615, %v2614
        %v2676 = vpack.c.b16 %v2617, %v2616
        %v2677 = vpack.c.b16 %v2619, %v2618
        %v2678 = vpack.c.b16 %v2621, %v2620
        %v2679 = vpack.c.b16 %v2623, %v2622
        %v2680 = vpack.c.b16 %v2625, %v2624
        %v2681 = vpack.c.b16 %v2627, %v2626
        %v2682 = vpack.c.b16 %v2629, %v2628
        %v2683 = vpack.c.b16 %v2631, %v2630
        %v2684 = vpack.c.b16 %v2633, %v2632
        %v2685 = vpack.c.b16 %v2635, %v2634
        %v2686 = vpack.c.b16 %v2637, %v2636
        %v2687 = vpack.c.b16 %v2639, %v2638
        %2688 = vrot.lane.b32.xlu0 %v2640, 112
        %v2689 = vpop.permute.xlu0 %2688
        %2690 = vrot.lane.b32.xlu0 %v2641, 112
        %v2691 = vpop.permute.xlu0 %2690
        %2692 = vrot.lane.b32.xlu0 %v2642, 112
        %v2693 = vpop.permute.xlu0 %2692
        %2694 = vrot.lane.b32.xlu0 %v2643, 112
        %v2695 = vpop.permute.xlu0 %2694
        %2696 = vrot.lane.b32.xlu0 %v2644, 112
        %v2697 = vpop.permute.xlu0 %2696
        %2698 = vrot.lane.b32.xlu0 %v2645, 112
        %v2699 = vpop.permute.xlu0 %2698
        %2700 = vrot.lane.b32.xlu0 %v2646, 112
        %v2701 = vpop.permute.xlu0 %2700
        %2702 = vrot.lane.b32.xlu0 %v2647, 112
        %v2703 = vpop.permute.xlu0 %2702
        %2704 = vrot.lane.b32.xlu0 %v2648, 112
        %v2705 = vpop.permute.xlu0 %2704
        %2706 = vrot.lane.b32.xlu0 %v2649, 112
        %v2707 = vpop.permute.xlu0 %2706
        %2708 = vrot.lane.b32.xlu0 %v2650, 112
        %v2709 = vpop.permute.xlu0 %2708
        %2710 = vrot.lane.b32.xlu0 %v2651, 112
        %v2711 = vpop.permute.xlu0 %2710
        %2712 = vrot.lane.b32.xlu0 %v2652, 112
        %v2713 = vpop.permute.xlu0 %2712
        %2714 = vrot.lane.b32.xlu0 %v2653, 112
        %v2715 = vpop.permute.xlu0 %2714
        %2716 = vrot.lane.b32.xlu0 %v2654, 112
        %v2717 = vpop.permute.xlu0 %2716
        %2718 = vrot.lane.b32.xlu0 %v2655, 112
        %v2719 = vpop.permute.xlu0 %2718
        %2720 = vrot.lane.b32.xlu0 %v2656, 112
        %v2721 = vpop.permute.xlu0 %2720
        %2722 = vrot.lane.b32.xlu0 %v2657, 112
        %v2723 = vpop.permute.xlu0 %2722
        %2724 = vrot.lane.b32.xlu0 %v2658, 112
        %v2725 = vpop.permute.xlu0 %2724
        %2726 = vrot.lane.b32.xlu0 %v2659, 112
        %v2727 = vpop.permute.xlu0 %2726
        %2728 = vrot.lane.b32.xlu0 %v2660, 112
        %v2729 = vpop.permute.xlu0 %2728
        %2730 = vrot.lane.b32.xlu0 %v2661, 112
        %v2731 = vpop.permute.xlu0 %2730
        %2732 = vrot.lane.b32.xlu0 %v2662, 112
        %v2733 = vpop.permute.xlu0 %2732
        %2734 = vrot.lane.b32.xlu0 %v2663, 112
        %v2735 = vpop.permute.xlu0 %2734
        %2736 = vrot.lane.b32.xlu0 %v2664, 112
        %v2737 = vpop.permute.xlu0 %2736
        %2738 = vrot.lane.b32.xlu0 %v2665, 112
        %v2739 = vpop.permute.xlu0 %2738
        %2740 = vrot.lane.b32.xlu0 %v2666, 112
        %v2741 = vpop.permute.xlu0 %2740
        %2742 = vrot.lane.b32.xlu0 %v2667, 112
        %v2743 = vpop.permute.xlu0 %2742
        %2744 = vrot.lane.b32.xlu0 %v2668, 112
        %v2745 = vpop.permute.xlu0 %2744
        %2746 = vrot.lane.b32.xlu0 %v2669, 112
        %v2747 = vpop.permute.xlu0 %2746
        %2748 = vrot.lane.b32.xlu0 %v2670, 112
        %v2749 = vpop.permute.xlu0 %2748
        %2750 = vrot.lane.b32.xlu0 %v2671, 112
        %v2751 = vpop.permute.xlu0 %2750
        %2752 = vrot.lane.b32.xlu0 %v2672, 112
        %v2753 = vpop.permute.xlu0 %2752
        %2754 = vrot.lane.b32.xlu0 %v2673, 112
        %v2755 = vpop.permute.xlu0 %2754
        %2756 = vrot.lane.b32.xlu0 %v2674, 112
        %v2757 = vpop.permute.xlu0 %2756
        %2758 = vrot.lane.b32.xlu0 %v2675, 112
        %v2759 = vpop.permute.xlu0 %2758
        %2760 = vrot.lane.b32.xlu0 %v2676, 112
        %v2761 = vpop.permute.xlu0 %2760
        %2762 = vrot.lane.b32.xlu0 %v2677, 112
        %v2763 = vpop.permute.xlu0 %2762
        %2764 = vrot.lane.b32.xlu0 %v2678, 112
        %v2765 = vpop.permute.xlu0 %2764
        %2766 = vrot.lane.b32.xlu0 %v2679, 112
        %v2767 = vpop.permute.xlu0 %2766
        %2768 = vrot.lane.b32.xlu0 %v2680, 112
        %v2769 = vpop.permute.xlu0 %2768
        %2770 = vrot.lane.b32.xlu0 %v2681, 112
        %v2771 = vpop.permute.xlu0 %2770
        %2772 = vrot.lane.b32.xlu0 %v2682, 112
        %v2773 = vpop.permute.xlu0 %2772
        %2774 = vrot.lane.b32.xlu0 %v2683, 112
        %v2775 = vpop.permute.xlu0 %2774
        %2776 = vrot.lane.b32.xlu0 %v2684, 112
        %v2777 = vpop.permute.xlu0 %2776
        %2778 = vrot.lane.b32.xlu0 %v2685, 112
        %v2779 = vpop.permute.xlu0 %2778
        %2780 = vrot.lane.b32.xlu0 %v2686, 112
        %v2781 = vpop.permute.xlu0 %2780
        %2782 = vrot.lane.b32.xlu0 %v2687, 112
        %v2783 = vpop.permute.xlu0 %2782
        %vm2784 = vcmask 228352
        %v2787 = vsel %vm2784, %v1392, %v1681
        %v2790 = vsel %vm2784, %v1393, %v1683
        %v2793 = vsel %vm2784, %v1394, %v1685
        %v2796 = vsel %vm2784, %v1395, %v1687
        %v2799 = vsel %vm2784, %v1396, %v1689
        %v2802 = vsel %vm2784, %v1397, %v1691
        %v2805 = vsel %vm2784, %v1398, %v1693
        %v2808 = vsel %vm2784, %v1399, %v1695
        %v2811 = vsel %vm2784, %v1400, %v1697
        %v2814 = vsel %vm2784, %v1401, %v1699
        %v2817 = vsel %vm2784, %v1402, %v1701
        %v2820 = vsel %vm2784, %v1403, %v1703
        %v2823 = vsel %vm2784, %v1404, %v1705
        %v2826 = vsel %vm2784, %v1405, %v1707
        %v2829 = vsel %vm2784, %v1406, %v1709
        %v2832 = vsel %vm2784, %v1407, %v1711
        %v2835 = vsel %vm2784, %v1408, %v1713
        %v2838 = vsel %vm2784, %v1409, %v1715
        %v2841 = vsel %vm2784, %v1410, %v1717
        %v2844 = vsel %vm2784, %v1411, %v1719
        %v2847 = vsel %vm2784, %v1412, %v1721
        %v2850 = vsel %vm2784, %v1413, %v1723
        %v2853 = vsel %vm2784, %v1414, %v1725
        %v2856 = vsel %vm2784, %v1415, %v1727
        %v2859 = vsel %vm2784, %v1416, %v1729
        %v2862 = vsel %vm2784, %v1417, %v1731
        %v2865 = vsel %vm2784, %v1418, %v1733
        %v2868 = vsel %vm2784, %v1419, %v1735
        %v2871 = vsel %vm2784, %v1420, %v1737
        %v2874 = vsel %vm2784, %v1421, %v1739
        %v2877 = vsel %vm2784, %v1422, %v1741
        %v2880 = vsel %vm2784, %v1423, %v1743
        %v2883 = vsel %vm2784, %v1424, %v1745
        %v2886 = vsel %vm2784, %v1425, %v1747
        %v2889 = vsel %vm2784, %v1426, %v1749
        %v2892 = vsel %vm2784, %v1427, %v1751
        %v2895 = vsel %vm2784, %v1428, %v1753
        %v2898 = vsel %vm2784, %v1429, %v1755
        %v2901 = vsel %vm2784, %v1430, %v1757
        %v2904 = vsel %vm2784, %v1431, %v1759
        %v2907 = vsel %vm2784, %v1432, %v1761
        %v2910 = vsel %vm2784, %v1433, %v1763
        %v2913 = vsel %vm2784, %v1434, %v1765
        %v2916 = vsel %vm2784, %v1435, %v1767
        %v2919 = vsel %vm2784, %v1436, %v1769
        %v2922 = vsel %vm2784, %v1437, %v1771
        %v2925 = vsel %vm2784, %v1438, %v1773
        %v2928 = vsel %vm2784, %v1439, %v1775
        %vm2929 = vcmask 457728
        %v2931 = vsel %vm2929, %v2787, %v2017
        %v2933 = vsel %vm2929, %v2790, %v2019
        %v2935 = vsel %vm2929, %v2793, %v2021
        %v2937 = vsel %vm2929, %v2796, %v2023
        %v2939 = vsel %vm2929, %v2799, %v2025
        %v2941 = vsel %vm2929, %v2802, %v2027
        %v2943 = vsel %vm2929, %v2805, %v2029
        %v2945 = vsel %vm2929, %v2808, %v2031
        %v2947 = vsel %vm2929, %v2811, %v2033
        %v2949 = vsel %vm2929, %v2814, %v2035
        %v2951 = vsel %vm2929, %v2817, %v2037
        %v2953 = vsel %vm2929, %v2820, %v2039
        %v2955 = vsel %vm2929, %v2823, %v2041
        %v2957 = vsel %vm2929, %v2826, %v2043
        %v2959 = vsel %vm2929, %v2829, %v2045
        %v2961 = vsel %vm2929, %v2832, %v2047
        %v2963 = vsel %vm2929, %v2835, %v2049
        %v2965 = vsel %vm2929, %v2838, %v2051
        %v2967 = vsel %vm2929, %v2841, %v2053
        %v2969 = vsel %vm2929, %v2844, %v2055
        %v2971 = vsel %vm2929, %v2847, %v2057
        %v2973 = vsel %vm2929, %v2850, %v2059
        %v2975 = vsel %vm2929, %v2853, %v2061
        %v2977 = vsel %vm2929, %v2856, %v2063
        %v2979 = vsel %vm2929, %v2859, %v2065
        %v2981 = vsel %vm2929, %v2862, %v2067
        %v2983 = vsel %vm2929, %v2865, %v2069
        %v2985 = vsel %vm2929, %v2868, %v2071
        %v2987 = vsel %vm2929, %v2871, %v2073
        %v2989 = vsel %vm2929, %v2874, %v2075
        %v2991 = vsel %vm2929, %v2877, %v2077
        %v2993 = vsel %vm2929, %v2880, %v2079
        %v2995 = vsel %vm2929, %v2883, %v2081
        %v2997 = vsel %vm2929, %v2886, %v2083
        %v2999 = vsel %vm2929, %v2889, %v2085
        %v3001 = vsel %vm2929, %v2892, %v2087
        %v3003 = vsel %vm2929, %v2895, %v2089
        %v3005 = vsel %vm2929, %v2898, %v2091
        %v3007 = vsel %vm2929, %v2901, %v2093
        %v3009 = vsel %vm2929, %v2904, %v2095
        %v3011 = vsel %vm2929, %v2907, %v2097
        %v3013 = vsel %vm2929, %v2910, %v2099
        %v3015 = vsel %vm2929, %v2913, %v2101
        %v3017 = vsel %vm2929, %v2916, %v2103
        %v3019 = vsel %vm2929, %v2919, %v2105
        %v3021 = vsel %vm2929, %v2922, %v2107
        %v3023 = vsel %vm2929, %v2925, %v2109
        %v3025 = vsel %vm2929, %v2928, %v2111
        %vm3026 = vcmask 687104
        %v3028 = vsel %vm3026, %v2931, %v2353
        %v3030 = vsel %vm3026, %v2933, %v2355
        %v3032 = vsel %vm3026, %v2935, %v2357
        %v3034 = vsel %vm3026, %v2937, %v2359
        %v3036 = vsel %vm3026, %v2939, %v2361
        %v3038 = vsel %vm3026, %v2941, %v2363
        %v3040 = vsel %vm3026, %v2943, %v2365
        %v3042 = vsel %vm3026, %v2945, %v2367
        %v3044 = vsel %vm3026, %v2947, %v2369
        %v3046 = vsel %vm3026, %v2949, %v2371
        %v3048 = vsel %vm3026, %v2951, %v2373
        %v3050 = vsel %vm3026, %v2953, %v2375
        %v3052 = vsel %vm3026, %v2955, %v2377
        %v3054 = vsel %vm3026, %v2957, %v2379
        %v3056 = vsel %vm3026, %v2959, %v2381
        %v3058 = vsel %vm3026, %v2961, %v2383
        %v3060 = vsel %vm3026, %v2963, %v2385
        %v3062 = vsel %vm3026, %v2965, %v2387
        %v3064 = vsel %vm3026, %v2967, %v2389
        %v3066 = vsel %vm3026, %v2969, %v2391
        %v3068 = vsel %vm3026, %v2971, %v2393
        %v3070 = vsel %vm3026, %v2973, %v2395
        %v3072 = vsel %vm3026, %v2975, %v2397
        %v3074 = vsel %vm3026, %v2977, %v2399
        %v3076 = vsel %vm3026, %v2979, %v2401
        %v3078 = vsel %vm3026, %v2981, %v2403
        %v3080 = vsel %vm3026, %v2983, %v2405
        %v3082 = vsel %vm3026, %v2985, %v2407
        %v3084 = vsel %vm3026, %v2987, %v2409
        %v3086 = vsel %vm3026, %v2989, %v2411
        %v3088 = vsel %vm3026, %v2991, %v2413
        %v3090 = vsel %vm3026, %v2993, %v2415
        %v3092 = vsel %vm3026, %v2995, %v2417
        %v3094 = vsel %vm3026, %v2997, %v2419
        %v3096 = vsel %vm3026, %v2999, %v2421
        %v3098 = vsel %vm3026, %v3001, %v2423
        %v3100 = vsel %vm3026, %v3003, %v2425
        %v3102 = vsel %vm3026, %v3005, %v2427
        %v3104 = vsel %vm3026, %v3007, %v2429
        %v3106 = vsel %vm3026, %v3009, %v2431
        %v3108 = vsel %vm3026, %v3011, %v2433
        %v3110 = vsel %vm3026, %v3013, %v2435
        %v3112 = vsel %vm3026, %v3015, %v2437
        %v3114 = vsel %vm3026, %v3017, %v2439
        %v3116 = vsel %vm3026, %v3019, %v2441
        %v3118 = vsel %vm3026, %v3021, %v2443
        %v3120 = vsel %vm3026, %v3023, %v2445
        %v3122 = vsel %vm3026, %v3025, %v2447
        %vm3123 = vcmask 916480
        %v3125 = vsel %vm3123, %v3028, %v2689
        %v3128 = vsel %vm3123, %v3030, %v2691
        %v3131 = vsel %vm3123, %v3032, %v2693
        %v3134 = vsel %vm3123, %v3034, %v2695
        %v3137 = vsel %vm3123, %v3036, %v2697
        %v3140 = vsel %vm3123, %v3038, %v2699
        %v3143 = vsel %vm3123, %v3040, %v2701
        %v3146 = vsel %vm3123, %v3042, %v2703
        %v3149 = vsel %vm3123, %v3044, %v2705
        %v3152 = vsel %vm3123, %v3046, %v2707
        %v3155 = vsel %vm3123, %v3048, %v2709
        %v3158 = vsel %vm3123, %v3050, %v2711
        %v3161 = vsel %vm3123, %v3052, %v2713
        %v3164 = vsel %vm3123, %v3054, %v2715
        %v3167 = vsel %vm3123, %v3056, %v2717
        %v3170 = vsel %vm3123, %v3058, %v2719
        %v3173 = vsel %vm3123, %v3060, %v2721
        %v3176 = vsel %vm3123, %v3062, %v2723
        %v3179 = vsel %vm3123, %v3064, %v2725
        %v3182 = vsel %vm3123, %v3066, %v2727
        %v3185 = vsel %vm3123, %v3068, %v2729
        %v3188 = vsel %vm3123, %v3070, %v2731
        %v3191 = vsel %vm3123, %v3072, %v2733
        %v3194 = vsel %vm3123, %v3074, %v2735
        %v3197 = vsel %vm3123, %v3076, %v2737
        %v3200 = vsel %vm3123, %v3078, %v2739
        %v3203 = vsel %vm3123, %v3080, %v2741
        %v3206 = vsel %vm3123, %v3082, %v2743
        %v3209 = vsel %vm3123, %v3084, %v2745
        %v3212 = vsel %vm3123, %v3086, %v2747
        %v3215 = vsel %vm3123, %v3088, %v2749
        %v3218 = vsel %vm3123, %v3090, %v2751
        %v3221 = vsel %vm3123, %v3092, %v2753
        %v3224 = vsel %vm3123, %v3094, %v2755
        %v3227 = vsel %vm3123, %v3096, %v2757
        %v3230 = vsel %vm3123, %v3098, %v2759
        %v3233 = vsel %vm3123, %v3100, %v2761
        %v3236 = vsel %vm3123, %v3102, %v2763
        %v3239 = vsel %vm3123, %v3104, %v2765
        %v3242 = vsel %vm3123, %v3106, %v2767
        %v3245 = vsel %vm3123, %v3108, %v2769
        %v3248 = vsel %vm3123, %v3110, %v2771
        %v3251 = vsel %vm3123, %v3112, %v2773
        %v3254 = vsel %vm3123, %v3114, %v2775
        %v3257 = vsel %vm3123, %v3116, %v2777
        %v3260 = vsel %vm3123, %v3118, %v2779
        %v3263 = vsel %vm3123, %v3120, %v2781
        %v3266 = vsel %vm3123, %v3122, %v2783
        %v3268 = vld [vmem:[%s1] sm:$0xff]
        %v3269 = vld [vmem:[%s1 + $0x8] sm:$0xff]
        %v3270 = vld [vmem:[%s1 + $0x10] sm:$0xff]
        %v3271 = vld [vmem:[%s1 + $0x18] sm:$0xff]
        %v3272 = vld [vmem:[%s1 + $0x20] sm:$0xff]
        %v3273 = vld [vmem:[%s1 + $0x28] sm:$0xff]
        %v3274 = vld [vmem:[%s1 + $0x30] sm:$0xff]
        %v3275 = vld [vmem:[%s1 + $0x38] sm:$0xff]
        %v3276 = vld [vmem:[%s1 + $0x40] sm:$0xff]
        %v3277 = vld [vmem:[%s1 + $0x48] sm:$0xff]
        %v3278 = vld [vmem:[%s1 + $0x50] sm:$0xff]
        %v3279 = vld [vmem:[%s1 + $0x58] sm:$0xff]
        %v3280 = vld [vmem:[%s1 + $0x60] sm:$0xff]
        %v3281 = vld [vmem:[%s1 + $0x68] sm:$0xff]
        %v3282 = vld [vmem:[%s1 + $0x70] sm:$0xff]
        %v3283 = vld [vmem:[%s1 + $0x78] sm:$0xff]
        %v3284 = vld [vmem:[%s1 + $0x80] sm:$0xff]
        %v3285 = vld [vmem:[%s1 + $0x88] sm:$0xff]
        %v3286 = vld [vmem:[%s1 + $0x90] sm:$0xff]
        %v3287 = vld [vmem:[%s1 + $0x98] sm:$0xff]
        %v3288 = vld [vmem:[%s1 + $0xa0] sm:$0xff]
        %v3289 = vld [vmem:[%s1 + $0xa8] sm:$0xff]
        %v3290 = vld [vmem:[%s1 + $0xb0] sm:$0xff]
        %v3291 = vld [vmem:[%s1 + $0xb8] sm:$0xff]
        %v3292 = vld [vmem:[%s1 + $0xc0] sm:$0xff]
        %v3293 = vld [vmem:[%s1 + $0xc8] sm:$0xff]
        %v3294 = vld [vmem:[%s1 + $0xd0] sm:$0xff]
        %v3295 = vld [vmem:[%s1 + $0xd8] sm:$0xff]
        %v3296 = vld [vmem:[%s1 + $0xe0] sm:$0xff]
        %v3297 = vld [vmem:[%s1 + $0xe8] sm:$0xff]
        %v3298 = vld [vmem:[%s1 + $0xf0] sm:$0xff]
        %v3299 = vld [vmem:[%s1 + $0xf8] sm:$0xff]
        %v3300 = vld [vmem:[%s1 + $0x100] sm:$0xff]
        %v3301 = vld [vmem:[%s1 + $0x108] sm:$0xff]
        %v3302 = vld [vmem:[%s1 + $0x110] sm:$0x33]
        %v3303 = vld [vmem:[%s1 + $0x118] sm:$0x33]
        %v3340 = vunpack.c.l.b16 %v3268
        %v3341 = vunpack.c.h.b16 %v3268
        %v3342 = vunpack.c.l.b16 %v3269
        %v3343 = vunpack.c.h.b16 %v3269
        %v3344 = vunpack.c.l.b16 %v3270
        %v3345 = vunpack.c.h.b16 %v3270
        %v3346 = vunpack.c.l.b16 %v3271
        %v3347 = vunpack.c.h.b16 %v3271
        %v3348 = vunpack.c.l.b16 %v3272
        %v3349 = vunpack.c.h.b16 %v3272
        %v3350 = vunpack.c.l.b16 %v3273
        %v3351 = vunpack.c.h.b16 %v3273
        %v3352 = vunpack.c.l.b16 %v3274
        %v3353 = vunpack.c.h.b16 %v3274
        %v3354 = vunpack.c.l.b16 %v3275
        %v3355 = vunpack.c.h.b16 %v3275
        %v3356 = vunpack.c.l.b16 %v3276
        %v3357 = vunpack.c.h.b16 %v3276
        %v3358 = vunpack.c.l.b16 %v3277
        %v3359 = vunpack.c.h.b16 %v3277
        %v3360 = vunpack.c.l.b16 %v3278
        %v3361 = vunpack.c.h.b16 %v3278
        %v3362 = vunpack.c.l.b16 %v3279
        %v3363 = vunpack.c.h.b16 %v3279
        %v3364 = vunpack.c.l.b16 %v3280
        %v3365 = vunpack.c.h.b16 %v3280
        %v3366 = vunpack.c.l.b16 %v3281
        %v3367 = vunpack.c.h.b16 %v3281
        %v3368 = vunpack.c.l.b16 %v3282
        %v3369 = vunpack.c.h.b16 %v3282
        %v3370 = vunpack.c.l.b16 %v3283
        %v3371 = vunpack.c.h.b16 %v3283
        %v3372 = vunpack.c.l.b16 %v3284
        %v3373 = vunpack.c.h.b16 %v3284
        %v3374 = vunpack.c.l.b16 %v3285
        %v3375 = vunpack.c.h.b16 %v3285
        %v3376 = vunpack.c.l.b16 %v3286
        %v3377 = vunpack.c.h.b16 %v3286
        %v3378 = vunpack.c.l.b16 %v3287
        %v3379 = vunpack.c.h.b16 %v3287
        %v3380 = vunpack.c.l.b16 %v3288
        %v3381 = vunpack.c.h.b16 %v3288
        %v3382 = vunpack.c.l.b16 %v3289
        %v3383 = vunpack.c.h.b16 %v3289
        %v3384 = vunpack.c.l.b16 %v3290
        %v3385 = vunpack.c.h.b16 %v3290
        %v3386 = vunpack.c.l.b16 %v3291
        %v3387 = vunpack.c.h.b16 %v3291
        %v3388 = vunpack.c.l.b16 %v3292
        %v3389 = vunpack.c.h.b16 %v3292
        %v3390 = vunpack.c.l.b16 %v3293
        %v3391 = vunpack.c.h.b16 %v3293
        %v3392 = vunpack.c.l.b16 %v3294
        %v3393 = vunpack.c.h.b16 %v3294
        %v3394 = vunpack.c.l.b16 %v3295
        %v3395 = vunpack.c.h.b16 %v3295
        %v3396 = vunpack.c.l.b16 %v3296
        %v3397 = vunpack.c.h.b16 %v3296
        %v3398 = vunpack.c.l.b16 %v3297
        %v3399 = vunpack.c.h.b16 %v3297
        %v3400 = vunpack.c.l.b16 %v3298
        %v3401 = vunpack.c.h.b16 %v3298
        %v3402 = vunpack.c.l.b16 %v3299
        %v3403 = vunpack.c.h.b16 %v3299
        %v3404 = vunpack.c.l.b16 %v3300
        %v3405 = vunpack.c.h.b16 %v3300
        %v3406 = vunpack.c.l.b16 %v3301
        %v3407 = vunpack.c.h.b16 %v3301
        %v3408 = vunpack.c.l.b16 %v3302
        %v3409 = vunpack.c.h.b16 %v3302
        %v3410 = vunpack.c.l.b16 %v3303
        %v3411 = vunpack.c.h.b16 %v3303
        %v3412 = vpack.c.b16 %v3344, %v3340
        %v3413 = vpack.c.b16 %v3345, %v3341
        %v3414 = vpack.c.b16 %v3346, %v3342
        %v3415 = vpack.c.b16 %v3347, %v3343
        %v3416 = vpack.c.b16 %v3352, %v3348
        %v3417 = vpack.c.b16 %v3353, %v3349
        %v3418 = vpack.c.b16 %v3354, %v3350
        %v3419 = vpack.c.b16 %v3355, %v3351
        %v3420 = vpack.c.b16 %v3360, %v3356
        %v3421 = vpack.c.b16 %v3361, %v3357
        %v3422 = vpack.c.b16 %v3362, %v3358
        %v3423 = vpack.c.b16 %v3363, %v3359
        %v3424 = vpack.c.b16 %v3368, %v3364
        %v3425 = vpack.c.b16 %v3369, %v3365
        %v3426 = vpack.c.b16 %v3370, %v3366
        %v3427 = vpack.c.b16 %v3371, %v3367
        %v3428 = vpack.c.b16 %v3376, %v3372
        %v3429 = vpack.c.b16 %v3377, %v3373
        %v3430 = vpack.c.b16 %v3378, %v3374
        %v3431 = vpack.c.b16 %v3379, %v3375
        %v3432 = vpack.c.b16 %v3384, %v3380
        %v3433 = vpack.c.b16 %v3385, %v3381
        %v3434 = vpack.c.b16 %v3386, %v3382
        %v3435 = vpack.c.b16 %v3387, %v3383
        %v3436 = vpack.c.b16 %v3392, %v3388
        %v3437 = vpack.c.b16 %v3393, %v3389
        %v3438 = vpack.c.b16 %v3394, %v3390
        %v3439 = vpack.c.b16 %v3395, %v3391
        %v3440 = vpack.c.b16 %v3400, %v3396
        %v3441 = vpack.c.b16 %v3401, %v3397
        %v3442 = vpack.c.b16 %v3402, %v3398
        %v3443 = vpack.c.b16 %v3403, %v3399
        %v3444 = vpack.c.b16 %v3408, %v3404
        %v3445 = vpack.c.b16 %v3409, %v3405
        %v3446 = vpack.c.b16 %v3410, %v3406
        %v3447 = vpack.c.b16 %v3411, %v3407
        %vm3480 = vcmask 97280
        %v3481 = vsel %vm3480, %v2689, 0
        %v3483 = vsel %vm3480, %v2691, 0
        %v3485 = vsel %vm3480, %v2693, 0
        %v3487 = vsel %vm3480, %v2695, 0
        %v3489 = vsel %vm3480, %v2697, 0
        %v3491 = vsel %vm3480, %v2699, 0
        %v3493 = vsel %vm3480, %v2701, 0
        %v3495 = vsel %vm3480, %v2703, 0
        %v3497 = vsel %vm3480, %v2705, 0
        %v3499 = vsel %vm3480, %v2707, 0
        %v3501 = vsel %vm3480, %v2709, 0
        %v3503 = vsel %vm3480, %v2711, 0
        %v3505 = vsel %vm3480, %v2713, 0
        %v3507 = vsel %vm3480, %v2715, 0
        %v3509 = vsel %vm3480, %v2717, 0
        %v3511 = vsel %vm3480, %v2719, 0
        %v3513 = vsel %vm3480, %v2721, 0
        %v3515 = vsel %vm3480, %v2723, 0
        %v3517 = vsel %vm3480, %v2725, 0
        %v3519 = vsel %vm3480, %v2727, 0
        %v3521 = vsel %vm3480, %v2729, 0
        %v3523 = vsel %vm3480, %v2731, 0
        %v3525 = vsel %vm3480, %v2733, 0
        %v3527 = vsel %vm3480, %v2735, 0
        %v3529 = vsel %vm3480, %v2737, 0
        %v3531 = vsel %vm3480, %v2739, 0
        %v3533 = vsel %vm3480, %v2741, 0
        %v3535 = vsel %vm3480, %v2743, 0
        %v3537 = vsel %vm3480, %v2745, 0
        %v3539 = vsel %vm3480, %v2747, 0
        %v3541 = vsel %vm3480, %v2749, 0
        %v3543 = vsel %vm3480, %v2751, 0
        %v3545 = vsel %vm3480, %v2753, 0
        %v3547 = vsel %vm3480, %v2755, 0
        %v3549 = vsel %vm3480, %v2757, 0
        %v3551 = vsel %vm3480, %v2759, 0
        %v3553 = vsel %vm3480, %v2761, 0
        %v3555 = vsel %vm3480, %v2763, 0
        %v3557 = vsel %vm3480, %v2765, 0
        %v3559 = vsel %vm3480, %v2767, 0
        %v3561 = vsel %vm3480, %v2769, 0
        %v3563 = vsel %vm3480, %v2771, 0
        %v3565 = vsel %vm3480, %v2773, 0
        %v3567 = vsel %vm3480, %v2775, 0
        %v3569 = vsel %vm3480, %v2777, 0
        %v3571 = vsel %vm3480, %v2779, 0
        %v3573 = vsel %vm3480, %v2781, 0
        %v3575 = vsel %vm3480, %v2783, 0
        %vm3577 = vcmask 1045504
        %v3579 = vsel %vm3577, %v3444, 0
        %v3582 = vsel %vm3577, %v3445, 0
        %v3585 = vsel %vm3577, %v3446, 0
        %v3588 = vsel %vm3577, %v3447, 0
        %3590 = vmatprep.subr.bf16.mxu0 %v3441
        %3591 = vmatpush1.bf16.msra.mxu0 %v3440
        %3592 = vmatprep.subr.bf16.mxu0 %v3437
        %3593 = vmatpush1.bf16.msra.mxu0 %v3436
        %3594 = vmatprep.subr.bf16.mxu0 %v3433
        %3595 = vmatpush1.bf16.msra.mxu0 %v3432
        %3596 = vmatprep.subr.bf16.mxu0 %v3429
        %3597 = vmatpush1.bf16.msra.mxu0 %v3428
        %3598 = vmatprep.subr.bf16.mxu0 %v3425
        %3599 = vmatpush1.bf16.msra.mxu0 %v3424
        %3600 = vmatprep.subr.bf16.mxu0 %v3421
        %3601 = vmatpush1.bf16.msra.mxu0 %v3420
        %3602 = vmatprep.subr.bf16.mxu0 %v3417
        %3603 = vmatpush1.bf16.msra.mxu0 %v3416
        %3604 = vmatprep.subr.bf16.mxu0 %v3413
        %3605 = vmatpush1.bf16.msra.mxu0 %v3412
        %3606 = vmatprep.subr.bf16.mxu0 0
        %3607 = vmatpush2.bf16.msra.mxu0 0
        %3608 = vmatprep.subr.bf16.mxu0 0
        %3609 = vmatpush2.bf16.msra.mxu0 0
        %3610 = vmatprep.subr.bf16.mxu0 0
        %3611 = vmatpush2.bf16.msra.mxu0 0
        %3612 = vmatprep.subr.bf16.mxu0 0
        %3613 = vmatpush2.bf16.msra.mxu0 0
        %3614 = vmatprep.subr.bf16.mxu0 0
        %3615 = vmatpush2.bf16.msra.mxu0 0
        %3616 = vmatprep.subr.bf16.mxu0 0
        %3617 = vmatpush2.bf16.msra.mxu0 0
        %3618 = vmatprep.subr.bf16.mxu0 0
        %3619 = vmatpush2.bf16.msra.mxu0 0
        %3620 = vmatprep.subr.bf16.mxu0 %v3582
        %3621 = vmatpush2.bf16.msra.mxu0 %v3579
        %3622 = vmatprep.mubr.bf16.mxu0 %v3481
        %3623 = vmatmul.mubr.bf16.gmra.mxu0 %v3125
        %v3624 = vpop.f32.mrf.mxu0
        %v3625 = vadd.f32 0.0, %v3624
        %v3626 = vpop.f32.mrf.mxu0
        %v3627 = vadd.f32 0.0, %v3626
        %v3628 = vpop.f32.mrf.mxu0
        %v3629 = vadd.f32 0.0, %v3628
        %v3630 = vpop.f32.mrf.mxu0
        %v3631 = vadd.f32 0.0, %v3630
        %3632 = vmatprep.mubr.bf16.mxu0 %v3483
        %3633 = vmatmul.mubr.bf16.gmra.mxu0 %v3128
        %v3634 = vpop.f32.mrf.mxu0
        %v3635 = vadd.f32 0.0, %v3634
        %v3636 = vpop.f32.mrf.mxu0
        %v3637 = vadd.f32 0.0, %v3636
        %v3638 = vpop.f32.mrf.mxu0
        %v3639 = vadd.f32 0.0, %v3638
        %v3640 = vpop.f32.mrf.mxu0
        %v3641 = vadd.f32 0.0, %v3640
        %3642 = vmatprep.mubr.bf16.mxu0 %v3485
        %3643 = vmatmul.mubr.bf16.gmra.mxu0 %v3131
        %v3644 = vpop.f32.mrf.mxu0
        %v3645 = vadd.f32 0.0, %v3644
        %v3646 = vpop.f32.mrf.mxu0
        %v3647 = vadd.f32 0.0, %v3646
        %v3648 = vpop.f32.mrf.mxu0
        %v3649 = vadd.f32 0.0, %v3648
        %v3650 = vpop.f32.mrf.mxu0
        %v3651 = vadd.f32 0.0, %v3650
        %3652 = vmatprep.mubr.bf16.mxu0 %v3487
        %3653 = vmatmul.mubr.bf16.gmra.mxu0 %v3134
        %v3654 = vpop.f32.mrf.mxu0
        %v3655 = vadd.f32 0.0, %v3654
        %v3656 = vpop.f32.mrf.mxu0
        %v3657 = vadd.f32 0.0, %v3656
        %v3658 = vpop.f32.mrf.mxu0
        %v3659 = vadd.f32 0.0, %v3658
        %v3660 = vpop.f32.mrf.mxu0
        %v3661 = vadd.f32 0.0, %v3660
        %3662 = vmatprep.mubr.bf16.mxu0 %v3489
        %3663 = vmatmul.mubr.bf16.gmra.mxu0 %v3137
        %v3664 = vpop.f32.mrf.mxu0
        %v3665 = vadd.f32 0.0, %v3664
        %v3666 = vpop.f32.mrf.mxu0
        %v3667 = vadd.f32 0.0, %v3666
        %v3668 = vpop.f32.mrf.mxu0
        %v3669 = vadd.f32 0.0, %v3668
        %v3670 = vpop.f32.mrf.mxu0
        %v3671 = vadd.f32 0.0, %v3670
        %3672 = vmatprep.mubr.bf16.mxu0 %v3491
        %3673 = vmatmul.mubr.bf16.gmra.mxu0 %v3140
        %v3674 = vpop.f32.mrf.mxu0
        %v3675 = vadd.f32 0.0, %v3674
        %v3676 = vpop.f32.mrf.mxu0
        %v3677 = vadd.f32 0.0, %v3676
        %v3678 = vpop.f32.mrf.mxu0
        %v3679 = vadd.f32 0.0, %v3678
        %v3680 = vpop.f32.mrf.mxu0
        %v3681 = vadd.f32 0.0, %v3680
        %3682 = vmatprep.mubr.bf16.mxu0 %v3493
        %3683 = vmatmul.mubr.bf16.gmra.mxu0 %v3143
        %v3684 = vpop.f32.mrf.mxu0
        %v3685 = vadd.f32 0.0, %v3684
        %v3686 = vpop.f32.mrf.mxu0
        %v3687 = vadd.f32 0.0, %v3686
        %v3688 = vpop.f32.mrf.mxu0
        %v3689 = vadd.f32 0.0, %v3688
        %v3690 = vpop.f32.mrf.mxu0
        %v3691 = vadd.f32 0.0, %v3690
        %3692 = vmatprep.mubr.bf16.mxu0 %v3495
        %3693 = vmatmul.mubr.bf16.gmra.mxu0 %v3146
        %v3694 = vpop.f32.mrf.mxu0
        %v3695 = vadd.f32 0.0, %v3694
        %v3696 = vpop.f32.mrf.mxu0
        %v3697 = vadd.f32 0.0, %v3696
        %v3698 = vpop.f32.mrf.mxu0
        %v3699 = vadd.f32 0.0, %v3698
        %v3700 = vpop.f32.mrf.mxu0
        %v3701 = vadd.f32 0.0, %v3700
        %3702 = vmatprep.mubr.bf16.mxu0 %v3497
        %3703 = vmatmul.mubr.bf16.gmra.mxu0 %v3149
        %v3704 = vpop.f32.mrf.mxu0
        %v3705 = vadd.f32 0.0, %v3704
        %v3706 = vpop.f32.mrf.mxu0
        %v3707 = vadd.f32 0.0, %v3706
        %v3708 = vpop.f32.mrf.mxu0
        %v3709 = vadd.f32 0.0, %v3708
        %v3710 = vpop.f32.mrf.mxu0
        %v3711 = vadd.f32 0.0, %v3710
        %3712 = vmatprep.mubr.bf16.mxu0 %v3499
        %3713 = vmatmul.mubr.bf16.gmra.mxu0 %v3152
        %v3714 = vpop.f32.mrf.mxu0
        %v3715 = vadd.f32 0.0, %v3714
        %v3716 = vpop.f32.mrf.mxu0
        %v3717 = vadd.f32 0.0, %v3716
        %v3718 = vpop.f32.mrf.mxu0
        %v3719 = vadd.f32 0.0, %v3718
        %v3720 = vpop.f32.mrf.mxu0
        %v3721 = vadd.f32 0.0, %v3720
        %3722 = vmatprep.mubr.bf16.mxu0 %v3501
        %3723 = vmatmul.mubr.bf16.gmra.mxu0 %v3155
        %v3724 = vpop.f32.mrf.mxu0
        %v3725 = vadd.f32 0.0, %v3724
        %v3726 = vpop.f32.mrf.mxu0
        %v3727 = vadd.f32 0.0, %v3726
        %v3728 = vpop.f32.mrf.mxu0
        %v3729 = vadd.f32 0.0, %v3728
        %v3730 = vpop.f32.mrf.mxu0
        %v3731 = vadd.f32 0.0, %v3730
        %3732 = vmatprep.mubr.bf16.mxu0 %v3503
        %3733 = vmatmul.mubr.bf16.gmra.mxu0 %v3158
        %v3734 = vpop.f32.mrf.mxu0
        %v3735 = vadd.f32 0.0, %v3734
        %v3736 = vpop.f32.mrf.mxu0
        %v3737 = vadd.f32 0.0, %v3736
        %v3738 = vpop.f32.mrf.mxu0
        %v3739 = vadd.f32 0.0, %v3738
        %v3740 = vpop.f32.mrf.mxu0
        %v3741 = vadd.f32 0.0, %v3740
        %3742 = vmatprep.mubr.bf16.mxu0 %v3505
        %3743 = vmatmul.mubr.bf16.gmra.mxu0 %v3161
        %v3744 = vpop.f32.mrf.mxu0
        %v3745 = vadd.f32 0.0, %v3744
        %v3746 = vpop.f32.mrf.mxu0
        %v3747 = vadd.f32 0.0, %v3746
        %v3748 = vpop.f32.mrf.mxu0
        %v3749 = vadd.f32 0.0, %v3748
        %v3750 = vpop.f32.mrf.mxu0
        %v3751 = vadd.f32 0.0, %v3750
        %3752 = vmatprep.mubr.bf16.mxu0 %v3507
        %3753 = vmatmul.mubr.bf16.gmra.mxu0 %v3164
        %v3754 = vpop.f32.mrf.mxu0
        %v3755 = vadd.f32 0.0, %v3754
        %v3756 = vpop.f32.mrf.mxu0
        %v3757 = vadd.f32 0.0, %v3756
        %v3758 = vpop.f32.mrf.mxu0
        %v3759 = vadd.f32 0.0, %v3758
        %v3760 = vpop.f32.mrf.mxu0
        %v3761 = vadd.f32 0.0, %v3760
        %3762 = vmatprep.mubr.bf16.mxu0 %v3509
        %3763 = vmatmul.mubr.bf16.gmra.mxu0 %v3167
        %v3764 = vpop.f32.mrf.mxu0
        %v3765 = vadd.f32 0.0, %v3764
        %v3766 = vpop.f32.mrf.mxu0
        %v3767 = vadd.f32 0.0, %v3766
        %v3768 = vpop.f32.mrf.mxu0
        %v3769 = vadd.f32 0.0, %v3768
        %v3770 = vpop.f32.mrf.mxu0
        %v3771 = vadd.f32 0.0, %v3770
        %3772 = vmatprep.mubr.bf16.mxu0 %v3511
        %3773 = vmatmul.mubr.bf16.gmra.mxu0 %v3170
        %v3774 = vpop.f32.mrf.mxu0
        %v3775 = vadd.f32 0.0, %v3774
        %v3776 = vpop.f32.mrf.mxu0
        %v3777 = vadd.f32 0.0, %v3776
        %v3778 = vpop.f32.mrf.mxu0
        %v3779 = vadd.f32 0.0, %v3778
        %v3780 = vpop.f32.mrf.mxu0
        %v3781 = vadd.f32 0.0, %v3780
        %3782 = vmatprep.mubr.bf16.mxu0 %v3513
        %3783 = vmatmul.mubr.bf16.gmra.mxu0 %v3173
        %v3784 = vpop.f32.mrf.mxu0
        %v3785 = vadd.f32 0.0, %v3784
        %v3786 = vpop.f32.mrf.mxu0
        %v3787 = vadd.f32 0.0, %v3786
        %v3788 = vpop.f32.mrf.mxu0
        %v3789 = vadd.f32 0.0, %v3788
        %v3790 = vpop.f32.mrf.mxu0
        %v3791 = vadd.f32 0.0, %v3790
        %3792 = vmatprep.mubr.bf16.mxu0 %v3515
        %3793 = vmatmul.mubr.bf16.gmra.mxu0 %v3176
        %v3794 = vpop.f32.mrf.mxu0
        %v3795 = vadd.f32 0.0, %v3794
        %v3796 = vpop.f32.mrf.mxu0
        %v3797 = vadd.f32 0.0, %v3796
        %v3798 = vpop.f32.mrf.mxu0
        %v3799 = vadd.f32 0.0, %v3798
        %v3800 = vpop.f32.mrf.mxu0
        %v3801 = vadd.f32 0.0, %v3800
        %3802 = vmatprep.mubr.bf16.mxu0 %v3517
        %3803 = vmatmul.mubr.bf16.gmra.mxu0 %v3179
        %v3804 = vpop.f32.mrf.mxu0
        %v3805 = vadd.f32 0.0, %v3804
        %v3806 = vpop.f32.mrf.mxu0
        %v3807 = vadd.f32 0.0, %v3806
        %v3808 = vpop.f32.mrf.mxu0
        %v3809 = vadd.f32 0.0, %v3808
        %v3810 = vpop.f32.mrf.mxu0
        %v3811 = vadd.f32 0.0, %v3810
        %3812 = vmatprep.mubr.bf16.mxu0 %v3519
        %3813 = vmatmul.mubr.bf16.gmra.mxu0 %v3182
        %v3814 = vpop.f32.mrf.mxu0
        %v3815 = vadd.f32 0.0, %v3814
        %v3816 = vpop.f32.mrf.mxu0
        %v3817 = vadd.f32 0.0, %v3816
        %v3818 = vpop.f32.mrf.mxu0
        %v3819 = vadd.f32 0.0, %v3818
        %v3820 = vpop.f32.mrf.mxu0
        %v3821 = vadd.f32 0.0, %v3820
        %3822 = vmatprep.mubr.bf16.mxu0 %v3521
        %3823 = vmatmul.mubr.bf16.gmra.mxu0 %v3185
        %v3824 = vpop.f32.mrf.mxu0
        %v3825 = vadd.f32 0.0, %v3824
        %v3826 = vpop.f32.mrf.mxu0
        %v3827 = vadd.f32 0.0, %v3826
        %v3828 = vpop.f32.mrf.mxu0
        %v3829 = vadd.f32 0.0, %v3828
        %v3830 = vpop.f32.mrf.mxu0
        %v3831 = vadd.f32 0.0, %v3830
        %3832 = vmatprep.mubr.bf16.mxu0 %v3523
        %3833 = vmatmul.mubr.bf16.gmra.mxu0 %v3188
        %v3834 = vpop.f32.mrf.mxu0
        %v3835 = vadd.f32 0.0, %v3834
        %v3836 = vpop.f32.mrf.mxu0
        %v3837 = vadd.f32 0.0, %v3836
        %v3838 = vpop.f32.mrf.mxu0
        %v3839 = vadd.f32 0.0, %v3838
        %v3840 = vpop.f32.mrf.mxu0
        %v3841 = vadd.f32 0.0, %v3840
        %3842 = vmatprep.mubr.bf16.mxu0 %v3525
        %3843 = vmatmul.mubr.bf16.gmra.mxu0 %v3191
        %v3844 = vpop.f32.mrf.mxu0
        %v3845 = vadd.f32 0.0, %v3844
        %v3846 = vpop.f32.mrf.mxu0
        %v3847 = vadd.f32 0.0, %v3846
        %v3848 = vpop.f32.mrf.mxu0
        %v3849 = vadd.f32 0.0, %v3848
        %v3850 = vpop.f32.mrf.mxu0
        %v3851 = vadd.f32 0.0, %v3850
        %3852 = vmatprep.mubr.bf16.mxu0 %v3527
        %3853 = vmatmul.mubr.bf16.gmra.mxu0 %v3194
        %v3854 = vpop.f32.mrf.mxu0
        %v3855 = vadd.f32 0.0, %v3854
        %v3856 = vpop.f32.mrf.mxu0
        %v3857 = vadd.f32 0.0, %v3856
        %v3858 = vpop.f32.mrf.mxu0
        %v3859 = vadd.f32 0.0, %v3858
        %v3860 = vpop.f32.mrf.mxu0
        %v3861 = vadd.f32 0.0, %v3860
        %3862 = vmatprep.mubr.bf16.mxu0 %v3529
        %3863 = vmatmul.mubr.bf16.gmra.mxu0 %v3197
        %v3864 = vpop.f32.mrf.mxu0
        %v3865 = vadd.f32 0.0, %v3864
        %v3866 = vpop.f32.mrf.mxu0
        %v3867 = vadd.f32 0.0, %v3866
        %v3868 = vpop.f32.mrf.mxu0
        %v3869 = vadd.f32 0.0, %v3868
        %v3870 = vpop.f32.mrf.mxu0
        %v3871 = vadd.f32 0.0, %v3870
        %3872 = vmatprep.mubr.bf16.mxu0 %v3531
        %3873 = vmatmul.mubr.bf16.gmra.mxu0 %v3200
        %v3874 = vpop.f32.mrf.mxu0
        %v3875 = vadd.f32 0.0, %v3874
        %v3876 = vpop.f32.mrf.mxu0
        %v3877 = vadd.f32 0.0, %v3876
        %v3878 = vpop.f32.mrf.mxu0
        %v3879 = vadd.f32 0.0, %v3878
        %v3880 = vpop.f32.mrf.mxu0
        %v3881 = vadd.f32 0.0, %v3880
        %3882 = vmatprep.mubr.bf16.mxu0 %v3533
        %3883 = vmatmul.mubr.bf16.gmra.mxu0 %v3203
        %v3884 = vpop.f32.mrf.mxu0
        %v3885 = vadd.f32 0.0, %v3884
        %v3886 = vpop.f32.mrf.mxu0
        %v3887 = vadd.f32 0.0, %v3886
        %v3888 = vpop.f32.mrf.mxu0
        %v3889 = vadd.f32 0.0, %v3888
        %v3890 = vpop.f32.mrf.mxu0
        %v3891 = vadd.f32 0.0, %v3890
        %3892 = vmatprep.mubr.bf16.mxu0 %v3535
        %3893 = vmatmul.mubr.bf16.gmra.mxu0 %v3206
        %v3894 = vpop.f32.mrf.mxu0
        %v3895 = vadd.f32 0.0, %v3894
        %v3896 = vpop.f32.mrf.mxu0
        %v3897 = vadd.f32 0.0, %v3896
        %v3898 = vpop.f32.mrf.mxu0
        %v3899 = vadd.f32 0.0, %v3898
        %v3900 = vpop.f32.mrf.mxu0
        %v3901 = vadd.f32 0.0, %v3900
        %3902 = vmatprep.mubr.bf16.mxu0 %v3537
        %3903 = vmatmul.mubr.bf16.gmra.mxu0 %v3209
        %v3904 = vpop.f32.mrf.mxu0
        %v3905 = vadd.f32 0.0, %v3904
        %v3906 = vpop.f32.mrf.mxu0
        %v3907 = vadd.f32 0.0, %v3906
        %v3908 = vpop.f32.mrf.mxu0
        %v3909 = vadd.f32 0.0, %v3908
        %v3910 = vpop.f32.mrf.mxu0
        %v3911 = vadd.f32 0.0, %v3910
        %3912 = vmatprep.mubr.bf16.mxu0 %v3539
        %3913 = vmatmul.mubr.bf16.gmra.mxu0 %v3212
        %v3914 = vpop.f32.mrf.mxu0
        %v3915 = vadd.f32 0.0, %v3914
        %v3916 = vpop.f32.mrf.mxu0
        %v3917 = vadd.f32 0.0, %v3916
        %v3918 = vpop.f32.mrf.mxu0
        %v3919 = vadd.f32 0.0, %v3918
        %v3920 = vpop.f32.mrf.mxu0
        %v3921 = vadd.f32 0.0, %v3920
        %3922 = vmatprep.mubr.bf16.mxu0 %v3541
        %3923 = vmatmul.mubr.bf16.gmra.mxu0 %v3215
        %v3924 = vpop.f32.mrf.mxu0
        %v3925 = vadd.f32 0.0, %v3924
        %v3926 = vpop.f32.mrf.mxu0
        %v3927 = vadd.f32 0.0, %v3926
        %v3928 = vpop.f32.mrf.mxu0
        %v3929 = vadd.f32 0.0, %v3928
        %v3930 = vpop.f32.mrf.mxu0
        %v3931 = vadd.f32 0.0, %v3930
        %3932 = vmatprep.mubr.bf16.mxu0 %v3543
        %3933 = vmatmul.mubr.bf16.gmra.mxu0 %v3218
        %v3934 = vpop.f32.mrf.mxu0
        %v3935 = vadd.f32 0.0, %v3934
        %v3936 = vpop.f32.mrf.mxu0
        %v3937 = vadd.f32 0.0, %v3936
        %v3938 = vpop.f32.mrf.mxu0
        %v3939 = vadd.f32 0.0, %v3938
        %v3940 = vpop.f32.mrf.mxu0
        %v3941 = vadd.f32 0.0, %v3940
        %3942 = vmatprep.mubr.bf16.mxu0 %v3545
        %3943 = vmatmul.mubr.bf16.gmra.mxu0 %v3221
        %v3944 = vpop.f32.mrf.mxu0
        %v3945 = vadd.f32 0.0, %v3944
        %v3946 = vpop.f32.mrf.mxu0
        %v3947 = vadd.f32 0.0, %v3946
        %v3948 = vpop.f32.mrf.mxu0
        %v3949 = vadd.f32 0.0, %v3948
        %v3950 = vpop.f32.mrf.mxu0
        %v3951 = vadd.f32 0.0, %v3950
        %3952 = vmatprep.mubr.bf16.mxu0 %v3547
        %3953 = vmatmul.mubr.bf16.gmra.mxu0 %v3224
        %v3954 = vpop.f32.mrf.mxu0
        %v3955 = vadd.f32 0.0, %v3954
        %v3956 = vpop.f32.mrf.mxu0
        %v3957 = vadd.f32 0.0, %v3956
        %v3958 = vpop.f32.mrf.mxu0
        %v3959 = vadd.f32 0.0, %v3958
        %v3960 = vpop.f32.mrf.mxu0
        %v3961 = vadd.f32 0.0, %v3960
        %3962 = vmatprep.mubr.bf16.mxu0 %v3549
        %3963 = vmatmul.mubr.bf16.gmra.mxu0 %v3227
        %v3964 = vpop.f32.mrf.mxu0
        %v3965 = vadd.f32 0.0, %v3964
        %v3966 = vpop.f32.mrf.mxu0
        %v3967 = vadd.f32 0.0, %v3966
        %v3968 = vpop.f32.mrf.mxu0
        %v3969 = vadd.f32 0.0, %v3968
        %v3970 = vpop.f32.mrf.mxu0
        %v3971 = vadd.f32 0.0, %v3970
        %3972 = vmatprep.mubr.bf16.mxu0 %v3551
        %3973 = vmatmul.mubr.bf16.gmra.mxu0 %v3230
        %v3974 = vpop.f32.mrf.mxu0
        %v3975 = vadd.f32 0.0, %v3974
        %v3976 = vpop.f32.mrf.mxu0
        %v3977 = vadd.f32 0.0, %v3976
        %v3978 = vpop.f32.mrf.mxu0
        %v3979 = vadd.f32 0.0, %v3978
        %v3980 = vpop.f32.mrf.mxu0
        %v3981 = vadd.f32 0.0, %v3980
        %3982 = vmatprep.mubr.bf16.mxu0 %v3553
        %3983 = vmatmul.mubr.bf16.gmra.mxu0 %v3233
        %v3984 = vpop.f32.mrf.mxu0
        %v3985 = vadd.f32 0.0, %v3984
        %v3986 = vpop.f32.mrf.mxu0
        %v3987 = vadd.f32 0.0, %v3986
        %v3988 = vpop.f32.mrf.mxu0
        %v3989 = vadd.f32 0.0, %v3988
        %v3990 = vpop.f32.mrf.mxu0
        %v3991 = vadd.f32 0.0, %v3990
        %3992 = vmatprep.mubr.bf16.mxu0 %v3555
        %3993 = vmatmul.mubr.bf16.gmra.mxu0 %v3236
        %v3994 = vpop.f32.mrf.mxu0
        %v3995 = vadd.f32 0.0, %v3994
        %v3996 = vpop.f32.mrf.mxu0
        %v3997 = vadd.f32 0.0, %v3996
        %v3998 = vpop.f32.mrf.mxu0
        %v3999 = vadd.f32 0.0, %v3998
        %v4000 = vpop.f32.mrf.mxu0
        %v4001 = vadd.f32 0.0, %v4000
        %4002 = vmatprep.mubr.bf16.mxu0 %v3557
        %4003 = vmatmul.mubr.bf16.gmra.mxu0 %v3239
        %v4004 = vpop.f32.mrf.mxu0
        %v4005 = vadd.f32 0.0, %v4004
        %v4006 = vpop.f32.mrf.mxu0
        %v4007 = vadd.f32 0.0, %v4006
        %v4008 = vpop.f32.mrf.mxu0
        %v4009 = vadd.f32 0.0, %v4008
        %v4010 = vpop.f32.mrf.mxu0
        %v4011 = vadd.f32 0.0, %v4010
        %4012 = vmatprep.mubr.bf16.mxu0 %v3559
        %4013 = vmatmul.mubr.bf16.gmra.mxu0 %v3242
        %v4014 = vpop.f32.mrf.mxu0
        %v4015 = vadd.f32 0.0, %v4014
        %v4016 = vpop.f32.mrf.mxu0
        %v4017 = vadd.f32 0.0, %v4016
        %v4018 = vpop.f32.mrf.mxu0
        %v4019 = vadd.f32 0.0, %v4018
        %v4020 = vpop.f32.mrf.mxu0
        %v4021 = vadd.f32 0.0, %v4020
        %4022 = vmatprep.mubr.bf16.mxu0 %v3561
        %4023 = vmatmul.mubr.bf16.gmra.mxu0 %v3245
        %v4024 = vpop.f32.mrf.mxu0
        %v4025 = vadd.f32 0.0, %v4024
        %v4026 = vpop.f32.mrf.mxu0
        %v4027 = vadd.f32 0.0, %v4026
        %v4028 = vpop.f32.mrf.mxu0
        %v4029 = vadd.f32 0.0, %v4028
        %v4030 = vpop.f32.mrf.mxu0
        %v4031 = vadd.f32 0.0, %v4030
        %4032 = vmatprep.mubr.bf16.mxu0 %v3563
        %4033 = vmatmul.mubr.bf16.gmra.mxu0 %v3248
        %v4034 = vpop.f32.mrf.mxu0
        %v4035 = vadd.f32 0.0, %v4034
        %v4036 = vpop.f32.mrf.mxu0
        %v4037 = vadd.f32 0.0, %v4036
        %v4038 = vpop.f32.mrf.mxu0
        %v4039 = vadd.f32 0.0, %v4038
        %v4040 = vpop.f32.mrf.mxu0
        %v4041 = vadd.f32 0.0, %v4040
        %4042 = vmatprep.mubr.bf16.mxu0 %v3565
        %4043 = vmatmul.mubr.bf16.gmra.mxu0 %v3251
        %v4044 = vpop.f32.mrf.mxu0
        %v4045 = vadd.f32 0.0, %v4044
        %v4046 = vpop.f32.mrf.mxu0
        %v4047 = vadd.f32 0.0, %v4046
        %v4048 = vpop.f32.mrf.mxu0
        %v4049 = vadd.f32 0.0, %v4048
        %v4050 = vpop.f32.mrf.mxu0
        %v4051 = vadd.f32 0.0, %v4050
        %4052 = vmatprep.mubr.bf16.mxu0 %v3567
        %4053 = vmatmul.mubr.bf16.gmra.mxu0 %v3254
        %v4054 = vpop.f32.mrf.mxu0
        %v4055 = vadd.f32 0.0, %v4054
        %v4056 = vpop.f32.mrf.mxu0
        %v4057 = vadd.f32 0.0, %v4056
        %v4058 = vpop.f32.mrf.mxu0
        %v4059 = vadd.f32 0.0, %v4058
        %v4060 = vpop.f32.mrf.mxu0
        %v4061 = vadd.f32 0.0, %v4060
        %4062 = vmatprep.mubr.bf16.mxu0 %v3569
        %4063 = vmatmul.mubr.bf16.gmra.mxu0 %v3257
        %v4064 = vpop.f32.mrf.mxu0
        %v4065 = vadd.f32 0.0, %v4064
        %v4066 = vpop.f32.mrf.mxu0
        %v4067 = vadd.f32 0.0, %v4066
        %v4068 = vpop.f32.mrf.mxu0
        %v4069 = vadd.f32 0.0, %v4068
        %v4070 = vpop.f32.mrf.mxu0
        %v4071 = vadd.f32 0.0, %v4070
        %4072 = vmatprep.mubr.bf16.mxu0 %v3571
        %4073 = vmatmul.mubr.bf16.gmra.mxu0 %v3260
        %v4074 = vpop.f32.mrf.mxu0
        %v4075 = vadd.f32 0.0, %v4074
        %v4076 = vpop.f32.mrf.mxu0
        %v4077 = vadd.f32 0.0, %v4076
        %v4078 = vpop.f32.mrf.mxu0
        %v4079 = vadd.f32 0.0, %v4078
        %v4080 = vpop.f32.mrf.mxu0
        %v4081 = vadd.f32 0.0, %v4080
        %4082 = vmatprep.mubr.bf16.mxu0 %v3573
        %4083 = vmatmul.mubr.bf16.gmra.mxu0 %v3263
        %v4084 = vpop.f32.mrf.mxu0
        %v4085 = vadd.f32 0.0, %v4084
        %v4086 = vpop.f32.mrf.mxu0
        %v4087 = vadd.f32 0.0, %v4086
        %v4088 = vpop.f32.mrf.mxu0
        %v4089 = vadd.f32 0.0, %v4088
        %v4090 = vpop.f32.mrf.mxu0
        %v4091 = vadd.f32 0.0, %v4090
        %4092 = vmatprep.mubr.bf16.mxu0 %v3575
        %4093 = vmatmul.mubr.bf16.gmra.mxu0 %v3266
        %v4094 = vpop.f32.mrf.mxu0
        %v4095 = vadd.f32 0.0, %v4094
        %v4096 = vpop.f32.mrf.mxu0
        %v4097 = vadd.f32 0.0, %v4096
        %v4098 = vpop.f32.mrf.mxu0
        %v4099 = vadd.f32 0.0, %v4098
        %v4100 = vpop.f32.mrf.mxu0
        %v4101 = vadd.f32 0.0, %v4100
        %4102 = vdwg.mxu0
        %4103 = vmatprep.subr.bf16.mxu0 %v3443
        %4104 = vmatpush1.bf16.msra.mxu0 %v3442
        %4105 = vmatprep.subr.bf16.mxu0 %v3439
        %4106 = vmatpush1.bf16.msra.mxu0 %v3438
        %4107 = vmatprep.subr.bf16.mxu0 %v3435
        %4108 = vmatpush1.bf16.msra.mxu0 %v3434
        %4109 = vmatprep.subr.bf16.mxu0 %v3431
        %4110 = vmatpush1.bf16.msra.mxu0 %v3430
        %4111 = vmatprep.subr.bf16.mxu0 %v3427
        %4112 = vmatpush1.bf16.msra.mxu0 %v3426
        %4113 = vmatprep.subr.bf16.mxu0 %v3423
        %4114 = vmatpush1.bf16.msra.mxu0 %v3422
        %4115 = vmatprep.subr.bf16.mxu0 %v3419
        %4116 = vmatpush1.bf16.msra.mxu0 %v3418
        %4117 = vmatprep.subr.bf16.mxu0 %v3415
        %4118 = vmatpush1.bf16.msra.mxu0 %v3414
        %4119 = vmatprep.subr.bf16.mxu0 0
        %4120 = vmatpush2.bf16.msra.mxu0 0
        %4121 = vmatprep.subr.bf16.mxu0 0
        %4122 = vmatpush2.bf16.msra.mxu0 0
        %4123 = vmatprep.subr.bf16.mxu0 0
        %4124 = vmatpush2.bf16.msra.mxu0 0
        %4125 = vmatprep.subr.bf16.mxu0 0
        %4126 = vmatpush2.bf16.msra.mxu0 0
        %4127 = vmatprep.subr.bf16.mxu0 0
        %4128 = vmatpush2.bf16.msra.mxu0 0
        %4129 = vmatprep.subr.bf16.mxu0 0
        %4130 = vmatpush2.bf16.msra.mxu0 0
        %4131 = vmatprep.subr.bf16.mxu0 0
        %4132 = vmatpush2.bf16.msra.mxu0 0
        %4133 = vmatprep.subr.bf16.mxu0 %v3588
        %4134 = vmatpush2.bf16.msra.mxu0 %v3585
        %4135 = vmatprep.mubr.bf16.mxu0 %v3481
        %4136 = vmatmul.mubr.bf16.gmra.mxu0 %v3125
        %v4137 = vpop.f32.mrf.mxu0
        %v4138 = vadd.f32 0.0, %v4137
        %v4139 = vpop.f32.mrf.mxu0
        %v4140 = vadd.f32 0.0, %v4139
        %v4141 = vpop.f32.mrf.mxu0
        %v4142 = vadd.f32 0.0, %v4141
        %v4143 = vpop.f32.mrf.mxu0
        %v4144 = vadd.f32 0.0, %v4143
        %4145 = vmatprep.mubr.bf16.mxu0 %v3483
        %4146 = vmatmul.mubr.bf16.gmra.mxu0 %v3128
        %v4147 = vpop.f32.mrf.mxu0
        %v4148 = vadd.f32 0.0, %v4147
        %v4149 = vpop.f32.mrf.mxu0
        %v4150 = vadd.f32 0.0, %v4149
        %v4151 = vpop.f32.mrf.mxu0
        %v4152 = vadd.f32 0.0, %v4151
        %v4153 = vpop.f32.mrf.mxu0
        %v4154 = vadd.f32 0.0, %v4153
        %4155 = vmatprep.mubr.bf16.mxu0 %v3485
        %4156 = vmatmul.mubr.bf16.gmra.mxu0 %v3131
        %v4157 = vpop.f32.mrf.mxu0
        %v4158 = vadd.f32 0.0, %v4157
        %v4159 = vpop.f32.mrf.mxu0
        %v4160 = vadd.f32 0.0, %v4159
        %v4161 = vpop.f32.mrf.mxu0
        %v4162 = vadd.f32 0.0, %v4161
        %v4163 = vpop.f32.mrf.mxu0
        %v4164 = vadd.f32 0.0, %v4163
        %4165 = vmatprep.mubr.bf16.mxu0 %v3487
        %4166 = vmatmul.mubr.bf16.gmra.mxu0 %v3134
        %v4167 = vpop.f32.mrf.mxu0
        %v4168 = vadd.f32 0.0, %v4167
        %v4169 = vpop.f32.mrf.mxu0
        %v4170 = vadd.f32 0.0, %v4169
        %v4171 = vpop.f32.mrf.mxu0
        %v4172 = vadd.f32 0.0, %v4171
        %v4173 = vpop.f32.mrf.mxu0
        %v4174 = vadd.f32 0.0, %v4173
        %4175 = vmatprep.mubr.bf16.mxu0 %v3489
        %4176 = vmatmul.mubr.bf16.gmra.mxu0 %v3137
        %v4177 = vpop.f32.mrf.mxu0
        %v4178 = vadd.f32 0.0, %v4177
        %v4179 = vpop.f32.mrf.mxu0
        %v4180 = vadd.f32 0.0, %v4179
        %v4181 = vpop.f32.mrf.mxu0
        %v4182 = vadd.f32 0.0, %v4181
        %v4183 = vpop.f32.mrf.mxu0
        %v4184 = vadd.f32 0.0, %v4183
        %4185 = vmatprep.mubr.bf16.mxu0 %v3491
        %4186 = vmatmul.mubr.bf16.gmra.mxu0 %v3140
        %v4187 = vpop.f32.mrf.mxu0
        %v4188 = vadd.f32 0.0, %v4187
        %v4189 = vpop.f32.mrf.mxu0
        %v4190 = vadd.f32 0.0, %v4189
        %v4191 = vpop.f32.mrf.mxu0
        %v4192 = vadd.f32 0.0, %v4191
        %v4193 = vpop.f32.mrf.mxu0
        %v4194 = vadd.f32 0.0, %v4193
        %4195 = vmatprep.mubr.bf16.mxu0 %v3493
        %4196 = vmatmul.mubr.bf16.gmra.mxu0 %v3143
        %v4197 = vpop.f32.mrf.mxu0
        %v4198 = vadd.f32 0.0, %v4197
        %v4199 = vpop.f32.mrf.mxu0
        %v4200 = vadd.f32 0.0, %v4199
        %v4201 = vpop.f32.mrf.mxu0
        %v4202 = vadd.f32 0.0, %v4201
        %v4203 = vpop.f32.mrf.mxu0
        %v4204 = vadd.f32 0.0, %v4203
        %4205 = vmatprep.mubr.bf16.mxu0 %v3495
        %4206 = vmatmul.mubr.bf16.gmra.mxu0 %v3146
        %v4207 = vpop.f32.mrf.mxu0
        %v4208 = vadd.f32 0.0, %v4207
        %v4209 = vpop.f32.mrf.mxu0
        %v4210 = vadd.f32 0.0, %v4209
        %v4211 = vpop.f32.mrf.mxu0
        %v4212 = vadd.f32 0.0, %v4211
        %v4213 = vpop.f32.mrf.mxu0
        %v4214 = vadd.f32 0.0, %v4213
        %4215 = vmatprep.mubr.bf16.mxu0 %v3497
        %4216 = vmatmul.mubr.bf16.gmra.mxu0 %v3149
        %v4217 = vpop.f32.mrf.mxu0
        %v4218 = vadd.f32 0.0, %v4217
        %v4219 = vpop.f32.mrf.mxu0
        %v4220 = vadd.f32 0.0, %v4219
        %v4221 = vpop.f32.mrf.mxu0
        %v4222 = vadd.f32 0.0, %v4221
        %v4223 = vpop.f32.mrf.mxu0
        %v4224 = vadd.f32 0.0, %v4223
        %4225 = vmatprep.mubr.bf16.mxu0 %v3499
        %4226 = vmatmul.mubr.bf16.gmra.mxu0 %v3152
        %v4227 = vpop.f32.mrf.mxu0
        %v4228 = vadd.f32 0.0, %v4227
        %v4229 = vpop.f32.mrf.mxu0
        %v4230 = vadd.f32 0.0, %v4229
        %v4231 = vpop.f32.mrf.mxu0
        %v4232 = vadd.f32 0.0, %v4231
        %v4233 = vpop.f32.mrf.mxu0
        %v4234 = vadd.f32 0.0, %v4233
        %4235 = vmatprep.mubr.bf16.mxu0 %v3501
        %4236 = vmatmul.mubr.bf16.gmra.mxu0 %v3155
        %v4237 = vpop.f32.mrf.mxu0
        %v4238 = vadd.f32 0.0, %v4237
        %v4239 = vpop.f32.mrf.mxu0
        %v4240 = vadd.f32 0.0, %v4239
        %v4241 = vpop.f32.mrf.mxu0
        %v4242 = vadd.f32 0.0, %v4241
        %v4243 = vpop.f32.mrf.mxu0
        %v4244 = vadd.f32 0.0, %v4243
        %4245 = vmatprep.mubr.bf16.mxu0 %v3503
        %4246 = vmatmul.mubr.bf16.gmra.mxu0 %v3158
        %v4247 = vpop.f32.mrf.mxu0
        %v4248 = vadd.f32 0.0, %v4247
        %v4249 = vpop.f32.mrf.mxu0
        %v4250 = vadd.f32 0.0, %v4249
        %v4251 = vpop.f32.mrf.mxu0
        %v4252 = vadd.f32 0.0, %v4251
        %v4253 = vpop.f32.mrf.mxu0
        %v4254 = vadd.f32 0.0, %v4253
        %4255 = vmatprep.mubr.bf16.mxu0 %v3505
        %4256 = vmatmul.mubr.bf16.gmra.mxu0 %v3161
        %v4257 = vpop.f32.mrf.mxu0
        %v4258 = vadd.f32 0.0, %v4257
        %v4259 = vpop.f32.mrf.mxu0
        %v4260 = vadd.f32 0.0, %v4259
        %v4261 = vpop.f32.mrf.mxu0
        %v4262 = vadd.f32 0.0, %v4261
        %v4263 = vpop.f32.mrf.mxu0
        %v4264 = vadd.f32 0.0, %v4263
        %4265 = vmatprep.mubr.bf16.mxu0 %v3507
        %4266 = vmatmul.mubr.bf16.gmra.mxu0 %v3164
        %v4267 = vpop.f32.mrf.mxu0
        %v4268 = vadd.f32 0.0, %v4267
        %v4269 = vpop.f32.mrf.mxu0
        %v4270 = vadd.f32 0.0, %v4269
        %v4271 = vpop.f32.mrf.mxu0
        %v4272 = vadd.f32 0.0, %v4271
        %v4273 = vpop.f32.mrf.mxu0
        %v4274 = vadd.f32 0.0, %v4273
        %4275 = vmatprep.mubr.bf16.mxu0 %v3509
        %4276 = vmatmul.mubr.bf16.gmra.mxu0 %v3167
        %v4277 = vpop.f32.mrf.mxu0
        %v4278 = vadd.f32 0.0, %v4277
        %v4279 = vpop.f32.mrf.mxu0
        %v4280 = vadd.f32 0.0, %v4279
        %v4281 = vpop.f32.mrf.mxu0
        %v4282 = vadd.f32 0.0, %v4281
        %v4283 = vpop.f32.mrf.mxu0
        %v4284 = vadd.f32 0.0, %v4283
        %4285 = vmatprep.mubr.bf16.mxu0 %v3511
        %4286 = vmatmul.mubr.bf16.gmra.mxu0 %v3170
        %v4287 = vpop.f32.mrf.mxu0
        %v4288 = vadd.f32 0.0, %v4287
        %v4289 = vpop.f32.mrf.mxu0
        %v4290 = vadd.f32 0.0, %v4289
        %v4291 = vpop.f32.mrf.mxu0
        %v4292 = vadd.f32 0.0, %v4291
        %v4293 = vpop.f32.mrf.mxu0
        %v4294 = vadd.f32 0.0, %v4293
        %4295 = vmatprep.mubr.bf16.mxu0 %v3513
        %4296 = vmatmul.mubr.bf16.gmra.mxu0 %v3173
        %v4297 = vpop.f32.mrf.mxu0
        %v4298 = vadd.f32 0.0, %v4297
        %v4299 = vpop.f32.mrf.mxu0
        %v4300 = vadd.f32 0.0, %v4299
        %v4301 = vpop.f32.mrf.mxu0
        %v4302 = vadd.f32 0.0, %v4301
        %v4303 = vpop.f32.mrf.mxu0
        %v4304 = vadd.f32 0.0, %v4303
        %4305 = vmatprep.mubr.bf16.mxu0 %v3515
        %4306 = vmatmul.mubr.bf16.gmra.mxu0 %v3176
        %v4307 = vpop.f32.mrf.mxu0
        %v4308 = vadd.f32 0.0, %v4307
        %v4309 = vpop.f32.mrf.mxu0
        %v4310 = vadd.f32 0.0, %v4309
        %v4311 = vpop.f32.mrf.mxu0
        %v4312 = vadd.f32 0.0, %v4311
        %v4313 = vpop.f32.mrf.mxu0
        %v4314 = vadd.f32 0.0, %v4313
        %4315 = vmatprep.mubr.bf16.mxu0 %v3517
        %4316 = vmatmul.mubr.bf16.gmra.mxu0 %v3179
        %v4317 = vpop.f32.mrf.mxu0
        %v4318 = vadd.f32 0.0, %v4317
        %v4319 = vpop.f32.mrf.mxu0
        %v4320 = vadd.f32 0.0, %v4319
        %v4321 = vpop.f32.mrf.mxu0
        %v4322 = vadd.f32 0.0, %v4321
        %v4323 = vpop.f32.mrf.mxu0
        %v4324 = vadd.f32 0.0, %v4323
        %4325 = vmatprep.mubr.bf16.mxu0 %v3519
        %4326 = vmatmul.mubr.bf16.gmra.mxu0 %v3182
        %v4327 = vpop.f32.mrf.mxu0
        %v4328 = vadd.f32 0.0, %v4327
        %v4329 = vpop.f32.mrf.mxu0
        %v4330 = vadd.f32 0.0, %v4329
        %v4331 = vpop.f32.mrf.mxu0
        %v4332 = vadd.f32 0.0, %v4331
        %v4333 = vpop.f32.mrf.mxu0
        %v4334 = vadd.f32 0.0, %v4333
        %4335 = vmatprep.mubr.bf16.mxu0 %v3521
        %4336 = vmatmul.mubr.bf16.gmra.mxu0 %v3185
        %v4337 = vpop.f32.mrf.mxu0
        %v4338 = vadd.f32 0.0, %v4337
        %v4339 = vpop.f32.mrf.mxu0
        %v4340 = vadd.f32 0.0, %v4339
        %v4341 = vpop.f32.mrf.mxu0
        %v4342 = vadd.f32 0.0, %v4341
        %v4343 = vpop.f32.mrf.mxu0
        %v4344 = vadd.f32 0.0, %v4343
        %4345 = vmatprep.mubr.bf16.mxu0 %v3523
        %4346 = vmatmul.mubr.bf16.gmra.mxu0 %v3188
        %v4347 = vpop.f32.mrf.mxu0
        %v4348 = vadd.f32 0.0, %v4347
        %v4349 = vpop.f32.mrf.mxu0
        %v4350 = vadd.f32 0.0, %v4349
        %v4351 = vpop.f32.mrf.mxu0
        %v4352 = vadd.f32 0.0, %v4351
        %v4353 = vpop.f32.mrf.mxu0
        %v4354 = vadd.f32 0.0, %v4353
        %4355 = vmatprep.mubr.bf16.mxu0 %v3525
        %4356 = vmatmul.mubr.bf16.gmra.mxu0 %v3191
        %v4357 = vpop.f32.mrf.mxu0
        %v4358 = vadd.f32 0.0, %v4357
        %v4359 = vpop.f32.mrf.mxu0
        %v4360 = vadd.f32 0.0, %v4359
        %v4361 = vpop.f32.mrf.mxu0
        %v4362 = vadd.f32 0.0, %v4361
        %v4363 = vpop.f32.mrf.mxu0
        %v4364 = vadd.f32 0.0, %v4363
        %4365 = vmatprep.mubr.bf16.mxu0 %v3527
        %4366 = vmatmul.mubr.bf16.gmra.mxu0 %v3194
        %v4367 = vpop.f32.mrf.mxu0
        %v4368 = vadd.f32 0.0, %v4367
        %v4369 = vpop.f32.mrf.mxu0
        %v4370 = vadd.f32 0.0, %v4369
        %v4371 = vpop.f32.mrf.mxu0
        %v4372 = vadd.f32 0.0, %v4371
        %v4373 = vpop.f32.mrf.mxu0
        %v4374 = vadd.f32 0.0, %v4373
        %4375 = vmatprep.mubr.bf16.mxu0 %v3529
        %4376 = vmatmul.mubr.bf16.gmra.mxu0 %v3197
        %v4377 = vpop.f32.mrf.mxu0
        %v4378 = vadd.f32 0.0, %v4377
        %v4379 = vpop.f32.mrf.mxu0
        %v4380 = vadd.f32 0.0, %v4379
        %v4381 = vpop.f32.mrf.mxu0
        %v4382 = vadd.f32 0.0, %v4381
        %v4383 = vpop.f32.mrf.mxu0
        %v4384 = vadd.f32 0.0, %v4383
        %4385 = vmatprep.mubr.bf16.mxu0 %v3531
        %4386 = vmatmul.mubr.bf16.gmra.mxu0 %v3200
        %v4387 = vpop.f32.mrf.mxu0
        %v4388 = vadd.f32 0.0, %v4387
        %v4389 = vpop.f32.mrf.mxu0
        %v4390 = vadd.f32 0.0, %v4389
        %v4391 = vpop.f32.mrf.mxu0
        %v4392 = vadd.f32 0.0, %v4391
        %v4393 = vpop.f32.mrf.mxu0
        %v4394 = vadd.f32 0.0, %v4393
        %4395 = vmatprep.mubr.bf16.mxu0 %v3533
        %4396 = vmatmul.mubr.bf16.gmra.mxu0 %v3203
        %v4397 = vpop.f32.mrf.mxu0
        %v4398 = vadd.f32 0.0, %v4397
        %v4399 = vpop.f32.mrf.mxu0
        %v4400 = vadd.f32 0.0, %v4399
        %v4401 = vpop.f32.mrf.mxu0
        %v4402 = vadd.f32 0.0, %v4401
        %v4403 = vpop.f32.mrf.mxu0
        %v4404 = vadd.f32 0.0, %v4403
        %4405 = vmatprep.mubr.bf16.mxu0 %v3535
        %4406 = vmatmul.mubr.bf16.gmra.mxu0 %v3206
        %v4407 = vpop.f32.mrf.mxu0
        %v4408 = vadd.f32 0.0, %v4407
        %v4409 = vpop.f32.mrf.mxu0
        %v4410 = vadd.f32 0.0, %v4409
        %v4411 = vpop.f32.mrf.mxu0
        %v4412 = vadd.f32 0.0, %v4411
        %v4413 = vpop.f32.mrf.mxu0
        %v4414 = vadd.f32 0.0, %v4413
        %4415 = vmatprep.mubr.bf16.mxu0 %v3537
        %4416 = vmatmul.mubr.bf16.gmra.mxu0 %v3209
        %v4417 = vpop.f32.mrf.mxu0
        %v4418 = vadd.f32 0.0, %v4417
        %v4419 = vpop.f32.mrf.mxu0
        %v4420 = vadd.f32 0.0, %v4419
        %v4421 = vpop.f32.mrf.mxu0
        %v4422 = vadd.f32 0.0, %v4421
        %v4423 = vpop.f32.mrf.mxu0
        %v4424 = vadd.f32 0.0, %v4423
        %4425 = vmatprep.mubr.bf16.mxu0 %v3539
        %4426 = vmatmul.mubr.bf16.gmra.mxu0 %v3212
        %v4427 = vpop.f32.mrf.mxu0
        %v4428 = vadd.f32 0.0, %v4427
        %v4429 = vpop.f32.mrf.mxu0
        %v4430 = vadd.f32 0.0, %v4429
        %v4431 = vpop.f32.mrf.mxu0
        %v4432 = vadd.f32 0.0, %v4431
        %v4433 = vpop.f32.mrf.mxu0
        %v4434 = vadd.f32 0.0, %v4433
        %4435 = vmatprep.mubr.bf16.mxu0 %v3541
        %4436 = vmatmul.mubr.bf16.gmra.mxu0 %v3215
        %v4437 = vpop.f32.mrf.mxu0
        %v4438 = vadd.f32 0.0, %v4437
        %v4439 = vpop.f32.mrf.mxu0
        %v4440 = vadd.f32 0.0, %v4439
        %v4441 = vpop.f32.mrf.mxu0
        %v4442 = vadd.f32 0.0, %v4441
        %v4443 = vpop.f32.mrf.mxu0
        %v4444 = vadd.f32 0.0, %v4443
        %4445 = vmatprep.mubr.bf16.mxu0 %v3543
        %4446 = vmatmul.mubr.bf16.gmra.mxu0 %v3218
        %v4447 = vpop.f32.mrf.mxu0
        %v4448 = vadd.f32 0.0, %v4447
        %v4449 = vpop.f32.mrf.mxu0
        %v4450 = vadd.f32 0.0, %v4449
        %v4451 = vpop.f32.mrf.mxu0
        %v4452 = vadd.f32 0.0, %v4451
        %v4453 = vpop.f32.mrf.mxu0
        %v4454 = vadd.f32 0.0, %v4453
        %4455 = vmatprep.mubr.bf16.mxu0 %v3545
        %4456 = vmatmul.mubr.bf16.gmra.mxu0 %v3221
        %v4457 = vpop.f32.mrf.mxu0
        %v4458 = vadd.f32 0.0, %v4457
        %v4459 = vpop.f32.mrf.mxu0
        %v4460 = vadd.f32 0.0, %v4459
        %v4461 = vpop.f32.mrf.mxu0
        %v4462 = vadd.f32 0.0, %v4461
        %v4463 = vpop.f32.mrf.mxu0
        %v4464 = vadd.f32 0.0, %v4463
        %4465 = vmatprep.mubr.bf16.mxu0 %v3547
        %4466 = vmatmul.mubr.bf16.gmra.mxu0 %v3224
        %v4467 = vpop.f32.mrf.mxu0
        %v4468 = vadd.f32 0.0, %v4467
        %v4469 = vpop.f32.mrf.mxu0
        %v4470 = vadd.f32 0.0, %v4469
        %v4471 = vpop.f32.mrf.mxu0
        %v4472 = vadd.f32 0.0, %v4471
        %v4473 = vpop.f32.mrf.mxu0
        %v4474 = vadd.f32 0.0, %v4473
        %4475 = vmatprep.mubr.bf16.mxu0 %v3549
        %4476 = vmatmul.mubr.bf16.gmra.mxu0 %v3227
        %v4477 = vpop.f32.mrf.mxu0
        %v4478 = vadd.f32 0.0, %v4477
        %v4479 = vpop.f32.mrf.mxu0
        %v4480 = vadd.f32 0.0, %v4479
        %v4481 = vpop.f32.mrf.mxu0
        %v4482 = vadd.f32 0.0, %v4481
        %v4483 = vpop.f32.mrf.mxu0
        %v4484 = vadd.f32 0.0, %v4483
        %4485 = vmatprep.mubr.bf16.mxu0 %v3551
        %4486 = vmatmul.mubr.bf16.gmra.mxu0 %v3230
        %v4487 = vpop.f32.mrf.mxu0
        %v4488 = vadd.f32 0.0, %v4487
        %v4489 = vpop.f32.mrf.mxu0
        %v4490 = vadd.f32 0.0, %v4489
        %v4491 = vpop.f32.mrf.mxu0
        %v4492 = vadd.f32 0.0, %v4491
        %v4493 = vpop.f32.mrf.mxu0
        %v4494 = vadd.f32 0.0, %v4493
        %4495 = vmatprep.mubr.bf16.mxu0 %v3553
        %4496 = vmatmul.mubr.bf16.gmra.mxu0 %v3233
        %v4497 = vpop.f32.mrf.mxu0
        %v4498 = vadd.f32 0.0, %v4497
        %v4499 = vpop.f32.mrf.mxu0
        %v4500 = vadd.f32 0.0, %v4499
        %v4501 = vpop.f32.mrf.mxu0
        %v4502 = vadd.f32 0.0, %v4501
        %v4503 = vpop.f32.mrf.mxu0
        %v4504 = vadd.f32 0.0, %v4503
        %4505 = vmatprep.mubr.bf16.mxu0 %v3555
        %4506 = vmatmul.mubr.bf16.gmra.mxu0 %v3236
        %v4507 = vpop.f32.mrf.mxu0
        %v4508 = vadd.f32 0.0, %v4507
        %v4509 = vpop.f32.mrf.mxu0
        %v4510 = vadd.f32 0.0, %v4509
        %v4511 = vpop.f32.mrf.mxu0
        %v4512 = vadd.f32 0.0, %v4511
        %v4513 = vpop.f32.mrf.mxu0
        %v4514 = vadd.f32 0.0, %v4513
        %4515 = vmatprep.mubr.bf16.mxu0 %v3557
        %4516 = vmatmul.mubr.bf16.gmra.mxu0 %v3239
        %v4517 = vpop.f32.mrf.mxu0
        %v4518 = vadd.f32 0.0, %v4517
        %v4519 = vpop.f32.mrf.mxu0
        %v4520 = vadd.f32 0.0, %v4519
        %v4521 = vpop.f32.mrf.mxu0
        %v4522 = vadd.f32 0.0, %v4521
        %v4523 = vpop.f32.mrf.mxu0
        %v4524 = vadd.f32 0.0, %v4523
        %4525 = vmatprep.mubr.bf16.mxu0 %v3559
        %4526 = vmatmul.mubr.bf16.gmra.mxu0 %v3242
        %v4527 = vpop.f32.mrf.mxu0
        %v4528 = vadd.f32 0.0, %v4527
        %v4529 = vpop.f32.mrf.mxu0
        %v4530 = vadd.f32 0.0, %v4529
        %v4531 = vpop.f32.mrf.mxu0
        %v4532 = vadd.f32 0.0, %v4531
        %v4533 = vpop.f32.mrf.mxu0
        %v4534 = vadd.f32 0.0, %v4533
        %4535 = vmatprep.mubr.bf16.mxu0 %v3561
        %4536 = vmatmul.mubr.bf16.gmra.mxu0 %v3245
        %v4537 = vpop.f32.mrf.mxu0
        %v4538 = vadd.f32 0.0, %v4537
        %v4539 = vpop.f32.mrf.mxu0
        %v4540 = vadd.f32 0.0, %v4539
        %v4541 = vpop.f32.mrf.mxu0
        %v4542 = vadd.f32 0.0, %v4541
        %v4543 = vpop.f32.mrf.mxu0
        %v4544 = vadd.f32 0.0, %v4543
        %4545 = vmatprep.mubr.bf16.mxu0 %v3563
        %4546 = vmatmul.mubr.bf16.gmra.mxu0 %v3248
        %v4547 = vpop.f32.mrf.mxu0
        %v4548 = vadd.f32 0.0, %v4547
        %v4549 = vpop.f32.mrf.mxu0
        %v4550 = vadd.f32 0.0, %v4549
        %v4551 = vpop.f32.mrf.mxu0
        %v4552 = vadd.f32 0.0, %v4551
        %v4553 = vpop.f32.mrf.mxu0
        %v4554 = vadd.f32 0.0, %v4553
        %4555 = vmatprep.mubr.bf16.mxu0 %v3565
        %4556 = vmatmul.mubr.bf16.gmra.mxu0 %v3251
        %v4557 = vpop.f32.mrf.mxu0
        %v4558 = vadd.f32 0.0, %v4557
        %v4559 = vpop.f32.mrf.mxu0
        %v4560 = vadd.f32 0.0, %v4559
        %v4561 = vpop.f32.mrf.mxu0
        %v4562 = vadd.f32 0.0, %v4561
        %v4563 = vpop.f32.mrf.mxu0
        %v4564 = vadd.f32 0.0, %v4563
        %4565 = vmatprep.mubr.bf16.mxu0 %v3567
        %4566 = vmatmul.mubr.bf16.gmra.mxu0 %v3254
        %v4567 = vpop.f32.mrf.mxu0
        %v4568 = vadd.f32 0.0, %v4567
        %v4569 = vpop.f32.mrf.mxu0
        %v4570 = vadd.f32 0.0, %v4569
        %v4571 = vpop.f32.mrf.mxu0
        %v4572 = vadd.f32 0.0, %v4571
        %v4573 = vpop.f32.mrf.mxu0
        %v4574 = vadd.f32 0.0, %v4573
        %4575 = vmatprep.mubr.bf16.mxu0 %v3569
        %4576 = vmatmul.mubr.bf16.gmra.mxu0 %v3257
        %v4577 = vpop.f32.mrf.mxu0
        %v4578 = vadd.f32 0.0, %v4577
        %v4579 = vpop.f32.mrf.mxu0
        %v4580 = vadd.f32 0.0, %v4579
        %v4581 = vpop.f32.mrf.mxu0
        %v4582 = vadd.f32 0.0, %v4581
        %v4583 = vpop.f32.mrf.mxu0
        %v4584 = vadd.f32 0.0, %v4583
        %4585 = vmatprep.mubr.bf16.mxu0 %v3571
        %4586 = vmatmul.mubr.bf16.gmra.mxu0 %v3260
        %v4587 = vpop.f32.mrf.mxu0
        %v4588 = vadd.f32 0.0, %v4587
        %v4589 = vpop.f32.mrf.mxu0
        %v4590 = vadd.f32 0.0, %v4589
        %v4591 = vpop.f32.mrf.mxu0
        %v4592 = vadd.f32 0.0, %v4591
        %v4593 = vpop.f32.mrf.mxu0
        %v4594 = vadd.f32 0.0, %v4593
        %4595 = vmatprep.mubr.bf16.mxu0 %v3573
        %4596 = vmatmul.mubr.bf16.gmra.mxu0 %v3263
        %v4597 = vpop.f32.mrf.mxu0
        %v4598 = vadd.f32 0.0, %v4597
        %v4599 = vpop.f32.mrf.mxu0
        %v4600 = vadd.f32 0.0, %v4599
        %v4601 = vpop.f32.mrf.mxu0
        %v4602 = vadd.f32 0.0, %v4601
        %v4603 = vpop.f32.mrf.mxu0
        %v4604 = vadd.f32 0.0, %v4603
        %4605 = vmatprep.mubr.bf16.mxu0 %v3575
        %4606 = vmatmul.mubr.bf16.gmra.mxu0 %v3266
        %v4607 = vpop.f32.mrf.mxu0
        %v4608 = vadd.f32 0.0, %v4607
        %v4609 = vpop.f32.mrf.mxu0
        %v4610 = vadd.f32 0.0, %v4609
        %v4611 = vpop.f32.mrf.mxu0
        %v4612 = vadd.f32 0.0, %v4611
        %v4613 = vpop.f32.mrf.mxu0
        %v4614 = vadd.f32 0.0, %v4613
        %4615 = vdwg.mxu0
        %v4616 = vmax.f32 %v3625, %v4138
        %v4617 = vmax.f32 %v3627, %v4140
        %v4618 = vmax.f32 %v3629, %v4142
        %v4619 = vmax.f32 %v3631, %v4144
        %v4620 = vmax.f32 %v3635, %v4148
        %v4621 = vmax.f32 %v3637, %v4150
        %v4622 = vmax.f32 %v3639, %v4152
        %v4623 = vmax.f32 %v3641, %v4154
        %v4624 = vmax.f32 %v3645, %v4158
        %v4625 = vmax.f32 %v3647, %v4160
        %v4626 = vmax.f32 %v3649, %v4162
        %v4627 = vmax.f32 %v3651, %v4164
        %v4628 = vmax.f32 %v3655, %v4168
        %v4629 = vmax.f32 %v3657, %v4170
        %v4630 = vmax.f32 %v3659, %v4172
        %v4631 = vmax.f32 %v3661, %v4174
        %v4632 = vmax.f32 %v3665, %v4178
        %v4633 = vmax.f32 %v3667, %v4180
        %v4634 = vmax.f32 %v3669, %v4182
        %v4635 = vmax.f32 %v3671, %v4184
        %v4636 = vmax.f32 %v3675, %v4188
        %v4637 = vmax.f32 %v3677, %v4190
        %v4638 = vmax.f32 %v3679, %v4192
        %v4639 = vmax.f32 %v3681, %v4194
        %v4640 = vmax.f32 %v3685, %v4198
        %v4641 = vmax.f32 %v3687, %v4200
        %v4642 = vmax.f32 %v3689, %v4202
        %v4643 = vmax.f32 %v3691, %v4204
        %v4644 = vmax.f32 %v3695, %v4208
        %v4645 = vmax.f32 %v3697, %v4210
        %v4646 = vmax.f32 %v3699, %v4212
        %v4647 = vmax.f32 %v3701, %v4214
        %v4648 = vmax.f32 %v3705, %v4218
        %v4649 = vmax.f32 %v3707, %v4220
        %v4650 = vmax.f32 %v3709, %v4222
        %v4651 = vmax.f32 %v3711, %v4224
        %v4652 = vmax.f32 %v3715, %v4228
        %v4653 = vmax.f32 %v3717, %v4230
        %v4654 = vmax.f32 %v3719, %v4232
        %v4655 = vmax.f32 %v3721, %v4234
        %v4656 = vmax.f32 %v3725, %v4238
        %v4657 = vmax.f32 %v3727, %v4240
        %v4658 = vmax.f32 %v3729, %v4242
        %v4659 = vmax.f32 %v3731, %v4244
        %v4660 = vmax.f32 %v3735, %v4248
        %v4661 = vmax.f32 %v3737, %v4250
        %v4662 = vmax.f32 %v3739, %v4252
        %v4663 = vmax.f32 %v3741, %v4254
        %v4664 = vmax.f32 %v3745, %v4258
        %v4665 = vmax.f32 %v3747, %v4260
        %v4666 = vmax.f32 %v3749, %v4262
        %v4667 = vmax.f32 %v3751, %v4264
        %v4668 = vmax.f32 %v3755, %v4268
        %v4669 = vmax.f32 %v3757, %v4270
        %v4670 = vmax.f32 %v3759, %v4272
        %v4671 = vmax.f32 %v3761, %v4274
        %v4672 = vmax.f32 %v3765, %v4278
        %v4673 = vmax.f32 %v3767, %v4280
        %v4674 = vmax.f32 %v3769, %v4282
        %v4675 = vmax.f32 %v3771, %v4284
        %v4676 = vmax.f32 %v3775, %v4288
        %v4677 = vmax.f32 %v3777, %v4290
        %v4678 = vmax.f32 %v3779, %v4292
        %v4679 = vmax.f32 %v3781, %v4294
        %v4680 = vmax.f32 %v3785, %v4298
        %v4681 = vmax.f32 %v3787, %v4300
        %v4682 = vmax.f32 %v3789, %v4302
        %v4683 = vmax.f32 %v3791, %v4304
        %v4684 = vmax.f32 %v3795, %v4308
        %v4685 = vmax.f32 %v3797, %v4310
        %v4686 = vmax.f32 %v3799, %v4312
        %v4687 = vmax.f32 %v3801, %v4314
        %v4688 = vmax.f32 %v3805, %v4318
        %v4689 = vmax.f32 %v3807, %v4320
        %v4690 = vmax.f32 %v3809, %v4322
        %v4691 = vmax.f32 %v3811, %v4324
        %v4692 = vmax.f32 %v3815, %v4328
        %v4693 = vmax.f32 %v3817, %v4330
        %v4694 = vmax.f32 %v3819, %v4332
        %v4695 = vmax.f32 %v3821, %v4334
        %v4696 = vmax.f32 %v3825, %v4338
        %v4697 = vmax.f32 %v3827, %v4340
        %v4698 = vmax.f32 %v3829, %v4342
        %v4699 = vmax.f32 %v3831, %v4344
        %v4700 = vmax.f32 %v3835, %v4348
        %v4701 = vmax.f32 %v3837, %v4350
        %v4702 = vmax.f32 %v3839, %v4352
        %v4703 = vmax.f32 %v3841, %v4354
        %v4704 = vmax.f32 %v3845, %v4358
        %v4705 = vmax.f32 %v3847, %v4360
        %v4706 = vmax.f32 %v3849, %v4362
        %v4707 = vmax.f32 %v3851, %v4364
        %v4708 = vmax.f32 %v3855, %v4368
        %v4709 = vmax.f32 %v3857, %v4370
        %v4710 = vmax.f32 %v3859, %v4372
        %v4711 = vmax.f32 %v3861, %v4374
        %v4712 = vmax.f32 %v3865, %v4378
        %v4713 = vmax.f32 %v3867, %v4380
        %v4714 = vmax.f32 %v3869, %v4382
        %v4715 = vmax.f32 %v3871, %v4384
        %v4716 = vmax.f32 %v3875, %v4388
        %v4717 = vmax.f32 %v3877, %v4390
        %v4718 = vmax.f32 %v3879, %v4392
        %v4719 = vmax.f32 %v3881, %v4394
        %v4720 = vmax.f32 %v3885, %v4398
        %v4721 = vmax.f32 %v3887, %v4400
        %v4722 = vmax.f32 %v3889, %v4402
        %v4723 = vmax.f32 %v3891, %v4404
        %v4724 = vmax.f32 %v3895, %v4408
        %v4725 = vmax.f32 %v3897, %v4410
        %v4726 = vmax.f32 %v3899, %v4412
        %v4727 = vmax.f32 %v3901, %v4414
        %v4728 = vmax.f32 %v3905, %v4418
        %v4729 = vmax.f32 %v3907, %v4420
        %v4730 = vmax.f32 %v3909, %v4422
        %v4731 = vmax.f32 %v3911, %v4424
        %v4732 = vmax.f32 %v3915, %v4428
        %v4733 = vmax.f32 %v3917, %v4430
        %v4734 = vmax.f32 %v3919, %v4432
        %v4735 = vmax.f32 %v3921, %v4434
        %v4736 = vmax.f32 %v3925, %v4438
        %v4737 = vmax.f32 %v3927, %v4440
        %v4738 = vmax.f32 %v3929, %v4442
        %v4739 = vmax.f32 %v3931, %v4444
        %v4740 = vmax.f32 %v3935, %v4448
        %v4741 = vmax.f32 %v3937, %v4450
        %v4742 = vmax.f32 %v3939, %v4452
        %v4743 = vmax.f32 %v3941, %v4454
        %v4744 = vmax.f32 %v3945, %v4458
        %v4745 = vmax.f32 %v3947, %v4460
        %v4746 = vmax.f32 %v3949, %v4462
        %v4747 = vmax.f32 %v3951, %v4464
        %v4748 = vmax.f32 %v3955, %v4468
        %v4749 = vmax.f32 %v3957, %v4470
        %v4750 = vmax.f32 %v3959, %v4472
        %v4751 = vmax.f32 %v3961, %v4474
        %v4752 = vmax.f32 %v3965, %v4478
        %v4753 = vmax.f32 %v3967, %v4480
        %v4754 = vmax.f32 %v3969, %v4482
        %v4755 = vmax.f32 %v3971, %v4484
        %v4756 = vmax.f32 %v3975, %v4488
        %v4757 = vmax.f32 %v3977, %v4490
        %v4758 = vmax.f32 %v3979, %v4492
        %v4759 = vmax.f32 %v3981, %v4494
        %v4760 = vmax.f32 %v3985, %v4498
        %v4761 = vmax.f32 %v3987, %v4500
        %v4762 = vmax.f32 %v3989, %v4502
        %v4763 = vmax.f32 %v3991, %v4504
        %v4764 = vmax.f32 %v3995, %v4508
        %v4765 = vmax.f32 %v3997, %v4510
        %v4766 = vmax.f32 %v3999, %v4512
        %v4767 = vmax.f32 %v4001, %v4514
        %v4768 = vmax.f32 %v4005, %v4518
        %v4769 = vmax.f32 %v4007, %v4520
        %v4770 = vmax.f32 %v4009, %v4522
        %v4771 = vmax.f32 %v4011, %v4524
        %v4772 = vmax.f32 %v4015, %v4528
        %v4773 = vmax.f32 %v4017, %v4530
        %v4774 = vmax.f32 %v4019, %v4532
        %v4775 = vmax.f32 %v4021, %v4534
        %v4776 = vmax.f32 %v4025, %v4538
        %v4777 = vmax.f32 %v4027, %v4540
        %v4778 = vmax.f32 %v4029, %v4542
        %v4779 = vmax.f32 %v4031, %v4544
        %v4780 = vmax.f32 %v4035, %v4548
        %v4781 = vmax.f32 %v4037, %v4550
        %v4782 = vmax.f32 %v4039, %v4552
        %v4783 = vmax.f32 %v4041, %v4554
        %v4784 = vmax.f32 %v4045, %v4558
        %v4785 = vmax.f32 %v4047, %v4560
        %v4786 = vmax.f32 %v4049, %v4562
        %v4787 = vmax.f32 %v4051, %v4564
        %v4788 = vmax.f32 %v4055, %v4568
        %v4789 = vmax.f32 %v4057, %v4570
        %v4790 = vmax.f32 %v4059, %v4572
        %v4791 = vmax.f32 %v4061, %v4574
        %v4792 = vmax.f32 %v4065, %v4578
        %v4793 = vmax.f32 %v4067, %v4580
        %v4794 = vmax.f32 %v4069, %v4582
        %v4795 = vmax.f32 %v4071, %v4584
        %v4796 = vmax.f32 %v4075, %v4588
        %v4797 = vmax.f32 %v4077, %v4590
        %v4798 = vmax.f32 %v4079, %v4592
        %v4799 = vmax.f32 %v4081, %v4594
        %v4800 = vmax.f32 %v4085, %v4598
        %v4801 = vmax.f32 %v4087, %v4600
        %v4802 = vmax.f32 %v4089, %v4602
        %v4803 = vmax.f32 %v4091, %v4604
        %v4804 = vmax.f32 %v4095, %v4608
        %v4805 = vmax.f32 %v4097, %v4610
        %v4806 = vmax.f32 %v4099, %v4612
        %v4807 = vmax.f32 %v4101, %v4614
        %v4808 = vld [vmem:[%s2] sm:$0x3]
        %v4810 = vlaneseq
        %v4811 = vshrl.u32 %v4810, 7
        %v4812 = vsub.s32 0, %v4811
        %v4813 = vrot.slane %v4808, %v4812
        %v4814 = vlaneseq
        %v4815 = vshrl.u32 %v4814, 7
        %v4816 = vsub.s32 1, %v4815
        %v4817 = vrot.slane %v4808, %v4816
        %v4820 = vadd.f32 %v4616, %v4813
        %v4821 = vadd.f32 %v4617, %v4817
        %v4822 = vadd.f32 %v4618, %v4813
        %v4823 = vadd.f32 %v4619, %v4817
        %v4824 = vadd.f32 %v4620, %v4813
        %v4825 = vadd.f32 %v4621, %v4817
        %v4826 = vadd.f32 %v4622, %v4813
        %v4827 = vadd.f32 %v4623, %v4817
        %v4828 = vadd.f32 %v4624, %v4813
        %v4829 = vadd.f32 %v4625, %v4817
        %v4830 = vadd.f32 %v4626, %v4813
        %v4831 = vadd.f32 %v4627, %v4817
        %v4832 = vadd.f32 %v4628, %v4813
        %v4833 = vadd.f32 %v4629, %v4817
        %v4834 = vadd.f32 %v4630, %v4813
        %v4835 = vadd.f32 %v4631, %v4817
        %v4836 = vadd.f32 %v4632, %v4813
        %v4837 = vadd.f32 %v4633, %v4817
        %v4838 = vadd.f32 %v4634, %v4813
        %v4839 = vadd.f32 %v4635, %v4817
        %v4840 = vadd.f32 %v4636, %v4813
        %v4841 = vadd.f32 %v4637, %v4817
        %v4842 = vadd.f32 %v4638, %v4813
        %v4843 = vadd.f32 %v4639, %v4817
        %v4844 = vadd.f32 %v4640, %v4813
        %v4845 = vadd.f32 %v4641, %v4817
        %v4846 = vadd.f32 %v4642, %v4813
        %v4847 = vadd.f32 %v4643, %v4817
        %v4848 = vadd.f32 %v4644, %v4813
        %v4849 = vadd.f32 %v4645, %v4817
        %v4850 = vadd.f32 %v4646, %v4813
        %v4851 = vadd.f32 %v4647, %v4817
        %v4852 = vadd.f32 %v4648, %v4813
        %v4853 = vadd.f32 %v4649, %v4817
        %v4854 = vadd.f32 %v4650, %v4813
        %v4855 = vadd.f32 %v4651, %v4817
        %v4856 = vadd.f32 %v4652, %v4813
        %v4857 = vadd.f32 %v4653, %v4817
        %v4858 = vadd.f32 %v4654, %v4813
        %v4859 = vadd.f32 %v4655, %v4817
        %v4860 = vadd.f32 %v4656, %v4813
        %v4861 = vadd.f32 %v4657, %v4817
        %v4862 = vadd.f32 %v4658, %v4813
        %v4863 = vadd.f32 %v4659, %v4817
        %v4864 = vadd.f32 %v4660, %v4813
        %v4865 = vadd.f32 %v4661, %v4817
        %v4866 = vadd.f32 %v4662, %v4813
        %v4867 = vadd.f32 %v4663, %v4817
        %v4868 = vadd.f32 %v4664, %v4813
        %v4869 = vadd.f32 %v4665, %v4817
        %v4870 = vadd.f32 %v4666, %v4813
        %v4871 = vadd.f32 %v4667, %v4817
        %v4872 = vadd.f32 %v4668, %v4813
        %v4873 = vadd.f32 %v4669, %v4817
        %v4874 = vadd.f32 %v4670, %v4813
        %v4875 = vadd.f32 %v4671, %v4817
        %v4876 = vadd.f32 %v4672, %v4813
        %v4877 = vadd.f32 %v4673, %v4817
        %v4878 = vadd.f32 %v4674, %v4813
        %v4879 = vadd.f32 %v4675, %v4817
        %v4880 = vadd.f32 %v4676, %v4813
        %v4881 = vadd.f32 %v4677, %v4817
        %v4882 = vadd.f32 %v4678, %v4813
        %v4883 = vadd.f32 %v4679, %v4817
        %v4884 = vadd.f32 %v4680, %v4813
        %v4885 = vadd.f32 %v4681, %v4817
        %v4886 = vadd.f32 %v4682, %v4813
        %v4887 = vadd.f32 %v4683, %v4817
        %v4888 = vadd.f32 %v4684, %v4813
        %v4889 = vadd.f32 %v4685, %v4817
        %v4890 = vadd.f32 %v4686, %v4813
        %v4891 = vadd.f32 %v4687, %v4817
        %v4892 = vadd.f32 %v4688, %v4813
        %v4893 = vadd.f32 %v4689, %v4817
        %v4894 = vadd.f32 %v4690, %v4813
        %v4895 = vadd.f32 %v4691, %v4817
        %v4896 = vadd.f32 %v4692, %v4813
        %v4897 = vadd.f32 %v4693, %v4817
        %v4898 = vadd.f32 %v4694, %v4813
        %v4899 = vadd.f32 %v4695, %v4817
        %v4900 = vadd.f32 %v4696, %v4813
        %v4901 = vadd.f32 %v4697, %v4817
        %v4902 = vadd.f32 %v4698, %v4813
        %v4903 = vadd.f32 %v4699, %v4817
        %v4904 = vadd.f32 %v4700, %v4813
        %v4905 = vadd.f32 %v4701, %v4817
        %v4906 = vadd.f32 %v4702, %v4813
        %v4907 = vadd.f32 %v4703, %v4817
        %v4908 = vadd.f32 %v4704, %v4813
        %v4909 = vadd.f32 %v4705, %v4817
        %v4910 = vadd.f32 %v4706, %v4813
        %v4911 = vadd.f32 %v4707, %v4817
        %v4912 = vadd.f32 %v4708, %v4813
        %v4913 = vadd.f32 %v4709, %v4817
        %v4914 = vadd.f32 %v4710, %v4813
        %v4915 = vadd.f32 %v4711, %v4817
        %v4916 = vadd.f32 %v4712, %v4813
        %v4917 = vadd.f32 %v4713, %v4817
        %v4918 = vadd.f32 %v4714, %v4813
        %v4919 = vadd.f32 %v4715, %v4817
        %v4920 = vadd.f32 %v4716, %v4813
        %v4921 = vadd.f32 %v4717, %v4817
        %v4922 = vadd.f32 %v4718, %v4813
        %v4923 = vadd.f32 %v4719, %v4817
        %v4924 = vadd.f32 %v4720, %v4813
        %v4925 = vadd.f32 %v4721, %v4817
        %v4926 = vadd.f32 %v4722, %v4813
        %v4927 = vadd.f32 %v4723, %v4817
        %v4928 = vadd.f32 %v4724, %v4813
        %v4929 = vadd.f32 %v4725, %v4817
        %v4930 = vadd.f32 %v4726, %v4813
        %v4931 = vadd.f32 %v4727, %v4817
        %v4932 = vadd.f32 %v4728, %v4813
        %v4933 = vadd.f32 %v4729, %v4817
        %v4934 = vadd.f32 %v4730, %v4813
        %v4935 = vadd.f32 %v4731, %v4817
        %v4936 = vadd.f32 %v4732, %v4813
        %v4937 = vadd.f32 %v4733, %v4817
        %v4938 = vadd.f32 %v4734, %v4813
        %v4939 = vadd.f32 %v4735, %v4817
        %v4940 = vadd.f32 %v4736, %v4813
        %v4941 = vadd.f32 %v4737, %v4817
        %v4942 = vadd.f32 %v4738, %v4813
        %v4943 = vadd.f32 %v4739, %v4817
        %v4944 = vadd.f32 %v4740, %v4813
        %v4945 = vadd.f32 %v4741, %v4817
        %v4946 = vadd.f32 %v4742, %v4813
        %v4947 = vadd.f32 %v4743, %v4817
        %v4948 = vadd.f32 %v4744, %v4813
        %v4949 = vadd.f32 %v4745, %v4817
        %v4950 = vadd.f32 %v4746, %v4813
        %v4951 = vadd.f32 %v4747, %v4817
        %v4952 = vadd.f32 %v4748, %v4813
        %v4953 = vadd.f32 %v4749, %v4817
        %v4954 = vadd.f32 %v4750, %v4813
        %v4955 = vadd.f32 %v4751, %v4817
        %v4956 = vadd.f32 %v4752, %v4813
        %v4957 = vadd.f32 %v4753, %v4817
        %v4958 = vadd.f32 %v4754, %v4813
        %v4959 = vadd.f32 %v4755, %v4817
        %v4960 = vadd.f32 %v4756, %v4813
        %v4961 = vadd.f32 %v4757, %v4817
        %v4962 = vadd.f32 %v4758, %v4813
        %v4963 = vadd.f32 %v4759, %v4817
        %v4964 = vadd.f32 %v4760, %v4813
        %v4965 = vadd.f32 %v4761, %v4817
        %v4966 = vadd.f32 %v4762, %v4813
        %v4967 = vadd.f32 %v4763, %v4817
        %v4968 = vadd.f32 %v4764, %v4813
        %v4969 = vadd.f32 %v4765, %v4817
        %v4970 = vadd.f32 %v4766, %v4813
        %v4971 = vadd.f32 %v4767, %v4817
        %v4972 = vadd.f32 %v4768, %v4813
        %v4973 = vadd.f32 %v4769, %v4817
        %v4974 = vadd.f32 %v4770, %v4813
        %v4975 = vadd.f32 %v4771, %v4817
        %v4976 = vadd.f32 %v4772, %v4813
        %v4977 = vadd.f32 %v4773, %v4817
        %v4978 = vadd.f32 %v4774, %v4813
        %v4979 = vadd.f32 %v4775, %v4817
        %v4980 = vadd.f32 %v4776, %v4813
        %v4981 = vadd.f32 %v4777, %v4817
        %v4982 = vadd.f32 %v4778, %v4813
        %v4983 = vadd.f32 %v4779, %v4817
        %v4984 = vadd.f32 %v4780, %v4813
        %v4985 = vadd.f32 %v4781, %v4817
        %v4986 = vadd.f32 %v4782, %v4813
        %v4987 = vadd.f32 %v4783, %v4817
        %v4988 = vadd.f32 %v4784, %v4813
        %v4989 = vadd.f32 %v4785, %v4817
        %v4990 = vadd.f32 %v4786, %v4813
        %v4991 = vadd.f32 %v4787, %v4817
        %v4992 = vadd.f32 %v4788, %v4813
        %v4993 = vadd.f32 %v4789, %v4817
        %v4994 = vadd.f32 %v4790, %v4813
        %v4995 = vadd.f32 %v4791, %v4817
        %v4996 = vadd.f32 %v4792, %v4813
        %v4997 = vadd.f32 %v4793, %v4817
        %v4998 = vadd.f32 %v4794, %v4813
        %v4999 = vadd.f32 %v4795, %v4817
        %v5000 = vadd.f32 %v4796, %v4813
        %v5001 = vadd.f32 %v4797, %v4817
        %v5002 = vadd.f32 %v4798, %v4813
        %v5003 = vadd.f32 %v4799, %v4817
        %v5004 = vadd.f32 %v4800, %v4813
        %v5005 = vadd.f32 %v4801, %v4817
        %v5006 = vadd.f32 %v4802, %v4813
        %v5007 = vadd.f32 %v4803, %v4817
        %v5008 = vadd.f32 %v4804, %v4813
        %v5009 = vadd.f32 %v4805, %v4817
        %v5010 = vadd.f32 %v4806, %v4813
        %v5011 = vadd.f32 %v4807, %v4817
        %v5012 = vmax.f32 %v4820, 0.0
        %v5013 = vmax.f32 %v4821, 0.0
        %v5014 = vmax.f32 %v4822, 0.0
        %v5015 = vmax.f32 %v4823, 0.0
        %v5016 = vmax.f32 %v4824, 0.0
        %v5017 = vmax.f32 %v4825, 0.0
        %v5018 = vmax.f32 %v4826, 0.0
        %v5019 = vmax.f32 %v4827, 0.0
        %v5020 = vmax.f32 %v4828, 0.0
        %v5021 = vmax.f32 %v4829, 0.0
        %v5022 = vmax.f32 %v4830, 0.0
        %v5023 = vmax.f32 %v4831, 0.0
        %v5024 = vmax.f32 %v4832, 0.0
        %v5025 = vmax.f32 %v4833, 0.0
        %v5026 = vmax.f32 %v4834, 0.0
        %v5027 = vmax.f32 %v4835, 0.0
        %v5028 = vmax.f32 %v4836, 0.0
        %v5029 = vmax.f32 %v4837, 0.0
        %v5030 = vmax.f32 %v4838, 0.0
        %v5031 = vmax.f32 %v4839, 0.0
        %v5032 = vmax.f32 %v4840, 0.0
        %v5033 = vmax.f32 %v4841, 0.0
        %v5034 = vmax.f32 %v4842, 0.0
        %v5035 = vmax.f32 %v4843, 0.0
        %v5036 = vmax.f32 %v4844, 0.0
        %v5037 = vmax.f32 %v4845, 0.0
        %v5038 = vmax.f32 %v4846, 0.0
        %v5039 = vmax.f32 %v4847, 0.0
        %v5040 = vmax.f32 %v4848, 0.0
        %v5041 = vmax.f32 %v4849, 0.0
        %v5042 = vmax.f32 %v4850, 0.0
        %v5043 = vmax.f32 %v4851, 0.0
        %v5044 = vmax.f32 %v4852, 0.0
        %v5045 = vmax.f32 %v4853, 0.0
        %v5046 = vmax.f32 %v4854, 0.0
        %v5047 = vmax.f32 %v4855, 0.0
        %v5048 = vmax.f32 %v4856, 0.0
        %v5049 = vmax.f32 %v4857, 0.0
        %v5050 = vmax.f32 %v4858, 0.0
        %v5051 = vmax.f32 %v4859, 0.0
        %v5052 = vmax.f32 %v4860, 0.0
        %v5053 = vmax.f32 %v4861, 0.0
        %v5054 = vmax.f32 %v4862, 0.0
        %v5055 = vmax.f32 %v4863, 0.0
        %v5056 = vmax.f32 %v4864, 0.0
        %v5057 = vmax.f32 %v4865, 0.0
        %v5058 = vmax.f32 %v4866, 0.0
        %v5059 = vmax.f32 %v4867, 0.0
        %v5060 = vmax.f32 %v4868, 0.0
        %v5061 = vmax.f32 %v4869, 0.0
        %v5062 = vmax.f32 %v4870, 0.0
        %v5063 = vmax.f32 %v4871, 0.0
        %v5064 = vmax.f32 %v4872, 0.0
        %v5065 = vmax.f32 %v4873, 0.0
        %v5066 = vmax.f32 %v4874, 0.0
        %v5067 = vmax.f32 %v4875, 0.0
        %v5068 = vmax.f32 %v4876, 0.0
        %v5069 = vmax.f32 %v4877, 0.0
        %v5070 = vmax.f32 %v4878, 0.0
        %v5071 = vmax.f32 %v4879, 0.0
        %v5072 = vmax.f32 %v4880, 0.0
        %v5073 = vmax.f32 %v4881, 0.0
        %v5074 = vmax.f32 %v4882, 0.0
        %v5075 = vmax.f32 %v4883, 0.0
        %v5076 = vmax.f32 %v4884, 0.0
        %v5077 = vmax.f32 %v4885, 0.0
        %v5078 = vmax.f32 %v4886, 0.0
        %v5079 = vmax.f32 %v4887, 0.0
        %v5080 = vmax.f32 %v4888, 0.0
        %v5081 = vmax.f32 %v4889, 0.0
        %v5082 = vmax.f32 %v4890, 0.0
        %v5083 = vmax.f32 %v4891, 0.0
        %v5084 = vmax.f32 %v4892, 0.0
        %v5085 = vmax.f32 %v4893, 0.0
        %v5086 = vmax.f32 %v4894, 0.0
        %v5087 = vmax.f32 %v4895, 0.0
        %v5088 = vmax.f32 %v4896, 0.0
        %v5089 = vmax.f32 %v4897, 0.0
        %v5090 = vmax.f32 %v4898, 0.0
        %v5091 = vmax.f32 %v4899, 0.0
        %v5092 = vmax.f32 %v4900, 0.0
        %v5093 = vmax.f32 %v4901, 0.0
        %v5094 = vmax.f32 %v4902, 0.0
        %v5095 = vmax.f32 %v4903, 0.0
        %v5096 = vmax.f32 %v4904, 0.0
        %v5097 = vmax.f32 %v4905, 0.0
        %v5098 = vmax.f32 %v4906, 0.0
        %v5099 = vmax.f32 %v4907, 0.0
        %v5100 = vmax.f32 %v4908, 0.0
        %v5101 = vmax.f32 %v4909, 0.0
        %v5102 = vmax.f32 %v4910, 0.0
        %v5103 = vmax.f32 %v4911, 0.0
        %v5104 = vmax.f32 %v4912, 0.0
        %v5105 = vmax.f32 %v4913, 0.0
        %v5106 = vmax.f32 %v4914, 0.0
        %v5107 = vmax.f32 %v4915, 0.0
        %v5108 = vmax.f32 %v4916, 0.0
        %v5109 = vmax.f32 %v4917, 0.0
        %v5110 = vmax.f32 %v4918, 0.0
        %v5111 = vmax.f32 %v4919, 0.0
        %v5112 = vmax.f32 %v4920, 0.0
        %v5113 = vmax.f32 %v4921, 0.0
        %v5114 = vmax.f32 %v4922, 0.0
        %v5115 = vmax.f32 %v4923, 0.0
        %v5116 = vmax.f32 %v4924, 0.0
        %v5117 = vmax.f32 %v4925, 0.0
        %v5118 = vmax.f32 %v4926, 0.0
        %v5119 = vmax.f32 %v4927, 0.0
        %v5120 = vmax.f32 %v4928, 0.0
        %v5121 = vmax.f32 %v4929, 0.0
        %v5122 = vmax.f32 %v4930, 0.0
        %v5123 = vmax.f32 %v4931, 0.0
        %v5124 = vmax.f32 %v4932, 0.0
        %v5125 = vmax.f32 %v4933, 0.0
        %v5126 = vmax.f32 %v4934, 0.0
        %v5127 = vmax.f32 %v4935, 0.0
        %v5128 = vmax.f32 %v4936, 0.0
        %v5129 = vmax.f32 %v4937, 0.0
        %v5130 = vmax.f32 %v4938, 0.0
        %v5131 = vmax.f32 %v4939, 0.0
        %v5132 = vmax.f32 %v4940, 0.0
        %v5133 = vmax.f32 %v4941, 0.0
        %v5134 = vmax.f32 %v4942, 0.0
        %v5135 = vmax.f32 %v4943, 0.0
        %v5136 = vmax.f32 %v4944, 0.0
        %v5137 = vmax.f32 %v4945, 0.0
        %v5138 = vmax.f32 %v4946, 0.0
        %v5139 = vmax.f32 %v4947, 0.0
        %v5140 = vmax.f32 %v4948, 0.0
        %v5141 = vmax.f32 %v4949, 0.0
        %v5142 = vmax.f32 %v4950, 0.0
        %v5143 = vmax.f32 %v4951, 0.0
        %v5144 = vmax.f32 %v4952, 0.0
        %v5145 = vmax.f32 %v4953, 0.0
        %v5146 = vmax.f32 %v4954, 0.0
        %v5147 = vmax.f32 %v4955, 0.0
        %v5148 = vmax.f32 %v4956, 0.0
        %v5149 = vmax.f32 %v4957, 0.0
        %v5150 = vmax.f32 %v4958, 0.0
        %v5151 = vmax.f32 %v4959, 0.0
        %v5152 = vmax.f32 %v4960, 0.0
        %v5153 = vmax.f32 %v4961, 0.0
        %v5154 = vmax.f32 %v4962, 0.0
        %v5155 = vmax.f32 %v4963, 0.0
        %v5156 = vmax.f32 %v4964, 0.0
        %v5157 = vmax.f32 %v4965, 0.0
        %v5158 = vmax.f32 %v4966, 0.0
        %v5159 = vmax.f32 %v4967, 0.0
        %v5160 = vmax.f32 %v4968, 0.0
        %v5161 = vmax.f32 %v4969, 0.0
        %v5162 = vmax.f32 %v4970, 0.0
        %v5163 = vmax.f32 %v4971, 0.0
        %v5164 = vmax.f32 %v4972, 0.0
        %v5165 = vmax.f32 %v4973, 0.0
        %v5166 = vmax.f32 %v4974, 0.0
        %v5167 = vmax.f32 %v4975, 0.0
        %v5168 = vmax.f32 %v4976, 0.0
        %v5169 = vmax.f32 %v4977, 0.0
        %v5170 = vmax.f32 %v4978, 0.0
        %v5171 = vmax.f32 %v4979, 0.0
        %v5172 = vmax.f32 %v4980, 0.0
        %v5173 = vmax.f32 %v4981, 0.0
        %v5174 = vmax.f32 %v4982, 0.0
        %v5175 = vmax.f32 %v4983, 0.0
        %v5176 = vmax.f32 %v4984, 0.0
        %v5177 = vmax.f32 %v4985, 0.0
        %v5178 = vmax.f32 %v4986, 0.0
        %v5179 = vmax.f32 %v4987, 0.0
        %v5180 = vmax.f32 %v4988, 0.0
        %v5181 = vmax.f32 %v4989, 0.0
        %v5182 = vmax.f32 %v4990, 0.0
        %v5183 = vmax.f32 %v4991, 0.0
        %v5184 = vmax.f32 %v4992, 0.0
        %v5185 = vmax.f32 %v4993, 0.0
        %v5186 = vmax.f32 %v4994, 0.0
        %v5187 = vmax.f32 %v4995, 0.0
        %v5188 = vmax.f32 %v4996, 0.0
        %v5189 = vmax.f32 %v4997, 0.0
        %v5190 = vmax.f32 %v4998, 0.0
        %v5191 = vmax.f32 %v4999, 0.0
        %v5192 = vmax.f32 %v5000, 0.0
        %v5193 = vmax.f32 %v5001, 0.0
        %v5194 = vmax.f32 %v5002, 0.0
        %v5195 = vmax.f32 %v5003, 0.0
        %v5196 = vmax.f32 %v5004, 0.0
        %v5197 = vmax.f32 %v5005, 0.0
        %v5198 = vmax.f32 %v5006, 0.0
        %v5199 = vmax.f32 %v5007, 0.0
        %v5200 = vmax.f32 %v5008, 0.0
        %v5201 = vmax.f32 %v5009, 0.0
        %v5202 = vmax.f32 %v5010, 0.0
        %v5203 = vmax.f32 %v5011, 0.0
        %v5204 = vmax.f32 %v5012, %v5020
        %v5205 = vmax.f32 %v5013, %v5021
        %v5206 = vmax.f32 %v5014, %v5022
        %v5207 = vmax.f32 %v5015, %v5023
        %v5208 = vmax.f32 %v5016, %v5024
        %v5209 = vmax.f32 %v5017, %v5025
        %v5210 = vmax.f32 %v5018, %v5026
        %v5211 = vmax.f32 %v5019, %v5027
        %v5212 = vmax.f32 %v5028, %v5036
        %v5213 = vmax.f32 %v5029, %v5037
        %v5214 = vmax.f32 %v5030, %v5038
        %v5215 = vmax.f32 %v5031, %v5039
        %v5216 = vmax.f32 %v5032, %v5040
        %v5217 = vmax.f32 %v5033, %v5041
        %v5218 = vmax.f32 %v5034, %v5042
        %v5219 = vmax.f32 %v5035, %v5043
        %v5220 = vmax.f32 %v5044, %v5052
        %v5221 = vmax.f32 %v5045, %v5053
        %v5222 = vmax.f32 %v5046, %v5054
        %v5223 = vmax.f32 %v5047, %v5055
        %v5224 = vmax.f32 %v5048, %v5056
        %v5225 = vmax.f32 %v5049, %v5057
        %v5226 = vmax.f32 %v5050, %v5058
        %v5227 = vmax.f32 %v5051, %v5059
        %v5228 = vmax.f32 %v5060, %v5068
        %v5229 = vmax.f32 %v5061, %v5069
        %v5230 = vmax.f32 %v5062, %v5070
        %v5231 = vmax.f32 %v5063, %v5071
        %v5232 = vmax.f32 %v5064, %v5072
        %v5233 = vmax.f32 %v5065, %v5073
        %v5234 = vmax.f32 %v5066, %v5074
        %v5235 = vmax.f32 %v5067, %v5075
        %v5236 = vmax.f32 %v5076, %v5084
        %v5237 = vmax.f32 %v5077, %v5085
        %v5238 = vmax.f32 %v5078, %v5086
        %v5239 = vmax.f32 %v5079, %v5087
        %v5240 = vmax.f32 %v5080, %v5088
        %v5241 = vmax.f32 %v5081, %v5089
        %v5242 = vmax.f32 %v5082, %v5090
        %v5243 = vmax.f32 %v5083, %v5091
        %v5244 = vmax.f32 %v5092, %v5100
        %v5245 = vmax.f32 %v5093, %v5101
        %v5246 = vmax.f32 %v5094, %v5102
        %v5247 = vmax.f32 %v5095, %v5103
        %v5248 = vmax.f32 %v5096, %v5104
        %v5249 = vmax.f32 %v5097, %v5105
        %v5250 = vmax.f32 %v5098, %v5106
        %v5251 = vmax.f32 %v5099, %v5107
        %v5252 = vmax.f32 %v5108, %v5116
        %v5253 = vmax.f32 %v5109, %v5117
        %v5254 = vmax.f32 %v5110, %v5118
        %v5255 = vmax.f32 %v5111, %v5119
        %v5256 = vmax.f32 %v5112, %v5120
        %v5257 = vmax.f32 %v5113, %v5121
        %v5258 = vmax.f32 %v5114, %v5122
        %v5259 = vmax.f32 %v5115, %v5123
        %v5260 = vmax.f32 %v5124, %v5132
        %v5261 = vmax.f32 %v5125, %v5133
        %v5262 = vmax.f32 %v5126, %v5134
        %v5263 = vmax.f32 %v5127, %v5135
        %v5264 = vmax.f32 %v5128, %v5136
        %v5265 = vmax.f32 %v5129, %v5137
        %v5266 = vmax.f32 %v5130, %v5138
        %v5267 = vmax.f32 %v5131, %v5139
        %v5268 = vmax.f32 %v5140, %v5148
        %v5269 = vmax.f32 %v5141, %v5149
        %v5270 = vmax.f32 %v5142, %v5150
        %v5271 = vmax.f32 %v5143, %v5151
        %v5272 = vmax.f32 %v5144, %v5152
        %v5273 = vmax.f32 %v5145, %v5153
        %v5274 = vmax.f32 %v5146, %v5154
        %v5275 = vmax.f32 %v5147, %v5155
        %v5276 = vmax.f32 %v5156, %v5164
        %v5277 = vmax.f32 %v5157, %v5165
        %v5278 = vmax.f32 %v5158, %v5166
        %v5279 = vmax.f32 %v5159, %v5167
        %v5280 = vmax.f32 %v5160, %v5168
        %v5281 = vmax.f32 %v5161, %v5169
        %v5282 = vmax.f32 %v5162, %v5170
        %v5283 = vmax.f32 %v5163, %v5171
        %v5284 = vmax.f32 %v5172, %v5180
        %v5285 = vmax.f32 %v5173, %v5181
        %v5286 = vmax.f32 %v5174, %v5182
        %v5287 = vmax.f32 %v5175, %v5183
        %v5288 = vmax.f32 %v5176, %v5184
        %v5289 = vmax.f32 %v5177, %v5185
        %v5290 = vmax.f32 %v5178, %v5186
        %v5291 = vmax.f32 %v5179, %v5187
        %v5292 = vmax.f32 %v5188, %v5196
        %v5293 = vmax.f32 %v5189, %v5197
        %v5294 = vmax.f32 %v5190, %v5198
        %v5295 = vmax.f32 %v5191, %v5199
        %v5296 = vmax.f32 %v5192, %v5200
        %v5297 = vmax.f32 %v5193, %v5201
        %v5298 = vmax.f32 %v5194, %v5202
        %v5299 = vmax.f32 %v5195, %v5203
        %v5300 = vpack.c.bf16 %v5206, %v5204
        %v5301 = vpack.c.bf16 %v5207, %v5205
        %v5302 = vpack.c.bf16 %v5210, %v5208
        %v5303 = vpack.c.bf16 %v5211, %v5209
        %v5304 = vpack.c.bf16 %v5214, %v5212
        %v5305 = vpack.c.bf16 %v5215, %v5213
        %v5306 = vpack.c.bf16 %v5218, %v5216
        %v5307 = vpack.c.bf16 %v5219, %v5217
        %v5308 = vpack.c.bf16 %v5222, %v5220
        %v5309 = vpack.c.bf16 %v5223, %v5221
        %v5310 = vpack.c.bf16 %v5226, %v5224
        %v5311 = vpack.c.bf16 %v5227, %v5225
        %v5312 = vpack.c.bf16 %v5230, %v5228
        %v5313 = vpack.c.bf16 %v5231, %v5229
        %v5314 = vpack.c.bf16 %v5234, %v5232
        %v5315 = vpack.c.bf16 %v5235, %v5233
        %v5316 = vpack.c.bf16 %v5238, %v5236
        %v5317 = vpack.c.bf16 %v5239, %v5237
        %v5318 = vpack.c.bf16 %v5242, %v5240
        %v5319 = vpack.c.bf16 %v5243, %v5241
        %v5320 = vpack.c.bf16 %v5246, %v5244
        %v5321 = vpack.c.bf16 %v5247, %v5245
        %v5322 = vpack.c.bf16 %v5250, %v5248
        %v5323 = vpack.c.bf16 %v5251, %v5249
        %v5324 = vpack.c.bf16 %v5254, %v5252
        %v5325 = vpack.c.bf16 %v5255, %v5253
        %v5326 = vpack.c.bf16 %v5258, %v5256
        %v5327 = vpack.c.bf16 %v5259, %v5257
        %v5328 = vpack.c.bf16 %v5262, %v5260
        %v5329 = vpack.c.bf16 %v5263, %v5261
        %v5330 = vpack.c.bf16 %v5266, %v5264
        %v5331 = vpack.c.bf16 %v5267, %v5265
        %v5332 = vpack.c.bf16 %v5270, %v5268
        %v5333 = vpack.c.bf16 %v5271, %v5269
        %v5334 = vpack.c.bf16 %v5274, %v5272
        %v5335 = vpack.c.bf16 %v5275, %v5273
        %v5336 = vpack.c.bf16 %v5278, %v5276
        %v5337 = vpack.c.bf16 %v5279, %v5277
        %v5338 = vpack.c.bf16 %v5282, %v5280
        %v5339 = vpack.c.bf16 %v5283, %v5281
        %v5340 = vpack.c.bf16 %v5286, %v5284
        %v5341 = vpack.c.bf16 %v5287, %v5285
        %v5342 = vpack.c.bf16 %v5290, %v5288
        %v5343 = vpack.c.bf16 %v5291, %v5289
        %v5344 = vpack.c.bf16 %v5294, %v5292
        %v5345 = vpack.c.bf16 %v5295, %v5293
        %v5346 = vpack.c.bf16 %v5298, %v5296
        %v5347 = vpack.c.bf16 %v5299, %v5297
        %v5348 = vld [vmem:[%s3] sm:$0xf]
        %v5349 = vld [vmem:[%s3 + $0x4] sm:$0xf]
        %v5350 = vld [vmem:[%s3 + $0x8] sm:$0xf]
        %v5351 = vld [vmem:[%s3 + $0xc] sm:$0xf]
        %v5352 = vld [vmem:[%s3 + $0x10] sm:$0xf]
        %v5353 = vld [vmem:[%s3 + $0x14] sm:$0xf]
        %v5354 = vld [vmem:[%s3 + $0x18] sm:$0xf]
        %v5355 = vld [vmem:[%s3 + $0x1c] sm:$0xf]
        %v5356 = vld [vmem:[%s3 + $0x20] sm:$0xf]
        %v5357 = vld [vmem:[%s3 + $0x24] sm:$0xf]
        %v5358 = vld [vmem:[%s3 + $0x28] sm:$0xf]
        %v5359 = vld [vmem:[%s3 + $0x2c] sm:$0xf]
        %v5360 = vld [vmem:[%s3 + $0x30] sm:$0xf]
        %v5361 = vld [vmem:[%s3 + $0x34] sm:$0xf]
        %v5362 = vld [vmem:[%s3 + $0x38] sm:$0xf]
        %v5363 = vld [vmem:[%s3 + $0x3c] sm:$0xf]
        %v5364 = vld [vmem:[%s3 + $0x40] sm:$0xf]
        %v5365 = vld [vmem:[%s3 + $0x44] sm:$0xf]
        %v5366 = vld [vmem:[%s3 + $0x48] sm:$0xf]
        %v5367 = vld [vmem:[%s3 + $0x4c] sm:$0xf]
        %v5368 = vld [vmem:[%s3 + $0x50] sm:$0xf]
        %v5369 = vld [vmem:[%s3 + $0x54] sm:$0xf]
        %v5370 = vld [vmem:[%s3 + $0x58] sm:$0xf]
        %v5371 = vld [vmem:[%s3 + $0x5c] sm:$0xf]
        %v5372 = vld [vmem:[%s3 + $0x60] sm:$0xf]
        %v5373 = vld [vmem:[%s3 + $0x64] sm:$0xf]
        %v5374 = vld [vmem:[%s3 + $0x68] sm:$0xf]
        %v5375 = vld [vmem:[%s3 + $0x6c] sm:$0xf]
        %v5376 = vld [vmem:[%s3 + $0x70] sm:$0xf]
        %v5377 = vld [vmem:[%s3 + $0x74] sm:$0xf]
        %v5378 = vld [vmem:[%s3 + $0x78] sm:$0xf]
        %v5379 = vld [vmem:[%s3 + $0x7c] sm:$0xf]
        %s5380 = scalar_lea.vmem %s3, 128
        %v5381 = vld [vmem:[%s5380] sm:$0xf]
        %v5382 = vld [vmem:[%s5380 + $0x4] sm:$0xf]
        %v5383 = vld [vmem:[%s5380 + $0x8] sm:$0xf]
        %v5384 = vld [vmem:[%s5380 + $0xc] sm:$0xf]
        %v5385 = vld [vmem:[%s5380 + $0x10] sm:$0xf]
        %v5386 = vld [vmem:[%s5380 + $0x14] sm:$0xf]
        %v5387 = vld [vmem:[%s5380 + $0x18] sm:$0xf]
        %v5388 = vld [vmem:[%s5380 + $0x1c] sm:$0xf]
        %v5389 = vld [vmem:[%s5380 + $0x20] sm:$0xf]
        %v5390 = vld [vmem:[%s5380 + $0x24] sm:$0xf]
        %v5391 = vld [vmem:[%s5380 + $0x28] sm:$0xf]
        %v5392 = vld [vmem:[%s5380 + $0x2c] sm:$0xf]
        %v5393 = vld [vmem:[%s5380 + $0x30] sm:$0xf]
        %v5394 = vld [vmem:[%s5380 + $0x34] sm:$0xf]
        %v5395 = vld [vmem:[%s5380 + $0x38] sm:$0xf]
        %v5396 = vld [vmem:[%s5380 + $0x3c] sm:$0xf]
        %v5397 = vld [vmem:[%s5380 + $0x40] sm:$0xf]
        %v5398 = vld [vmem:[%s5380 + $0x44] sm:$0xf]
        %v5399 = vld [vmem:[%s5380 + $0x48] sm:$0xf]
        %v5400 = vld [vmem:[%s5380 + $0x4c] sm:$0xf]
        %v5401 = vld [vmem:[%s5380 + $0x50] sm:$0xf]
        %v5402 = vld [vmem:[%s5380 + $0x54] sm:$0xf]
        %v5403 = vld [vmem:[%s5380 + $0x58] sm:$0xf]
        %v5404 = vld [vmem:[%s5380 + $0x5c] sm:$0xf]
        %v5405 = vld [vmem:[%s5380 + $0x60] sm:$0xf]
        %v5406 = vld [vmem:[%s5380 + $0x64] sm:$0xf]
        %v5407 = vld [vmem:[%s5380 + $0x68] sm:$0xf]
        %v5408 = vld [vmem:[%s5380 + $0x6c] sm:$0xf]
        %v5409 = vld [vmem:[%s5380 + $0x70] sm:$0xf]
        %v5410 = vld [vmem:[%s5380 + $0x74] sm:$0xf]
        %v5411 = vld [vmem:[%s5380 + $0x78] sm:$0xf]
        %v5412 = vld [vmem:[%s5380 + $0x7c] sm:$0xf]
        %v5445 = vunpack.c.l.b16 %v5381
        %v5446 = vunpack.c.l.b16 %v5382
        %v5447 = vunpack.c.l.b16 %v5383
        %v5448 = vunpack.c.l.b16 %v5384
        %v5449 = vunpack.c.l.b16 %v5385
        %v5450 = vunpack.c.l.b16 %v5386
        %v5451 = vunpack.c.l.b16 %v5387
        %v5452 = vunpack.c.l.b16 %v5388
        %v5453 = vunpack.c.l.b16 %v5389
        %v5454 = vunpack.c.l.b16 %v5390
        %v5455 = vunpack.c.l.b16 %v5391
        %v5456 = vunpack.c.l.b16 %v5392
        %v5457 = vunpack.c.l.b16 %v5393
        %v5458 = vunpack.c.l.b16 %v5394
        %v5459 = vunpack.c.l.b16 %v5395
        %v5460 = vunpack.c.l.b16 %v5396
        %v5461 = vunpack.c.l.b16 %v5397
        %v5462 = vunpack.c.l.b16 %v5398
        %v5463 = vunpack.c.l.b16 %v5399
        %v5464 = vunpack.c.l.b16 %v5400
        %v5465 = vunpack.c.l.b16 %v5401
        %v5466 = vunpack.c.l.b16 %v5402
        %v5467 = vunpack.c.l.b16 %v5403
        %v5468 = vunpack.c.l.b16 %v5404
        %v5469 = vunpack.c.l.b16 %v5405
        %v5470 = vunpack.c.l.b16 %v5406
        %v5471 = vunpack.c.l.b16 %v5407
        %v5472 = vunpack.c.l.b16 %v5408
        %v5473 = vunpack.c.l.b16 %v5409
        %v5474 = vunpack.c.l.b16 %v5410
        %v5475 = vunpack.c.l.b16 %v5411
        %v5476 = vunpack.c.l.b16 %v5412
        %v5477 = vpack.c.b16 %v5446, %v5445
        %v5478 = vpack.c.b16 %v5448, %v5447
        %v5479 = vpack.c.b16 %v5450, %v5449
        %v5480 = vpack.c.b16 %v5452, %v5451
        %v5481 = vpack.c.b16 %v5454, %v5453
        %v5482 = vpack.c.b16 %v5456, %v5455
        %v5483 = vpack.c.b16 %v5458, %v5457
        %v5484 = vpack.c.b16 %v5460, %v5459
        %v5485 = vpack.c.b16 %v5462, %v5461
        %v5486 = vpack.c.b16 %v5464, %v5463
        %v5487 = vpack.c.b16 %v5466, %v5465
        %v5488 = vpack.c.b16 %v5468, %v5467
        %v5489 = vpack.c.b16 %v5470, %v5469
        %v5490 = vpack.c.b16 %v5472, %v5471
        %v5491 = vpack.c.b16 %v5474, %v5473
        %v5492 = vpack.c.b16 %v5476, %v5475
        %5509 = vmatprep.subr.bf16.mxu0 0
        %5510 = vmatpush1.bf16.msra.mxu0 %v5484
        %5511 = vmatprep.subr.bf16.mxu0 0
        %5512 = vmatpush1.bf16.msra.mxu0 %v5483
        %5513 = vmatprep.subr.bf16.mxu0 0
        %5514 = vmatpush1.bf16.msra.mxu0 %v5482
        %5515 = vmatprep.subr.bf16.mxu0 0
        %5516 = vmatpush1.bf16.msra.mxu0 %v5481
        %5517 = vmatprep.subr.bf16.mxu0 0
        %5518 = vmatpush1.bf16.msra.mxu0 %v5480
        %5519 = vmatprep.subr.bf16.mxu0 0
        %5520 = vmatpush1.bf16.msra.mxu0 %v5479
        %5521 = vmatprep.subr.bf16.mxu0 0
        %5522 = vmatpush1.bf16.msra.mxu0 %v5478
        %5523 = vmatprep.subr.bf16.mxu0 0
        %5524 = vmatpush1.bf16.msra.mxu0 %v5477
        %5525 = vmatprep.subr.bf16.mxu0 0
        %5526 = vmatpush2.bf16.msra.mxu0 %v5492
        %5527 = vmatprep.subr.bf16.mxu0 0
        %5528 = vmatpush2.bf16.msra.mxu0 %v5491
        %5529 = vmatprep.subr.bf16.mxu0 0
        %5530 = vmatpush2.bf16.msra.mxu0 %v5490
        %5531 = vmatprep.subr.bf16.mxu0 0
        %5532 = vmatpush2.bf16.msra.mxu0 %v5489
        %5533 = vmatprep.subr.bf16.mxu0 0
        %5534 = vmatpush2.bf16.msra.mxu0 %v5488
        %5535 = vmatprep.subr.bf16.mxu0 0
        %5536 = vmatpush2.bf16.msra.mxu0 %v5487
        %5537 = vmatprep.subr.bf16.mxu0 0
        %5538 = vmatpush2.bf16.msra.mxu0 %v5486
        %5539 = vmatprep.subr.bf16.mxu0 0
        %5540 = vmatpush2.bf16.msra.mxu0 %v5485
        %5541 = vmatprep.mubr.bf16.mxu0 %v5305
        %5542 = vmatmul.mubr.bf16.gmra.mxu0 %v5304
        %v5543 = vpop.f32.mrf.mxu0
        %v5544 = vadd.f32 0.0, %v5543
        %v5545 = vpop.f32.mrf.mxu0
        %v5546 = vpop.f32.mrf.mxu0
        %v5547 = vadd.f32 0.0, %v5546
        %v5548 = vpop.f32.mrf.mxu0
        %5549 = vmatprep.mubr.bf16.mxu0 %v5307
        %5550 = vmatmul.mubr.bf16.gmra.mxu0 %v5306
        %v5551 = vpop.f32.mrf.mxu0
        %v5552 = vadd.f32 0.0, %v5551
        %v5553 = vpop.f32.mrf.mxu0
        %v5554 = vpop.f32.mrf.mxu0
        %v5555 = vadd.f32 0.0, %v5554
        %v5556 = vpop.f32.mrf.mxu0
        %5557 = vdwg.mxu0
        %v5590 = vunpack.c.l.b16 %v5348
        %v5591 = vunpack.c.l.b16 %v5349
        %v5592 = vunpack.c.l.b16 %v5350
        %v5593 = vunpack.c.l.b16 %v5351
        %v5594 = vunpack.c.l.b16 %v5352
        %v5595 = vunpack.c.l.b16 %v5353
        %v5596 = vunpack.c.l.b16 %v5354
        %v5597 = vunpack.c.l.b16 %v5355
        %v5598 = vunpack.c.l.b16 %v5356
        %v5599 = vunpack.c.l.b16 %v5357
        %v5600 = vunpack.c.l.b16 %v5358
        %v5601 = vunpack.c.l.b16 %v5359
        %v5602 = vunpack.c.l.b16 %v5360
        %v5603 = vunpack.c.l.b16 %v5361
        %v5604 = vunpack.c.l.b16 %v5362
        %v5605 = vunpack.c.l.b16 %v5363
        %v5606 = vunpack.c.l.b16 %v5364
        %v5607 = vunpack.c.l.b16 %v5365
        %v5608 = vunpack.c.l.b16 %v5366
        %v5609 = vunpack.c.l.b16 %v5367
        %v5610 = vunpack.c.l.b16 %v5368
        %v5611 = vunpack.c.l.b16 %v5369
        %v5612 = vunpack.c.l.b16 %v5370
        %v5613 = vunpack.c.l.b16 %v5371
        %v5614 = vunpack.c.l.b16 %v5372
        %v5615 = vunpack.c.l.b16 %v5373
        %v5616 = vunpack.c.l.b16 %v5374
        %v5617 = vunpack.c.l.b16 %v5375
        %v5618 = vunpack.c.l.b16 %v5376
        %v5619 = vunpack.c.l.b16 %v5377
        %v5620 = vunpack.c.l.b16 %v5378
        %v5621 = vunpack.c.l.b16 %v5379
        %v5622 = vpack.c.b16 %v5591, %v5590
        %v5623 = vpack.c.b16 %v5593, %v5592
        %v5624 = vpack.c.b16 %v5595, %v5594
        %v5625 = vpack.c.b16 %v5597, %v5596
        %v5626 = vpack.c.b16 %v5599, %v5598
        %v5627 = vpack.c.b16 %v5601, %v5600
        %v5628 = vpack.c.b16 %v5603, %v5602
        %v5629 = vpack.c.b16 %v5605, %v5604
        %v5630 = vpack.c.b16 %v5607, %v5606
        %v5631 = vpack.c.b16 %v5609, %v5608
        %v5632 = vpack.c.b16 %v5611, %v5610
        %v5633 = vpack.c.b16 %v5613, %v5612
        %v5634 = vpack.c.b16 %v5615, %v5614
        %v5635 = vpack.c.b16 %v5617, %v5616
        %v5636 = vpack.c.b16 %v5619, %v5618
        %v5637 = vpack.c.b16 %v5621, %v5620
        %5654 = vmatprep.subr.bf16.mxu0 0
        %5655 = vmatpush1.bf16.msra.mxu0 %v5629
        %5656 = vmatprep.subr.bf16.mxu0 0
        %5657 = vmatpush1.bf16.msra.mxu0 %v5628
        %5658 = vmatprep.subr.bf16.mxu0 0
        %5659 = vmatpush1.bf16.msra.mxu0 %v5627
        %5660 = vmatprep.subr.bf16.mxu0 0
        %5661 = vmatpush1.bf16.msra.mxu0 %v5626
        %5662 = vmatprep.subr.bf16.mxu0 0
        %5663 = vmatpush1.bf16.msra.mxu0 %v5625
        %5664 = vmatprep.subr.bf16.mxu0 0
        %5665 = vmatpush1.bf16.msra.mxu0 %v5624
        %5666 = vmatprep.subr.bf16.mxu0 0
        %5667 = vmatpush1.bf16.msra.mxu0 %v5623
        %5668 = vmatprep.subr.bf16.mxu0 0
        %5669 = vmatpush1.bf16.msra.mxu0 %v5622
        %5670 = vmatprep.subr.bf16.mxu0 0
        %5671 = vmatpush2.bf16.msra.mxu0 %v5637
        %5672 = vmatprep.subr.bf16.mxu0 0
        %5673 = vmatpush2.bf16.msra.mxu0 %v5636
        %5674 = vmatprep.subr.bf16.mxu0 0
        %5675 = vmatpush2.bf16.msra.mxu0 %v5635
        %5676 = vmatprep.subr.bf16.mxu0 0
        %5677 = vmatpush2.bf16.msra.mxu0 %v5634
        %5678 = vmatprep.subr.bf16.mxu0 0
        %5679 = vmatpush2.bf16.msra.mxu0 %v5633
        %5680 = vmatprep.subr.bf16.mxu0 0
        %5681 = vmatpush2.bf16.msra.mxu0 %v5632
        %5682 = vmatprep.subr.bf16.mxu0 0
        %5683 = vmatpush2.bf16.msra.mxu0 %v5631
        %5684 = vmatprep.subr.bf16.mxu0 0
        %5685 = vmatpush2.bf16.msra.mxu0 %v5630
        %5686 = vmatprep.mubr.bf16.mxu0 %v5301
        %5687 = vmatmul.mubr.bf16.gmra.mxu0 %v5300
        %v5688 = vpop.f32.mrf.mxu0
        %v5689 = vadd.f32 %v5544, %v5688
        %v5690 = vpop.f32.mrf.mxu0
        %v5691 = vpop.f32.mrf.mxu0
        %v5692 = vadd.f32 %v5547, %v5691
        %v5693 = vpop.f32.mrf.mxu0
        %5694 = vmatprep.mubr.bf16.mxu0 %v5303
        %5695 = vmatmul.mubr.bf16.gmra.mxu0 %v5302
        %v5696 = vpop.f32.mrf.mxu0
        %v5697 = vadd.f32 %v5552, %v5696
        %v5698 = vpop.f32.mrf.mxu0
        %v5699 = vpop.f32.mrf.mxu0
        %v5700 = vadd.f32 %v5555, %v5699
        %v5701 = vpop.f32.mrf.mxu0
        %5702 = vdwg.mxu0
        %s5703 = scalar_lea.vmem %s3, 256
        %v5704 = vld [vmem:[%s5703] sm:$0xf]
        %v5705 = vld [vmem:[%s5703 + $0x4] sm:$0xf]
        %v5706 = vld [vmem:[%s5703 + $0x8] sm:$0xf]
        %v5707 = vld [vmem:[%s5703 + $0xc] sm:$0xf]
        %v5708 = vld [vmem:[%s5703 + $0x10] sm:$0xf]
        %v5709 = vld [vmem:[%s5703 + $0x14] sm:$0xf]
        %v5710 = vld [vmem:[%s5703 + $0x18] sm:$0xf]
        %v5711 = vld [vmem:[%s5703 + $0x1c] sm:$0xf]
        %v5712 = vld [vmem:[%s5703 + $0x20] sm:$0xf]
        %v5713 = vld [vmem:[%s5703 + $0x24] sm:$0xf]
        %v5714 = vld [vmem:[%s5703 + $0x28] sm:$0xf]
        %v5715 = vld [vmem:[%s5703 + $0x2c] sm:$0xf]
        %v5716 = vld [vmem:[%s5703 + $0x30] sm:$0xf]
        %v5717 = vld [vmem:[%s5703 + $0x34] sm:$0xf]
        %v5718 = vld [vmem:[%s5703 + $0x38] sm:$0xf]
        %v5719 = vld [vmem:[%s5703 + $0x3c] sm:$0xf]
        %v5720 = vld [vmem:[%s5703 + $0x40] sm:$0xf]
        %v5721 = vld [vmem:[%s5703 + $0x44] sm:$0xf]
        %v5722 = vld [vmem:[%s5703 + $0x48] sm:$0xf]
        %v5723 = vld [vmem:[%s5703 + $0x4c] sm:$0xf]
        %v5724 = vld [vmem:[%s5703 + $0x50] sm:$0xf]
        %v5725 = vld [vmem:[%s5703 + $0x54] sm:$0xf]
        %v5726 = vld [vmem:[%s5703 + $0x58] sm:$0xf]
        %v5727 = vld [vmem:[%s5703 + $0x5c] sm:$0xf]
        %v5728 = vld [vmem:[%s5703 + $0x60] sm:$0xf]
        %v5729 = vld [vmem:[%s5703 + $0x64] sm:$0xf]
        %v5730 = vld [vmem:[%s5703 + $0x68] sm:$0xf]
        %v5731 = vld [vmem:[%s5703 + $0x6c] sm:$0xf]
        %v5732 = vld [vmem:[%s5703 + $0x70] sm:$0xf]
        %v5733 = vld [vmem:[%s5703 + $0x74] sm:$0xf]
        %v5734 = vld [vmem:[%s5703 + $0x78] sm:$0xf]
        %v5735 = vld [vmem:[%s5703 + $0x7c] sm:$0xf]
        %v5768 = vunpack.c.l.b16 %v5704
        %v5769 = vunpack.c.l.b16 %v5705
        %v5770 = vunpack.c.l.b16 %v5706
        %v5771 = vunpack.c.l.b16 %v5707
        %v5772 = vunpack.c.l.b16 %v5708
        %v5773 = vunpack.c.l.b16 %v5709
        %v5774 = vunpack.c.l.b16 %v5710
        %v5775 = vunpack.c.l.b16 %v5711
        %v5776 = vunpack.c.l.b16 %v5712
        %v5777 = vunpack.c.l.b16 %v5713
        %v5778 = vunpack.c.l.b16 %v5714
        %v5779 = vunpack.c.l.b16 %v5715
        %v5780 = vunpack.c.l.b16 %v5716
        %v5781 = vunpack.c.l.b16 %v5717
        %v5782 = vunpack.c.l.b16 %v5718
        %v5783 = vunpack.c.l.b16 %v5719
        %v5784 = vunpack.c.l.b16 %v5720
        %v5785 = vunpack.c.l.b16 %v5721
        %v5786 = vunpack.c.l.b16 %v5722
        %v5787 = vunpack.c.l.b16 %v5723
        %v5788 = vunpack.c.l.b16 %v5724
        %v5789 = vunpack.c.l.b16 %v5725
        %v5790 = vunpack.c.l.b16 %v5726
        %v5791 = vunpack.c.l.b16 %v5727
        %v5792 = vunpack.c.l.b16 %v5728
        %v5793 = vunpack.c.l.b16 %v5729
        %v5794 = vunpack.c.l.b16 %v5730
        %v5795 = vunpack.c.l.b16 %v5731
        %v5796 = vunpack.c.l.b16 %v5732
        %v5797 = vunpack.c.l.b16 %v5733
        %v5798 = vunpack.c.l.b16 %v5734
        %v5799 = vunpack.c.l.b16 %v5735
        %v5800 = vpack.c.b16 %v5769, %v5768
        %v5801 = vpack.c.b16 %v5771, %v5770
        %v5802 = vpack.c.b16 %v5773, %v5772
        %v5803 = vpack.c.b16 %v5775, %v5774
        %v5804 = vpack.c.b16 %v5777, %v5776
        %v5805 = vpack.c.b16 %v5779, %v5778
        %v5806 = vpack.c.b16 %v5781, %v5780
        %v5807 = vpack.c.b16 %v5783, %v5782
        %v5808 = vpack.c.b16 %v5785, %v5784
        %v5809 = vpack.c.b16 %v5787, %v5786
        %v5810 = vpack.c.b16 %v5789, %v5788
        %v5811 = vpack.c.b16 %v5791, %v5790
        %v5812 = vpack.c.b16 %v5793, %v5792
        %v5813 = vpack.c.b16 %v5795, %v5794
        %v5814 = vpack.c.b16 %v5797, %v5796
        %v5815 = vpack.c.b16 %v5799, %v5798
        %5832 = vmatprep.subr.bf16.mxu0 0
        %5833 = vmatpush1.bf16.msra.mxu0 %v5807
        %5834 = vmatprep.subr.bf16.mxu0 0
        %5835 = vmatpush1.bf16.msra.mxu0 %v5806
        %5836 = vmatprep.subr.bf16.mxu0 0
        %5837 = vmatpush1.bf16.msra.mxu0 %v5805
        %5838 = vmatprep.subr.bf16.mxu0 0
        %5839 = vmatpush1.bf16.msra.mxu0 %v5804
        %5840 = vmatprep.subr.bf16.mxu0 0
        %5841 = vmatpush1.bf16.msra.mxu0 %v5803
        %5842 = vmatprep.subr.bf16.mxu0 0
        %5843 = vmatpush1.bf16.msra.mxu0 %v5802
        %5844 = vmatprep.subr.bf16.mxu0 0
        %5845 = vmatpush1.bf16.msra.mxu0 %v5801
        %5846 = vmatprep.subr.bf16.mxu0 0
        %5847 = vmatpush1.bf16.msra.mxu0 %v5800
        %5848 = vmatprep.subr.bf16.mxu0 0
        %5849 = vmatpush2.bf16.msra.mxu0 %v5815
        %5850 = vmatprep.subr.bf16.mxu0 0
        %5851 = vmatpush2.bf16.msra.mxu0 %v5814
        %5852 = vmatprep.subr.bf16.mxu0 0
        %5853 = vmatpush2.bf16.msra.mxu0 %v5813
        %5854 = vmatprep.subr.bf16.mxu0 0
        %5855 = vmatpush2.bf16.msra.mxu0 %v5812
        %5856 = vmatprep.subr.bf16.mxu0 0
        %5857 = vmatpush2.bf16.msra.mxu0 %v5811
        %5858 = vmatprep.subr.bf16.mxu0 0
        %5859 = vmatpush2.bf16.msra.mxu0 %v5810
        %5860 = vmatprep.subr.bf16.mxu0 0
        %5861 = vmatpush2.bf16.msra.mxu0 %v5809
        %5862 = vmatprep.subr.bf16.mxu0 0
        %5863 = vmatpush2.bf16.msra.mxu0 %v5808
        %5864 = vmatprep.mubr.bf16.mxu0 %v5309
        %5865 = vmatmul.mubr.bf16.gmra.mxu0 %v5308
        %v5866 = vpop.f32.mrf.mxu0
        %v5867 = vadd.f32 0.0, %v5866
        %v5868 = vpop.f32.mrf.mxu0
        %v5869 = vpop.f32.mrf.mxu0
        %v5870 = vadd.f32 0.0, %v5869
        %v5871 = vpop.f32.mrf.mxu0
        %5872 = vmatprep.mubr.bf16.mxu0 %v5311
        %5873 = vmatmul.mubr.bf16.gmra.mxu0 %v5310
        %v5874 = vpop.f32.mrf.mxu0
        %v5875 = vadd.f32 0.0, %v5874
        %v5876 = vpop.f32.mrf.mxu0
        %v5877 = vpop.f32.mrf.mxu0
        %v5878 = vadd.f32 0.0, %v5877
        %v5879 = vpop.f32.mrf.mxu0
        %5880 = vdwg.mxu0
        %v5881 = vadd.f32 %v5689, %v5867
        %v5882 = vadd.f32 %v5692, %v5870
        %v5883 = vadd.f32 %v5697, %v5875
        %v5884 = vadd.f32 %v5700, %v5878
        %s5885 = scalar_lea.vmem %s3, 384
        %v5886 = vld [vmem:[%s5885] sm:$0xf]
        %v5887 = vld [vmem:[%s5885 + $0x4] sm:$0xf]
        %v5888 = vld [vmem:[%s5885 + $0x8] sm:$0xf]
        %v5889 = vld [vmem:[%s5885 + $0xc] sm:$0xf]
        %v5890 = vld [vmem:[%s5885 + $0x10] sm:$0xf]
        %v5891 = vld [vmem:[%s5885 + $0x14] sm:$0xf]
        %v5892 = vld [vmem:[%s5885 + $0x18] sm:$0xf]
        %v5893 = vld [vmem:[%s5885 + $0x1c] sm:$0xf]
        %v5894 = vld [vmem:[%s5885 + $0x20] sm:$0xf]
        %v5895 = vld [vmem:[%s5885 + $0x24] sm:$0xf]
        %v5896 = vld [vmem:[%s5885 + $0x28] sm:$0xf]
        %v5897 = vld [vmem:[%s5885 + $0x2c] sm:$0xf]
        %v5898 = vld [vmem:[%s5885 + $0x30] sm:$0xf]
        %v5899 = vld [vmem:[%s5885 + $0x34] sm:$0xf]
        %v5900 = vld [vmem:[%s5885 + $0x38] sm:$0xf]
        %v5901 = vld [vmem:[%s5885 + $0x3c] sm:$0xf]
        %v5902 = vld [vmem:[%s5885 + $0x40] sm:$0xf]
        %v5903 = vld [vmem:[%s5885 + $0x44] sm:$0xf]
        %v5904 = vld [vmem:[%s5885 + $0x48] sm:$0xf]
        %v5905 = vld [vmem:[%s5885 + $0x4c] sm:$0xf]
        %v5906 = vld [vmem:[%s5885 + $0x50] sm:$0xf]
        %v5907 = vld [vmem:[%s5885 + $0x54] sm:$0xf]
        %v5908 = vld [vmem:[%s5885 + $0x58] sm:$0xf]
        %v5909 = vld [vmem:[%s5885 + $0x5c] sm:$0xf]
        %v5910 = vld [vmem:[%s5885 + $0x60] sm:$0xf]
        %v5911 = vld [vmem:[%s5885 + $0x64] sm:$0xf]
        %v5912 = vld [vmem:[%s5885 + $0x68] sm:$0xf]
        %v5913 = vld [vmem:[%s5885 + $0x6c] sm:$0xf]
        %v5914 = vld [vmem:[%s5885 + $0x70] sm:$0xf]
        %v5915 = vld [vmem:[%s5885 + $0x74] sm:$0xf]
        %v5916 = vld [vmem:[%s5885 + $0x78] sm:$0xf]
        %v5917 = vld [vmem:[%s5885 + $0x7c] sm:$0xf]
        %v5950 = vunpack.c.l.b16 %v5886
        %v5951 = vunpack.c.l.b16 %v5887
        %v5952 = vunpack.c.l.b16 %v5888
        %v5953 = vunpack.c.l.b16 %v5889
        %v5954 = vunpack.c.l.b16 %v5890
        %v5955 = vunpack.c.l.b16 %v5891
        %v5956 = vunpack.c.l.b16 %v5892
        %v5957 = vunpack.c.l.b16 %v5893
        %v5958 = vunpack.c.l.b16 %v5894
        %v5959 = vunpack.c.l.b16 %v5895
        %v5960 = vunpack.c.l.b16 %v5896
        %v5961 = vunpack.c.l.b16 %v5897
        %v5962 = vunpack.c.l.b16 %v5898
        %v5963 = vunpack.c.l.b16 %v5899
        %v5964 = vunpack.c.l.b16 %v5900
        %v5965 = vunpack.c.l.b16 %v5901
        %v5966 = vunpack.c.l.b16 %v5902
        %v5967 = vunpack.c.l.b16 %v5903
        %v5968 = vunpack.c.l.b16 %v5904
        %v5969 = vunpack.c.l.b16 %v5905
        %v5970 = vunpack.c.l.b16 %v5906
        %v5971 = vunpack.c.l.b16 %v5907
        %v5972 = vunpack.c.l.b16 %v5908
        %v5973 = vunpack.c.l.b16 %v5909
        %v5974 = vunpack.c.l.b16 %v5910
        %v5975 = vunpack.c.l.b16 %v5911
        %v5976 = vunpack.c.l.b16 %v5912
        %v5977 = vunpack.c.l.b16 %v5913
        %v5978 = vunpack.c.l.b16 %v5914
        %v5979 = vunpack.c.l.b16 %v5915
        %v5980 = vunpack.c.l.b16 %v5916
        %v5981 = vunpack.c.l.b16 %v5917
        %v5982 = vpack.c.b16 %v5951, %v5950
        %v5983 = vpack.c.b16 %v5953, %v5952
        %v5984 = vpack.c.b16 %v5955, %v5954
        %v5985 = vpack.c.b16 %v5957, %v5956
        %v5986 = vpack.c.b16 %v5959, %v5958
        %v5987 = vpack.c.b16 %v5961, %v5960
        %v5988 = vpack.c.b16 %v5963, %v5962
        %v5989 = vpack.c.b16 %v5965, %v5964
        %v5990 = vpack.c.b16 %v5967, %v5966
        %v5991 = vpack.c.b16 %v5969, %v5968
        %v5992 = vpack.c.b16 %v5971, %v5970
        %v5993 = vpack.c.b16 %v5973, %v5972
        %v5994 = vpack.c.b16 %v5975, %v5974
        %v5995 = vpack.c.b16 %v5977, %v5976
        %v5996 = vpack.c.b16 %v5979, %v5978
        %v5997 = vpack.c.b16 %v5981, %v5980
        %6014 = vmatprep.subr.bf16.mxu0 0
        %6015 = vmatpush1.bf16.msra.mxu0 %v5989
        %6016 = vmatprep.subr.bf16.mxu0 0
        %6017 = vmatpush1.bf16.msra.mxu0 %v5988
        %6018 = vmatprep.subr.bf16.mxu0 0
        %6019 = vmatpush1.bf16.msra.mxu0 %v5987
        %6020 = vmatprep.subr.bf16.mxu0 0
        %6021 = vmatpush1.bf16.msra.mxu0 %v5986
        %6022 = vmatprep.subr.bf16.mxu0 0
        %6023 = vmatpush1.bf16.msra.mxu0 %v5985
        %6024 = vmatprep.subr.bf16.mxu0 0
        %6025 = vmatpush1.bf16.msra.mxu0 %v5984
        %6026 = vmatprep.subr.bf16.mxu0 0
        %6027 = vmatpush1.bf16.msra.mxu0 %v5983
        %6028 = vmatprep.subr.bf16.mxu0 0
        %6029 = vmatpush1.bf16.msra.mxu0 %v5982
        %6030 = vmatprep.subr.bf16.mxu0 0
        %6031 = vmatpush2.bf16.msra.mxu0 %v5997
        %6032 = vmatprep.subr.bf16.mxu0 0
        %6033 = vmatpush2.bf16.msra.mxu0 %v5996
        %6034 = vmatprep.subr.bf16.mxu0 0
        %6035 = vmatpush2.bf16.msra.mxu0 %v5995
        %6036 = vmatprep.subr.bf16.mxu0 0
        %6037 = vmatpush2.bf16.msra.mxu0 %v5994
        %6038 = vmatprep.subr.bf16.mxu0 0
        %6039 = vmatpush2.bf16.msra.mxu0 %v5993
        %6040 = vmatprep.subr.bf16.mxu0 0
        %6041 = vmatpush2.bf16.msra.mxu0 %v5992
        %6042 = vmatprep.subr.bf16.mxu0 0
        %6043 = vmatpush2.bf16.msra.mxu0 %v5991
        %6044 = vmatprep.subr.bf16.mxu0 0
        %6045 = vmatpush2.bf16.msra.mxu0 %v5990
        %6046 = vmatprep.mubr.bf16.mxu0 %v5313
        %6047 = vmatmul.mubr.bf16.gmra.mxu0 %v5312
        %v6048 = vpop.f32.mrf.mxu0
        %v6049 = vadd.f32 0.0, %v6048
        %v6050 = vpop.f32.mrf.mxu0
        %v6051 = vpop.f32.mrf.mxu0
        %v6052 = vadd.f32 0.0, %v6051
        %v6053 = vpop.f32.mrf.mxu0
        %6054 = vmatprep.mubr.bf16.mxu0 %v5315
        %6055 = vmatmul.mubr.bf16.gmra.mxu0 %v5314
        %v6056 = vpop.f32.mrf.mxu0
        %v6057 = vadd.f32 0.0, %v6056
        %v6058 = vpop.f32.mrf.mxu0
        %v6059 = vpop.f32.mrf.mxu0
        %v6060 = vadd.f32 0.0, %v6059
        %v6061 = vpop.f32.mrf.mxu0
        %6062 = vdwg.mxu0
        %v6063 = vadd.f32 %v5881, %v6049
        %v6064 = vadd.f32 %v5882, %v6052
        %v6065 = vadd.f32 %v5883, %v6057
        %v6066 = vadd.f32 %v5884, %v6060
        %s6067 = scalar_lea.vmem %s3, 512
        %v6068 = vld [vmem:[%s6067] sm:$0xf]
        %v6069 = vld [vmem:[%s6067 + $0x4] sm:$0xf]
        %v6070 = vld [vmem:[%s6067 + $0x8] sm:$0xf]
        %v6071 = vld [vmem:[%s6067 + $0xc] sm:$0xf]
        %v6072 = vld [vmem:[%s6067 + $0x10] sm:$0xf]
        %v6073 = vld [vmem:[%s6067 + $0x14] sm:$0xf]
        %v6074 = vld [vmem:[%s6067 + $0x18] sm:$0xf]
        %v6075 = vld [vmem:[%s6067 + $0x1c] sm:$0xf]
        %v6076 = vld [vmem:[%s6067 + $0x20] sm:$0xf]
        %v6077 = vld [vmem:[%s6067 + $0x24] sm:$0xf]
        %v6078 = vld [vmem:[%s6067 + $0x28] sm:$0xf]
        %v6079 = vld [vmem:[%s6067 + $0x2c] sm:$0xf]
        %v6080 = vld [vmem:[%s6067 + $0x30] sm:$0xf]
        %v6081 = vld [vmem:[%s6067 + $0x34] sm:$0xf]
        %v6082 = vld [vmem:[%s6067 + $0x38] sm:$0xf]
        %v6083 = vld [vmem:[%s6067 + $0x3c] sm:$0xf]
        %v6084 = vld [vmem:[%s6067 + $0x40] sm:$0xf]
        %v6085 = vld [vmem:[%s6067 + $0x44] sm:$0xf]
        %v6086 = vld [vmem:[%s6067 + $0x48] sm:$0xf]
        %v6087 = vld [vmem:[%s6067 + $0x4c] sm:$0xf]
        %v6088 = vld [vmem:[%s6067 + $0x50] sm:$0xf]
        %v6089 = vld [vmem:[%s6067 + $0x54] sm:$0xf]
        %v6090 = vld [vmem:[%s6067 + $0x58] sm:$0xf]
        %v6091 = vld [vmem:[%s6067 + $0x5c] sm:$0xf]
        %v6092 = vld [vmem:[%s6067 + $0x60] sm:$0xf]
        %v6093 = vld [vmem:[%s6067 + $0x64] sm:$0xf]
        %v6094 = vld [vmem:[%s6067 + $0x68] sm:$0xf]
        %v6095 = vld [vmem:[%s6067 + $0x6c] sm:$0xf]
        %v6096 = vld [vmem:[%s6067 + $0x70] sm:$0xf]
        %v6097 = vld [vmem:[%s6067 + $0x74] sm:$0xf]
        %v6098 = vld [vmem:[%s6067 + $0x78] sm:$0xf]
        %v6099 = vld [vmem:[%s6067 + $0x7c] sm:$0xf]
        %v6132 = vunpack.c.l.b16 %v6068
        %v6133 = vunpack.c.l.b16 %v6069
        %v6134 = vunpack.c.l.b16 %v6070
        %v6135 = vunpack.c.l.b16 %v6071
        %v6136 = vunpack.c.l.b16 %v6072
        %v6137 = vunpack.c.l.b16 %v6073
        %v6138 = vunpack.c.l.b16 %v6074
        %v6139 = vunpack.c.l.b16 %v6075
        %v6140 = vunpack.c.l.b16 %v6076
        %v6141 = vunpack.c.l.b16 %v6077
        %v6142 = vunpack.c.l.b16 %v6078
        %v6143 = vunpack.c.l.b16 %v6079
        %v6144 = vunpack.c.l.b16 %v6080
        %v6145 = vunpack.c.l.b16 %v6081
        %v6146 = vunpack.c.l.b16 %v6082
        %v6147 = vunpack.c.l.b16 %v6083
        %v6148 = vunpack.c.l.b16 %v6084
        %v6149 = vunpack.c.l.b16 %v6085
        %v6150 = vunpack.c.l.b16 %v6086
        %v6151 = vunpack.c.l.b16 %v6087
        %v6152 = vunpack.c.l.b16 %v6088
        %v6153 = vunpack.c.l.b16 %v6089
        %v6154 = vunpack.c.l.b16 %v6090
        %v6155 = vunpack.c.l.b16 %v6091
        %v6156 = vunpack.c.l.b16 %v6092
        %v6157 = vunpack.c.l.b16 %v6093
        %v6158 = vunpack.c.l.b16 %v6094
        %v6159 = vunpack.c.l.b16 %v6095
        %v6160 = vunpack.c.l.b16 %v6096
        %v6161 = vunpack.c.l.b16 %v6097
        %v6162 = vunpack.c.l.b16 %v6098
        %v6163 = vunpack.c.l.b16 %v6099
        %v6164 = vpack.c.b16 %v6133, %v6132
        %v6165 = vpack.c.b16 %v6135, %v6134
        %v6166 = vpack.c.b16 %v6137, %v6136
        %v6167 = vpack.c.b16 %v6139, %v6138
        %v6168 = vpack.c.b16 %v6141, %v6140
        %v6169 = vpack.c.b16 %v6143, %v6142
        %v6170 = vpack.c.b16 %v6145, %v6144
        %v6171 = vpack.c.b16 %v6147, %v6146
        %v6172 = vpack.c.b16 %v6149, %v6148
        %v6173 = vpack.c.b16 %v6151, %v6150
        %v6174 = vpack.c.b16 %v6153, %v6152
        %v6175 = vpack.c.b16 %v6155, %v6154
        %v6176 = vpack.c.b16 %v6157, %v6156
        %v6177 = vpack.c.b16 %v6159, %v6158
        %v6178 = vpack.c.b16 %v6161, %v6160
        %v6179 = vpack.c.b16 %v6163, %v6162
        %6196 = vmatprep.subr.bf16.mxu0 0
        %6197 = vmatpush1.bf16.msra.mxu0 %v6171
        %6198 = vmatprep.subr.bf16.mxu0 0
        %6199 = vmatpush1.bf16.msra.mxu0 %v6170
        %6200 = vmatprep.subr.bf16.mxu0 0
        %6201 = vmatpush1.bf16.msra.mxu0 %v6169
        %6202 = vmatprep.subr.bf16.mxu0 0
        %6203 = vmatpush1.bf16.msra.mxu0 %v6168
        %6204 = vmatprep.subr.bf16.mxu0 0
        %6205 = vmatpush1.bf16.msra.mxu0 %v6167
        %6206 = vmatprep.subr.bf16.mxu0 0
        %6207 = vmatpush1.bf16.msra.mxu0 %v6166
        %6208 = vmatprep.subr.bf16.mxu0 0
        %6209 = vmatpush1.bf16.msra.mxu0 %v6165
        %6210 = vmatprep.subr.bf16.mxu0 0
        %6211 = vmatpush1.bf16.msra.mxu0 %v6164
        %6212 = vmatprep.subr.bf16.mxu0 0
        %6213 = vmatpush2.bf16.msra.mxu0 %v6179
        %6214 = vmatprep.subr.bf16.mxu0 0
        %6215 = vmatpush2.bf16.msra.mxu0 %v6178
        %6216 = vmatprep.subr.bf16.mxu0 0
        %6217 = vmatpush2.bf16.msra.mxu0 %v6177
        %6218 = vmatprep.subr.bf16.mxu0 0
        %6219 = vmatpush2.bf16.msra.mxu0 %v6176
        %6220 = vmatprep.subr.bf16.mxu0 0
        %6221 = vmatpush2.bf16.msra.mxu0 %v6175
        %6222 = vmatprep.subr.bf16.mxu0 0
        %6223 = vmatpush2.bf16.msra.mxu0 %v6174
        %6224 = vmatprep.subr.bf16.mxu0 0
        %6225 = vmatpush2.bf16.msra.mxu0 %v6173
        %6226 = vmatprep.subr.bf16.mxu0 0
        %6227 = vmatpush2.bf16.msra.mxu0 %v6172
        %6228 = vmatprep.mubr.bf16.mxu0 %v5317
        %6229 = vmatmul.mubr.bf16.gmra.mxu0 %v5316
        %v6230 = vpop.f32.mrf.mxu0
        %v6231 = vadd.f32 0.0, %v6230
        %v6232 = vpop.f32.mrf.mxu0
        %v6233 = vpop.f32.mrf.mxu0
        %v6234 = vadd.f32 0.0, %v6233
        %v6235 = vpop.f32.mrf.mxu0
        %6236 = vmatprep.mubr.bf16.mxu0 %v5319
        %6237 = vmatmul.mubr.bf16.gmra.mxu0 %v5318
        %v6238 = vpop.f32.mrf.mxu0
        %v6239 = vadd.f32 0.0, %v6238
        %v6240 = vpop.f32.mrf.mxu0
        %v6241 = vpop.f32.mrf.mxu0
        %v6242 = vadd.f32 0.0, %v6241
        %v6243 = vpop.f32.mrf.mxu0
        %6244 = vdwg.mxu0
        %v6245 = vadd.f32 %v6063, %v6231
        %v6246 = vadd.f32 %v6064, %v6234
        %v6247 = vadd.f32 %v6065, %v6239
        %v6248 = vadd.f32 %v6066, %v6242
        %s6249 = scalar_lea.vmem %s3, 640
        %v6250 = vld [vmem:[%s6249] sm:$0xf]
        %v6251 = vld [vmem:[%s6249 + $0x4] sm:$0xf]
        %v6252 = vld [vmem:[%s6249 + $0x8] sm:$0xf]
        %v6253 = vld [vmem:[%s6249 + $0xc] sm:$0xf]
        %v6254 = vld [vmem:[%s6249 + $0x10] sm:$0xf]
        %v6255 = vld [vmem:[%s6249 + $0x14] sm:$0xf]
        %v6256 = vld [vmem:[%s6249 + $0x18] sm:$0xf]
        %v6257 = vld [vmem:[%s6249 + $0x1c] sm:$0xf]
        %v6258 = vld [vmem:[%s6249 + $0x20] sm:$0xf]
        %v6259 = vld [vmem:[%s6249 + $0x24] sm:$0xf]
        %v6260 = vld [vmem:[%s6249 + $0x28] sm:$0xf]
        %v6261 = vld [vmem:[%s6249 + $0x2c] sm:$0xf]
        %v6262 = vld [vmem:[%s6249 + $0x30] sm:$0xf]
        %v6263 = vld [vmem:[%s6249 + $0x34] sm:$0xf]
        %v6264 = vld [vmem:[%s6249 + $0x38] sm:$0xf]
        %v6265 = vld [vmem:[%s6249 + $0x3c] sm:$0xf]
        %v6266 = vld [vmem:[%s6249 + $0x40] sm:$0xf]
        %v6267 = vld [vmem:[%s6249 + $0x44] sm:$0xf]
        %v6268 = vld [vmem:[%s6249 + $0x48] sm:$0xf]
        %v6269 = vld [vmem:[%s6249 + $0x4c] sm:$0xf]
        %v6270 = vld [vmem:[%s6249 + $0x50] sm:$0xf]
        %v6271 = vld [vmem:[%s6249 + $0x54] sm:$0xf]
        %v6272 = vld [vmem:[%s6249 + $0x58] sm:$0xf]
        %v6273 = vld [vmem:[%s6249 + $0x5c] sm:$0xf]
        %v6274 = vld [vmem:[%s6249 + $0x60] sm:$0xf]
        %v6275 = vld [vmem:[%s6249 + $0x64] sm:$0xf]
        %v6276 = vld [vmem:[%s6249 + $0x68] sm:$0xf]
        %v6277 = vld [vmem:[%s6249 + $0x6c] sm:$0xf]
        %v6278 = vld [vmem:[%s6249 + $0x70] sm:$0xf]
        %v6279 = vld [vmem:[%s6249 + $0x74] sm:$0xf]
        %v6280 = vld [vmem:[%s6249 + $0x78] sm:$0xf]
        %v6281 = vld [vmem:[%s6249 + $0x7c] sm:$0xf]
        %v6314 = vunpack.c.l.b16 %v6250
        %v6315 = vunpack.c.l.b16 %v6251
        %v6316 = vunpack.c.l.b16 %v6252
        %v6317 = vunpack.c.l.b16 %v6253
        %v6318 = vunpack.c.l.b16 %v6254
        %v6319 = vunpack.c.l.b16 %v6255
        %v6320 = vunpack.c.l.b16 %v6256
        %v6321 = vunpack.c.l.b16 %v6257
        %v6322 = vunpack.c.l.b16 %v6258
        %v6323 = vunpack.c.l.b16 %v6259
        %v6324 = vunpack.c.l.b16 %v6260
        %v6325 = vunpack.c.l.b16 %v6261
        %v6326 = vunpack.c.l.b16 %v6262
        %v6327 = vunpack.c.l.b16 %v6263
        %v6328 = vunpack.c.l.b16 %v6264
        %v6329 = vunpack.c.l.b16 %v6265
        %v6330 = vunpack.c.l.b16 %v6266
        %v6331 = vunpack.c.l.b16 %v6267
        %v6332 = vunpack.c.l.b16 %v6268
        %v6333 = vunpack.c.l.b16 %v6269
        %v6334 = vunpack.c.l.b16 %v6270
        %v6335 = vunpack.c.l.b16 %v6271
        %v6336 = vunpack.c.l.b16 %v6272
        %v6337 = vunpack.c.l.b16 %v6273
        %v6338 = vunpack.c.l.b16 %v6274
        %v6339 = vunpack.c.l.b16 %v6275
        %v6340 = vunpack.c.l.b16 %v6276
        %v6341 = vunpack.c.l.b16 %v6277
        %v6342 = vunpack.c.l.b16 %v6278
        %v6343 = vunpack.c.l.b16 %v6279
        %v6344 = vunpack.c.l.b16 %v6280
        %v6345 = vunpack.c.l.b16 %v6281
        %v6346 = vpack.c.b16 %v6315, %v6314
        %v6347 = vpack.c.b16 %v6317, %v6316
        %v6348 = vpack.c.b16 %v6319, %v6318
        %v6349 = vpack.c.b16 %v6321, %v6320
        %v6350 = vpack.c.b16 %v6323, %v6322
        %v6351 = vpack.c.b16 %v6325, %v6324
        %v6352 = vpack.c.b16 %v6327, %v6326
        %v6353 = vpack.c.b16 %v6329, %v6328
        %v6354 = vpack.c.b16 %v6331, %v6330
        %v6355 = vpack.c.b16 %v6333, %v6332
        %v6356 = vpack.c.b16 %v6335, %v6334
        %v6357 = vpack.c.b16 %v6337, %v6336
        %v6358 = vpack.c.b16 %v6339, %v6338
        %v6359 = vpack.c.b16 %v6341, %v6340
        %v6360 = vpack.c.b16 %v6343, %v6342
        %v6361 = vpack.c.b16 %v6345, %v6344
        %6378 = vmatprep.subr.bf16.mxu0 0
        %6379 = vmatpush1.bf16.msra.mxu0 %v6353
        %6380 = vmatprep.subr.bf16.mxu0 0
        %6381 = vmatpush1.bf16.msra.mxu0 %v6352
        %6382 = vmatprep.subr.bf16.mxu0 0
        %6383 = vmatpush1.bf16.msra.mxu0 %v6351
        %6384 = vmatprep.subr.bf16.mxu0 0
        %6385 = vmatpush1.bf16.msra.mxu0 %v6350
        %6386 = vmatprep.subr.bf16.mxu0 0
        %6387 = vmatpush1.bf16.msra.mxu0 %v6349
        %6388 = vmatprep.subr.bf16.mxu0 0
        %6389 = vmatpush1.bf16.msra.mxu0 %v6348
        %6390 = vmatprep.subr.bf16.mxu0 0
        %6391 = vmatpush1.bf16.msra.mxu0 %v6347
        %6392 = vmatprep.subr.bf16.mxu0 0
        %6393 = vmatpush1.bf16.msra.mxu0 %v6346
        %6394 = vmatprep.subr.bf16.mxu0 0
        %6395 = vmatpush2.bf16.msra.mxu0 %v6361
        %6396 = vmatprep.subr.bf16.mxu0 0
        %6397 = vmatpush2.bf16.msra.mxu0 %v6360
        %6398 = vmatprep.subr.bf16.mxu0 0
        %6399 = vmatpush2.bf16.msra.mxu0 %v6359
        %6400 = vmatprep.subr.bf16.mxu0 0
        %6401 = vmatpush2.bf16.msra.mxu0 %v6358
        %6402 = vmatprep.subr.bf16.mxu0 0
        %6403 = vmatpush2.bf16.msra.mxu0 %v6357
        %6404 = vmatprep.subr.bf16.mxu0 0
        %6405 = vmatpush2.bf16.msra.mxu0 %v6356
        %6406 = vmatprep.subr.bf16.mxu0 0
        %6407 = vmatpush2.bf16.msra.mxu0 %v6355
        %6408 = vmatprep.subr.bf16.mxu0 0
        %6409 = vmatpush2.bf16.msra.mxu0 %v6354
        %6410 = vmatprep.mubr.bf16.mxu0 %v5321
        %6411 = vmatmul.mubr.bf16.gmra.mxu0 %v5320
        %v6412 = vpop.f32.mrf.mxu0
        %v6413 = vadd.f32 0.0, %v6412
        %v6414 = vpop.f32.mrf.mxu0
        %v6415 = vpop.f32.mrf.mxu0
        %v6416 = vadd.f32 0.0, %v6415
        %v6417 = vpop.f32.mrf.mxu0
        %6418 = vmatprep.mubr.bf16.mxu0 %v5323
        %6419 = vmatmul.mubr.bf16.gmra.mxu0 %v5322
        %v6420 = vpop.f32.mrf.mxu0
        %v6421 = vadd.f32 0.0, %v6420
        %v6422 = vpop.f32.mrf.mxu0
        %v6423 = vpop.f32.mrf.mxu0
        %v6424 = vadd.f32 0.0, %v6423
        %v6425 = vpop.f32.mrf.mxu0
        %6426 = vdwg.mxu0
        %v6427 = vadd.f32 %v6245, %v6413
        %v6428 = vadd.f32 %v6246, %v6416
        %v6429 = vadd.f32 %v6247, %v6421
        %v6430 = vadd.f32 %v6248, %v6424
        %s6431 = scalar_lea.vmem %s3, 768
        %v6432 = vld [vmem:[%s6431] sm:$0xf]
        %v6433 = vld [vmem:[%s6431 + $0x4] sm:$0xf]
        %v6434 = vld [vmem:[%s6431 + $0x8] sm:$0xf]
        %v6435 = vld [vmem:[%s6431 + $0xc] sm:$0xf]
        %v6436 = vld [vmem:[%s6431 + $0x10] sm:$0xf]
        %v6437 = vld [vmem:[%s6431 + $0x14] sm:$0xf]
        %v6438 = vld [vmem:[%s6431 + $0x18] sm:$0xf]
        %v6439 = vld [vmem:[%s6431 + $0x1c] sm:$0xf]
        %v6440 = vld [vmem:[%s6431 + $0x20] sm:$0xf]
        %v6441 = vld [vmem:[%s6431 + $0x24] sm:$0xf]
        %v6442 = vld [vmem:[%s6431 + $0x28] sm:$0xf]
        %v6443 = vld [vmem:[%s6431 + $0x2c] sm:$0xf]
        %v6444 = vld [vmem:[%s6431 + $0x30] sm:$0xf]
        %v6445 = vld [vmem:[%s6431 + $0x34] sm:$0xf]
        %v6446 = vld [vmem:[%s6431 + $0x38] sm:$0xf]
        %v6447 = vld [vmem:[%s6431 + $0x3c] sm:$0xf]
        %v6448 = vld [vmem:[%s6431 + $0x40] sm:$0xf]
        %v6449 = vld [vmem:[%s6431 + $0x44] sm:$0xf]
        %v6450 = vld [vmem:[%s6431 + $0x48] sm:$0xf]
        %v6451 = vld [vmem:[%s6431 + $0x4c] sm:$0xf]
        %v6452 = vld [vmem:[%s6431 + $0x50] sm:$0xf]
        %v6453 = vld [vmem:[%s6431 + $0x54] sm:$0xf]
        %v6454 = vld [vmem:[%s6431 + $0x58] sm:$0xf]
        %v6455 = vld [vmem:[%s6431 + $0x5c] sm:$0xf]
        %v6456 = vld [vmem:[%s6431 + $0x60] sm:$0xf]
        %v6457 = vld [vmem:[%s6431 + $0x64] sm:$0xf]
        %v6458 = vld [vmem:[%s6431 + $0x68] sm:$0xf]
        %v6459 = vld [vmem:[%s6431 + $0x6c] sm:$0xf]
        %v6460 = vld [vmem:[%s6431 + $0x70] sm:$0xf]
        %v6461 = vld [vmem:[%s6431 + $0x74] sm:$0xf]
        %v6462 = vld [vmem:[%s6431 + $0x78] sm:$0xf]
        %v6463 = vld [vmem:[%s6431 + $0x7c] sm:$0xf]
        %v6496 = vunpack.c.l.b16 %v6432
        %v6497 = vunpack.c.l.b16 %v6433
        %v6498 = vunpack.c.l.b16 %v6434
        %v6499 = vunpack.c.l.b16 %v6435
        %v6500 = vunpack.c.l.b16 %v6436
        %v6501 = vunpack.c.l.b16 %v6437
        %v6502 = vunpack.c.l.b16 %v6438
        %v6503 = vunpack.c.l.b16 %v6439
        %v6504 = vunpack.c.l.b16 %v6440
        %v6505 = vunpack.c.l.b16 %v6441
        %v6506 = vunpack.c.l.b16 %v6442
        %v6507 = vunpack.c.l.b16 %v6443
        %v6508 = vunpack.c.l.b16 %v6444
        %v6509 = vunpack.c.l.b16 %v6445
        %v6510 = vunpack.c.l.b16 %v6446
        %v6511 = vunpack.c.l.b16 %v6447
        %v6512 = vunpack.c.l.b16 %v6448
        %v6513 = vunpack.c.l.b16 %v6449
        %v6514 = vunpack.c.l.b16 %v6450
        %v6515 = vunpack.c.l.b16 %v6451
        %v6516 = vunpack.c.l.b16 %v6452
        %v6517 = vunpack.c.l.b16 %v6453
        %v6518 = vunpack.c.l.b16 %v6454
        %v6519 = vunpack.c.l.b16 %v6455
        %v6520 = vunpack.c.l.b16 %v6456
        %v6521 = vunpack.c.l.b16 %v6457
        %v6522 = vunpack.c.l.b16 %v6458
        %v6523 = vunpack.c.l.b16 %v6459
        %v6524 = vunpack.c.l.b16 %v6460
        %v6525 = vunpack.c.l.b16 %v6461
        %v6526 = vunpack.c.l.b16 %v6462
        %v6527 = vunpack.c.l.b16 %v6463
        %v6528 = vpack.c.b16 %v6497, %v6496
        %v6529 = vpack.c.b16 %v6499, %v6498
        %v6530 = vpack.c.b16 %v6501, %v6500
        %v6531 = vpack.c.b16 %v6503, %v6502
        %v6532 = vpack.c.b16 %v6505, %v6504
        %v6533 = vpack.c.b16 %v6507, %v6506
        %v6534 = vpack.c.b16 %v6509, %v6508
        %v6535 = vpack.c.b16 %v6511, %v6510
        %v6536 = vpack.c.b16 %v6513, %v6512
        %v6537 = vpack.c.b16 %v6515, %v6514
        %v6538 = vpack.c.b16 %v6517, %v6516
        %v6539 = vpack.c.b16 %v6519, %v6518
        %v6540 = vpack.c.b16 %v6521, %v6520
        %v6541 = vpack.c.b16 %v6523, %v6522
        %v6542 = vpack.c.b16 %v6525, %v6524
        %v6543 = vpack.c.b16 %v6527, %v6526
        %6560 = vmatprep.subr.bf16.mxu0 0
        %6561 = vmatpush1.bf16.msra.mxu0 %v6535
        %6562 = vmatprep.subr.bf16.mxu0 0
        %6563 = vmatpush1.bf16.msra.mxu0 %v6534
        %6564 = vmatprep.subr.bf16.mxu0 0
        %6565 = vmatpush1.bf16.msra.mxu0 %v6533
        %6566 = vmatprep.subr.bf16.mxu0 0
        %6567 = vmatpush1.bf16.msra.mxu0 %v6532
        %6568 = vmatprep.subr.bf16.mxu0 0
        %6569 = vmatpush1.bf16.msra.mxu0 %v6531
        %6570 = vmatprep.subr.bf16.mxu0 0
        %6571 = vmatpush1.bf16.msra.mxu0 %v6530
        %6572 = vmatprep.subr.bf16.mxu0 0
        %6573 = vmatpush1.bf16.msra.mxu0 %v6529
        %6574 = vmatprep.subr.bf16.mxu0 0
        %6575 = vmatpush1.bf16.msra.mxu0 %v6528
        %6576 = vmatprep.subr.bf16.mxu0 0
        %6577 = vmatpush2.bf16.msra.mxu0 %v6543
        %6578 = vmatprep.subr.bf16.mxu0 0
        %6579 = vmatpush2.bf16.msra.mxu0 %v6542
        %6580 = vmatprep.subr.bf16.mxu0 0
        %6581 = vmatpush2.bf16.msra.mxu0 %v6541
        %6582 = vmatprep.subr.bf16.mxu0 0
        %6583 = vmatpush2.bf16.msra.mxu0 %v6540
        %6584 = vmatprep.subr.bf16.mxu0 0
        %6585 = vmatpush2.bf16.msra.mxu0 %v6539
        %6586 = vmatprep.subr.bf16.mxu0 0
        %6587 = vmatpush2.bf16.msra.mxu0 %v6538
        %6588 = vmatprep.subr.bf16.mxu0 0
        %6589 = vmatpush2.bf16.msra.mxu0 %v6537
        %6590 = vmatprep.subr.bf16.mxu0 0
        %6591 = vmatpush2.bf16.msra.mxu0 %v6536
        %6592 = vmatprep.mubr.bf16.mxu0 %v5325
        %6593 = vmatmul.mubr.bf16.gmra.mxu0 %v5324
        %v6594 = vpop.f32.mrf.mxu0
        %v6595 = vadd.f32 0.0, %v6594
        %v6596 = vpop.f32.mrf.mxu0
        %v6597 = vpop.f32.mrf.mxu0
        %v6598 = vadd.f32 0.0, %v6597
        %v6599 = vpop.f32.mrf.mxu0
        %6600 = vmatprep.mubr.bf16.mxu0 %v5327
        %6601 = vmatmul.mubr.bf16.gmra.mxu0 %v5326
        %v6602 = vpop.f32.mrf.mxu0
        %v6603 = vadd.f32 0.0, %v6602
        %v6604 = vpop.f32.mrf.mxu0
        %v6605 = vpop.f32.mrf.mxu0
        %v6606 = vadd.f32 0.0, %v6605
        %v6607 = vpop.f32.mrf.mxu0
        %6608 = vdwg.mxu0
        %v6609 = vadd.f32 %v6427, %v6595
        %v6610 = vadd.f32 %v6428, %v6598
        %v6611 = vadd.f32 %v6429, %v6603
        %v6612 = vadd.f32 %v6430, %v6606
        %s6613 = scalar_lea.vmem %s3, 896
        %v6614 = vld [vmem:[%s6613] sm:$0xf]
        %v6615 = vld [vmem:[%s6613 + $0x4] sm:$0xf]
        %v6616 = vld [vmem:[%s6613 + $0x8] sm:$0xf]
        %v6617 = vld [vmem:[%s6613 + $0xc] sm:$0xf]
        %v6618 = vld [vmem:[%s6613 + $0x10] sm:$0xf]
        %v6619 = vld [vmem:[%s6613 + $0x14] sm:$0xf]
        %v6620 = vld [vmem:[%s6613 + $0x18] sm:$0xf]
        %v6621 = vld [vmem:[%s6613 + $0x1c] sm:$0xf]
        %v6622 = vld [vmem:[%s6613 + $0x20] sm:$0xf]
        %v6623 = vld [vmem:[%s6613 + $0x24] sm:$0xf]
        %v6624 = vld [vmem:[%s6613 + $0x28] sm:$0xf]
        %v6625 = vld [vmem:[%s6613 + $0x2c] sm:$0xf]
        %v6626 = vld [vmem:[%s6613 + $0x30] sm:$0xf]
        %v6627 = vld [vmem:[%s6613 + $0x34] sm:$0xf]
        %v6628 = vld [vmem:[%s6613 + $0x38] sm:$0xf]
        %v6629 = vld [vmem:[%s6613 + $0x3c] sm:$0xf]
        %v6630 = vld [vmem:[%s6613 + $0x40] sm:$0xf]
        %v6631 = vld [vmem:[%s6613 + $0x44] sm:$0xf]
        %v6632 = vld [vmem:[%s6613 + $0x48] sm:$0xf]
        %v6633 = vld [vmem:[%s6613 + $0x4c] sm:$0xf]
        %v6634 = vld [vmem:[%s6613 + $0x50] sm:$0xf]
        %v6635 = vld [vmem:[%s6613 + $0x54] sm:$0xf]
        %v6636 = vld [vmem:[%s6613 + $0x58] sm:$0xf]
        %v6637 = vld [vmem:[%s6613 + $0x5c] sm:$0xf]
        %v6638 = vld [vmem:[%s6613 + $0x60] sm:$0xf]
        %v6639 = vld [vmem:[%s6613 + $0x64] sm:$0xf]
        %v6640 = vld [vmem:[%s6613 + $0x68] sm:$0xf]
        %v6641 = vld [vmem:[%s6613 + $0x6c] sm:$0xf]
        %v6642 = vld [vmem:[%s6613 + $0x70] sm:$0xf]
        %v6643 = vld [vmem:[%s6613 + $0x74] sm:$0xf]
        %v6644 = vld [vmem:[%s6613 + $0x78] sm:$0xf]
        %v6645 = vld [vmem:[%s6613 + $0x7c] sm:$0xf]
        %v6678 = vunpack.c.l.b16 %v6614
        %v6679 = vunpack.c.l.b16 %v6615
        %v6680 = vunpack.c.l.b16 %v6616
        %v6681 = vunpack.c.l.b16 %v6617
        %v6682 = vunpack.c.l.b16 %v6618
        %v6683 = vunpack.c.l.b16 %v6619
        %v6684 = vunpack.c.l.b16 %v6620
        %v6685 = vunpack.c.l.b16 %v6621
        %v6686 = vunpack.c.l.b16 %v6622
        %v6687 = vunpack.c.l.b16 %v6623
        %v6688 = vunpack.c.l.b16 %v6624
        %v6689 = vunpack.c.l.b16 %v6625
        %v6690 = vunpack.c.l.b16 %v6626
        %v6691 = vunpack.c.l.b16 %v6627
        %v6692 = vunpack.c.l.b16 %v6628
        %v6693 = vunpack.c.l.b16 %v6629
        %v6694 = vunpack.c.l.b16 %v6630
        %v6695 = vunpack.c.l.b16 %v6631
        %v6696 = vunpack.c.l.b16 %v6632
        %v6697 = vunpack.c.l.b16 %v6633
        %v6698 = vunpack.c.l.b16 %v6634
        %v6699 = vunpack.c.l.b16 %v6635
        %v6700 = vunpack.c.l.b16 %v6636
        %v6701 = vunpack.c.l.b16 %v6637
        %v6702 = vunpack.c.l.b16 %v6638
        %v6703 = vunpack.c.l.b16 %v6639
        %v6704 = vunpack.c.l.b16 %v6640
        %v6705 = vunpack.c.l.b16 %v6641
        %v6706 = vunpack.c.l.b16 %v6642
        %v6707 = vunpack.c.l.b16 %v6643
        %v6708 = vunpack.c.l.b16 %v6644
        %v6709 = vunpack.c.l.b16 %v6645
        %v6710 = vpack.c.b16 %v6679, %v6678
        %v6711 = vpack.c.b16 %v6681, %v6680
        %v6712 = vpack.c.b16 %v6683, %v6682
        %v6713 = vpack.c.b16 %v6685, %v6684
        %v6714 = vpack.c.b16 %v6687, %v6686
        %v6715 = vpack.c.b16 %v6689, %v6688
        %v6716 = vpack.c.b16 %v6691, %v6690
        %v6717 = vpack.c.b16 %v6693, %v6692
        %v6718 = vpack.c.b16 %v6695, %v6694
        %v6719 = vpack.c.b16 %v6697, %v6696
        %v6720 = vpack.c.b16 %v6699, %v6698
        %v6721 = vpack.c.b16 %v6701, %v6700
        %v6722 = vpack.c.b16 %v6703, %v6702
        %v6723 = vpack.c.b16 %v6705, %v6704
        %v6724 = vpack.c.b16 %v6707, %v6706
        %v6725 = vpack.c.b16 %v6709, %v6708
        %6742 = vmatprep.subr.bf16.mxu0 0
        %6743 = vmatpush1.bf16.msra.mxu0 %v6717
        %6744 = vmatprep.subr.bf16.mxu0 0
        %6745 = vmatpush1.bf16.msra.mxu0 %v6716
        %6746 = vmatprep.subr.bf16.mxu0 0
        %6747 = vmatpush1.bf16.msra.mxu0 %v6715
        %6748 = vmatprep.subr.bf16.mxu0 0
        %6749 = vmatpush1.bf16.msra.mxu0 %v6714
        %6750 = vmatprep.subr.bf16.mxu0 0
        %6751 = vmatpush1.bf16.msra.mxu0 %v6713
        %6752 = vmatprep.subr.bf16.mxu0 0
        %6753 = vmatpush1.bf16.msra.mxu0 %v6712
        %6754 = vmatprep.subr.bf16.mxu0 0
        %6755 = vmatpush1.bf16.msra.mxu0 %v6711
        %6756 = vmatprep.subr.bf16.mxu0 0
        %6757 = vmatpush1.bf16.msra.mxu0 %v6710
        %6758 = vmatprep.subr.bf16.mxu0 0
        %6759 = vmatpush2.bf16.msra.mxu0 %v6725
        %6760 = vmatprep.subr.bf16.mxu0 0
        %6761 = vmatpush2.bf16.msra.mxu0 %v6724
        %6762 = vmatprep.subr.bf16.mxu0 0
        %6763 = vmatpush2.bf16.msra.mxu0 %v6723
        %6764 = vmatprep.subr.bf16.mxu0 0
        %6765 = vmatpush2.bf16.msra.mxu0 %v6722
        %6766 = vmatprep.subr.bf16.mxu0 0
        %6767 = vmatpush2.bf16.msra.mxu0 %v6721
        %6768 = vmatprep.subr.bf16.mxu0 0
        %6769 = vmatpush2.bf16.msra.mxu0 %v6720
        %6770 = vmatprep.subr.bf16.mxu0 0
        %6771 = vmatpush2.bf16.msra.mxu0 %v6719
        %6772 = vmatprep.subr.bf16.mxu0 0
        %6773 = vmatpush2.bf16.msra.mxu0 %v6718
        %6774 = vmatprep.mubr.bf16.mxu0 %v5329
        %6775 = vmatmul.mubr.bf16.gmra.mxu0 %v5328
        %v6776 = vpop.f32.mrf.mxu0
        %v6777 = vadd.f32 0.0, %v6776
        %v6778 = vpop.f32.mrf.mxu0
        %v6779 = vpop.f32.mrf.mxu0
        %v6780 = vadd.f32 0.0, %v6779
        %v6781 = vpop.f32.mrf.mxu0
        %6782 = vmatprep.mubr.bf16.mxu0 %v5331
        %6783 = vmatmul.mubr.bf16.gmra.mxu0 %v5330
        %v6784 = vpop.f32.mrf.mxu0
        %v6785 = vadd.f32 0.0, %v6784
        %v6786 = vpop.f32.mrf.mxu0
        %v6787 = vpop.f32.mrf.mxu0
        %v6788 = vadd.f32 0.0, %v6787
        %v6789 = vpop.f32.mrf.mxu0
        %6790 = vdwg.mxu0
        %v6791 = vadd.f32 %v6609, %v6777
        %v6792 = vadd.f32 %v6610, %v6780
        %v6793 = vadd.f32 %v6611, %v6785
        %v6794 = vadd.f32 %v6612, %v6788
        %s6795 = scalar_lea.vmem %s3, 1024
        %v6796 = vld [vmem:[%s6795] sm:$0xf]
        %v6797 = vld [vmem:[%s6795 + $0x4] sm:$0xf]
        %v6798 = vld [vmem:[%s6795 + $0x8] sm:$0xf]
        %v6799 = vld [vmem:[%s6795 + $0xc] sm:$0xf]
        %v6800 = vld [vmem:[%s6795 + $0x10] sm:$0xf]
        %v6801 = vld [vmem:[%s6795 + $0x14] sm:$0xf]
        %v6802 = vld [vmem:[%s6795 + $0x18] sm:$0xf]
        %v6803 = vld [vmem:[%s6795 + $0x1c] sm:$0xf]
        %v6804 = vld [vmem:[%s6795 + $0x20] sm:$0xf]
        %v6805 = vld [vmem:[%s6795 + $0x24] sm:$0xf]
        %v6806 = vld [vmem:[%s6795 + $0x28] sm:$0xf]
        %v6807 = vld [vmem:[%s6795 + $0x2c] sm:$0xf]
        %v6808 = vld [vmem:[%s6795 + $0x30] sm:$0xf]
        %v6809 = vld [vmem:[%s6795 + $0x34] sm:$0xf]
        %v6810 = vld [vmem:[%s6795 + $0x38] sm:$0xf]
        %v6811 = vld [vmem:[%s6795 + $0x3c] sm:$0xf]
        %v6812 = vld [vmem:[%s6795 + $0x40] sm:$0xf]
        %v6813 = vld [vmem:[%s6795 + $0x44] sm:$0xf]
        %v6814 = vld [vmem:[%s6795 + $0x48] sm:$0xf]
        %v6815 = vld [vmem:[%s6795 + $0x4c] sm:$0xf]
        %v6816 = vld [vmem:[%s6795 + $0x50] sm:$0xf]
        %v6817 = vld [vmem:[%s6795 + $0x54] sm:$0xf]
        %v6818 = vld [vmem:[%s6795 + $0x58] sm:$0xf]
        %v6819 = vld [vmem:[%s6795 + $0x5c] sm:$0xf]
        %v6820 = vld [vmem:[%s6795 + $0x60] sm:$0xf]
        %v6821 = vld [vmem:[%s6795 + $0x64] sm:$0xf]
        %v6822 = vld [vmem:[%s6795 + $0x68] sm:$0xf]
        %v6823 = vld [vmem:[%s6795 + $0x6c] sm:$0xf]
        %v6824 = vld [vmem:[%s6795 + $0x70] sm:$0xf]
        %v6825 = vld [vmem:[%s6795 + $0x74] sm:$0xf]
        %v6826 = vld [vmem:[%s6795 + $0x78] sm:$0xf]
        %v6827 = vld [vmem:[%s6795 + $0x7c] sm:$0xf]
        %v6860 = vunpack.c.l.b16 %v6796
        %v6861 = vunpack.c.l.b16 %v6797
        %v6862 = vunpack.c.l.b16 %v6798
        %v6863 = vunpack.c.l.b16 %v6799
        %v6864 = vunpack.c.l.b16 %v6800
        %v6865 = vunpack.c.l.b16 %v6801
        %v6866 = vunpack.c.l.b16 %v6802
        %v6867 = vunpack.c.l.b16 %v6803
        %v6868 = vunpack.c.l.b16 %v6804
        %v6869 = vunpack.c.l.b16 %v6805
        %v6870 = vunpack.c.l.b16 %v6806
        %v6871 = vunpack.c.l.b16 %v6807
        %v6872 = vunpack.c.l.b16 %v6808
        %v6873 = vunpack.c.l.b16 %v6809
        %v6874 = vunpack.c.l.b16 %v6810
        %v6875 = vunpack.c.l.b16 %v6811
        %v6876 = vunpack.c.l.b16 %v6812
        %v6877 = vunpack.c.l.b16 %v6813
        %v6878 = vunpack.c.l.b16 %v6814
        %v6879 = vunpack.c.l.b16 %v6815
        %v6880 = vunpack.c.l.b16 %v6816
        %v6881 = vunpack.c.l.b16 %v6817
        %v6882 = vunpack.c.l.b16 %v6818
        %v6883 = vunpack.c.l.b16 %v6819
        %v6884 = vunpack.c.l.b16 %v6820
        %v6885 = vunpack.c.l.b16 %v6821
        %v6886 = vunpack.c.l.b16 %v6822
        %v6887 = vunpack.c.l.b16 %v6823
        %v6888 = vunpack.c.l.b16 %v6824
        %v6889 = vunpack.c.l.b16 %v6825
        %v6890 = vunpack.c.l.b16 %v6826
        %v6891 = vunpack.c.l.b16 %v6827
        %v6892 = vpack.c.b16 %v6861, %v6860
        %v6893 = vpack.c.b16 %v6863, %v6862
        %v6894 = vpack.c.b16 %v6865, %v6864
        %v6895 = vpack.c.b16 %v6867, %v6866
        %v6896 = vpack.c.b16 %v6869, %v6868
        %v6897 = vpack.c.b16 %v6871, %v6870
        %v6898 = vpack.c.b16 %v6873, %v6872
        %v6899 = vpack.c.b16 %v6875, %v6874
        %v6900 = vpack.c.b16 %v6877, %v6876
        %v6901 = vpack.c.b16 %v6879, %v6878
        %v6902 = vpack.c.b16 %v6881, %v6880
        %v6903 = vpack.c.b16 %v6883, %v6882
        %v6904 = vpack.c.b16 %v6885, %v6884
        %v6905 = vpack.c.b16 %v6887, %v6886
        %v6906 = vpack.c.b16 %v6889, %v6888
        %v6907 = vpack.c.b16 %v6891, %v6890
        %6924 = vmatprep.subr.bf16.mxu0 0
        %6925 = vmatpush1.bf16.msra.mxu0 %v6899
        %6926 = vmatprep.subr.bf16.mxu0 0
        %6927 = vmatpush1.bf16.msra.mxu0 %v6898
        %6928 = vmatprep.subr.bf16.mxu0 0
        %6929 = vmatpush1.bf16.msra.mxu0 %v6897
        %6930 = vmatprep.subr.bf16.mxu0 0
        %6931 = vmatpush1.bf16.msra.mxu0 %v6896
        %6932 = vmatprep.subr.bf16.mxu0 0
        %6933 = vmatpush1.bf16.msra.mxu0 %v6895
        %6934 = vmatprep.subr.bf16.mxu0 0
        %6935 = vmatpush1.bf16.msra.mxu0 %v6894
        %6936 = vmatprep.subr.bf16.mxu0 0
        %6937 = vmatpush1.bf16.msra.mxu0 %v6893
        %6938 = vmatprep.subr.bf16.mxu0 0
        %6939 = vmatpush1.bf16.msra.mxu0 %v6892
        %6940 = vmatprep.subr.bf16.mxu0 0
        %6941 = vmatpush2.bf16.msra.mxu0 %v6907
        %6942 = vmatprep.subr.bf16.mxu0 0
        %6943 = vmatpush2.bf16.msra.mxu0 %v6906
        %6944 = vmatprep.subr.bf16.mxu0 0
        %6945 = vmatpush2.bf16.msra.mxu0 %v6905
        %6946 = vmatprep.subr.bf16.mxu0 0
        %6947 = vmatpush2.bf16.msra.mxu0 %v6904
        %6948 = vmatprep.subr.bf16.mxu0 0
        %6949 = vmatpush2.bf16.msra.mxu0 %v6903
        %6950 = vmatprep.subr.bf16.mxu0 0
        %6951 = vmatpush2.bf16.msra.mxu0 %v6902
        %6952 = vmatprep.subr.bf16.mxu0 0
        %6953 = vmatpush2.bf16.msra.mxu0 %v6901
        %6954 = vmatprep.subr.bf16.mxu0 0
        %6955 = vmatpush2.bf16.msra.mxu0 %v6900
        %6956 = vmatprep.mubr.bf16.mxu0 %v5333
        %6957 = vmatmul.mubr.bf16.gmra.mxu0 %v5332
        %v6958 = vpop.f32.mrf.mxu0
        %v6959 = vadd.f32 0.0, %v6958
        %v6960 = vpop.f32.mrf.mxu0
        %v6961 = vpop.f32.mrf.mxu0
        %v6962 = vadd.f32 0.0, %v6961
        %v6963 = vpop.f32.mrf.mxu0
        %6964 = vmatprep.mubr.bf16.mxu0 %v5335
        %6965 = vmatmul.mubr.bf16.gmra.mxu0 %v5334
        %v6966 = vpop.f32.mrf.mxu0
        %v6967 = vadd.f32 0.0, %v6966
        %v6968 = vpop.f32.mrf.mxu0
        %v6969 = vpop.f32.mrf.mxu0
        %v6970 = vadd.f32 0.0, %v6969
        %v6971 = vpop.f32.mrf.mxu0
        %6972 = vdwg.mxu0
        %v6973 = vadd.f32 %v6791, %v6959
        %v6974 = vadd.f32 %v6792, %v6962
        %v6975 = vadd.f32 %v6793, %v6967
        %v6976 = vadd.f32 %v6794, %v6970
        %s6977 = scalar_lea.vmem %s3, 1152
        %v6978 = vld [vmem:[%s6977] sm:$0xf]
        %v6979 = vld [vmem:[%s6977 + $0x4] sm:$0xf]
        %v6980 = vld [vmem:[%s6977 + $0x8] sm:$0xf]
        %v6981 = vld [vmem:[%s6977 + $0xc] sm:$0xf]
        %v6982 = vld [vmem:[%s6977 + $0x10] sm:$0xf]
        %v6983 = vld [vmem:[%s6977 + $0x14] sm:$0xf]
        %v6984 = vld [vmem:[%s6977 + $0x18] sm:$0xf]
        %v6985 = vld [vmem:[%s6977 + $0x1c] sm:$0xf]
        %v6986 = vld [vmem:[%s6977 + $0x20] sm:$0xf]
        %v6987 = vld [vmem:[%s6977 + $0x24] sm:$0xf]
        %v6988 = vld [vmem:[%s6977 + $0x28] sm:$0xf]
        %v6989 = vld [vmem:[%s6977 + $0x2c] sm:$0xf]
        %v6990 = vld [vmem:[%s6977 + $0x30] sm:$0xf]
        %v6991 = vld [vmem:[%s6977 + $0x34] sm:$0xf]
        %v6992 = vld [vmem:[%s6977 + $0x38] sm:$0xf]
        %v6993 = vld [vmem:[%s6977 + $0x3c] sm:$0xf]
        %v6994 = vld [vmem:[%s6977 + $0x40] sm:$0xf]
        %v6995 = vld [vmem:[%s6977 + $0x44] sm:$0xf]
        %v6996 = vld [vmem:[%s6977 + $0x48] sm:$0xf]
        %v6997 = vld [vmem:[%s6977 + $0x4c] sm:$0xf]
        %v6998 = vld [vmem:[%s6977 + $0x50] sm:$0xf]
        %v6999 = vld [vmem:[%s6977 + $0x54] sm:$0xf]
        %v7000 = vld [vmem:[%s6977 + $0x58] sm:$0xf]
        %v7001 = vld [vmem:[%s6977 + $0x5c] sm:$0xf]
        %v7002 = vld [vmem:[%s6977 + $0x60] sm:$0xf]
        %v7003 = vld [vmem:[%s6977 + $0x64] sm:$0xf]
        %v7004 = vld [vmem:[%s6977 + $0x68] sm:$0xf]
        %v7005 = vld [vmem:[%s6977 + $0x6c] sm:$0xf]
        %v7006 = vld [vmem:[%s6977 + $0x70] sm:$0xf]
        %v7007 = vld [vmem:[%s6977 + $0x74] sm:$0xf]
        %v7008 = vld [vmem:[%s6977 + $0x78] sm:$0xf]
        %v7009 = vld [vmem:[%s6977 + $0x7c] sm:$0xf]
        %v7042 = vunpack.c.l.b16 %v6978
        %v7043 = vunpack.c.l.b16 %v6979
        %v7044 = vunpack.c.l.b16 %v6980
        %v7045 = vunpack.c.l.b16 %v6981
        %v7046 = vunpack.c.l.b16 %v6982
        %v7047 = vunpack.c.l.b16 %v6983
        %v7048 = vunpack.c.l.b16 %v6984
        %v7049 = vunpack.c.l.b16 %v6985
        %v7050 = vunpack.c.l.b16 %v6986
        %v7051 = vunpack.c.l.b16 %v6987
        %v7052 = vunpack.c.l.b16 %v6988
        %v7053 = vunpack.c.l.b16 %v6989
        %v7054 = vunpack.c.l.b16 %v6990
        %v7055 = vunpack.c.l.b16 %v6991
        %v7056 = vunpack.c.l.b16 %v6992
        %v7057 = vunpack.c.l.b16 %v6993
        %v7058 = vunpack.c.l.b16 %v6994
        %v7059 = vunpack.c.l.b16 %v6995
        %v7060 = vunpack.c.l.b16 %v6996
        %v7061 = vunpack.c.l.b16 %v6997
        %v7062 = vunpack.c.l.b16 %v6998
        %v7063 = vunpack.c.l.b16 %v6999
        %v7064 = vunpack.c.l.b16 %v7000
        %v7065 = vunpack.c.l.b16 %v7001
        %v7066 = vunpack.c.l.b16 %v7002
        %v7067 = vunpack.c.l.b16 %v7003
        %v7068 = vunpack.c.l.b16 %v7004
        %v7069 = vunpack.c.l.b16 %v7005
        %v7070 = vunpack.c.l.b16 %v7006
        %v7071 = vunpack.c.l.b16 %v7007
        %v7072 = vunpack.c.l.b16 %v7008
        %v7073 = vunpack.c.l.b16 %v7009
        %v7074 = vpack.c.b16 %v7043, %v7042
        %v7075 = vpack.c.b16 %v7045, %v7044
        %v7076 = vpack.c.b16 %v7047, %v7046
        %v7077 = vpack.c.b16 %v7049, %v7048
        %v7078 = vpack.c.b16 %v7051, %v7050
        %v7079 = vpack.c.b16 %v7053, %v7052
        %v7080 = vpack.c.b16 %v7055, %v7054
        %v7081 = vpack.c.b16 %v7057, %v7056
        %v7082 = vpack.c.b16 %v7059, %v7058
        %v7083 = vpack.c.b16 %v7061, %v7060
        %v7084 = vpack.c.b16 %v7063, %v7062
        %v7085 = vpack.c.b16 %v7065, %v7064
        %v7086 = vpack.c.b16 %v7067, %v7066
        %v7087 = vpack.c.b16 %v7069, %v7068
        %v7088 = vpack.c.b16 %v7071, %v7070
        %v7089 = vpack.c.b16 %v7073, %v7072
        %7106 = vmatprep.subr.bf16.mxu0 0
        %7107 = vmatpush1.bf16.msra.mxu0 %v7081
        %7108 = vmatprep.subr.bf16.mxu0 0
        %7109 = vmatpush1.bf16.msra.mxu0 %v7080
        %7110 = vmatprep.subr.bf16.mxu0 0
        %7111 = vmatpush1.bf16.msra.mxu0 %v7079
        %7112 = vmatprep.subr.bf16.mxu0 0
        %7113 = vmatpush1.bf16.msra.mxu0 %v7078
        %7114 = vmatprep.subr.bf16.mxu0 0
        %7115 = vmatpush1.bf16.msra.mxu0 %v7077
        %7116 = vmatprep.subr.bf16.mxu0 0
        %7117 = vmatpush1.bf16.msra.mxu0 %v7076
        %7118 = vmatprep.subr.bf16.mxu0 0
        %7119 = vmatpush1.bf16.msra.mxu0 %v7075
        %7120 = vmatprep.subr.bf16.mxu0 0
        %7121 = vmatpush1.bf16.msra.mxu0 %v7074
        %7122 = vmatprep.subr.bf16.mxu0 0
        %7123 = vmatpush2.bf16.msra.mxu0 %v7089
        %7124 = vmatprep.subr.bf16.mxu0 0
        %7125 = vmatpush2.bf16.msra.mxu0 %v7088
        %7126 = vmatprep.subr.bf16.mxu0 0
        %7127 = vmatpush2.bf16.msra.mxu0 %v7087
        %7128 = vmatprep.subr.bf16.mxu0 0
        %7129 = vmatpush2.bf16.msra.mxu0 %v7086
        %7130 = vmatprep.subr.bf16.mxu0 0
        %7131 = vmatpush2.bf16.msra.mxu0 %v7085
        %7132 = vmatprep.subr.bf16.mxu0 0
        %7133 = vmatpush2.bf16.msra.mxu0 %v7084
        %7134 = vmatprep.subr.bf16.mxu0 0
        %7135 = vmatpush2.bf16.msra.mxu0 %v7083
        %7136 = vmatprep.subr.bf16.mxu0 0
        %7137 = vmatpush2.bf16.msra.mxu0 %v7082
        %7138 = vmatprep.mubr.bf16.mxu0 %v5337
        %7139 = vmatmul.mubr.bf16.gmra.mxu0 %v5336
        %v7140 = vpop.f32.mrf.mxu0
        %v7141 = vadd.f32 0.0, %v7140
        %v7142 = vpop.f32.mrf.mxu0
        %v7143 = vpop.f32.mrf.mxu0
        %v7144 = vadd.f32 0.0, %v7143
        %v7145 = vpop.f32.mrf.mxu0
        %7146 = vmatprep.mubr.bf16.mxu0 %v5339
        %7147 = vmatmul.mubr.bf16.gmra.mxu0 %v5338
        %v7148 = vpop.f32.mrf.mxu0
        %v7149 = vadd.f32 0.0, %v7148
        %v7150 = vpop.f32.mrf.mxu0
        %v7151 = vpop.f32.mrf.mxu0
        %v7152 = vadd.f32 0.0, %v7151
        %v7153 = vpop.f32.mrf.mxu0
        %7154 = vdwg.mxu0
        %v7155 = vadd.f32 %v6973, %v7141
        %v7156 = vadd.f32 %v6974, %v7144
        %v7157 = vadd.f32 %v6975, %v7149
        %v7158 = vadd.f32 %v6976, %v7152
        %s7159 = scalar_lea.vmem %s3, 1280
        %v7160 = vld [vmem:[%s7159] sm:$0xf]
        %v7161 = vld [vmem:[%s7159 + $0x4] sm:$0xf]
        %v7162 = vld [vmem:[%s7159 + $0x8] sm:$0xf]
        %v7163 = vld [vmem:[%s7159 + $0xc] sm:$0xf]
        %v7164 = vld [vmem:[%s7159 + $0x10] sm:$0xf]
        %v7165 = vld [vmem:[%s7159 + $0x14] sm:$0xf]
        %v7166 = vld [vmem:[%s7159 + $0x18] sm:$0xf]
        %v7167 = vld [vmem:[%s7159 + $0x1c] sm:$0xf]
        %v7168 = vld [vmem:[%s7159 + $0x20] sm:$0xf]
        %v7169 = vld [vmem:[%s7159 + $0x24] sm:$0xf]
        %v7170 = vld [vmem:[%s7159 + $0x28] sm:$0xf]
        %v7171 = vld [vmem:[%s7159 + $0x2c] sm:$0xf]
        %v7172 = vld [vmem:[%s7159 + $0x30] sm:$0xf]
        %v7173 = vld [vmem:[%s7159 + $0x34] sm:$0xf]
        %v7174 = vld [vmem:[%s7159 + $0x38] sm:$0xf]
        %v7175 = vld [vmem:[%s7159 + $0x3c] sm:$0xf]
        %v7176 = vld [vmem:[%s7159 + $0x40] sm:$0xf]
        %v7177 = vld [vmem:[%s7159 + $0x44] sm:$0xf]
        %v7178 = vld [vmem:[%s7159 + $0x48] sm:$0xf]
        %v7179 = vld [vmem:[%s7159 + $0x4c] sm:$0xf]
        %v7180 = vld [vmem:[%s7159 + $0x50] sm:$0xf]
        %v7181 = vld [vmem:[%s7159 + $0x54] sm:$0xf]
        %v7182 = vld [vmem:[%s7159 + $0x58] sm:$0xf]
        %v7183 = vld [vmem:[%s7159 + $0x5c] sm:$0xf]
        %v7184 = vld [vmem:[%s7159 + $0x60] sm:$0xf]
        %v7185 = vld [vmem:[%s7159 + $0x64] sm:$0xf]
        %v7186 = vld [vmem:[%s7159 + $0x68] sm:$0xf]
        %v7187 = vld [vmem:[%s7159 + $0x6c] sm:$0xf]
        %v7188 = vld [vmem:[%s7159 + $0x70] sm:$0xf]
        %v7189 = vld [vmem:[%s7159 + $0x74] sm:$0xf]
        %v7190 = vld [vmem:[%s7159 + $0x78] sm:$0xf]
        %v7191 = vld [vmem:[%s7159 + $0x7c] sm:$0xf]
        %v7224 = vunpack.c.l.b16 %v7160
        %v7225 = vunpack.c.l.b16 %v7161
        %v7226 = vunpack.c.l.b16 %v7162
        %v7227 = vunpack.c.l.b16 %v7163
        %v7228 = vunpack.c.l.b16 %v7164
        %v7229 = vunpack.c.l.b16 %v7165
        %v7230 = vunpack.c.l.b16 %v7166
        %v7231 = vunpack.c.l.b16 %v7167
        %v7232 = vunpack.c.l.b16 %v7168
        %v7233 = vunpack.c.l.b16 %v7169
        %v7234 = vunpack.c.l.b16 %v7170
        %v7235 = vunpack.c.l.b16 %v7171
        %v7236 = vunpack.c.l.b16 %v7172
        %v7237 = vunpack.c.l.b16 %v7173
        %v7238 = vunpack.c.l.b16 %v7174
        %v7239 = vunpack.c.l.b16 %v7175
        %v7240 = vunpack.c.l.b16 %v7176
        %v7241 = vunpack.c.l.b16 %v7177
        %v7242 = vunpack.c.l.b16 %v7178
        %v7243 = vunpack.c.l.b16 %v7179
        %v7244 = vunpack.c.l.b16 %v7180
        %v7245 = vunpack.c.l.b16 %v7181
        %v7246 = vunpack.c.l.b16 %v7182
        %v7247 = vunpack.c.l.b16 %v7183
        %v7248 = vunpack.c.l.b16 %v7184
        %v7249 = vunpack.c.l.b16 %v7185
        %v7250 = vunpack.c.l.b16 %v7186
        %v7251 = vunpack.c.l.b16 %v7187
        %v7252 = vunpack.c.l.b16 %v7188
        %v7253 = vunpack.c.l.b16 %v7189
        %v7254 = vunpack.c.l.b16 %v7190
        %v7255 = vunpack.c.l.b16 %v7191
        %v7256 = vpack.c.b16 %v7225, %v7224
        %v7257 = vpack.c.b16 %v7227, %v7226
        %v7258 = vpack.c.b16 %v7229, %v7228
        %v7259 = vpack.c.b16 %v7231, %v7230
        %v7260 = vpack.c.b16 %v7233, %v7232
        %v7261 = vpack.c.b16 %v7235, %v7234
        %v7262 = vpack.c.b16 %v7237, %v7236
        %v7263 = vpack.c.b16 %v7239, %v7238
        %v7264 = vpack.c.b16 %v7241, %v7240
        %v7265 = vpack.c.b16 %v7243, %v7242
        %v7266 = vpack.c.b16 %v7245, %v7244
        %v7267 = vpack.c.b16 %v7247, %v7246
        %v7268 = vpack.c.b16 %v7249, %v7248
        %v7269 = vpack.c.b16 %v7251, %v7250
        %v7270 = vpack.c.b16 %v7253, %v7252
        %v7271 = vpack.c.b16 %v7255, %v7254
        %7288 = vmatprep.subr.bf16.mxu0 0
        %7289 = vmatpush1.bf16.msra.mxu0 %v7263
        %7290 = vmatprep.subr.bf16.mxu0 0
        %7291 = vmatpush1.bf16.msra.mxu0 %v7262
        %7292 = vmatprep.subr.bf16.mxu0 0
        %7293 = vmatpush1.bf16.msra.mxu0 %v7261
        %7294 = vmatprep.subr.bf16.mxu0 0
        %7295 = vmatpush1.bf16.msra.mxu0 %v7260
        %7296 = vmatprep.subr.bf16.mxu0 0
        %7297 = vmatpush1.bf16.msra.mxu0 %v7259
        %7298 = vmatprep.subr.bf16.mxu0 0
        %7299 = vmatpush1.bf16.msra.mxu0 %v7258
        %7300 = vmatprep.subr.bf16.mxu0 0
        %7301 = vmatpush1.bf16.msra.mxu0 %v7257
        %7302 = vmatprep.subr.bf16.mxu0 0
        %7303 = vmatpush1.bf16.msra.mxu0 %v7256
        %7304 = vmatprep.subr.bf16.mxu0 0
        %7305 = vmatpush2.bf16.msra.mxu0 %v7271
        %7306 = vmatprep.subr.bf16.mxu0 0
        %7307 = vmatpush2.bf16.msra.mxu0 %v7270
        %7308 = vmatprep.subr.bf16.mxu0 0
        %7309 = vmatpush2.bf16.msra.mxu0 %v7269
        %7310 = vmatprep.subr.bf16.mxu0 0
        %7311 = vmatpush2.bf16.msra.mxu0 %v7268
        %7312 = vmatprep.subr.bf16.mxu0 0
        %7313 = vmatpush2.bf16.msra.mxu0 %v7267
        %7314 = vmatprep.subr.bf16.mxu0 0
        %7315 = vmatpush2.bf16.msra.mxu0 %v7266
        %7316 = vmatprep.subr.bf16.mxu0 0
        %7317 = vmatpush2.bf16.msra.mxu0 %v7265
        %7318 = vmatprep.subr.bf16.mxu0 0
        %7319 = vmatpush2.bf16.msra.mxu0 %v7264
        %7320 = vmatprep.mubr.bf16.mxu0 %v5341
        %7321 = vmatmul.mubr.bf16.gmra.mxu0 %v5340
        %v7322 = vpop.f32.mrf.mxu0
        %v7323 = vadd.f32 0.0, %v7322
        %v7324 = vpop.f32.mrf.mxu0
        %v7325 = vpop.f32.mrf.mxu0
        %v7326 = vadd.f32 0.0, %v7325
        %v7327 = vpop.f32.mrf.mxu0
        %7328 = vmatprep.mubr.bf16.mxu0 %v5343
        %7329 = vmatmul.mubr.bf16.gmra.mxu0 %v5342
        %v7330 = vpop.f32.mrf.mxu0
        %v7331 = vadd.f32 0.0, %v7330
        %v7332 = vpop.f32.mrf.mxu0
        %v7333 = vpop.f32.mrf.mxu0
        %v7334 = vadd.f32 0.0, %v7333
        %v7335 = vpop.f32.mrf.mxu0
        %7336 = vdwg.mxu0
        %v7337 = vadd.f32 %v7155, %v7323
        %v7338 = vadd.f32 %v7156, %v7326
        %v7339 = vadd.f32 %v7157, %v7331
        %v7340 = vadd.f32 %v7158, %v7334
        %s7341 = scalar_lea.vmem %s3, 1408
        %v7342 = vld [vmem:[%s7341] sm:$0xf]
        %v7343 = vld [vmem:[%s7341 + $0x4] sm:$0xf]
        %v7344 = vld [vmem:[%s7341 + $0x8] sm:$0xf]
        %v7345 = vld [vmem:[%s7341 + $0xc] sm:$0xf]
        %v7346 = vld [vmem:[%s7341 + $0x10] sm:$0xf]
        %v7347 = vld [vmem:[%s7341 + $0x14] sm:$0xf]
        %v7348 = vld [vmem:[%s7341 + $0x18] sm:$0xf]
        %v7349 = vld [vmem:[%s7341 + $0x1c] sm:$0xf]
        %v7350 = vld [vmem:[%s7341 + $0x20] sm:$0xf]
        %v7351 = vld [vmem:[%s7341 + $0x24] sm:$0xf]
        %v7352 = vld [vmem:[%s7341 + $0x28] sm:$0xf]
        %v7353 = vld [vmem:[%s7341 + $0x2c] sm:$0xf]
        %v7354 = vld [vmem:[%s7341 + $0x30] sm:$0xf]
        %v7355 = vld [vmem:[%s7341 + $0x34] sm:$0xf]
        %v7356 = vld [vmem:[%s7341 + $0x38] sm:$0xf]
        %v7357 = vld [vmem:[%s7341 + $0x3c] sm:$0xf]
        %v7358 = vld [vmem:[%s7341 + $0x40] sm:$0xf]
        %v7359 = vld [vmem:[%s7341 + $0x44] sm:$0xf]
        %v7360 = vld [vmem:[%s7341 + $0x48] sm:$0xf]
        %v7361 = vld [vmem:[%s7341 + $0x4c] sm:$0xf]
        %v7362 = vld [vmem:[%s7341 + $0x50] sm:$0xf]
        %v7363 = vld [vmem:[%s7341 + $0x54] sm:$0xf]
        %v7364 = vld [vmem:[%s7341 + $0x58] sm:$0xf]
        %v7365 = vld [vmem:[%s7341 + $0x5c] sm:$0xf]
        %v7366 = vld [vmem:[%s7341 + $0x60] sm:$0xf]
        %v7367 = vld [vmem:[%s7341 + $0x64] sm:$0xf]
        %v7368 = vld [vmem:[%s7341 + $0x68] sm:$0xf]
        %v7369 = vld [vmem:[%s7341 + $0x6c] sm:$0xf]
        %v7370 = vld [vmem:[%s7341 + $0x70] sm:$0xf]
        %v7371 = vld [vmem:[%s7341 + $0x74] sm:$0xf]
        %v7372 = vld [vmem:[%s7341 + $0x78] sm:$0xf]
        %v7373 = vld [vmem:[%s7341 + $0x7c] sm:$0xf]
        %v7406 = vunpack.c.l.b16 %v7342
        %v7407 = vunpack.c.l.b16 %v7343
        %v7408 = vunpack.c.l.b16 %v7344
        %v7409 = vunpack.c.l.b16 %v7345
        %v7410 = vunpack.c.l.b16 %v7346
        %v7411 = vunpack.c.l.b16 %v7347
        %v7412 = vunpack.c.l.b16 %v7348
        %v7413 = vunpack.c.l.b16 %v7349
        %v7414 = vunpack.c.l.b16 %v7350
        %v7415 = vunpack.c.l.b16 %v7351
        %v7416 = vunpack.c.l.b16 %v7352
        %v7417 = vunpack.c.l.b16 %v7353
        %v7418 = vunpack.c.l.b16 %v7354
        %v7419 = vunpack.c.l.b16 %v7355
        %v7420 = vunpack.c.l.b16 %v7356
        %v7421 = vunpack.c.l.b16 %v7357
        %v7422 = vunpack.c.l.b16 %v7358
        %v7423 = vunpack.c.l.b16 %v7359
        %v7424 = vunpack.c.l.b16 %v7360
        %v7425 = vunpack.c.l.b16 %v7361
        %v7426 = vunpack.c.l.b16 %v7362
        %v7427 = vunpack.c.l.b16 %v7363
        %v7428 = vunpack.c.l.b16 %v7364
        %v7429 = vunpack.c.l.b16 %v7365
        %v7430 = vunpack.c.l.b16 %v7366
        %v7431 = vunpack.c.l.b16 %v7367
        %v7432 = vunpack.c.l.b16 %v7368
        %v7433 = vunpack.c.l.b16 %v7369
        %v7434 = vunpack.c.l.b16 %v7370
        %v7435 = vunpack.c.l.b16 %v7371
        %v7436 = vunpack.c.l.b16 %v7372
        %v7437 = vunpack.c.l.b16 %v7373
        %v7438 = vpack.c.b16 %v7407, %v7406
        %v7439 = vpack.c.b16 %v7409, %v7408
        %v7440 = vpack.c.b16 %v7411, %v7410
        %v7441 = vpack.c.b16 %v7413, %v7412
        %v7442 = vpack.c.b16 %v7415, %v7414
        %v7443 = vpack.c.b16 %v7417, %v7416
        %v7444 = vpack.c.b16 %v7419, %v7418
        %v7445 = vpack.c.b16 %v7421, %v7420
        %v7446 = vpack.c.b16 %v7423, %v7422
        %v7447 = vpack.c.b16 %v7425, %v7424
        %v7448 = vpack.c.b16 %v7427, %v7426
        %v7449 = vpack.c.b16 %v7429, %v7428
        %v7450 = vpack.c.b16 %v7431, %v7430
        %v7451 = vpack.c.b16 %v7433, %v7432
        %v7452 = vpack.c.b16 %v7435, %v7434
        %v7453 = vpack.c.b16 %v7437, %v7436
        %7470 = vmatprep.subr.bf16.mxu0 0
        %7471 = vmatpush1.bf16.msra.mxu0 %v7445
        %7472 = vmatprep.subr.bf16.mxu0 0
        %7473 = vmatpush1.bf16.msra.mxu0 %v7444
        %7474 = vmatprep.subr.bf16.mxu0 0
        %7475 = vmatpush1.bf16.msra.mxu0 %v7443
        %7476 = vmatprep.subr.bf16.mxu0 0
        %7477 = vmatpush1.bf16.msra.mxu0 %v7442
        %7478 = vmatprep.subr.bf16.mxu0 0
        %7479 = vmatpush1.bf16.msra.mxu0 %v7441
        %7480 = vmatprep.subr.bf16.mxu0 0
        %7481 = vmatpush1.bf16.msra.mxu0 %v7440
        %7482 = vmatprep.subr.bf16.mxu0 0
        %7483 = vmatpush1.bf16.msra.mxu0 %v7439
        %7484 = vmatprep.subr.bf16.mxu0 0
        %7485 = vmatpush1.bf16.msra.mxu0 %v7438
        %7486 = vmatprep.subr.bf16.mxu0 0
        %7487 = vmatpush2.bf16.msra.mxu0 %v7453
        %7488 = vmatprep.subr.bf16.mxu0 0
        %7489 = vmatpush2.bf16.msra.mxu0 %v7452
        %7490 = vmatprep.subr.bf16.mxu0 0
        %7491 = vmatpush2.bf16.msra.mxu0 %v7451
        %7492 = vmatprep.subr.bf16.mxu0 0
        %7493 = vmatpush2.bf16.msra.mxu0 %v7450
        %7494 = vmatprep.subr.bf16.mxu0 0
        %7495 = vmatpush2.bf16.msra.mxu0 %v7449
        %7496 = vmatprep.subr.bf16.mxu0 0
        %7497 = vmatpush2.bf16.msra.mxu0 %v7448
        %7498 = vmatprep.subr.bf16.mxu0 0
        %7499 = vmatpush2.bf16.msra.mxu0 %v7447
        %7500 = vmatprep.subr.bf16.mxu0 0
        %7501 = vmatpush2.bf16.msra.mxu0 %v7446
        %7502 = vmatprep.mubr.bf16.mxu0 %v5345
        %7503 = vmatmul.mubr.bf16.gmra.mxu0 %v5344
        %v7504 = vpop.f32.mrf.mxu0
        %v7505 = vadd.f32 0.0, %v7504
        %v7506 = vpop.f32.mrf.mxu0
        %v7507 = vpop.f32.mrf.mxu0
        %v7508 = vadd.f32 0.0, %v7507
        %v7509 = vpop.f32.mrf.mxu0
        %7510 = vmatprep.mubr.bf16.mxu0 %v5347
        %7511 = vmatmul.mubr.bf16.gmra.mxu0 %v5346
        %v7512 = vpop.f32.mrf.mxu0
        %v7513 = vadd.f32 0.0, %v7512
        %v7514 = vpop.f32.mrf.mxu0
        %v7515 = vpop.f32.mrf.mxu0
        %v7516 = vadd.f32 0.0, %v7515
        %v7517 = vpop.f32.mrf.mxu0
        %7518 = vdwg.mxu0
        %v7519 = vadd.f32 %v7337, %v7505
        %v7520 = vadd.f32 %v7338, %v7508
        %v7521 = vadd.f32 %v7339, %v7513
        %v7522 = vadd.f32 %v7340, %v7516
        %v7523 = vld [vmem:[%s4] sm:$0x1]
        %v7525 = vlaneseq
        %v7526 = vshrl.u32 %v7525, 7
        %v7527 = vsub.s32 0, %v7526
        %v7528 = vrot.slane %v7523, %v7527
        %v7530 = vadd.f32 %v7519, %v7528
        %v7531 = vadd.f32 %v7520, %v7528
        %v7532 = vadd.f32 %v7521, %v7528
        %v7533 = vadd.f32 %v7522, %v7528
        %7534 = vst [vmem:[%s713] sm:$0xff] %v7530
        %7535 = vst [vmem:[%s713 + $0x8] sm:$0xff] %v7531
        %7536 = vst [vmem:[%s713 + $0x10] sm:$0xff] %v7532
        %7537 = vst [vmem:[%s713 + $0x18] sm:$0xff] %v7533
        %s7538 = smul.u32 4, %s16
        %p7539 = scmp.lt.s32.totalorder %s7538, 7
        %s7540 = scalar_select %p7539, %s7538, 7
        %s7541 = smul.addr %s7540, 8
        %s7542 = scalar_lea.vmem %s5, %s7541
        // Predicated region
        $region82: #{lenet_forward.1} parent=76 // pred_check
          %p7543 = pneg %p144
        $region83: #{lenet_forward.1} parent=76 // pred_check_branch
          %7545 = sbr.rel (%p7543) target = $region85
        $region84: #{lenet_forward.1} parent=76 // pred_region
          %s7546 = smul.u32 4, %s16
        $region85: #{lenet_forward.1} parent=76 // pred_fallthru
          _
      $region77: #{lenet_forward.1} parent=5 // pred_fallthru
        _
      %p7547 = scmp.le.s32.totalorder 2, %s11
      // Predicated region
      $region86: #{lenet_forward.1} parent=5 // pred_check
        %p7548 = pneg %p7547
      $region87: #{lenet_forward.1} parent=5 // pred_check_branch
        %7550 = sbr.rel (%p7548) target = $region89
      $region88: #{lenet_forward.1} parent=5 // pred_region
        %s7551 = ssub.s32 %s11, 2
        // Predicated region
        $region90: #{lenet_forward.1} parent=88 // pred_check
          %p7552 = pneg %p150
        $region91: #{lenet_forward.1} parent=88 // pred_check_branch
          %7554 = sbr.rel (%p7552) target = $region93
        $region92: #{lenet_forward.1} parent=88 // pred_region
          %s7555 = smul.u32 4, %s17
          %p7556 = scmp.lt.s32.totalorder %s7555, 7
          %s7557 = scalar_select %p7556, %s7555, 7
          %s7558 = smul.addr %s7557, 8
          %s7559 = scalar_lea.vmem %s5, %s7558
        $region93: #{lenet_forward.1} parent=88 // pred_fallthru
          _
      $region89: #{lenet_forward.1} parent=5 // pred_fallthru
        _
    $region6: #{lenet_forward.1} parent=1 // loop_footer
      %s15 = sadd.s32 1, %s11
    $region7: #{lenet_forward.1} parent=1 // loop_footer_branch
      %10 = sbr.rel target = $region3
    $region8: #{lenet_forward.1} parent=1 // loop_exit
      _

</llo_original>
